<compile_context>
chip_gen: v5e
topology: v5e:2x2
jax: 0.10.0
libtpu: 0.0.40
codegen_flags: <defaults>
</compile_context>

<pallas_src>
import math

import numpy as np

import jax
import jax.numpy as jnp
from jax import lax
from jax.experimental import pallas as pl
from jax.experimental.pallas import tpu as pltpu

# ---------------- config (synthetic, mirrors the module's `config`) ----------
TEXT_PROJ_DIM = 64
NUM_CLASSES = 12
TEXT_EMB_DIM = 96
K = 1
C_IN = 40

BN_EPS = 1e-5
BN_SCALE = 1.0 / math.sqrt(1.0 + BN_EPS)   # fresh eval-mode BN => scale-only fold
# TODO(synk): with trained running stats the BN fold also needs the
# beta - gamma*mean/sqrt(var+eps) bias term (dropped here: fresh stats).

LANE = 128   # q/k/v each padded to one full 128-lane chunk


def _half_len(t):   # Conv2d(k=3, s=2, p=1) and 1x1/stride-2 shortcut: ceil(t/2)
    return (t - 1) // 2 + 1


def _pad8(t):       # per-sample band length: >= t+2 (zero pad rows), multiple of 8
    return ((t + 2 + 7) // 8) * 8


# ---------------- in-kernel helpers -------------------------------------------

def _bf(x):
    return x.astype(jnp.bfloat16)


def _mm(a, b):
    # every matmul on the MXU in bf16 with f32 accumulation
    return jnp.dot(_bf(a), _bf(b), preferred_element_type=jnp.float32)


def _conv3(x, w_cat):
    """3-tap temporal conv, stride 1, 'same' zero padding.

    x: (N, C) band layout (pad rows of each band are zero); w_cat: (3*C, C_out).
    im2col slab via two XLU sublane rolls + lane concat, one MXU matmul.
    """
    n = x.shape[0]
    xm = pltpu.roll(x, shift=1, axis=0)        # row t -> x[t-1]
    xp = pltpu.roll(x, shift=n - 1, axis=0)    # row t -> x[t+1]
    slab = jnp.concatenate([xm, x, xp], axis=-1)
    return _mm(slab, w_cat)


def _mha(h, pe, wqkv, bqkv, wo, bo, nb, t_pad, t_valid, d_model):
    """PositionalEncoding + single-head self-attention (dropout = identity)."""
    h = h + pe                                              # (nb*t_pad, d)
    qkv = _mm(h, wqkv) + bqkv                               # (N, 3*128), lane aligned
    q = qkv[:, 0 * LANE:1 * LANE].reshape(nb, t_pad, LANE)
    k = qkv[:, 1 * LANE:2 * LANE].reshape(nb, t_pad, LANE)
    v = qkv[:, 2 * LANE:3 * LANE].reshape(nb, t_pad, LANE)
    s = jnp.einsum('bqd,bkd->bqk', _bf(q), _bf(k),
                   preferred_element_type=jnp.float32)
    s = s * (1.0 / math.sqrt(d_model))
    kidx = lax.broadcasted_iota(jnp.int32, s.shape, 2)
    s = jnp.where(kidx < t_valid, s, -1e30)                 # mask pad-row keys
    s = s - jnp.max(s, axis=-1, keepdims=True)
    p = jnp.exp(s)
    p = p * pl.reciprocal(jnp.sum(p, axis=-1, keepdims=True), approx=True)
    ctx = jnp.einsum('bqk,bkd->bqd', _bf(p), _bf(v),
                     preferred_element_type=jnp.float32)
    return _mm(ctx.reshape(nb * t_pad, LANE), wo) + bo      # output proj (128 -> d)


def _lg_block(x, sel, w1, w2, wsc, pe, wqkv, bqkv, wo, bo,
              nb, t_pad, t_valid, d_model):
    """LGBlock: [conv3 s2 -> BN -> ReLU -> conv3 s1 -> BN] + shortcut, ReLU,
    then PE + 1-head attention.  BN folded into weights.

    `sel` (0/1 block-diagonal) performs stride-2 row selection, re-banding and
    pad-row zeroing in a single MXU matmul (replaces all strided sublane reads).
    """
    res = _mm(_mm(sel, x), wsc)                             # 1x1 stride-2 shortcut
    h = jnp.maximum(_mm(sel, _conv3(x, w1)), 0.0)           # conv s2 -> ReLU
    h = jnp.maximum(_conv3(h, w2) + res, 0.0)               # conv s1 + residual -> ReLU
    return _mha(h, pe, wqkv, bqkv, wo, bo, nb, t_pad, t_valid, d_model)


# ---------------- structural constants (built with numpy at trace time) --------

def _sel_matrix(nb, t_in_pad, t_out_valid, t_out_pad):
    s = np.zeros((nb * t_out_pad, nb * t_in_pad), np.float32)
    for i in range(nb):
        for t in range(t_out_valid):
            s[i * t_out_pad + t, i * t_in_pad + 2 * t] = 1.0
    return jnp.asarray(s, jnp.bfloat16)


def _row_mask(nb, t_valid, t_pad):
    m = np.zeros((nb * t_pad, 1), np.float32)
    for i in range(nb):
        m[i * t_pad:i * t_pad + t_valid, 0] = 1.0
    return jnp.asarray(m)


def _pool_matrix(nb, t_valid, t_pad):
    p = np.zeros((nb, nb * t_pad), np.float32)
    for i in range(nb):
        p[i, i * t_pad:i * t_pad + t_valid] = 1.0
    return jnp.asarray(p, jnp.bfloat16)


def _pe_tiled(nb, t_valid, t_pad, d_model):
    pe = np.zeros((t_pad, d_model), np.float32)
    pos = np.arange(t_valid, dtype=np.float32)[:, None]
    div = np.exp(np.arange(0, d_model, 2, dtype=np.float32)
                 * (-math.log(10000.0) / d_model))
    pe[:t_valid, 0::2] = np.sin(pos * div)
    pe[:t_valid, 1::2] = np.cos(pos * div)
    return jnp.asarray(np.tile(pe, (nb, 1)))


# ---------------- model forward -------------------------------------------------

def lgnet3_forward(pos_mfcc, neg_mfcc, anchor, params):
    """pos/neg: (B, 40, T) precomputed MFCC features; anchor: (B, TEXT_EMB_DIM)."""
    b, c_in, t0 = pos_mfcc.shape
    t1 = _half_len(t0)
    t2 = _half_len(t1)
    t3 = _half_len(t2)
    p0, p1, p2, p3 = _pad8(t0), _pad8(t1), _pad8(t2), _pad8(t3)

    c32 = params['lg1']['w1'].shape[-1]
    c48 = params['lg2']['w1'].shape[-1]
    c52 = params['lg3']['w1'].shape[-1]
    d_emb = params['cls1_w'].shape[-1]
    n_cls = params['cls2_w'].shape[-1]
    assert n_cls <= d_emb and params['mtp_w'].shape[-1] == d_emb

    # ---- host-side packing into the per-sample band layout --------------------
    # (the ~130 KB transpose/pad is minor; kept host-side so the kernel body has
    #  no in-kernel transposes or scratch staging at all)
    x = jnp.concatenate([pos_mfcc, neg_mfcc], axis=0)        # (2B, 40, T)
    x = jnp.transpose(x, (0, 2, 1))                          # (2B, T, 40)
    x = jnp.pad(x, ((0, 0), (0, p0 - t0), (0, 0)))           # (2B, p0, 40)
    x = x.reshape(2, b * p0, c_in)                           # (2, B*p0, 40)

    # ---- structural constants --------------------------------------------------
    m0 = _row_mask(b, t0, p0)
    m1 = _row_mask(b, t1, p1)
    m2 = _row_mask(b, t2, p2)
    s1 = _sel_matrix(b, p0, t1, p1)
    s2 = _sel_matrix(b, p1, t2, p2)
    s3 = _sel_matrix(b, p2, t3, p3)
    pe1 = _pe_tiled(b, t1, p1, c32)
    pe2 = _pe_tiled(b, t2, p2, c48)
    pe3 = _pe_tiled(b, t3, p3, c52)
    pmat = _pool_matrix(b, t3, p3)

    lg1, lg2, lg3 = params['lg1'], params['lg2'], params['lg3']
    consts = [
        m0, params['conv1_w'], params['conv1_b'],
        s1, lg1['w1'], lg1['w2'], lg1['wsc'], pe1,
        lg1['wqkv'], lg1['bqkv'], lg1['wo'], lg1['bo'], m1,
        s2, lg2['w1'], lg2['w2'], lg2['wsc'], pe2,
        lg2['wqkv'], lg2['bqkv'], lg2['wo'], lg2['bo'], m2,
        s3, lg3['w1'], lg3['w2'], lg3['wsc'], pe3,
        lg3['wqkv'], lg3['bqkv'], lg3['wo'], lg3['bo'],
        pmat, params['cls1_w'], params['cls1_b'], params['cls2_w'],
        params['cls2_b'], params['mtp_w'], params['mtp_b'],
    ]

    def kernel(x_ref, anchor_ref, *refs):
        (m0_, wc1, bc1,
         s1_, w1a, w1b, w1sc, pe1_, wq1, bq1, wo1, bo1, m1_,
         s2_, w2a, w2b, w2sc, pe2_, wq2, bq2, wo2, bo2, m2_,
         s3_, w3a, w3b, w3sc, pe3_, wq3, bq3, wo3, bo3,
         pm, wcls1, bcls1, wcls2, bcls2, wmtp, bmtp,
         out_ref) = refs

        x0 = x_ref[0]                                                # (B*p0, 40)
        # conv1 (3x1, s=1, bias) + pad-row zeroing
        h = (_conv3(x0, wc1[...]) + bc1[...]) * m0_[...]
        # three LGBlocks; block-1/2 outputs get pad rows re-zeroed so the next
        # block's conv taps / attention never see garbage; block-3 pad rows are
        # ignored by the pooling matrix.
        h = _lg_block(h, s1_[...], w1a[...], w1b[...], w1sc[...], pe1_[...],
                      wq1[...], bq1[...], wo1[...], bo1[...],
                      b, p1, t1, c32) * m1_[...]
        h = _lg_block(h, s2_[...], w2a[...], w2b[...], w2sc[...], pe2_[...],
                      wq2[...], bq2[...], wo2[...], bo2[...],
                      b, p2, t2, c48) * m2_[...]
        h = _lg_block(h, s3_[...], w3a[...], w3b[...], w3sc[...], pe3_[...],
                      wq3[...], bq3[...], wo3[...], bo3[...],
                      b, p3, t3, c52)

        # AvgPool2d((13,1)) -> classifier -> classifier2 (dropout = identity)
        pooled = _mm(pm[...], h) * (1.0 / float(t3))                 # (B, 52)
        emb = _mm(pooled, wcls1[...]) + bcls1[...]                   # (B, 64)
        logits = _mm(emb, wcls2[...]) + bcls2[...]                   # (B, n_cls)
        # anchor text projection (match_text_proj) fused in; neg step stores it
        anc = _mm(anchor_ref[...], wmtp[...]) + bmtp[...]            # (B, 64)

        # lane-dense packed output: lanes [0,64) = embedding;
        # lanes [64,128) = logits (pos half, zero padded) or anchor projection.
        logits_pad = jnp.concatenate(
            [logits, jnp.zeros((b, d_emb - n_cls), jnp.float32)], axis=1)
        pos_flag = (pl.program_id(0) == 0).astype(jnp.float32)
        tail = pos_flag * logits_pad + (1.0 - pos_flag) * anc
        out_ref[0] = jnp.concatenate([emb, tail], axis=1)

    grid_spec = pltpu.PrefetchScalarGridSpec(
        num_scalar_prefetch=0,
        grid=(2,),
        in_specs=[
            pl.BlockSpec((1, b * p0, c_in), lambda h: (h, 0, 0)),
            pl.BlockSpec((b, anchor.shape[1]), lambda h: (0, 0)),
        ] + [pl.BlockSpec(a.shape, lambda h: (0, 0)) for a in consts],
        out_specs=pl.BlockSpec((1, b, 2 * d_emb), lambda h: (h, 0, 0)),
    )

    out = pl.pallas_call(
        kernel,
        grid_spec=grid_spec,
        out_shape=jax.ShapeDtypeStruct((2, b, 2 * d_emb), jnp.float32),
        compiler_params=pltpu.CompilerParams(
            dimension_semantics=("parallel",)),
    )(x, anchor, *consts)

    pos_blk, neg_blk = out[0], out[1]
    pos_logits = pos_blk[:, d_emb:d_emb + n_cls]
    emb_pos = pos_blk[:, :d_emb]
    emb_neg = neg_blk[:, :d_emb]
    anchor_proj = neg_blk[:, d_emb:2 * d_emb]
    return pos_logits, emb_pos, emb_neg, anchor_proj


# ---------------- deterministic parameter init (normal std=0.01, bias=0) -------

def init_params(key):
    keys = iter(jax.random.split(key, 64))

    def normal(shape):
        return 0.01 * jax.random.normal(next(keys), shape, jnp.float32)

    def conv_cat(cout, cin, scale=1.0):
        # torch Conv2d weight (cout, cin, 3, 1) -> packed im2col layout:
        # rows [k*cin:(k+1)*cin] = tap k (t-1, t, t+1), transposed to (cin, cout)
        w = normal((cout, cin, 3))
        cat = jnp.concatenate([w[:, :, k].T for k in range(3)], axis=0)
        return (cat * scale).astype(jnp.bfloat16)

    def linear(out_dim, in_dim):
        w = jnp.transpose(normal((out_dim, in_dim)))          # -> (in, out)
        return w.astype(jnp.bfloat16), jnp.zeros((1, out_dim), jnp.float32)

    def lgblock(cin, cout):
        wq, _ = linear(cout, cout)
        wk, _ = linear(cout, cout)
        wv, _ = linear(cout, cout)
        wo, bo = linear(cout, cout)
        # q/k/v each padded to a full 128-lane chunk -> lane-aligned splits
        wqkv = jnp.zeros((cout, 3 * LANE), jnp.bfloat16)
        wqkv = (wqkv.at[:, 0:cout].set(wq)
                     .at[:, LANE:LANE + cout].set(wk)
                     .at[:, 2 * LANE:2 * LANE + cout].set(wv))
        bqkv = jnp.zeros((1, 3 * LANE), jnp.float32)
        wo_pad = jnp.zeros((LANE, cout), jnp.bfloat16).at[:cout, :].set(wo)
        return dict(
            w1=conv_cat(cout, cin, BN_SCALE),    # conv(3, s=2), eval-BN folded
            w2=conv_cat(cout, cout, BN_SCALE),   # conv(3, s=1), eval-BN folded
            wsc=(jnp.transpose(normal((cout, cin))) * BN_SCALE).astype(jnp.bfloat16),
            wqkv=wqkv, bqkv=bqkv, wo=wo_pad, bo=bo)

    c24, c32, c48, c52 = int(24 * K), int(32 * K), int(48 * K), int(52 * K)
    cls1_w, cls1_b = linear(TEXT_PROJ_DIM, c52)
    cls2_w, cls2_b = linear(NUM_CLASSES, TEXT_PROJ_DIM)
    mtp_w, mtp_b = linear(TEXT_PROJ_DIM, TEXT_EMB_DIM)
    return dict(
        conv1_w=conv_cat(c24, C_IN),
        conv1_b=jnp.zeros((1, c24), jnp.float32),
        lg1=lgblock(c24, c32),
        lg2=lgblock(c32, c48),
        lg3=lgblock(c48, c52),
        cls1_w=cls1_w, cls1_b=cls1_b,
        cls2_w=cls2_w, cls2_b=cls2_b,
        mtp_w=mtp_w, mtp_b=mtp_b,
    )


# ---------------- main -----------------------------------------------------------

if __name__ == "__main__":
    key = jax.random.PRNGKey(0)
    kp, kn, ka, kw = jax.random.split(key, 4)

    B, T = 2, 101          # T=101 -> 51 -> 26 -> 13 (matches each block's PE max_len)
    pos_mfcc = jax.random.normal(kp, (B, C_IN, T), jnp.float32)
    neg_mfcc = jax.random.normal(kn, (B, C_IN, T), jnp.float32)
    anchor = jax.random.normal(ka, (B, TEXT_EMB_DIM), jnp.float32)

    params = init_params(kw)

    fwd = jax.jit(lgnet3_forward)
    outs = jax.block_until_ready(fwd(pos_mfcc, neg_mfcc, anchor, params))

    pos_logits, emb_pos, emb_neg, anchor_proj = outs
    assert pos_logits.shape == (B, NUM_CLASSES)
    assert emb_pos.shape == (B, TEXT_PROJ_DIM)
    assert emb_neg.shape == (B, TEXT_PROJ_DIM)
    assert anchor_proj.shape == (B, TEXT_PROJ_DIM)
    assert all(bool(jnp.all(jnp.isfinite(o))) for o in outs)
    print("KERNEL_OK")
</pallas_src>

<mosaic_0001>
module attributes {stable_mosaic.version = 11 : i64} {
  func.func @kernel(%arg0: i32, %arg1: memref<1x208x40xf32, #tpu.memory_space<vmem>>, %arg2: memref<2x96xf32, #tpu.memory_space<vmem>>, %arg3: memref<208x1xf32, #tpu.memory_space<vmem>>, %arg4: memref<120x24xbf16, #tpu.memory_space<vmem>>, %arg5: memref<1x24xf32, #tpu.memory_space<vmem>>, %arg6: memref<112x208xbf16, #tpu.memory_space<vmem>>, %arg7: memref<72x32xbf16, #tpu.memory_space<vmem>>, %arg8: memref<96x32xbf16, #tpu.memory_space<vmem>>, %arg9: memref<24x32xbf16, #tpu.memory_space<vmem>>, %arg10: memref<112x32xf32, #tpu.memory_space<vmem>>, %arg11: memref<32x384xbf16, #tpu.memory_space<vmem>>, %arg12: memref<1x384xf32, #tpu.memory_space<vmem>>, %arg13: memref<128x32xbf16, #tpu.memory_space<vmem>>, %arg14: memref<1x32xf32, #tpu.memory_space<vmem>>, %arg15: memref<112x1xf32, #tpu.memory_space<vmem>>, %arg16: memref<64x112xbf16, #tpu.memory_space<vmem>>, %arg17: memref<96x48xbf16, #tpu.memory_space<vmem>>, %arg18: memref<144x48xbf16, #tpu.memory_space<vmem>>, %arg19: memref<32x48xbf16, #tpu.memory_space<vmem>>, %arg20: memref<64x48xf32, #tpu.memory_space<vmem>>, %arg21: memref<48x384xbf16, #tpu.memory_space<vmem>>, %arg22: memref<1x384xf32, #tpu.memory_space<vmem>>, %arg23: memref<128x48xbf16, #tpu.memory_space<vmem>>, %arg24: memref<1x48xf32, #tpu.memory_space<vmem>>, %arg25: memref<64x1xf32, #tpu.memory_space<vmem>>, %arg26: memref<32x64xbf16, #tpu.memory_space<vmem>>, %arg27: memref<144x52xbf16, #tpu.memory_space<vmem>>, %arg28: memref<156x52xbf16, #tpu.memory_space<vmem>>, %arg29: memref<48x52xbf16, #tpu.memory_space<vmem>>, %arg30: memref<32x52xf32, #tpu.memory_space<vmem>>, %arg31: memref<52x384xbf16, #tpu.memory_space<vmem>>, %arg32: memref<1x384xf32, #tpu.memory_space<vmem>>, %arg33: memref<128x52xbf16, #tpu.memory_space<vmem>>, %arg34: memref<1x52xf32, #tpu.memory_space<vmem>>, %arg35: memref<2x32xbf16, #tpu.memory_space<vmem>>, %arg36: memref<52x64xbf16, #tpu.memory_space<vmem>>, %arg37: memref<1x64xf32, #tpu.memory_space<vmem>>, %arg38: memref<64x12xbf16, #tpu.memory_space<vmem>>, %arg39: memref<1x12xf32, #tpu.memory_space<vmem>>, %arg40: memref<96x64xbf16, #tpu.memory_space<vmem>>, %arg41: memref<1x64xf32, #tpu.memory_space<vmem>>, %arg42: memref<1x2x128xf32, #tpu.memory_space<vmem>>) attributes {dimension_semantics = [#tpu.dimension_semantics<parallel>], iteration_bounds = array<i64: 2>, scalar_prefetch = 0 : i64, scratch_operands = 0 : i64, tpu.core_type = #tpu.core_type<tc>, window_params = [{transform_indices = @transform_0, window_bounds = array<i64: 1, 208, 40>}, {pipeline_mode = #tpu.pipeline_mode<synchronous>, transform_indices = @transform_1, window_bounds = array<i64: 2, 96>}, {pipeline_mode = #tpu.pipeline_mode<synchronous>, transform_indices = @transform_2, window_bounds = array<i64: 208, 1>}, {pipeline_mode = #tpu.pipeline_mode<synchronous>, transform_indices = @transform_3, window_bounds = array<i64: 120, 24>}, {pipeline_mode = #tpu.pipeline_mode<synchronous>, transform_indices = @transform_4, window_bounds = array<i64: 1, 24>}, {pipeline_mode = #tpu.pipeline_mode<synchronous>, transform_indices = @transform_5, window_bounds = array<i64: 112, 208>}, {pipeline_mode = #tpu.pipeline_mode<synchronous>, transform_indices = @transform_6, window_bounds = array<i64: 72, 32>}, {pipeline_mode = #tpu.pipeline_mode<synchronous>, transform_indices = @transform_7, window_bounds = array<i64: 96, 32>}, {pipeline_mode = #tpu.pipeline_mode<synchronous>, transform_indices = @transform_8, window_bounds = array<i64: 24, 32>}, {pipeline_mode = #tpu.pipeline_mode<synchronous>, transform_indices = @transform_9, window_bounds = array<i64: 112, 32>}, {pipeline_mode = #tpu.pipeline_mode<synchronous>, transform_indices = @transform_10, window_bounds = array<i64: 32, 384>}, {pipeline_mode = #tpu.pipeline_mode<synchronous>, transform_indices = @transform_11, window_bounds = array<i64: 1, 384>}, {pipeline_mode = #tpu.pipeline_mode<synchronous>, transform_indices = @transform_12, window_bounds = array<i64: 128, 32>}, {pipeline_mode = #tpu.pipeline_mode<synchronous>, transform_indices = @transform_13, window_bounds = array<i64: 1, 32>}, {pipeline_mode = #tpu.pipeline_mode<synchronous>, transform_indices = @transform_14, window_bounds = array<i64: 112, 1>}, {pipeline_mode = #tpu.pipeline_mode<synchronous>, transform_indices = @transform_15, window_bounds = array<i64: 64, 112>}, {pipeline_mode = #tpu.pipeline_mode<synchronous>, transform_indices = @transform_16, window_bounds = array<i64: 96, 48>}, {pipeline_mode = #tpu.pipeline_mode<synchronous>, transform_indices = @transform_17, window_bounds = array<i64: 144, 48>}, {pipeline_mode = #tpu.pipeline_mode<synchronous>, transform_indices = @transform_18, window_bounds = array<i64: 32, 48>}, {pipeline_mode = #tpu.pipeline_mode<synchronous>, transform_indices = @transform_19, window_bounds = array<i64: 64, 48>}, {pipeline_mode = #tpu.pipeline_mode<synchronous>, transform_indices = @transform_20, window_bounds = array<i64: 48, 384>}, {pipeline_mode = #tpu.pipeline_mode<synchronous>, transform_indices = @transform_21, window_bounds = array<i64: 1, 384>}, {pipeline_mode = #tpu.pipeline_mode<synchronous>, transform_indices = @transform_22, window_bounds = array<i64: 128, 48>}, {pipeline_mode = #tpu.pipeline_mode<synchronous>, transform_indices = @transform_23, window_bounds = array<i64: 1, 48>}, {pipeline_mode = #tpu.pipeline_mode<synchronous>, transform_indices = @transform_24, window_bounds = array<i64: 64, 1>}, {pipeline_mode = #tpu.pipeline_mode<synchronous>, transform_indices = @transform_25, window_bounds = array<i64: 32, 64>}, {pipeline_mode = #tpu.pipeline_mode<synchronous>, transform_indices = @transform_26, window_bounds = array<i64: 144, 52>}, {pipeline_mode = #tpu.pipeline_mode<synchronous>, transform_indices = @transform_27, window_bounds = array<i64: 156, 52>}, {pipeline_mode = #tpu.pipeline_mode<synchronous>, transform_indices = @transform_28, window_bounds = array<i64: 48, 52>}, {pipeline_mode = #tpu.pipeline_mode<synchronous>, transform_indices = @transform_29, window_bounds = array<i64: 32, 52>}, {pipeline_mode = #tpu.pipeline_mode<synchronous>, transform_indices = @transform_30, window_bounds = array<i64: 52, 384>}, {pipeline_mode = #tpu.pipeline_mode<synchronous>, transform_indices = @transform_31, window_bounds = array<i64: 1, 384>}, {pipeline_mode = #tpu.pipeline_mode<synchronous>, transform_indices = @transform_32, window_bounds = array<i64: 128, 52>}, {pipeline_mode = #tpu.pipeline_mode<synchronous>, transform_indices = @transform_33, window_bounds = array<i64: 1, 52>}, {pipeline_mode = #tpu.pipeline_mode<synchronous>, transform_indices = @transform_34, window_bounds = array<i64: 2, 32>}, {pipeline_mode = #tpu.pipeline_mode<synchronous>, transform_indices = @transform_35, window_bounds = array<i64: 52, 64>}, {pipeline_mode = #tpu.pipeline_mode<synchronous>, transform_indices = @transform_36, window_bounds = array<i64: 1, 64>}, {pipeline_mode = #tpu.pipeline_mode<synchronous>, transform_indices = @transform_37, window_bounds = array<i64: 64, 12>}, {pipeline_mode = #tpu.pipeline_mode<synchronous>, transform_indices = @transform_38, window_bounds = array<i64: 1, 12>}, {pipeline_mode = #tpu.pipeline_mode<synchronous>, transform_indices = @transform_39, window_bounds = array<i64: 96, 64>}, {pipeline_mode = #tpu.pipeline_mode<synchronous>, transform_indices = @transform_40, window_bounds = array<i64: 1, 64>}, {transform_indices = @transform_41, window_bounds = array<i64: 1, 2, 128>}]} {
    %c0 = arith.constant 0 : index
    %c0_0 = arith.constant 0 : index
    %c0_1 = arith.constant 0 : index
    %0 = vector.load %arg1[%c0, %c0_0, %c0_1] : memref<1x208x40xf32, #tpu.memory_space<vmem>>, vector<1x208x40xf32>
    %1 = vector.shape_cast %0 : vector<1x208x40xf32> to vector<208x40xf32>
    %c0_2 = arith.constant 0 : index
    %c0_3 = arith.constant 0 : index
    %2 = vector.load %arg4[%c0_2, %c0_3] : memref<120x24xbf16, #tpu.memory_space<vmem>>, vector<120x24xbf16>
    %c1_i32 = arith.constant 1 : i32
    %3 = tpu.dynamic_rotate %1 by %c1_i32 dim 0 : vector<208x40xf32>, i32 -> vector<208x40xf32>
    %c207_i32 = arith.constant 207 : i32
    %4 = tpu.dynamic_rotate %1 by %c207_i32 dim 0 : vector<208x40xf32>, i32 -> vector<208x40xf32>
    %5 = tpu.concatenate %3, %1, %4 in 1 : vector<208x40xf32>, vector<208x40xf32>, vector<208x40xf32> -> vector<208x120xf32>
    %6 = arith.truncf %5 : vector<208x120xf32> to vector<208x120xbf16>
    %cst = arith.constant dense<0.000000e+00> : vector<208x24xf32>
    %7 = tpu.matmul %6, %2, %cst {dimension_numbers = #tpu.dot_dimension_numbers<[1], [0], [0], [1], [0, 0, 1, 1], [], []>} : vector<208x120xbf16>, vector<120x24xbf16>, vector<208x24xf32> -> vector<208x24xf32>
    %c0_4 = arith.constant 0 : index
    %c0_5 = arith.constant 0 : index
    %8 = vector.load %arg5[%c0_4, %c0_5] : memref<1x24xf32, #tpu.memory_space<vmem>>, vector<1x24xf32>
    %9 = vector.broadcast %8 : vector<1x24xf32> to vector<208x24xf32>
    %10 = arith.addf %7, %9 : vector<208x24xf32>
    %c0_6 = arith.constant 0 : index
    %c0_7 = arith.constant 0 : index
    %11 = vector.load %arg3[%c0_6, %c0_7] : memref<208x1xf32, #tpu.memory_space<vmem>>, vector<208x1xf32>
    %12 = vector.broadcast %11 : vector<208x1xf32> to vector<208x24xf32>
    %13 = arith.mulf %10, %12 : vector<208x24xf32>
    %c0_8 = arith.constant 0 : index
    %c0_9 = arith.constant 0 : index
    %14 = vector.load %arg6[%c0_8, %c0_9] : memref<112x208xbf16, #tpu.memory_space<vmem>>, vector<112x208xbf16>
    %c0_10 = arith.constant 0 : index
    %c0_11 = arith.constant 0 : index
    %15 = vector.load %arg7[%c0_10, %c0_11] : memref<72x32xbf16, #tpu.memory_space<vmem>>, vector<72x32xbf16>
    %c0_12 = arith.constant 0 : index
    %c0_13 = arith.constant 0 : index
    %16 = vector.load %arg8[%c0_12, %c0_13] : memref<96x32xbf16, #tpu.memory_space<vmem>>, vector<96x32xbf16>
    %c0_14 = arith.constant 0 : index
    %c0_15 = arith.constant 0 : index
    %17 = vector.load %arg9[%c0_14, %c0_15] : memref<24x32xbf16, #tpu.memory_space<vmem>>, vector<24x32xbf16>
    %c0_16 = arith.constant 0 : index
    %c0_17 = arith.constant 0 : index
    %18 = vector.load %arg10[%c0_16, %c0_17] : memref<112x32xf32, #tpu.memory_space<vmem>>, vector<112x32xf32>
    %c0_18 = arith.constant 0 : index
    %c0_19 = arith.constant 0 : index
    %19 = vector.load %arg11[%c0_18, %c0_19] : memref<32x384xbf16, #tpu.memory_space<vmem>>, vector<32x384xbf16>
    %c0_20 = arith.constant 0 : index
    %c0_21 = arith.constant 0 : index
    %20 = vector.load %arg12[%c0_20, %c0_21] : memref<1x384xf32, #tpu.memory_space<vmem>>, vector<1x384xf32>
    %c0_22 = arith.constant 0 : index
    %c0_23 = arith.constant 0 : index
    %21 = vector.load %arg13[%c0_22, %c0_23] : memref<128x32xbf16, #tpu.memory_space<vmem>>, vector<128x32xbf16>
    %c0_24 = arith.constant 0 : index
    %c0_25 = arith.constant 0 : index
    %22 = vector.load %arg14[%c0_24, %c0_25] : memref<1x32xf32, #tpu.memory_space<vmem>>, vector<1x32xf32>
    %23 = arith.truncf %13 : vector<208x24xf32> to vector<208x24xbf16>
    %cst_26 = arith.constant dense<0.000000e+00> : vector<112x24xf32>
    %24 = tpu.matmul %14, %23, %cst_26 {dimension_numbers = #tpu.dot_dimension_numbers<[1], [0], [0], [1], [0, 0, 1, 1], [], []>} : vector<112x208xbf16>, vector<208x24xbf16>, vector<112x24xf32> -> vector<112x24xf32>
    %25 = arith.truncf %24 : vector<112x24xf32> to vector<112x24xbf16>
    %cst_27 = arith.constant dense<0.000000e+00> : vector<112x32xf32>
    %26 = tpu.matmul %25, %17, %cst_27 {dimension_numbers = #tpu.dot_dimension_numbers<[1], [0], [0], [1], [0, 0, 1, 1], [], []>} : vector<112x24xbf16>, vector<24x32xbf16>, vector<112x32xf32> -> vector<112x32xf32>
    %c1_i32_28 = arith.constant 1 : i32
    %27 = tpu.dynamic_rotate %13 by %c1_i32_28 dim 0 : vector<208x24xf32>, i32 -> vector<208x24xf32>
    %c207_i32_29 = arith.constant 207 : i32
    %28 = tpu.dynamic_rotate %13 by %c207_i32_29 dim 0 : vector<208x24xf32>, i32 -> vector<208x24xf32>
    %29 = tpu.concatenate %27, %13, %28 in 1 : vector<208x24xf32>, vector<208x24xf32>, vector<208x24xf32> -> vector<208x72xf32>
    %30 = arith.truncf %29 : vector<208x72xf32> to vector<208x72xbf16>
    %cst_30 = arith.constant dense<0.000000e+00> : vector<208x32xf32>
    %31 = tpu.matmul %30, %15, %cst_30 {dimension_numbers = #tpu.dot_dimension_numbers<[1], [0], [0], [1], [0, 0, 1, 1], [], []>} : vector<208x72xbf16>, vector<72x32xbf16>, vector<208x32xf32> -> vector<208x32xf32>
    %32 = arith.truncf %31 : vector<208x32xf32> to vector<208x32xbf16>
    %cst_31 = arith.constant dense<0.000000e+00> : vector<112x32xf32>
    %33 = tpu.matmul %14, %32, %cst_31 {dimension_numbers = #tpu.dot_dimension_numbers<[1], [0], [0], [1], [0, 0, 1, 1], [], []>} : vector<112x208xbf16>, vector<208x32xbf16>, vector<112x32xf32> -> vector<112x32xf32>
    %cst_32 = arith.constant 0.000000e+00 : f32
    %34 = vector.broadcast %cst_32 : f32 to vector<112x32xf32>
    %35 = arith.maximumf %33, %34 : vector<112x32xf32>
    %c1_i32_33 = arith.constant 1 : i32
    %36 = tpu.dynamic_rotate %35 by %c1_i32_33 dim 0 : vector<112x32xf32>, i32 -> vector<112x32xf32>
    %c111_i32 = arith.constant 111 : i32
    %37 = tpu.dynamic_rotate %35 by %c111_i32 dim 0 : vector<112x32xf32>, i32 -> vector<112x32xf32>
    %38 = tpu.concatenate %36, %35, %37 in 1 : vector<112x32xf32>, vector<112x32xf32>, vector<112x32xf32> -> vector<112x96xf32>
    %39 = arith.truncf %38 : vector<112x96xf32> to vector<112x96xbf16>
    %cst_34 = arith.constant dense<0.000000e+00> : vector<112x32xf32>
    %40 = tpu.matmul %39, %16, %cst_34 {dimension_numbers = #tpu.dot_dimension_numbers<[1], [0], [0], [1], [0, 0, 1, 1], [], []>} : vector<112x96xbf16>, vector<96x32xbf16>, vector<112x32xf32> -> vector<112x32xf32>
    %41 = arith.addf %40, %26 : vector<112x32xf32>
    %cst_35 = arith.constant 0.000000e+00 : f32
    %42 = vector.broadcast %cst_35 : f32 to vector<112x32xf32>
    %43 = arith.maximumf %41, %42 : vector<112x32xf32>
    %44 = arith.addf %43, %18 : vector<112x32xf32>
    %45 = arith.truncf %44 : vector<112x32xf32> to vector<112x32xbf16>
    %cst_36 = arith.constant dense<0.000000e+00> : vector<112x384xf32>
    %46 = tpu.matmul %45, %19, %cst_36 {dimension_numbers = #tpu.dot_dimension_numbers<[1], [0], [0], [1], [0, 0, 1, 1], [], []>} : vector<112x32xbf16>, vector<32x384xbf16>, vector<112x384xf32> -> vector<112x384xf32>
    %47 = vector.broadcast %20 : vector<1x384xf32> to vector<112x384xf32>
    %48 = arith.addf %46, %47 : vector<112x384xf32>
    %49 = vector.extract_strided_slice %48 {offsets = [0, 0], sizes = [112, 128], strides = [1, 1]} : vector<112x384xf32> to vector<112x128xf32>
    %50 = vector.shape_cast %49 : vector<112x128xf32> to vector<2x56x128xf32>
    %51 = vector.extract_strided_slice %48 {offsets = [0, 128], sizes = [112, 128], strides = [1, 1]} : vector<112x384xf32> to vector<112x128xf32>
    %52 = vector.shape_cast %51 : vector<112x128xf32> to vector<2x56x128xf32>
    %53 = vector.extract_strided_slice %48 {offsets = [0, 256], sizes = [112, 128], strides = [1, 1]} : vector<112x384xf32> to vector<112x128xf32>
    %54 = vector.shape_cast %53 : vector<112x128xf32> to vector<2x56x128xf32>
    %55 = arith.truncf %50 : vector<2x56x128xf32> to vector<2x56x128xbf16>
    %56 = arith.truncf %52 : vector<2x56x128xf32> to vector<2x56x128xbf16>
    "tpu.trace_start"() <{level = 10 : i32, message = "bqd,bkd->bqk"}> : () -> ()
    %cst_37 = arith.constant dense<0.000000e+00> : vector<2x56x56xf32>
    %57 = tpu.matmul %55, %56, %cst_37 {dimension_numbers = #tpu.dot_dimension_numbers<[2], [2], [1], [1], [0, 0, 0, 1, 1, 1], [0], [0]>} : vector<2x56x128xbf16>, vector<2x56x128xbf16>, vector<2x56x56xf32> -> vector<2x56x56xf32>
    "tpu.trace_stop"() : () -> ()
    %cst_38 = arith.constant 0.176776692 : f32
    %58 = vector.broadcast %cst_38 : f32 to vector<2x56x56xf32>
    %59 = arith.mulf %57, %58 : vector<2x56x56xf32>
    %60 = tpu.iota {dimensions = array<i32: 2>} : vector<2x56x56xi32>
    %c51_i32 = arith.constant 51 : i32
    %61 = vector.broadcast %c51_i32 : i32 to vector<2x56x56xi32>
    %62 = arith.cmpi slt, %60, %61 : vector<2x56x56xi32>
    %cst_39 = arith.constant -1.000000e+30 : f32
    %63 = vector.broadcast %cst_39 : f32 to vector<2x56x56xf32>
    %64 = arith.select %62, %59, %63 : vector<2x56x56xi1>, vector<2x56x56xf32>
    %cst_40 = arith.constant dense<0xFF800000> : vector<2x56xf32>
    %65 = vector.multi_reduction <maximumf>, %64, %cst_40 [2] : vector<2x56x56xf32> to vector<2x56xf32>
    %66 = vector.shape_cast %65 : vector<2x56xf32> to vector<2x56x1xf32>
    %67 = vector.broadcast %66 : vector<2x56x1xf32> to vector<2x56x56xf32>
    %68 = arith.subf %64, %67 : vector<2x56x56xf32>
    %69 = math.exp %68 : vector<2x56x56xf32>
    %cst_41 = arith.constant dense<0.000000e+00> : vector<2x56xf32>
    %70 = vector.multi_reduction <add>, %69, %cst_41 [2] : vector<2x56x56xf32> to vector<2x56xf32>
    %71 = vector.shape_cast %70 : vector<2x56xf32> to vector<2x56x1xf32>
    %72 = tpu.reciprocal %71 {approx = true} : vector<2x56x1xf32> -> vector<2x56x1xf32>
    %73 = vector.broadcast %72 : vector<2x56x1xf32> to vector<2x56x56xf32>
    %74 = arith.mulf %69, %73 : vector<2x56x56xf32>
    %75 = arith.truncf %74 : vector<2x56x56xf32> to vector<2x56x56xbf16>
    %76 = arith.truncf %54 : vector<2x56x128xf32> to vector<2x56x128xbf16>
    "tpu.trace_start"() <{level = 10 : i32, message = "bqk,bkd->bqd"}> : () -> ()
    %cst_42 = arith.constant dense<0.000000e+00> : vector<2x56x128xf32>
    %77 = tpu.matmul %75, %76, %cst_42 {dimension_numbers = #tpu.dot_dimension_numbers<[2], [1], [1], [2], [0, 0, 0, 1, 1, 2], [0], [0]>} : vector<2x56x56xbf16>, vector<2x56x128xbf16>, vector<2x56x128xf32> -> vector<2x56x128xf32>
    "tpu.trace_stop"() : () -> ()
    %78 = vector.shape_cast %77 : vector<2x56x128xf32> to vector<112x128xf32>
    %79 = arith.truncf %78 : vector<112x128xf32> to vector<112x128xbf16>
    %cst_43 = arith.constant dense<0.000000e+00> : vector<112x32xf32>
    %80 = tpu.matmul %79, %21, %cst_43 {dimension_numbers = #tpu.dot_dimension_numbers<[1], [0], [0], [1], [0, 0, 1, 1], [], []>} : vector<112x128xbf16>, vector<128x32xbf16>, vector<112x32xf32> -> vector<112x32xf32>
    %81 = vector.broadcast %22 : vector<1x32xf32> to vector<112x32xf32>
    %82 = arith.addf %80, %81 : vector<112x32xf32>
    %c0_44 = arith.constant 0 : index
    %c0_45 = arith.constant 0 : index
    %83 = vector.load %arg15[%c0_44, %c0_45] : memref<112x1xf32, #tpu.memory_space<vmem>>, vector<112x1xf32>
    %84 = vector.broadcast %83 : vector<112x1xf32> to vector<112x32xf32>
    %85 = arith.mulf %82, %84 : vector<112x32xf32>
    %c0_46 = arith.constant 0 : index
    %c0_47 = arith.constant 0 : index
    %86 = vector.load %arg16[%c0_46, %c0_47] : memref<64x112xbf16, #tpu.memory_space<vmem>>, vector<64x112xbf16>
    %c0_48 = arith.constant 0 : index
    %c0_49 = arith.constant 0 : index
    %87 = vector.load %arg17[%c0_48, %c0_49] : memref<96x48xbf16, #tpu.memory_space<vmem>>, vector<96x48xbf16>
    %c0_50 = arith.constant 0 : index
    %c0_51 = arith.constant 0 : index
    %88 = vector.load %arg18[%c0_50, %c0_51] : memref<144x48xbf16, #tpu.memory_space<vmem>>, vector<144x48xbf16>
    %c0_52 = arith.constant 0 : index
    %c0_53 = arith.constant 0 : index
    %89 = vector.load %arg19[%c0_52, %c0_53] : memref<32x48xbf16, #tpu.memory_space<vmem>>, vector<32x48xbf16>
    %c0_54 = arith.constant 0 : index
    %c0_55 = arith.constant 0 : index
    %90 = vector.load %arg20[%c0_54, %c0_55] : memref<64x48xf32, #tpu.memory_space<vmem>>, vector<64x48xf32>
    %c0_56 = arith.constant 0 : index
    %c0_57 = arith.constant 0 : index
    %91 = vector.load %arg21[%c0_56, %c0_57] : memref<48x384xbf16, #tpu.memory_space<vmem>>, vector<48x384xbf16>
    %c0_58 = arith.constant 0 : index
    %c0_59 = arith.constant 0 : index
    %92 = vector.load %arg22[%c0_58, %c0_59] : memref<1x384xf32, #tpu.memory_space<vmem>>, vector<1x384xf32>
    %c0_60 = arith.constant 0 : index
    %c0_61 = arith.constant 0 : index
    %93 = vector.load %arg23[%c0_60, %c0_61] : memref<128x48xbf16, #tpu.memory_space<vmem>>, vector<128x48xbf16>
    %c0_62 = arith.constant 0 : index
    %c0_63 = arith.constant 0 : index
    %94 = vector.load %arg24[%c0_62, %c0_63] : memref<1x48xf32, #tpu.memory_space<vmem>>, vector<1x48xf32>
    %95 = arith.truncf %85 : vector<112x32xf32> to vector<112x32xbf16>
    %cst_64 = arith.constant dense<0.000000e+00> : vector<64x32xf32>
    %96 = tpu.matmul %86, %95, %cst_64 {dimension_numbers = #tpu.dot_dimension_numbers<[1], [0], [0], [1], [0, 0, 1, 1], [], []>} : vector<64x112xbf16>, vector<112x32xbf16>, vector<64x32xf32> -> vector<64x32xf32>
    %97 = arith.truncf %96 : vector<64x32xf32> to vector<64x32xbf16>
    %cst_65 = arith.constant dense<0.000000e+00> : vector<64x48xf32>
    %98 = tpu.matmul %97, %89, %cst_65 {dimension_numbers = #tpu.dot_dimension_numbers<[1], [0], [0], [1], [0, 0, 1, 1], [], []>} : vector<64x32xbf16>, vector<32x48xbf16>, vector<64x48xf32> -> vector<64x48xf32>
    %c1_i32_66 = arith.constant 1 : i32
    %99 = tpu.dynamic_rotate %85 by %c1_i32_66 dim 0 : vector<112x32xf32>, i32 -> vector<112x32xf32>
    %c111_i32_67 = arith.constant 111 : i32
    %100 = tpu.dynamic_rotate %85 by %c111_i32_67 dim 0 : vector<112x32xf32>, i32 -> vector<112x32xf32>
    %101 = tpu.concatenate %99, %85, %100 in 1 : vector<112x32xf32>, vector<112x32xf32>, vector<112x32xf32> -> vector<112x96xf32>
    %102 = arith.truncf %101 : vector<112x96xf32> to vector<112x96xbf16>
    %cst_68 = arith.constant dense<0.000000e+00> : vector<112x48xf32>
    %103 = tpu.matmul %102, %87, %cst_68 {dimension_numbers = #tpu.dot_dimension_numbers<[1], [0], [0], [1], [0, 0, 1, 1], [], []>} : vector<112x96xbf16>, vector<96x48xbf16>, vector<112x48xf32> -> vector<112x48xf32>
    %104 = arith.truncf %103 : vector<112x48xf32> to vector<112x48xbf16>
    %cst_69 = arith.constant dense<0.000000e+00> : vector<64x48xf32>
    %105 = tpu.matmul %86, %104, %cst_69 {dimension_numbers = #tpu.dot_dimension_numbers<[1], [0], [0], [1], [0, 0, 1, 1], [], []>} : vector<64x112xbf16>, vector<112x48xbf16>, vector<64x48xf32> -> vector<64x48xf32>
    %cst_70 = arith.constant 0.000000e+00 : f32
    %106 = vector.broadcast %cst_70 : f32 to vector<64x48xf32>
    %107 = arith.maximumf %105, %106 : vector<64x48xf32>
    %c1_i32_71 = arith.constant 1 : i32
    %108 = tpu.dynamic_rotate %107 by %c1_i32_71 dim 0 : vector<64x48xf32>, i32 -> vector<64x48xf32>
    %c63_i32 = arith.constant 63 : i32
    %109 = tpu.dynamic_rotate %107 by %c63_i32 dim 0 : vector<64x48xf32>, i32 -> vector<64x48xf32>
    %110 = tpu.concatenate %108, %107, %109 in 1 : vector<64x48xf32>, vector<64x48xf32>, vector<64x48xf32> -> vector<64x144xf32>
    %111 = arith.truncf %110 : vector<64x144xf32> to vector<64x144xbf16>
    %cst_72 = arith.constant dense<0.000000e+00> : vector<64x48xf32>
    %112 = tpu.matmul %111, %88, %cst_72 {dimension_numbers = #tpu.dot_dimension_numbers<[1], [0], [0], [1], [0, 0, 1, 1], [], []>} : vector<64x144xbf16>, vector<144x48xbf16>, vector<64x48xf32> -> vector<64x48xf32>
    %113 = arith.addf %112, %98 : vector<64x48xf32>
    %cst_73 = arith.constant 0.000000e+00 : f32
    %114 = vector.broadcast %cst_73 : f32 to vector<64x48xf32>
    %115 = arith.maximumf %113, %114 : vector<64x48xf32>
    %116 = arith.addf %115, %90 : vector<64x48xf32>
    %117 = arith.truncf %116 : vector<64x48xf32> to vector<64x48xbf16>
    %cst_74 = arith.constant dense<0.000000e+00> : vector<64x384xf32>
    %118 = tpu.matmul %117, %91, %cst_74 {dimension_numbers = #tpu.dot_dimension_numbers<[1], [0], [0], [1], [0, 0, 1, 1], [], []>} : vector<64x48xbf16>, vector<48x384xbf16>, vector<64x384xf32> -> vector<64x384xf32>
    %119 = vector.broadcast %92 : vector<1x384xf32> to vector<64x384xf32>
    %120 = arith.addf %118, %119 : vector<64x384xf32>
    %121 = vector.extract_strided_slice %120 {offsets = [0, 0], sizes = [64, 128], strides = [1, 1]} : vector<64x384xf32> to vector<64x128xf32>
    %122 = vector.shape_cast %121 : vector<64x128xf32> to vector<2x32x128xf32>
    %123 = vector.extract_strided_slice %120 {offsets = [0, 128], sizes = [64, 128], strides = [1, 1]} : vector<64x384xf32> to vector<64x128xf32>
    %124 = vector.shape_cast %123 : vector<64x128xf32> to vector<2x32x128xf32>
    %125 = vector.extract_strided_slice %120 {offsets = [0, 256], sizes = [64, 128], strides = [1, 1]} : vector<64x384xf32> to vector<64x128xf32>
    %126 = vector.shape_cast %125 : vector<64x128xf32> to vector<2x32x128xf32>
    %127 = arith.truncf %122 : vector<2x32x128xf32> to vector<2x32x128xbf16>
    %128 = arith.truncf %124 : vector<2x32x128xf32> to vector<2x32x128xbf16>
    "tpu.trace_start"() <{level = 10 : i32, message = "bqd,bkd->bqk"}> : () -> ()
    %cst_75 = arith.constant dense<0.000000e+00> : vector<2x32x32xf32>
    %129 = tpu.matmul %127, %128, %cst_75 {dimension_numbers = #tpu.dot_dimension_numbers<[2], [2], [1], [1], [0, 0, 0, 1, 1, 1], [0], [0]>} : vector<2x32x128xbf16>, vector<2x32x128xbf16>, vector<2x32x32xf32> -> vector<2x32x32xf32>
    "tpu.trace_stop"() : () -> ()
    %cst_76 = arith.constant 0.144337565 : f32
    %130 = vector.broadcast %cst_76 : f32 to vector<2x32x32xf32>
    %131 = arith.mulf %129, %130 : vector<2x32x32xf32>
    %132 = tpu.iota {dimensions = array<i32: 2>} : vector<2x32x32xi32>
    %c26_i32 = arith.constant 26 : i32
    %133 = vector.broadcast %c26_i32 : i32 to vector<2x32x32xi32>
    %134 = arith.cmpi slt, %132, %133 : vector<2x32x32xi32>
    %cst_77 = arith.constant -1.000000e+30 : f32
    %135 = vector.broadcast %cst_77 : f32 to vector<2x32x32xf32>
    %136 = arith.select %134, %131, %135 : vector<2x32x32xi1>, vector<2x32x32xf32>
    %cst_78 = arith.constant dense<0xFF800000> : vector<2x32xf32>
    %137 = vector.multi_reduction <maximumf>, %136, %cst_78 [2] : vector<2x32x32xf32> to vector<2x32xf32>
    %138 = vector.shape_cast %137 : vector<2x32xf32> to vector<2x32x1xf32>
    %139 = vector.broadcast %138 : vector<2x32x1xf32> to vector<2x32x32xf32>
    %140 = arith.subf %136, %139 : vector<2x32x32xf32>
    %141 = math.exp %140 : vector<2x32x32xf32>
    %cst_79 = arith.constant dense<0.000000e+00> : vector<2x32xf32>
    %142 = vector.multi_reduction <add>, %141, %cst_79 [2] : vector<2x32x32xf32> to vector<2x32xf32>
    %143 = vector.shape_cast %142 : vector<2x32xf32> to vector<2x32x1xf32>
    %144 = tpu.reciprocal %143 {approx = true} : vector<2x32x1xf32> -> vector<2x32x1xf32>
    %145 = vector.broadcast %144 : vector<2x32x1xf32> to vector<2x32x32xf32>
    %146 = arith.mulf %141, %145 : vector<2x32x32xf32>
    %147 = arith.truncf %146 : vector<2x32x32xf32> to vector<2x32x32xbf16>
    %148 = arith.truncf %126 : vector<2x32x128xf32> to vector<2x32x128xbf16>
    "tpu.trace_start"() <{level = 10 : i32, message = "bqk,bkd->bqd"}> : () -> ()
    %cst_80 = arith.constant dense<0.000000e+00> : vector<2x32x128xf32>
    %149 = tpu.matmul %147, %148, %cst_80 {dimension_numbers = #tpu.dot_dimension_numbers<[2], [1], [1], [2], [0, 0, 0, 1, 1, 2], [0], [0]>} : vector<2x32x32xbf16>, vector<2x32x128xbf16>, vector<2x32x128xf32> -> vector<2x32x128xf32>
    "tpu.trace_stop"() : () -> ()
    %150 = vector.shape_cast %149 : vector<2x32x128xf32> to vector<64x128xf32>
    %151 = arith.truncf %150 : vector<64x128xf32> to vector<64x128xbf16>
    %cst_81 = arith.constant dense<0.000000e+00> : vector<64x48xf32>
    %152 = tpu.matmul %151, %93, %cst_81 {dimension_numbers = #tpu.dot_dimension_numbers<[1], [0], [0], [1], [0, 0, 1, 1], [], []>} : vector<64x128xbf16>, vector<128x48xbf16>, vector<64x48xf32> -> vector<64x48xf32>
    %153 = vector.broadcast %94 : vector<1x48xf32> to vector<64x48xf32>
    %154 = arith.addf %152, %153 : vector<64x48xf32>
    %c0_82 = arith.constant 0 : index
    %c0_83 = arith.constant 0 : index
    %155 = vector.load %arg25[%c0_82, %c0_83] : memref<64x1xf32, #tpu.memory_space<vmem>>, vector<64x1xf32>
    %156 = vector.broadcast %155 : vector<64x1xf32> to vector<64x48xf32>
    %157 = arith.mulf %154, %156 : vector<64x48xf32>
    %c0_84 = arith.constant 0 : index
    %c0_85 = arith.constant 0 : index
    %158 = vector.load %arg26[%c0_84, %c0_85] : memref<32x64xbf16, #tpu.memory_space<vmem>>, vector<32x64xbf16>
    %c0_86 = arith.constant 0 : index
    %c0_87 = arith.constant 0 : index
    %159 = vector.load %arg27[%c0_86, %c0_87] : memref<144x52xbf16, #tpu.memory_space<vmem>>, vector<144x52xbf16>
    %c0_88 = arith.constant 0 : index
    %c0_89 = arith.constant 0 : index
    %160 = vector.load %arg28[%c0_88, %c0_89] : memref<156x52xbf16, #tpu.memory_space<vmem>>, vector<156x52xbf16>
    %c0_90 = arith.constant 0 : index
    %c0_91 = arith.constant 0 : index
    %161 = vector.load %arg29[%c0_90, %c0_91] : memref<48x52xbf16, #tpu.memory_space<vmem>>, vector<48x52xbf16>
    %c0_92 = arith.constant 0 : index
    %c0_93 = arith.constant 0 : index
    %162 = vector.load %arg30[%c0_92, %c0_93] : memref<32x52xf32, #tpu.memory_space<vmem>>, vector<32x52xf32>
    %c0_94 = arith.constant 0 : index
    %c0_95 = arith.constant 0 : index
    %163 = vector.load %arg31[%c0_94, %c0_95] : memref<52x384xbf16, #tpu.memory_space<vmem>>, vector<52x384xbf16>
    %c0_96 = arith.constant 0 : index
    %c0_97 = arith.constant 0 : index
    %164 = vector.load %arg32[%c0_96, %c0_97] : memref<1x384xf32, #tpu.memory_space<vmem>>, vector<1x384xf32>
    %c0_98 = arith.constant 0 : index
    %c0_99 = arith.constant 0 : index
    %165 = vector.load %arg33[%c0_98, %c0_99] : memref<128x52xbf16, #tpu.memory_space<vmem>>, vector<128x52xbf16>
    %c0_100 = arith.constant 0 : index
    %c0_101 = arith.constant 0 : index
    %166 = vector.load %arg34[%c0_100, %c0_101] : memref<1x52xf32, #tpu.memory_space<vmem>>, vector<1x52xf32>
    %167 = arith.truncf %157 : vector<64x48xf32> to vector<64x48xbf16>
    %cst_102 = arith.constant dense<0.000000e+00> : vector<32x48xf32>
    %168 = tpu.matmul %158, %167, %cst_102 {dimension_numbers = #tpu.dot_dimension_numbers<[1], [0], [0], [1], [0, 0, 1, 1], [], []>} : vector<32x64xbf16>, vector<64x48xbf16>, vector<32x48xf32> -> vector<32x48xf32>
    %169 = arith.truncf %168 : vector<32x48xf32> to vector<32x48xbf16>
    %cst_103 = arith.constant dense<0.000000e+00> : vector<32x52xf32>
    %170 = tpu.matmul %169, %161, %cst_103 {dimension_numbers = #tpu.dot_dimension_numbers<[1], [0], [0], [1], [0, 0, 1, 1], [], []>} : vector<32x48xbf16>, vector<48x52xbf16>, vector<32x52xf32> -> vector<32x52xf32>
    %c1_i32_104 = arith.constant 1 : i32
    %171 = tpu.dynamic_rotate %157 by %c1_i32_104 dim 0 : vector<64x48xf32>, i32 -> vector<64x48xf32>
    %c63_i32_105 = arith.constant 63 : i32
    %172 = tpu.dynamic_rotate %157 by %c63_i32_105 dim 0 : vector<64x48xf32>, i32 -> vector<64x48xf32>
    %173 = tpu.concatenate %171, %157, %172 in 1 : vector<64x48xf32>, vector<64x48xf32>, vector<64x48xf32> -> vector<64x144xf32>
    %174 = arith.truncf %173 : vector<64x144xf32> to vector<64x144xbf16>
    %cst_106 = arith.constant dense<0.000000e+00> : vector<64x52xf32>
    %175 = tpu.matmul %174, %159, %cst_106 {dimension_numbers = #tpu.dot_dimension_numbers<[1], [0], [0], [1], [0, 0, 1, 1], [], []>} : vector<64x144xbf16>, vector<144x52xbf16>, vector<64x52xf32> -> vector<64x52xf32>
    %176 = arith.truncf %175 : vector<64x52xf32> to vector<64x52xbf16>
    %cst_107 = arith.constant dense<0.000000e+00> : vector<32x52xf32>
    %177 = tpu.matmul %158, %176, %cst_107 {dimension_numbers = #tpu.dot_dimension_numbers<[1], [0], [0], [1], [0, 0, 1, 1], [], []>} : vector<32x64xbf16>, vector<64x52xbf16>, vector<32x52xf32> -> vector<32x52xf32>
    %cst_108 = arith.constant 0.000000e+00 : f32
    %178 = vector.broadcast %cst_108 : f32 to vector<32x52xf32>
    %179 = arith.maximumf %177, %178 : vector<32x52xf32>
    %c1_i32_109 = arith.constant 1 : i32
    %180 = tpu.dynamic_rotate %179 by %c1_i32_109 dim 0 : vector<32x52xf32>, i32 -> vector<32x52xf32>
    %c31_i32 = arith.constant 31 : i32
    %181 = tpu.dynamic_rotate %179 by %c31_i32 dim 0 : vector<32x52xf32>, i32 -> vector<32x52xf32>
    %182 = tpu.concatenate %180, %179, %181 in 1 : vector<32x52xf32>, vector<32x52xf32>, vector<32x52xf32> -> vector<32x156xf32>
    %183 = arith.truncf %182 : vector<32x156xf32> to vector<32x156xbf16>
    %cst_110 = arith.constant dense<0.000000e+00> : vector<32x52xf32>
    %184 = tpu.matmul %183, %160, %cst_110 {dimension_numbers = #tpu.dot_dimension_numbers<[1], [0], [0], [1], [0, 0, 1, 1], [], []>} : vector<32x156xbf16>, vector<156x52xbf16>, vector<32x52xf32> -> vector<32x52xf32>
    %185 = arith.addf %184, %170 : vector<32x52xf32>
    %cst_111 = arith.constant 0.000000e+00 : f32
    %186 = vector.broadcast %cst_111 : f32 to vector<32x52xf32>
    %187 = arith.maximumf %185, %186 : vector<32x52xf32>
    %188 = arith.addf %187, %162 : vector<32x52xf32>
    %189 = arith.truncf %188 : vector<32x52xf32> to vector<32x52xbf16>
    %cst_112 = arith.constant dense<0.000000e+00> : vector<32x384xf32>
    %190 = tpu.matmul %189, %163, %cst_112 {dimension_numbers = #tpu.dot_dimension_numbers<[1], [0], [0], [1], [0, 0, 1, 1], [], []>} : vector<32x52xbf16>, vector<52x384xbf16>, vector<32x384xf32> -> vector<32x384xf32>
    %191 = vector.broadcast %164 : vector<1x384xf32> to vector<32x384xf32>
    %192 = arith.addf %190, %191 : vector<32x384xf32>
    %193 = vector.extract_strided_slice %192 {offsets = [0, 0], sizes = [32, 128], strides = [1, 1]} : vector<32x384xf32> to vector<32x128xf32>
    %194 = vector.shape_cast %193 : vector<32x128xf32> to vector<2x16x128xf32>
    %195 = vector.extract_strided_slice %192 {offsets = [0, 128], sizes = [32, 128], strides = [1, 1]} : vector<32x384xf32> to vector<32x128xf32>
    %196 = vector.shape_cast %195 : vector<32x128xf32> to vector<2x16x128xf32>
    %197 = vector.extract_strided_slice %192 {offsets = [0, 256], sizes = [32, 128], strides = [1, 1]} : vector<32x384xf32> to vector<32x128xf32>
    %198 = vector.shape_cast %197 : vector<32x128xf32> to vector<2x16x128xf32>
    %199 = arith.truncf %194 : vector<2x16x128xf32> to vector<2x16x128xbf16>
    %200 = arith.truncf %196 : vector<2x16x128xf32> to vector<2x16x128xbf16>
    "tpu.trace_start"() <{level = 10 : i32, message = "bqd,bkd->bqk"}> : () -> ()
    %cst_113 = arith.constant dense<0.000000e+00> : vector<2x16x16xf32>
    %201 = tpu.matmul %199, %200, %cst_113 {dimension_numbers = #tpu.dot_dimension_numbers<[2], [2], [1], [1], [0, 0, 0, 1, 1, 1], [0], [0]>} : vector<2x16x128xbf16>, vector<2x16x128xbf16>, vector<2x16x16xf32> -> vector<2x16x16xf32>
    "tpu.trace_stop"() : () -> ()
    %cst_114 = arith.constant 0.138675049 : f32
    %202 = vector.broadcast %cst_114 : f32 to vector<2x16x16xf32>
    %203 = arith.mulf %201, %202 : vector<2x16x16xf32>
    %204 = tpu.iota {dimensions = array<i32: 2>} : vector<2x16x16xi32>
    %c13_i32 = arith.constant 13 : i32
    %205 = vector.broadcast %c13_i32 : i32 to vector<2x16x16xi32>
    %206 = arith.cmpi slt, %204, %205 : vector<2x16x16xi32>
    %cst_115 = arith.constant -1.000000e+30 : f32
    %207 = vector.broadcast %cst_115 : f32 to vector<2x16x16xf32>
    %208 = arith.select %206, %203, %207 : vector<2x16x16xi1>, vector<2x16x16xf32>
    %cst_116 = arith.constant dense<0xFF800000> : vector<2x16xf32>
    %209 = vector.multi_reduction <maximumf>, %208, %cst_116 [2] : vector<2x16x16xf32> to vector<2x16xf32>
    %210 = vector.shape_cast %209 : vector<2x16xf32> to vector<2x16x1xf32>
    %211 = vector.broadcast %210 : vector<2x16x1xf32> to vector<2x16x16xf32>
    %212 = arith.subf %208, %211 : vector<2x16x16xf32>
    %213 = math.exp %212 : vector<2x16x16xf32>
    %cst_117 = arith.constant dense<0.000000e+00> : vector<2x16xf32>
    %214 = vector.multi_reduction <add>, %213, %cst_117 [2] : vector<2x16x16xf32> to vector<2x16xf32>
    %215 = vector.shape_cast %214 : vector<2x16xf32> to vector<2x16x1xf32>
    %216 = tpu.reciprocal %215 {approx = true} : vector<2x16x1xf32> -> vector<2x16x1xf32>
    %217 = vector.broadcast %216 : vector<2x16x1xf32> to vector<2x16x16xf32>
    %218 = arith.mulf %213, %217 : vector<2x16x16xf32>
    %219 = arith.truncf %218 : vector<2x16x16xf32> to vector<2x16x16xbf16>
    %220 = arith.truncf %198 : vector<2x16x128xf32> to vector<2x16x128xbf16>
    "tpu.trace_start"() <{level = 10 : i32, message = "bqk,bkd->bqd"}> : () -> ()
    %cst_118 = arith.constant dense<0.000000e+00> : vector<2x16x128xf32>
    %221 = tpu.matmul %219, %220, %cst_118 {dimension_numbers = #tpu.dot_dimension_numbers<[2], [1], [1], [2], [0, 0, 0, 1, 1, 2], [0], [0]>} : vector<2x16x16xbf16>, vector<2x16x128xbf16>, vector<2x16x128xf32> -> vector<2x16x128xf32>
    "tpu.trace_stop"() : () -> ()
    %222 = vector.shape_cast %221 : vector<2x16x128xf32> to vector<32x128xf32>
    %223 = arith.truncf %222 : vector<32x128xf32> to vector<32x128xbf16>
    %cst_119 = arith.constant dense<0.000000e+00> : vector<32x52xf32>
    %224 = tpu.matmul %223, %165, %cst_119 {dimension_numbers = #tpu.dot_dimension_numbers<[1], [0], [0], [1], [0, 0, 1, 1], [], []>} : vector<32x128xbf16>, vector<128x52xbf16>, vector<32x52xf32> -> vector<32x52xf32>
    %225 = vector.broadcast %166 : vector<1x52xf32> to vector<32x52xf32>
    %226 = arith.addf %224, %225 : vector<32x52xf32>
    %c0_120 = arith.constant 0 : index
    %c0_121 = arith.constant 0 : index
    %227 = vector.load %arg35[%c0_120, %c0_121] : memref<2x32xbf16, #tpu.memory_space<vmem>>, vector<2x32xbf16>
    %228 = arith.truncf %226 : vector<32x52xf32> to vector<32x52xbf16>
    %cst_122 = arith.constant dense<0.000000e+00> : vector<2x52xf32>
    %229 = tpu.matmul %227, %228, %cst_122 {dimension_numbers = #tpu.dot_dimension_numbers<[1], [0], [0], [1], [0, 0, 1, 1], [], []>} : vector<2x32xbf16>, vector<32x52xbf16>, vector<2x52xf32> -> vector<2x52xf32>
    %cst_123 = arith.constant 0.0769230798 : f32
    %230 = vector.broadcast %cst_123 : f32 to vector<2x52xf32>
    %231 = arith.mulf %229, %230 : vector<2x52xf32>
    %c0_124 = arith.constant 0 : index
    %c0_125 = arith.constant 0 : index
    %232 = vector.load %arg36[%c0_124, %c0_125] : memref<52x64xbf16, #tpu.memory_space<vmem>>, vector<52x64xbf16>
    %233 = arith.truncf %231 : vector<2x52xf32> to vector<2x52xbf16>
    %cst_126 = arith.constant dense<0.000000e+00> : vector<2x64xf32>
    %234 = tpu.matmul %233, %232, %cst_126 {dimension_numbers = #tpu.dot_dimension_numbers<[1], [0], [0], [1], [0, 0, 1, 1], [], []>} : vector<2x52xbf16>, vector<52x64xbf16>, vector<2x64xf32> -> vector<2x64xf32>
    %c0_127 = arith.constant 0 : index
    %c0_128 = arith.constant 0 : index
    %235 = vector.load %arg37[%c0_127, %c0_128] : memref<1x64xf32, #tpu.memory_space<vmem>>, vector<1x64xf32>
    %236 = vector.broadcast %235 : vector<1x64xf32> to vector<2x64xf32>
    %237 = arith.addf %234, %236 : vector<2x64xf32>
    %c0_129 = arith.constant 0 : index
    %c0_130 = arith.constant 0 : index
    %238 = vector.load %arg38[%c0_129, %c0_130] : memref<64x12xbf16, #tpu.memory_space<vmem>>, vector<64x12xbf16>
    %239 = arith.truncf %237 : vector<2x64xf32> to vector<2x64xbf16>
    %cst_131 = arith.constant dense<0.000000e+00> : vector<2x12xf32>
    %240 = tpu.matmul %239, %238, %cst_131 {dimension_numbers = #tpu.dot_dimension_numbers<[1], [0], [0], [1], [0, 0, 1, 1], [], []>} : vector<2x64xbf16>, vector<64x12xbf16>, vector<2x12xf32> -> vector<2x12xf32>
    %c0_132 = arith.constant 0 : index
    %c0_133 = arith.constant 0 : index
    %241 = vector.load %arg39[%c0_132, %c0_133] : memref<1x12xf32, #tpu.memory_space<vmem>>, vector<1x12xf32>
    %242 = vector.broadcast %241 : vector<1x12xf32> to vector<2x12xf32>
    %243 = arith.addf %240, %242 : vector<2x12xf32>
    %c0_134 = arith.constant 0 : index
    %c0_135 = arith.constant 0 : index
    %244 = vector.load %arg2[%c0_134, %c0_135] : memref<2x96xf32, #tpu.memory_space<vmem>>, vector<2x96xf32>
    %c0_136 = arith.constant 0 : index
    %c0_137 = arith.constant 0 : index
    %245 = vector.load %arg40[%c0_136, %c0_137] : memref<96x64xbf16, #tpu.memory_space<vmem>>, vector<96x64xbf16>
    %246 = arith.truncf %244 : vector<2x96xf32> to vector<2x96xbf16>
    %cst_138 = arith.constant dense<0.000000e+00> : vector<2x64xf32>
    %247 = tpu.matmul %246, %245, %cst_138 {dimension_numbers = #tpu.dot_dimension_numbers<[1], [0], [0], [1], [0, 0, 1, 1], [], []>} : vector<2x96xbf16>, vector<96x64xbf16>, vector<2x64xf32> -> vector<2x64xf32>
    %c0_139 = arith.constant 0 : index
    %c0_140 = arith.constant 0 : index
    %248 = vector.load %arg41[%c0_139, %c0_140] : memref<1x64xf32, #tpu.memory_space<vmem>>, vector<1x64xf32>
    %249 = vector.broadcast %248 : vector<1x64xf32> to vector<2x64xf32>
    %250 = arith.addf %247, %249 : vector<2x64xf32>
    %cst_141 = arith.constant 0.000000e+00 : f32
    %251 = vector.broadcast %cst_141 : f32 to vector<2x52xf32>
    %252 = tpu.concatenate %243, %251 in 1 : vector<2x12xf32>, vector<2x52xf32> -> vector<2x64xf32>
    %c0_i32 = arith.constant 0 : i32
    %253 = arith.cmpi eq, %arg0, %c0_i32 : i32
    %254 = arith.extui %253 : i1 to i32
    %255 = arith.sitofp %254 : i32 to f32
    %256 = vector.broadcast %255 : f32 to vector<2x64xf32>
    %257 = arith.mulf %256, %252 : vector<2x64xf32>
    %cst_142 = arith.constant 1.000000e+00 : f32
    %258 = arith.subf %cst_142, %255 : f32
    %259 = vector.broadcast %258 : f32 to vector<2x64xf32>
    %260 = arith.mulf %259, %250 : vector<2x64xf32>
    %261 = arith.addf %257, %260 : vector<2x64xf32>
    %262 = tpu.concatenate %237, %261 in 1 : vector<2x64xf32>, vector<2x64xf32> -> vector<2x128xf32>
    %c0_143 = arith.constant 0 : index
    %c0_144 = arith.constant 0 : index
    %c0_145 = arith.constant 0 : index
    %263 = vector.load %arg42[%c0_143, %c0_144, %c0_145] : memref<1x2x128xf32, #tpu.memory_space<vmem>>, vector<1x2x128xf32>
    %264 = vector.shape_cast %263 : vector<1x2x128xf32> to vector<2x128xf32>
    %265 = vector.shape_cast %262 : vector<2x128xf32> to vector<1x2x128xf32>
    tpu.vector_store %arg42[%c0_143, %c0_144, %c0_145], %265 {strides = array<i32>} : memref<1x2x128xf32, #tpu.memory_space<vmem>>, vector<1x2x128xf32>,
    return
  }
  func.func @transform_0(%arg0: i32) -> (i32, i32, i32) {
    %c0_i32 = arith.constant 0 : i32
    %c0_i32_0 = arith.constant 0 : i32
    %c0_i32_1 = arith.constant 0 : i32
    return %arg0, %c0_i32, %c0_i32_0 : i32, i32, i32
  }
  func.func @transform_1(%arg0: i32) -> (i32, i32) {
    %c0_i32 = arith.constant 0 : i32
    %c0_i32_0 = arith.constant 0 : i32
    %c0_i32_1 = arith.constant 0 : i32
    return %c0_i32, %c0_i32_0 : i32, i32
  }
  func.func @transform_2(%arg0: i32) -> (i32, i32) {
    %c0_i32 = arith.constant 0 : i32
    %c0_i32_0 = arith.constant 0 : i32
    %c0_i32_1 = arith.constant 0 : i32
    return %c0_i32, %c0_i32_0 : i32, i32
  }
  func.func @transform_3(%arg0: i32) -> (i32, i32) {
    %c0_i32 = arith.constant 0 : i32
    %c0_i32_0 = arith.constant 0 : i32
    %c0_i32_1 = arith.constant 0 : i32
    return %c0_i32, %c0_i32_0 : i32, i32
  }
  func.func @transform_4(%arg0: i32) -> (i32, i32) {
    %c0_i32 = arith.constant 0 : i32
    %c0_i32_0 = arith.constant 0 : i32
    %c0_i32_1 = arith.constant 0 : i32
    return %c0_i32, %c0_i32_0 : i32, i32
  }
  func.func @transform_5(%arg0: i32) -> (i32, i32) {
    %c0_i32 = arith.constant 0 : i32
    %c0_i32_0 = arith.constant 0 : i32
    %c0_i32_1 = arith.constant 0 : i32
    return %c0_i32, %c0_i32_0 : i32, i32
  }
  func.func @transform_6(%arg0: i32) -> (i32, i32) {
    %c0_i32 = arith.constant 0 : i32
    %c0_i32_0 = arith.constant 0 : i32
    %c0_i32_1 = arith.constant 0 : i32
    return %c0_i32, %c0_i32_0 : i32, i32
  }
  func.func @transform_7(%arg0: i32) -> (i32, i32) {
    %c0_i32 = arith.constant 0 : i32
    %c0_i32_0 = arith.constant 0 : i32
    %c0_i32_1 = arith.constant 0 : i32
    return %c0_i32, %c0_i32_0 : i32, i32
  }
  func.func @transform_8(%arg0: i32) -> (i32, i32) {
    %c0_i32 = arith.constant 0 : i32
    %c0_i32_0 = arith.constant 0 : i32
    %c0_i32_1 = arith.constant 0 : i32
    return %c0_i32, %c0_i32_0 : i32, i32
  }
  func.func @transform_9(%arg0: i32) -> (i32, i32) {
    %c0_i32 = arith.constant 0 : i32
    %c0_i32_0 = arith.constant 0 : i32
    %c0_i32_1 = arith.constant 0 : i32
    return %c0_i32, %c0_i32_0 : i32, i32
  }
  func.func @transform_10(%arg0: i32) -> (i32, i32) {
    %c0_i32 = arith.constant 0 : i32
    %c0_i32_0 = arith.constant 0 : i32
    %c0_i32_1 = arith.constant 0 : i32
    return %c0_i32, %c0_i32_0 : i32, i32
  }
  func.func @transform_11(%arg0: i32) -> (i32, i32) {
    %c0_i32 = arith.constant 0 : i32
    %c0_i32_0 = arith.constant 0 : i32
    %c0_i32_1 = arith.constant 0 : i32
    return %c0_i32, %c0_i32_0 : i32, i32
  }
  func.func @transform_12(%arg0: i32) -> (i32, i32) {
    %c0_i32 = arith.constant 0 : i32
    %c0_i32_0 = arith.constant 0 : i32
    %c0_i32_1 = arith.constant 0 : i32
    return %c0_i32, %c0_i32_0 : i32, i32
  }
  func.func @transform_13(%arg0: i32) -> (i32, i32) {
    %c0_i32 = arith.constant 0 : i32
    %c0_i32_0 = arith.constant 0 : i32
    %c0_i32_1 = arith.constant 0 : i32
    return %c0_i32, %c0_i32_0 : i32, i32
  }
  func.func @transform_14(%arg0: i32) -> (i32, i32) {
    %c0_i32 = arith.constant 0 : i32
    %c0_i32_0 = arith.constant 0 : i32
    %c0_i32_1 = arith.constant 0 : i32
    return %c0_i32, %c0_i32_0 : i32, i32
  }
  func.func @transform_15(%arg0: i32) -> (i32, i32) {
    %c0_i32 = arith.constant 0 : i32
    %c0_i32_0 = arith.constant 0 : i32
    %c0_i32_1 = arith.constant 0 : i32
    return %c0_i32, %c0_i32_0 : i32, i32
  }
  func.func @transform_16(%arg0: i32) -> (i32, i32) {
    %c0_i32 = arith.constant 0 : i32
    %c0_i32_0 = arith.constant 0 : i32
    %c0_i32_1 = arith.constant 0 : i32
    return %c0_i32, %c0_i32_0 : i32, i32
  }
  func.func @transform_17(%arg0: i32) -> (i32, i32) {
    %c0_i32 = arith.constant 0 : i32
    %c0_i32_0 = arith.constant 0 : i32
    %c0_i32_1 = arith.constant 0 : i32
    return %c0_i32, %c0_i32_0 : i32, i32
  }
  func.func @transform_18(%arg0: i32) -> (i32, i32) {
    %c0_i32 = arith.constant 0 : i32
    %c0_i32_0 = arith.constant 0 : i32
    %c0_i32_1 = arith.constant 0 : i32
    return %c0_i32, %c0_i32_0 : i32, i32
  }
  func.func @transform_19(%arg0: i32) -> (i32, i32) {
    %c0_i32 = arith.constant 0 : i32
    %c0_i32_0 = arith.constant 0 : i32
    %c0_i32_1 = arith.constant 0 : i32
    return %c0_i32, %c0_i32_0 : i32, i32
  }
  func.func @transform_20(%arg0: i32) -> (i32, i32) {
    %c0_i32 = arith.constant 0 : i32
    %c0_i32_0 = arith.constant 0 : i32
    %c0_i32_1 = arith.constant 0 : i32
    return %c0_i32, %c0_i32_0 : i32, i32
  }
  func.func @transform_21(%arg0: i32) -> (i32, i32) {
    %c0_i32 = arith.constant 0 : i32
    %c0_i32_0 = arith.constant 0 : i32
    %c0_i32_1 = arith.constant 0 : i32
    return %c0_i32, %c0_i32_0 : i32, i32
  }
  func.func @transform_22(%arg0: i32) -> (i32, i32) {
    %c0_i32 = arith.constant 0 : i32
    %c0_i32_0 = arith.constant 0 : i32
    %c0_i32_1 = arith.constant 0 : i32
    return %c0_i32, %c0_i32_0 : i32, i32
  }
  func.func @transform_23(%arg0: i32) -> (i32, i32) {
    %c0_i32 = arith.constant 0 : i32
    %c0_i32_0 = arith.constant 0 : i32
    %c0_i32_1 = arith.constant 0 : i32
    return %c0_i32, %c0_i32_0 : i32, i32
  }
  func.func @transform_24(%arg0: i32) -> (i32, i32) {
    %c0_i32 = arith.constant 0 : i32
    %c0_i32_0 = arith.constant 0 : i32
    %c0_i32_1 = arith.constant 0 : i32
    return %c0_i32, %c0_i32_0 : i32, i32
  }
  func.func @transform_25(%arg0: i32) -> (i32, i32) {
    %c0_i32 = arith.constant 0 : i32
    %c0_i32_0 = arith.constant 0 : i32
    %c0_i32_1 = arith.constant 0 : i32
    return %c0_i32, %c0_i32_0 : i32, i32
  }
  func.func @transform_26(%arg0: i32) -> (i32, i32) {
    %c0_i32 = arith.constant 0 : i32
    %c0_i32_0 = arith.constant 0 : i32
    %c0_i32_1 = arith.constant 0 : i32
    return %c0_i32, %c0_i32_0 : i32, i32
  }
  func.func @transform_27(%arg0: i32) -> (i32, i32) {
    %c0_i32 = arith.constant 0 : i32
    %c0_i32_0 = arith.constant 0 : i32
    %c0_i32_1 = arith.constant 0 : i32
    return %c0_i32, %c0_i32_0 : i32, i32
  }
  func.func @transform_28(%arg0: i32) -> (i32, i32) {
    %c0_i32 = arith.constant 0 : i32
    %c0_i32_0 = arith.constant 0 : i32
    %c0_i32_1 = arith.constant 0 : i32
    return %c0_i32, %c0_i32_0 : i32, i32
  }
  func.func @transform_29(%arg0: i32) -> (i32, i32) {
    %c0_i32 = arith.constant 0 : i32
    %c0_i32_0 = arith.constant 0 : i32
    %c0_i32_1 = arith.constant 0 : i32
    return %c0_i32, %c0_i32_0 : i32, i32
  }
  func.func @transform_30(%arg0: i32) -> (i32, i32) {
    %c0_i32 = arith.constant 0 : i32
    %c0_i32_0 = arith.constant 0 : i32
    %c0_i32_1 = arith.constant 0 : i32
    return %c0_i32, %c0_i32_0 : i32, i32
  }
  func.func @transform_31(%arg0: i32) -> (i32, i32) {
    %c0_i32 = arith.constant 0 : i32
    %c0_i32_0 = arith.constant 0 : i32
    %c0_i32_1 = arith.constant 0 : i32
    return %c0_i32, %c0_i32_0 : i32, i32
  }
  func.func @transform_32(%arg0: i32) -> (i32, i32) {
    %c0_i32 = arith.constant 0 : i32
    %c0_i32_0 = arith.constant 0 : i32
    %c0_i32_1 = arith.constant 0 : i32
    return %c0_i32, %c0_i32_0 : i32, i32
  }
  func.func @transform_33(%arg0: i32) -> (i32, i32) {
    %c0_i32 = arith.constant 0 : i32
    %c0_i32_0 = arith.constant 0 : i32
    %c0_i32_1 = arith.constant 0 : i32
    return %c0_i32, %c0_i32_0 : i32, i32
  }
  func.func @transform_34(%arg0: i32) -> (i32, i32) {
    %c0_i32 = arith.constant 0 : i32
    %c0_i32_0 = arith.constant 0 : i32
    %c0_i32_1 = arith.constant 0 : i32
    return %c0_i32, %c0_i32_0 : i32, i32
  }
  func.func @transform_35(%arg0: i32) -> (i32, i32) {
    %c0_i32 = arith.constant 0 : i32
    %c0_i32_0 = arith.constant 0 : i32
    %c0_i32_1 = arith.constant 0 : i32
    return %c0_i32, %c0_i32_0 : i32, i32
  }
  func.func @transform_36(%arg0: i32) -> (i32, i32) {
    %c0_i32 = arith.constant 0 : i32
    %c0_i32_0 = arith.constant 0 : i32
    %c0_i32_1 = arith.constant 0 : i32
    return %c0_i32, %c0_i32_0 : i32, i32
  }
  func.func @transform_37(%arg0: i32) -> (i32, i32) {
    %c0_i32 = arith.constant 0 : i32
    %c0_i32_0 = arith.constant 0 : i32
    %c0_i32_1 = arith.constant 0 : i32
    return %c0_i32, %c0_i32_0 : i32, i32
  }
  func.func @transform_38(%arg0: i32) -> (i32, i32) {
    %c0_i32 = arith.constant 0 : i32
    %c0_i32_0 = arith.constant 0 : i32
    %c0_i32_1 = arith.constant 0 : i32
    return %c0_i32, %c0_i32_0 : i32, i32
  }
  func.func @transform_39(%arg0: i32) -> (i32, i32) {
    %c0_i32 = arith.constant 0 : i32
    %c0_i32_0 = arith.constant 0 : i32
    %c0_i32_1 = arith.constant 0 : i32
    return %c0_i32, %c0_i32_0 : i32, i32
  }
  func.func @transform_40(%arg0: i32) -> (i32, i32) {
    %c0_i32 = arith.constant 0 : i32
    %c0_i32_0 = arith.constant 0 : i32
    %c0_i32_1 = arith.constant 0 : i32
    return %c0_i32, %c0_i32_0 : i32, i32
  }
  func.func @transform_41(%arg0: i32) -> (i32, i32, i32) {
    %c0_i32 = arith.constant 0 : i32
    %c0_i32_0 = arith.constant 0 : i32
    %c0_i32_1 = arith.constant 0 : i32
    return %arg0, %c0_i32, %c0_i32_0 : i32, i32, i32
  }
}

</mosaic_0001>

<llo_original>
// kernel: lgnet3_forward.1
$region0: #{lgnet3_forward.1}
  #allocation0 [shape = 'u32[]', space=smem, size = 0x4, offset = 0x4, fixed_abs, tag = 'smem constant byte address 0x4 - core index']
  #allocation1 [shape = 'u32[72,128]{1,0:T(1,128)}', space=vmem, size = 0x9000, scoped, tag = 'internal scratch']
  %s0 = inlined_call_operand.smem [shape: u32[42], index: -1, kind: input, shape index: {}]
  %s1 = sld [smem:[%s0]]
  %s2 = scalar_lea.smem %s0, 1
  %s3 = sld [smem:[%s2]]
  %s4 = scalar_lea.smem %s0, 2
  %s5 = sld [smem:[%s4]]
  %s6 = scalar_lea.smem %s0, 3
  %s7 = sld [smem:[%s6]]
  %s8 = scalar_lea.smem %s0, 4
  %s9 = sld [smem:[%s8]]
  %s10 = scalar_lea.smem %s0, 5
  %s11 = sld [smem:[%s10]]
  %s12 = scalar_lea.smem %s0, 6
  %s13 = sld [smem:[%s12]]
  %s14 = scalar_lea.smem %s0, 7
  %s15 = sld [smem:[%s14]]
  %s16 = scalar_lea.smem %s0, 8
  %s17 = sld [smem:[%s16]]
  %s18 = scalar_lea.smem %s0, 9
  %s19 = sld [smem:[%s18]]
  %s20 = scalar_lea.smem %s0, 10
  %s21 = sld [smem:[%s20]]
  %s22 = scalar_lea.smem %s0, 11
  %s23 = sld [smem:[%s22]]
  %s24 = scalar_lea.smem %s0, 12
  %s25 = sld [smem:[%s24]]
  %s26 = scalar_lea.smem %s0, 13
  %s27 = sld [smem:[%s26]]
  %s28 = scalar_lea.smem %s0, 14
  %s29 = sld [smem:[%s28]]
  %s30 = scalar_lea.smem %s0, 15
  %s31 = sld [smem:[%s30]]
  %s32 = scalar_lea.smem %s0, 16
  %s33 = sld [smem:[%s32]]
  %s34 = scalar_lea.smem %s0, 17
  %s35 = sld [smem:[%s34]]
  %s36 = scalar_lea.smem %s0, 18
  %s37 = sld [smem:[%s36]]
  %s38 = scalar_lea.smem %s0, 19
  %s39 = sld [smem:[%s38]]
  %s40 = scalar_lea.smem %s0, 20
  %s41 = sld [smem:[%s40]]
  %s42 = scalar_lea.smem %s0, 21
  %s43 = sld [smem:[%s42]]
  %s44 = scalar_lea.smem %s0, 22
  %s45 = sld [smem:[%s44]]
  %s46 = scalar_lea.smem %s0, 23
  %s47 = sld [smem:[%s46]]
  %s48 = scalar_lea.smem %s0, 24
  %s49 = sld [smem:[%s48]]
  %s50 = scalar_lea.smem %s0, 25
  %s51 = sld [smem:[%s50]]
  %s52 = scalar_lea.smem %s0, 26
  %s53 = sld [smem:[%s52]]
  %s54 = scalar_lea.smem %s0, 27
  %s55 = sld [smem:[%s54]]
  %s56 = scalar_lea.smem %s0, 28
  %s57 = sld [smem:[%s56]]
  %s58 = scalar_lea.smem %s0, 29
  %s59 = sld [smem:[%s58]]
  %s60 = scalar_lea.smem %s0, 30
  %s61 = sld [smem:[%s60]]
  %s62 = scalar_lea.smem %s0, 31
  %s63 = sld [smem:[%s62]]
  %s64 = scalar_lea.smem %s0, 32
  %s65 = sld [smem:[%s64]]
  %s66 = scalar_lea.smem %s0, 33
  %s67 = sld [smem:[%s66]]
  %s68 = scalar_lea.smem %s0, 34
  %s69 = sld [smem:[%s68]]
  %s70 = scalar_lea.smem %s0, 35
  %s71 = sld [smem:[%s70]]
  %s72 = scalar_lea.smem %s0, 36
  %s73 = sld [smem:[%s72]]
  %s74 = scalar_lea.smem %s0, 37
  %s75 = sld [smem:[%s74]]
  %s76 = scalar_lea.smem %s0, 38
  %s77 = sld [smem:[%s76]]
  %s78 = scalar_lea.smem %s0, 39
  %s79 = sld [smem:[%s78]]
  %s80 = scalar_lea.smem %s0, 40
  %s81 = sld [smem:[%s80]]
  %s82 = scalar_lea.smem %s0, 41
  %s83 = sld [smem:[%s82]]
  %s84 = sld [smem:[#allocation0]]
  $region197: #{lgnet3_forward.1} parent=0
    _
  %s86 = ssub.s32 1, %s84
  %s87 = scalar_select 0, %s86, %s84
  loop: start=0, step=1, limit=4
  $region2: #{lgnet3_forward.1} parent=0 // loop_pre_header
    _
  $region3: #{lgnet3_forward.1} parent=0 // loop_header
    %s89 = sphi 0, %s93
    %p90 = scmp.ge.s32.totalorder %s89, 4
    %s99 = sphi 0, %s101
    %s102 = sphi 0, %s99
    %s103 = sphi 0, %s102
    %s119 = sphi 0, %s103
    %s123 = sphi 0, %s123
    %s125 = sphi 0, %s123
    %s126 = sphi 0, %s125
    %s140 = sphi 0, %s126
    %s144 = sphi 0, %s144
    %s146 = sphi 0, %s144
    %s147 = sphi 0, %s146
    %s161 = sphi 0, %s147
    %s165 = sphi 0, %s165
    %s167 = sphi 0, %s165
    %s168 = sphi 0, %s167
    %s182 = sphi 0, %s168
    %s186 = sphi 0, %s186
    %s188 = sphi 0, %s186
    %s189 = sphi 0, %s188
    %s203 = sphi 0, %s189
    %s207 = sphi 0, %s207
    %s209 = sphi 0, %s207
    %s210 = sphi 0, %s209
    %s224 = sphi 0, %s210
    %s228 = sphi 0, %s228
    %s230 = sphi 0, %s228
    %s231 = sphi 0, %s230
    %s245 = sphi 0, %s231
    %s249 = sphi 0, %s249
    %s251 = sphi 0, %s249
    %s252 = sphi 0, %s251
    %s266 = sphi 0, %s252
    %s270 = sphi 0, %s270
    %s272 = sphi 0, %s270
    %s273 = sphi 0, %s272
    %s287 = sphi 0, %s273
    %s291 = sphi 0, %s291
    %s293 = sphi 0, %s291
    %s294 = sphi 0, %s293
    %s308 = sphi 0, %s294
    %s312 = sphi 0, %s312
    %s314 = sphi 0, %s312
    %s315 = sphi 0, %s314
    %s329 = sphi 0, %s315
    %s333 = sphi 0, %s333
    %s335 = sphi 0, %s333
    %s336 = sphi 0, %s335
    %s350 = sphi 0, %s336
    %s354 = sphi 0, %s354
    %s356 = sphi 0, %s354
    %s357 = sphi 0, %s356
    %s371 = sphi 0, %s357
    %s375 = sphi 0, %s375
    %s377 = sphi 0, %s375
    %s378 = sphi 0, %s377
    %s392 = sphi 0, %s378
    %s396 = sphi 0, %s396
    %s398 = sphi 0, %s396
    %s399 = sphi 0, %s398
    %s413 = sphi 0, %s399
    %s417 = sphi 0, %s417
    %s419 = sphi 0, %s417
    %s420 = sphi 0, %s419
    %s434 = sphi 0, %s420
    %s438 = sphi 0, %s438
    %s440 = sphi 0, %s438
    %s441 = sphi 0, %s440
    %s455 = sphi 0, %s441
    %s459 = sphi 0, %s459
    %s461 = sphi 0, %s459
    %s462 = sphi 0, %s461
    %s476 = sphi 0, %s462
    %s480 = sphi 0, %s480
    %s482 = sphi 0, %s480
    %s483 = sphi 0, %s482
    %s497 = sphi 0, %s483
    %s501 = sphi 0, %s501
    %s503 = sphi 0, %s501
    %s504 = sphi 0, %s503
    %s518 = sphi 0, %s504
    %s522 = sphi 0, %s522
    %s524 = sphi 0, %s522
    %s525 = sphi 0, %s524
    %s539 = sphi 0, %s525
    %s543 = sphi 0, %s543
    %s545 = sphi 0, %s543
    %s546 = sphi 0, %s545
    %s560 = sphi 0, %s546
    %s564 = sphi 0, %s564
    %s566 = sphi 0, %s564
    %s567 = sphi 0, %s566
    %s581 = sphi 0, %s567
    %s585 = sphi 0, %s585
    %s587 = sphi 0, %s585
    %s588 = sphi 0, %s587
    %s602 = sphi 0, %s588
    %s606 = sphi 0, %s606
    %s608 = sphi 0, %s606
    %s609 = sphi 0, %s608
    %s623 = sphi 0, %s609
    %s627 = sphi 0, %s627
    %s629 = sphi 0, %s627
    %s630 = sphi 0, %s629
    %s644 = sphi 0, %s630
    %s648 = sphi 0, %s648
    %s650 = sphi 0, %s648
    %s651 = sphi 0, %s650
    %s665 = sphi 0, %s651
    %s669 = sphi 0, %s669
    %s671 = sphi 0, %s669
    %s672 = sphi 0, %s671
    %s686 = sphi 0, %s672
    %s690 = sphi 0, %s690
    %s692 = sphi 0, %s690
    %s693 = sphi 0, %s692
    %s707 = sphi 0, %s693
    %s711 = sphi 0, %s711
    %s713 = sphi 0, %s711
    %s714 = sphi 0, %s713
    %s728 = sphi 0, %s714
    %s732 = sphi 0, %s732
    %s734 = sphi 0, %s732
    %s735 = sphi 0, %s734
    %s749 = sphi 0, %s735
    %s753 = sphi 0, %s753
    %s755 = sphi 0, %s753
    %s756 = sphi 0, %s755
    %s770 = sphi 0, %s756
    %s774 = sphi 0, %s774
    %s776 = sphi 0, %s774
    %s777 = sphi 0, %s776
    %s791 = sphi 0, %s777
    %s795 = sphi 0, %s795
    %s797 = sphi 0, %s795
    %s798 = sphi 0, %s797
    %s812 = sphi 0, %s798
    %s816 = sphi 0, %s816
    %s818 = sphi 0, %s816
    %s819 = sphi 0, %s818
    %s833 = sphi 0, %s819
    %s837 = sphi 0, %s837
    %s839 = sphi 0, %s837
    %s840 = sphi 0, %s839
    %s854 = sphi 0, %s840
    %s858 = sphi 0, %s858
    %s860 = sphi 0, %s858
    %s861 = sphi 0, %s860
    %s875 = sphi 0, %s861
    %s879 = sphi 0, %s879
    %s881 = sphi 0, %s879
    %s882 = sphi 0, %s881
    %s896 = sphi 0, %s882
    %s900 = sphi 0, %s900
    %s902 = sphi 0, %s900
    %s903 = sphi 0, %s902
    %s917 = sphi 0, %s903
    %s921 = sphi 0, %s921
    %s923 = sphi 0, %s921
    %s924 = sphi 0, %s923
    %s938 = sphi 0, %s924
    %s942 = sphi 0, %s942
    %s944 = sphi 0, %s942
    %s945 = sphi 0, %s944
    %s959 = sphi 0, %s945
    %s965 = sphi 0, %s967
    %s968 = sphi 0, %s965
    %s969 = sphi 0, %s968
    %s985 = sphi 0, %s969
  $region4: #{lgnet3_forward.1} parent=0 // loop_header_branch
    %92 = sbr.rel (%p90) target = $region8
  $region5: #{lgnet3_forward.1} parent=0 // loop_body
    %s94 = ssub.s32 %s89, 1
    %s95 = ssub.s32 %s89, 2
    %s96 = sadd.s32 %s89, 1
    %s97 = ssub.s32 %s89, %s96
    %p98 = scmp.eq.s32.totalorder %s97, 0
    %s100 = sadd.s32 %s99, 1
    %s101 = scalar_select %p98, %s99, %s100
    %p104 = pneg %p98
    %p105 = scmp.eq.s32.totalorder %s89, 1
    %p106 = por %p104, %p105
    %p107 = scmp.ne.s32.totalorder %s99, %s102
    %p108 = scmp.eq.s32.totalorder %s89, 0
    %p109 = por %p107, %p108
    %p110 = scmp.ne.s32.totalorder %s99, %s102
    %p111 = scmp.eq.s32.totalorder %s94, 1
    %p112 = por %p110, %p111
    %p113 = scmp.ne.s32.totalorder %s102, %s103
    %p114 = scmp.eq.s32.totalorder %s94, 0
    %p115 = por %p113, %p114
    %p116 = scmp.ne.s32.totalorder %s102, %s103
    %p117 = scmp.eq.s32.totalorder %s95, 1
    %p118 = por %p116, %p117
    %p120 = scmp.ne.s32.totalorder %s103, %s119
    %p121 = scmp.eq.s32.totalorder %s95, 0
    %p122 = por %p120, %p121
    %s124 = sadd.s32 %s123, 1
    %p127 = scmp.eq.s32.totalorder %s89, 1
    %p128 = scmp.ne.s32.totalorder %s123, %s125
    %p129 = scmp.eq.s32.totalorder %s89, 0
    %p130 = por %p128, %p129
    %p131 = scmp.ne.s32.totalorder %s123, %s125
    %p132 = scmp.eq.s32.totalorder %s94, 1
    %p133 = por %p131, %p132
    %p134 = scmp.ne.s32.totalorder %s125, %s126
    %p135 = scmp.eq.s32.totalorder %s94, 0
    %p136 = por %p134, %p135
    %p137 = scmp.ne.s32.totalorder %s125, %s126
    %p138 = scmp.eq.s32.totalorder %s95, 1
    %p139 = por %p137, %p138
    %p141 = scmp.ne.s32.totalorder %s126, %s140
    %p142 = scmp.eq.s32.totalorder %s95, 0
    %p143 = por %p141, %p142
    %s145 = sadd.s32 %s144, 1
    %p148 = scmp.eq.s32.totalorder %s89, 1
    %p149 = scmp.ne.s32.totalorder %s144, %s146
    %p150 = scmp.eq.s32.totalorder %s89, 0
    %p151 = por %p149, %p150
    %p152 = scmp.ne.s32.totalorder %s144, %s146
    %p153 = scmp.eq.s32.totalorder %s94, 1
    %p154 = por %p152, %p153
    %p155 = scmp.ne.s32.totalorder %s146, %s147
    %p156 = scmp.eq.s32.totalorder %s94, 0
    %p157 = por %p155, %p156
    %p158 = scmp.ne.s32.totalorder %s146, %s147
    %p159 = scmp.eq.s32.totalorder %s95, 1
    %p160 = por %p158, %p159
    %p162 = scmp.ne.s32.totalorder %s147, %s161
    %p163 = scmp.eq.s32.totalorder %s95, 0
    %p164 = por %p162, %p163
    %s166 = sadd.s32 %s165, 1
    %p169 = scmp.eq.s32.totalorder %s89, 1
    %p170 = scmp.ne.s32.totalorder %s165, %s167
    %p171 = scmp.eq.s32.totalorder %s89, 0
    %p172 = por %p170, %p171
    %p173 = scmp.ne.s32.totalorder %s165, %s167
    %p174 = scmp.eq.s32.totalorder %s94, 1
    %p175 = por %p173, %p174
    %p176 = scmp.ne.s32.totalorder %s167, %s168
    %p177 = scmp.eq.s32.totalorder %s94, 0
    %p178 = por %p176, %p177
    %p179 = scmp.ne.s32.totalorder %s167, %s168
    %p180 = scmp.eq.s32.totalorder %s95, 1
    %p181 = por %p179, %p180
    %p183 = scmp.ne.s32.totalorder %s168, %s182
    %p184 = scmp.eq.s32.totalorder %s95, 0
    %p185 = por %p183, %p184
    %s187 = sadd.s32 %s186, 1
    %p190 = scmp.eq.s32.totalorder %s89, 1
    %p191 = scmp.ne.s32.totalorder %s186, %s188
    %p192 = scmp.eq.s32.totalorder %s89, 0
    %p193 = por %p191, %p192
    %p194 = scmp.ne.s32.totalorder %s186, %s188
    %p195 = scmp.eq.s32.totalorder %s94, 1
    %p196 = por %p194, %p195
    %p197 = scmp.ne.s32.totalorder %s188, %s189
    %p198 = scmp.eq.s32.totalorder %s94, 0
    %p199 = por %p197, %p198
    %p200 = scmp.ne.s32.totalorder %s188, %s189
    %p201 = scmp.eq.s32.totalorder %s95, 1
    %p202 = por %p200, %p201
    %p204 = scmp.ne.s32.totalorder %s189, %s203
    %p205 = scmp.eq.s32.totalorder %s95, 0
    %p206 = por %p204, %p205
    %s208 = sadd.s32 %s207, 1
    %p211 = scmp.eq.s32.totalorder %s89, 1
    %p212 = scmp.ne.s32.totalorder %s207, %s209
    %p213 = scmp.eq.s32.totalorder %s89, 0
    %p214 = por %p212, %p213
    %p215 = scmp.ne.s32.totalorder %s207, %s209
    %p216 = scmp.eq.s32.totalorder %s94, 1
    %p217 = por %p215, %p216
    %p218 = scmp.ne.s32.totalorder %s209, %s210
    %p219 = scmp.eq.s32.totalorder %s94, 0
    %p220 = por %p218, %p219
    %p221 = scmp.ne.s32.totalorder %s209, %s210
    %p222 = scmp.eq.s32.totalorder %s95, 1
    %p223 = por %p221, %p222
    %p225 = scmp.ne.s32.totalorder %s210, %s224
    %p226 = scmp.eq.s32.totalorder %s95, 0
    %p227 = por %p225, %p226
    %s229 = sadd.s32 %s228, 1
    %p232 = scmp.eq.s32.totalorder %s89, 1
    %p233 = scmp.ne.s32.totalorder %s228, %s230
    %p234 = scmp.eq.s32.totalorder %s89, 0
    %p235 = por %p233, %p234
    %p236 = scmp.ne.s32.totalorder %s228, %s230
    %p237 = scmp.eq.s32.totalorder %s94, 1
    %p238 = por %p236, %p237
    %p239 = scmp.ne.s32.totalorder %s230, %s231
    %p240 = scmp.eq.s32.totalorder %s94, 0
    %p241 = por %p239, %p240
    %p242 = scmp.ne.s32.totalorder %s230, %s231
    %p243 = scmp.eq.s32.totalorder %s95, 1
    %p244 = por %p242, %p243
    %p246 = scmp.ne.s32.totalorder %s231, %s245
    %p247 = scmp.eq.s32.totalorder %s95, 0
    %p248 = por %p246, %p247
    %s250 = sadd.s32 %s249, 1
    %p253 = scmp.eq.s32.totalorder %s89, 1
    %p254 = scmp.ne.s32.totalorder %s249, %s251
    %p255 = scmp.eq.s32.totalorder %s89, 0
    %p256 = por %p254, %p255
    %p257 = scmp.ne.s32.totalorder %s249, %s251
    %p258 = scmp.eq.s32.totalorder %s94, 1
    %p259 = por %p257, %p258
    %p260 = scmp.ne.s32.totalorder %s251, %s252
    %p261 = scmp.eq.s32.totalorder %s94, 0
    %p262 = por %p260, %p261
    %p263 = scmp.ne.s32.totalorder %s251, %s252
    %p264 = scmp.eq.s32.totalorder %s95, 1
    %p265 = por %p263, %p264
    %p267 = scmp.ne.s32.totalorder %s252, %s266
    %p268 = scmp.eq.s32.totalorder %s95, 0
    %p269 = por %p267, %p268
    %s271 = sadd.s32 %s270, 1
    %p274 = scmp.eq.s32.totalorder %s89, 1
    %p275 = scmp.ne.s32.totalorder %s270, %s272
    %p276 = scmp.eq.s32.totalorder %s89, 0
    %p277 = por %p275, %p276
    %p278 = scmp.ne.s32.totalorder %s270, %s272
    %p279 = scmp.eq.s32.totalorder %s94, 1
    %p280 = por %p278, %p279
    %p281 = scmp.ne.s32.totalorder %s272, %s273
    %p282 = scmp.eq.s32.totalorder %s94, 0
    %p283 = por %p281, %p282
    %p284 = scmp.ne.s32.totalorder %s272, %s273
    %p285 = scmp.eq.s32.totalorder %s95, 1
    %p286 = por %p284, %p285
    %p288 = scmp.ne.s32.totalorder %s273, %s287
    %p289 = scmp.eq.s32.totalorder %s95, 0
    %p290 = por %p288, %p289
    %s292 = sadd.s32 %s291, 1
    %p295 = scmp.eq.s32.totalorder %s89, 1
    %p296 = scmp.ne.s32.totalorder %s291, %s293
    %p297 = scmp.eq.s32.totalorder %s89, 0
    %p298 = por %p296, %p297
    %p299 = scmp.ne.s32.totalorder %s291, %s293
    %p300 = scmp.eq.s32.totalorder %s94, 1
    %p301 = por %p299, %p300
    %p302 = scmp.ne.s32.totalorder %s293, %s294
    %p303 = scmp.eq.s32.totalorder %s94, 0
    %p304 = por %p302, %p303
    %p305 = scmp.ne.s32.totalorder %s293, %s294
    %p306 = scmp.eq.s32.totalorder %s95, 1
    %p307 = por %p305, %p306
    %p309 = scmp.ne.s32.totalorder %s294, %s308
    %p310 = scmp.eq.s32.totalorder %s95, 0
    %p311 = por %p309, %p310
    %s313 = sadd.s32 %s312, 1
    %p316 = scmp.eq.s32.totalorder %s89, 1
    %p317 = scmp.ne.s32.totalorder %s312, %s314
    %p318 = scmp.eq.s32.totalorder %s89, 0
    %p319 = por %p317, %p318
    %p320 = scmp.ne.s32.totalorder %s312, %s314
    %p321 = scmp.eq.s32.totalorder %s94, 1
    %p322 = por %p320, %p321
    %p323 = scmp.ne.s32.totalorder %s314, %s315
    %p324 = scmp.eq.s32.totalorder %s94, 0
    %p325 = por %p323, %p324
    %p326 = scmp.ne.s32.totalorder %s314, %s315
    %p327 = scmp.eq.s32.totalorder %s95, 1
    %p328 = por %p326, %p327
    %p330 = scmp.ne.s32.totalorder %s315, %s329
    %p331 = scmp.eq.s32.totalorder %s95, 0
    %p332 = por %p330, %p331
    %s334 = sadd.s32 %s333, 1
    %p337 = scmp.eq.s32.totalorder %s89, 1
    %p338 = scmp.ne.s32.totalorder %s333, %s335
    %p339 = scmp.eq.s32.totalorder %s89, 0
    %p340 = por %p338, %p339
    %p341 = scmp.ne.s32.totalorder %s333, %s335
    %p342 = scmp.eq.s32.totalorder %s94, 1
    %p343 = por %p341, %p342
    %p344 = scmp.ne.s32.totalorder %s335, %s336
    %p345 = scmp.eq.s32.totalorder %s94, 0
    %p346 = por %p344, %p345
    %p347 = scmp.ne.s32.totalorder %s335, %s336
    %p348 = scmp.eq.s32.totalorder %s95, 1
    %p349 = por %p347, %p348
    %p351 = scmp.ne.s32.totalorder %s336, %s350
    %p352 = scmp.eq.s32.totalorder %s95, 0
    %p353 = por %p351, %p352
    %s355 = sadd.s32 %s354, 1
    %p358 = scmp.eq.s32.totalorder %s89, 1
    %p359 = scmp.ne.s32.totalorder %s354, %s356
    %p360 = scmp.eq.s32.totalorder %s89, 0
    %p361 = por %p359, %p360
    %p362 = scmp.ne.s32.totalorder %s354, %s356
    %p363 = scmp.eq.s32.totalorder %s94, 1
    %p364 = por %p362, %p363
    %p365 = scmp.ne.s32.totalorder %s356, %s357
    %p366 = scmp.eq.s32.totalorder %s94, 0
    %p367 = por %p365, %p366
    %p368 = scmp.ne.s32.totalorder %s356, %s357
    %p369 = scmp.eq.s32.totalorder %s95, 1
    %p370 = por %p368, %p369
    %p372 = scmp.ne.s32.totalorder %s357, %s371
    %p373 = scmp.eq.s32.totalorder %s95, 0
    %p374 = por %p372, %p373
    %s376 = sadd.s32 %s375, 1
    %p379 = scmp.eq.s32.totalorder %s89, 1
    %p380 = scmp.ne.s32.totalorder %s375, %s377
    %p381 = scmp.eq.s32.totalorder %s89, 0
    %p382 = por %p380, %p381
    %p383 = scmp.ne.s32.totalorder %s375, %s377
    %p384 = scmp.eq.s32.totalorder %s94, 1
    %p385 = por %p383, %p384
    %p386 = scmp.ne.s32.totalorder %s377, %s378
    %p387 = scmp.eq.s32.totalorder %s94, 0
    %p388 = por %p386, %p387
    %p389 = scmp.ne.s32.totalorder %s377, %s378
    %p390 = scmp.eq.s32.totalorder %s95, 1
    %p391 = por %p389, %p390
    %p393 = scmp.ne.s32.totalorder %s378, %s392
    %p394 = scmp.eq.s32.totalorder %s95, 0
    %p395 = por %p393, %p394
    %s397 = sadd.s32 %s396, 1
    %p400 = scmp.eq.s32.totalorder %s89, 1
    %p401 = scmp.ne.s32.totalorder %s396, %s398
    %p402 = scmp.eq.s32.totalorder %s89, 0
    %p403 = por %p401, %p402
    %p404 = scmp.ne.s32.totalorder %s396, %s398
    %p405 = scmp.eq.s32.totalorder %s94, 1
    %p406 = por %p404, %p405
    %p407 = scmp.ne.s32.totalorder %s398, %s399
    %p408 = scmp.eq.s32.totalorder %s94, 0
    %p409 = por %p407, %p408
    %p410 = scmp.ne.s32.totalorder %s398, %s399
    %p411 = scmp.eq.s32.totalorder %s95, 1
    %p412 = por %p410, %p411
    %p414 = scmp.ne.s32.totalorder %s399, %s413
    %p415 = scmp.eq.s32.totalorder %s95, 0
    %p416 = por %p414, %p415
    %s418 = sadd.s32 %s417, 1
    %p421 = scmp.eq.s32.totalorder %s89, 1
    %p422 = scmp.ne.s32.totalorder %s417, %s419
    %p423 = scmp.eq.s32.totalorder %s89, 0
    %p424 = por %p422, %p423
    %p425 = scmp.ne.s32.totalorder %s417, %s419
    %p426 = scmp.eq.s32.totalorder %s94, 1
    %p427 = por %p425, %p426
    %p428 = scmp.ne.s32.totalorder %s419, %s420
    %p429 = scmp.eq.s32.totalorder %s94, 0
    %p430 = por %p428, %p429
    %p431 = scmp.ne.s32.totalorder %s419, %s420
    %p432 = scmp.eq.s32.totalorder %s95, 1
    %p433 = por %p431, %p432
    %p435 = scmp.ne.s32.totalorder %s420, %s434
    %p436 = scmp.eq.s32.totalorder %s95, 0
    %p437 = por %p435, %p436
    %s439 = sadd.s32 %s438, 1
    %p442 = scmp.eq.s32.totalorder %s89, 1
    %p443 = scmp.ne.s32.totalorder %s438, %s440
    %p444 = scmp.eq.s32.totalorder %s89, 0
    %p445 = por %p443, %p444
    %p446 = scmp.ne.s32.totalorder %s438, %s440
    %p447 = scmp.eq.s32.totalorder %s94, 1
    %p448 = por %p446, %p447
    %p449 = scmp.ne.s32.totalorder %s440, %s441
    %p450 = scmp.eq.s32.totalorder %s94, 0
    %p451 = por %p449, %p450
    %p452 = scmp.ne.s32.totalorder %s440, %s441
    %p453 = scmp.eq.s32.totalorder %s95, 1
    %p454 = por %p452, %p453
    %p456 = scmp.ne.s32.totalorder %s441, %s455
    %p457 = scmp.eq.s32.totalorder %s95, 0
    %p458 = por %p456, %p457
    %s460 = sadd.s32 %s459, 1
    %p463 = scmp.eq.s32.totalorder %s89, 1
    %p464 = scmp.ne.s32.totalorder %s459, %s461
    %p465 = scmp.eq.s32.totalorder %s89, 0
    %p466 = por %p464, %p465
    %p467 = scmp.ne.s32.totalorder %s459, %s461
    %p468 = scmp.eq.s32.totalorder %s94, 1
    %p469 = por %p467, %p468
    %p470 = scmp.ne.s32.totalorder %s461, %s462
    %p471 = scmp.eq.s32.totalorder %s94, 0
    %p472 = por %p470, %p471
    %p473 = scmp.ne.s32.totalorder %s461, %s462
    %p474 = scmp.eq.s32.totalorder %s95, 1
    %p475 = por %p473, %p474
    %p477 = scmp.ne.s32.totalorder %s462, %s476
    %p478 = scmp.eq.s32.totalorder %s95, 0
    %p479 = por %p477, %p478
    %s481 = sadd.s32 %s480, 1
    %p484 = scmp.eq.s32.totalorder %s89, 1
    %p485 = scmp.ne.s32.totalorder %s480, %s482
    %p486 = scmp.eq.s32.totalorder %s89, 0
    %p487 = por %p485, %p486
    %p488 = scmp.ne.s32.totalorder %s480, %s482
    %p489 = scmp.eq.s32.totalorder %s94, 1
    %p490 = por %p488, %p489
    %p491 = scmp.ne.s32.totalorder %s482, %s483
    %p492 = scmp.eq.s32.totalorder %s94, 0
    %p493 = por %p491, %p492
    %p494 = scmp.ne.s32.totalorder %s482, %s483
    %p495 = scmp.eq.s32.totalorder %s95, 1
    %p496 = por %p494, %p495
    %p498 = scmp.ne.s32.totalorder %s483, %s497
    %p499 = scmp.eq.s32.totalorder %s95, 0
    %p500 = por %p498, %p499
    %s502 = sadd.s32 %s501, 1
    %p505 = scmp.eq.s32.totalorder %s89, 1
    %p506 = scmp.ne.s32.totalorder %s501, %s503
    %p507 = scmp.eq.s32.totalorder %s89, 0
    %p508 = por %p506, %p507
    %p509 = scmp.ne.s32.totalorder %s501, %s503
    %p510 = scmp.eq.s32.totalorder %s94, 1
    %p511 = por %p509, %p510
    %p512 = scmp.ne.s32.totalorder %s503, %s504
    %p513 = scmp.eq.s32.totalorder %s94, 0
    %p514 = por %p512, %p513
    %p515 = scmp.ne.s32.totalorder %s503, %s504
    %p516 = scmp.eq.s32.totalorder %s95, 1
    %p517 = por %p515, %p516
    %p519 = scmp.ne.s32.totalorder %s504, %s518
    %p520 = scmp.eq.s32.totalorder %s95, 0
    %p521 = por %p519, %p520
    %s523 = sadd.s32 %s522, 1
    %p526 = scmp.eq.s32.totalorder %s89, 1
    %p527 = scmp.ne.s32.totalorder %s522, %s524
    %p528 = scmp.eq.s32.totalorder %s89, 0
    %p529 = por %p527, %p528
    %p530 = scmp.ne.s32.totalorder %s522, %s524
    %p531 = scmp.eq.s32.totalorder %s94, 1
    %p532 = por %p530, %p531
    %p533 = scmp.ne.s32.totalorder %s524, %s525
    %p534 = scmp.eq.s32.totalorder %s94, 0
    %p535 = por %p533, %p534
    %p536 = scmp.ne.s32.totalorder %s524, %s525
    %p537 = scmp.eq.s32.totalorder %s95, 1
    %p538 = por %p536, %p537
    %p540 = scmp.ne.s32.totalorder %s525, %s539
    %p541 = scmp.eq.s32.totalorder %s95, 0
    %p542 = por %p540, %p541
    %s544 = sadd.s32 %s543, 1
    %p547 = scmp.eq.s32.totalorder %s89, 1
    %p548 = scmp.ne.s32.totalorder %s543, %s545
    %p549 = scmp.eq.s32.totalorder %s89, 0
    %p550 = por %p548, %p549
    %p551 = scmp.ne.s32.totalorder %s543, %s545
    %p552 = scmp.eq.s32.totalorder %s94, 1
    %p553 = por %p551, %p552
    %p554 = scmp.ne.s32.totalorder %s545, %s546
    %p555 = scmp.eq.s32.totalorder %s94, 0
    %p556 = por %p554, %p555
    %p557 = scmp.ne.s32.totalorder %s545, %s546
    %p558 = scmp.eq.s32.totalorder %s95, 1
    %p559 = por %p557, %p558
    %p561 = scmp.ne.s32.totalorder %s546, %s560
    %p562 = scmp.eq.s32.totalorder %s95, 0
    %p563 = por %p561, %p562
    %s565 = sadd.s32 %s564, 1
    %p568 = scmp.eq.s32.totalorder %s89, 1
    %p569 = scmp.ne.s32.totalorder %s564, %s566
    %p570 = scmp.eq.s32.totalorder %s89, 0
    %p571 = por %p569, %p570
    %p572 = scmp.ne.s32.totalorder %s564, %s566
    %p573 = scmp.eq.s32.totalorder %s94, 1
    %p574 = por %p572, %p573
    %p575 = scmp.ne.s32.totalorder %s566, %s567
    %p576 = scmp.eq.s32.totalorder %s94, 0
    %p577 = por %p575, %p576
    %p578 = scmp.ne.s32.totalorder %s566, %s567
    %p579 = scmp.eq.s32.totalorder %s95, 1
    %p580 = por %p578, %p579
    %p582 = scmp.ne.s32.totalorder %s567, %s581
    %p583 = scmp.eq.s32.totalorder %s95, 0
    %p584 = por %p582, %p583
    %s586 = sadd.s32 %s585, 1
    %p589 = scmp.eq.s32.totalorder %s89, 1
    %p590 = scmp.ne.s32.totalorder %s585, %s587
    %p591 = scmp.eq.s32.totalorder %s89, 0
    %p592 = por %p590, %p591
    %p593 = scmp.ne.s32.totalorder %s585, %s587
    %p594 = scmp.eq.s32.totalorder %s94, 1
    %p595 = por %p593, %p594
    %p596 = scmp.ne.s32.totalorder %s587, %s588
    %p597 = scmp.eq.s32.totalorder %s94, 0
    %p598 = por %p596, %p597
    %p599 = scmp.ne.s32.totalorder %s587, %s588
    %p600 = scmp.eq.s32.totalorder %s95, 1
    %p601 = por %p599, %p600
    %p603 = scmp.ne.s32.totalorder %s588, %s602
    %p604 = scmp.eq.s32.totalorder %s95, 0
    %p605 = por %p603, %p604
    %s607 = sadd.s32 %s606, 1
    %p610 = scmp.eq.s32.totalorder %s89, 1
    %p611 = scmp.ne.s32.totalorder %s606, %s608
    %p612 = scmp.eq.s32.totalorder %s89, 0
    %p613 = por %p611, %p612
    %p614 = scmp.ne.s32.totalorder %s606, %s608
    %p615 = scmp.eq.s32.totalorder %s94, 1
    %p616 = por %p614, %p615
    %p617 = scmp.ne.s32.totalorder %s608, %s609
    %p618 = scmp.eq.s32.totalorder %s94, 0
    %p619 = por %p617, %p618
    %p620 = scmp.ne.s32.totalorder %s608, %s609
    %p621 = scmp.eq.s32.totalorder %s95, 1
    %p622 = por %p620, %p621
    %p624 = scmp.ne.s32.totalorder %s609, %s623
    %p625 = scmp.eq.s32.totalorder %s95, 0
    %p626 = por %p624, %p625
    %s628 = sadd.s32 %s627, 1
    %p631 = scmp.eq.s32.totalorder %s89, 1
    %p632 = scmp.ne.s32.totalorder %s627, %s629
    %p633 = scmp.eq.s32.totalorder %s89, 0
    %p634 = por %p632, %p633
    %p635 = scmp.ne.s32.totalorder %s627, %s629
    %p636 = scmp.eq.s32.totalorder %s94, 1
    %p637 = por %p635, %p636
    %p638 = scmp.ne.s32.totalorder %s629, %s630
    %p639 = scmp.eq.s32.totalorder %s94, 0
    %p640 = por %p638, %p639
    %p641 = scmp.ne.s32.totalorder %s629, %s630
    %p642 = scmp.eq.s32.totalorder %s95, 1
    %p643 = por %p641, %p642
    %p645 = scmp.ne.s32.totalorder %s630, %s644
    %p646 = scmp.eq.s32.totalorder %s95, 0
    %p647 = por %p645, %p646
    %s649 = sadd.s32 %s648, 1
    %p652 = scmp.eq.s32.totalorder %s89, 1
    %p653 = scmp.ne.s32.totalorder %s648, %s650
    %p654 = scmp.eq.s32.totalorder %s89, 0
    %p655 = por %p653, %p654
    %p656 = scmp.ne.s32.totalorder %s648, %s650
    %p657 = scmp.eq.s32.totalorder %s94, 1
    %p658 = por %p656, %p657
    %p659 = scmp.ne.s32.totalorder %s650, %s651
    %p660 = scmp.eq.s32.totalorder %s94, 0
    %p661 = por %p659, %p660
    %p662 = scmp.ne.s32.totalorder %s650, %s651
    %p663 = scmp.eq.s32.totalorder %s95, 1
    %p664 = por %p662, %p663
    %p666 = scmp.ne.s32.totalorder %s651, %s665
    %p667 = scmp.eq.s32.totalorder %s95, 0
    %p668 = por %p666, %p667
    %s670 = sadd.s32 %s669, 1
    %p673 = scmp.eq.s32.totalorder %s89, 1
    %p674 = scmp.ne.s32.totalorder %s669, %s671
    %p675 = scmp.eq.s32.totalorder %s89, 0
    %p676 = por %p674, %p675
    %p677 = scmp.ne.s32.totalorder %s669, %s671
    %p678 = scmp.eq.s32.totalorder %s94, 1
    %p679 = por %p677, %p678
    %p680 = scmp.ne.s32.totalorder %s671, %s672
    %p681 = scmp.eq.s32.totalorder %s94, 0
    %p682 = por %p680, %p681
    %p683 = scmp.ne.s32.totalorder %s671, %s672
    %p684 = scmp.eq.s32.totalorder %s95, 1
    %p685 = por %p683, %p684
    %p687 = scmp.ne.s32.totalorder %s672, %s686
    %p688 = scmp.eq.s32.totalorder %s95, 0
    %p689 = por %p687, %p688
    %s691 = sadd.s32 %s690, 1
    %p694 = scmp.eq.s32.totalorder %s89, 1
    %p695 = scmp.ne.s32.totalorder %s690, %s692
    %p696 = scmp.eq.s32.totalorder %s89, 0
    %p697 = por %p695, %p696
    %p698 = scmp.ne.s32.totalorder %s690, %s692
    %p699 = scmp.eq.s32.totalorder %s94, 1
    %p700 = por %p698, %p699
    %p701 = scmp.ne.s32.totalorder %s692, %s693
    %p702 = scmp.eq.s32.totalorder %s94, 0
    %p703 = por %p701, %p702
    %p704 = scmp.ne.s32.totalorder %s692, %s693
    %p705 = scmp.eq.s32.totalorder %s95, 1
    %p706 = por %p704, %p705
    %p708 = scmp.ne.s32.totalorder %s693, %s707
    %p709 = scmp.eq.s32.totalorder %s95, 0
    %p710 = por %p708, %p709
    %s712 = sadd.s32 %s711, 1
    %p715 = scmp.eq.s32.totalorder %s89, 1
    %p716 = scmp.ne.s32.totalorder %s711, %s713
    %p717 = scmp.eq.s32.totalorder %s89, 0
    %p718 = por %p716, %p717
    %p719 = scmp.ne.s32.totalorder %s711, %s713
    %p720 = scmp.eq.s32.totalorder %s94, 1
    %p721 = por %p719, %p720
    %p722 = scmp.ne.s32.totalorder %s713, %s714
    %p723 = scmp.eq.s32.totalorder %s94, 0
    %p724 = por %p722, %p723
    %p725 = scmp.ne.s32.totalorder %s713, %s714
    %p726 = scmp.eq.s32.totalorder %s95, 1
    %p727 = por %p725, %p726
    %p729 = scmp.ne.s32.totalorder %s714, %s728
    %p730 = scmp.eq.s32.totalorder %s95, 0
    %p731 = por %p729, %p730
    %s733 = sadd.s32 %s732, 1
    %p736 = scmp.eq.s32.totalorder %s89, 1
    %p737 = scmp.ne.s32.totalorder %s732, %s734
    %p738 = scmp.eq.s32.totalorder %s89, 0
    %p739 = por %p737, %p738
    %p740 = scmp.ne.s32.totalorder %s732, %s734
    %p741 = scmp.eq.s32.totalorder %s94, 1
    %p742 = por %p740, %p741
    %p743 = scmp.ne.s32.totalorder %s734, %s735
    %p744 = scmp.eq.s32.totalorder %s94, 0
    %p745 = por %p743, %p744
    %p746 = scmp.ne.s32.totalorder %s734, %s735
    %p747 = scmp.eq.s32.totalorder %s95, 1
    %p748 = por %p746, %p747
    %p750 = scmp.ne.s32.totalorder %s735, %s749
    %p751 = scmp.eq.s32.totalorder %s95, 0
    %p752 = por %p750, %p751
    %s754 = sadd.s32 %s753, 1
    %p757 = scmp.eq.s32.totalorder %s89, 1
    %p758 = scmp.ne.s32.totalorder %s753, %s755
    %p759 = scmp.eq.s32.totalorder %s89, 0
    %p760 = por %p758, %p759
    %p761 = scmp.ne.s32.totalorder %s753, %s755
    %p762 = scmp.eq.s32.totalorder %s94, 1
    %p763 = por %p761, %p762
    %p764 = scmp.ne.s32.totalorder %s755, %s756
    %p765 = scmp.eq.s32.totalorder %s94, 0
    %p766 = por %p764, %p765
    %p767 = scmp.ne.s32.totalorder %s755, %s756
    %p768 = scmp.eq.s32.totalorder %s95, 1
    %p769 = por %p767, %p768
    %p771 = scmp.ne.s32.totalorder %s756, %s770
    %p772 = scmp.eq.s32.totalorder %s95, 0
    %p773 = por %p771, %p772
    %s775 = sadd.s32 %s774, 1
    %p778 = scmp.eq.s32.totalorder %s89, 1
    %p779 = scmp.ne.s32.totalorder %s774, %s776
    %p780 = scmp.eq.s32.totalorder %s89, 0
    %p781 = por %p779, %p780
    %p782 = scmp.ne.s32.totalorder %s774, %s776
    %p783 = scmp.eq.s32.totalorder %s94, 1
    %p784 = por %p782, %p783
    %p785 = scmp.ne.s32.totalorder %s776, %s777
    %p786 = scmp.eq.s32.totalorder %s94, 0
    %p787 = por %p785, %p786
    %p788 = scmp.ne.s32.totalorder %s776, %s777
    %p789 = scmp.eq.s32.totalorder %s95, 1
    %p790 = por %p788, %p789
    %p792 = scmp.ne.s32.totalorder %s777, %s791
    %p793 = scmp.eq.s32.totalorder %s95, 0
    %p794 = por %p792, %p793
    %s796 = sadd.s32 %s795, 1
    %p799 = scmp.eq.s32.totalorder %s89, 1
    %p800 = scmp.ne.s32.totalorder %s795, %s797
    %p801 = scmp.eq.s32.totalorder %s89, 0
    %p802 = por %p800, %p801
    %p803 = scmp.ne.s32.totalorder %s795, %s797
    %p804 = scmp.eq.s32.totalorder %s94, 1
    %p805 = por %p803, %p804
    %p806 = scmp.ne.s32.totalorder %s797, %s798
    %p807 = scmp.eq.s32.totalorder %s94, 0
    %p808 = por %p806, %p807
    %p809 = scmp.ne.s32.totalorder %s797, %s798
    %p810 = scmp.eq.s32.totalorder %s95, 1
    %p811 = por %p809, %p810
    %p813 = scmp.ne.s32.totalorder %s798, %s812
    %p814 = scmp.eq.s32.totalorder %s95, 0
    %p815 = por %p813, %p814
    %s817 = sadd.s32 %s816, 1
    %p820 = scmp.eq.s32.totalorder %s89, 1
    %p821 = scmp.ne.s32.totalorder %s816, %s818
    %p822 = scmp.eq.s32.totalorder %s89, 0
    %p823 = por %p821, %p822
    %p824 = scmp.ne.s32.totalorder %s816, %s818
    %p825 = scmp.eq.s32.totalorder %s94, 1
    %p826 = por %p824, %p825
    %p827 = scmp.ne.s32.totalorder %s818, %s819
    %p828 = scmp.eq.s32.totalorder %s94, 0
    %p829 = por %p827, %p828
    %p830 = scmp.ne.s32.totalorder %s818, %s819
    %p831 = scmp.eq.s32.totalorder %s95, 1
    %p832 = por %p830, %p831
    %p834 = scmp.ne.s32.totalorder %s819, %s833
    %p835 = scmp.eq.s32.totalorder %s95, 0
    %p836 = por %p834, %p835
    %s838 = sadd.s32 %s837, 1
    %p841 = scmp.eq.s32.totalorder %s89, 1
    %p842 = scmp.ne.s32.totalorder %s837, %s839
    %p843 = scmp.eq.s32.totalorder %s89, 0
    %p844 = por %p842, %p843
    %p845 = scmp.ne.s32.totalorder %s837, %s839
    %p846 = scmp.eq.s32.totalorder %s94, 1
    %p847 = por %p845, %p846
    %p848 = scmp.ne.s32.totalorder %s839, %s840
    %p849 = scmp.eq.s32.totalorder %s94, 0
    %p850 = por %p848, %p849
    %p851 = scmp.ne.s32.totalorder %s839, %s840
    %p852 = scmp.eq.s32.totalorder %s95, 1
    %p853 = por %p851, %p852
    %p855 = scmp.ne.s32.totalorder %s840, %s854
    %p856 = scmp.eq.s32.totalorder %s95, 0
    %p857 = por %p855, %p856
    %s859 = sadd.s32 %s858, 1
    %p862 = scmp.eq.s32.totalorder %s89, 1
    %p863 = scmp.ne.s32.totalorder %s858, %s860
    %p864 = scmp.eq.s32.totalorder %s89, 0
    %p865 = por %p863, %p864
    %p866 = scmp.ne.s32.totalorder %s858, %s860
    %p867 = scmp.eq.s32.totalorder %s94, 1
    %p868 = por %p866, %p867
    %p869 = scmp.ne.s32.totalorder %s860, %s861
    %p870 = scmp.eq.s32.totalorder %s94, 0
    %p871 = por %p869, %p870
    %p872 = scmp.ne.s32.totalorder %s860, %s861
    %p873 = scmp.eq.s32.totalorder %s95, 1
    %p874 = por %p872, %p873
    %p876 = scmp.ne.s32.totalorder %s861, %s875
    %p877 = scmp.eq.s32.totalorder %s95, 0
    %p878 = por %p876, %p877
    %s880 = sadd.s32 %s879, 1
    %p883 = scmp.eq.s32.totalorder %s89, 1
    %p884 = scmp.ne.s32.totalorder %s879, %s881
    %p885 = scmp.eq.s32.totalorder %s89, 0
    %p886 = por %p884, %p885
    %p887 = scmp.ne.s32.totalorder %s879, %s881
    %p888 = scmp.eq.s32.totalorder %s94, 1
    %p889 = por %p887, %p888
    %p890 = scmp.ne.s32.totalorder %s881, %s882
    %p891 = scmp.eq.s32.totalorder %s94, 0
    %p892 = por %p890, %p891
    %p893 = scmp.ne.s32.totalorder %s881, %s882
    %p894 = scmp.eq.s32.totalorder %s95, 1
    %p895 = por %p893, %p894
    %p897 = scmp.ne.s32.totalorder %s882, %s896
    %p898 = scmp.eq.s32.totalorder %s95, 0
    %p899 = por %p897, %p898
    %s901 = sadd.s32 %s900, 1
    %p904 = scmp.eq.s32.totalorder %s89, 1
    %p905 = scmp.ne.s32.totalorder %s900, %s902
    %p906 = scmp.eq.s32.totalorder %s89, 0
    %p907 = por %p905, %p906
    %p908 = scmp.ne.s32.totalorder %s900, %s902
    %p909 = scmp.eq.s32.totalorder %s94, 1
    %p910 = por %p908, %p909
    %p911 = scmp.ne.s32.totalorder %s902, %s903
    %p912 = scmp.eq.s32.totalorder %s94, 0
    %p913 = por %p911, %p912
    %p914 = scmp.ne.s32.totalorder %s902, %s903
    %p915 = scmp.eq.s32.totalorder %s95, 1
    %p916 = por %p914, %p915
    %p918 = scmp.ne.s32.totalorder %s903, %s917
    %p919 = scmp.eq.s32.totalorder %s95, 0
    %p920 = por %p918, %p919
    %s922 = sadd.s32 %s921, 1
    %p925 = scmp.eq.s32.totalorder %s89, 1
    %p926 = scmp.ne.s32.totalorder %s921, %s923
    %p927 = scmp.eq.s32.totalorder %s89, 0
    %p928 = por %p926, %p927
    %p929 = scmp.ne.s32.totalorder %s921, %s923
    %p930 = scmp.eq.s32.totalorder %s94, 1
    %p931 = por %p929, %p930
    %p932 = scmp.ne.s32.totalorder %s923, %s924
    %p933 = scmp.eq.s32.totalorder %s94, 0
    %p934 = por %p932, %p933
    %p935 = scmp.ne.s32.totalorder %s923, %s924
    %p936 = scmp.eq.s32.totalorder %s95, 1
    %p937 = por %p935, %p936
    %p939 = scmp.ne.s32.totalorder %s924, %s938
    %p940 = scmp.eq.s32.totalorder %s95, 0
    %p941 = por %p939, %p940
    %s943 = sadd.s32 %s942, 1
    %p946 = scmp.eq.s32.totalorder %s89, 1
    %p947 = scmp.ne.s32.totalorder %s942, %s944
    %p948 = scmp.eq.s32.totalorder %s89, 0
    %p949 = por %p947, %p948
    %p950 = scmp.ne.s32.totalorder %s942, %s944
    %p951 = scmp.eq.s32.totalorder %s94, 1
    %p952 = por %p950, %p951
    %p953 = scmp.ne.s32.totalorder %s944, %s945
    %p954 = scmp.eq.s32.totalorder %s94, 0
    %p955 = por %p953, %p954
    %p956 = scmp.ne.s32.totalorder %s944, %s945
    %p957 = scmp.eq.s32.totalorder %s95, 1
    %p958 = por %p956, %p957
    %p960 = scmp.ne.s32.totalorder %s945, %s959
    %p961 = scmp.eq.s32.totalorder %s95, 0
    %p962 = por %p960, %p961
    %s963 = ssub.s32 %s89, %s96
    %p964 = scmp.eq.s32.totalorder %s963, 0
    %s966 = sadd.s32 %s965, 1
    %s967 = scalar_select %p964, %s965, %s966
    %p970 = pneg %p964
    %p971 = scmp.eq.s32.totalorder %s89, 1
    %p972 = por %p970, %p971
    %p973 = scmp.ne.s32.totalorder %s965, %s968
    %p974 = scmp.eq.s32.totalorder %s89, 0
    %p975 = por %p973, %p974
    %p976 = scmp.ne.s32.totalorder %s965, %s968
    %p977 = scmp.eq.s32.totalorder %s94, 1
    %p978 = por %p976, %p977
    %p979 = scmp.ne.s32.totalorder %s968, %s969
    %p980 = scmp.eq.s32.totalorder %s94, 0
    %p981 = por %p979, %p980
    %p982 = scmp.ne.s32.totalorder %s968, %s969
    %p983 = scmp.eq.s32.totalorder %s95, 1
    %p984 = por %p982, %p983
    %p986 = scmp.ne.s32.totalorder %s969, %s985
    %p987 = scmp.eq.s32.totalorder %s95, 0
    %p988 = por %p986, %p987
    %p989 = scmp.le.s32.totalorder 1, %s89
    %p990 = scmp.lt.s32.totalorder %s89, 3
    %p991 = pnand %p989, %p990
    %p992 = pneg %p991
    // Predicated region
    $region9: #{lgnet3_forward.1} parent=5 // pred_check
      _
    $region10: #{lgnet3_forward.1} parent=5 // pred_check_branch
      %994 = sbr.rel (%p991) target = $region12
    $region11: #{lgnet3_forward.1} parent=5 // pred_region
      %s995 = ssub.s32 %s89, 1
      // Predicated region
      $region13: #{lgnet3_forward.1} parent=11 // pred_check
        %p996 = pneg %p136
      $region14: #{lgnet3_forward.1} parent=11 // pred_check_branch
        %998 = sbr.rel (%p996) target = $region16
      $region15: #{lgnet3_forward.1} parent=11 // pred_region
        _
      $region16: #{lgnet3_forward.1} parent=11 // pred_fallthru
        _
      // Predicated region
      $region17: #{lgnet3_forward.1} parent=11 // pred_check
        %p999 = pneg %p157
      $region18: #{lgnet3_forward.1} parent=11 // pred_check_branch
        %1001 = sbr.rel (%p999) target = $region20
      $region19: #{lgnet3_forward.1} parent=11 // pred_region
        _
      $region20: #{lgnet3_forward.1} parent=11 // pred_fallthru
        _
      // Predicated region
      $region21: #{lgnet3_forward.1} parent=11 // pred_check
        %p1002 = pneg %p178
      $region22: #{lgnet3_forward.1} parent=11 // pred_check_branch
        %1004 = sbr.rel (%p1002) target = $region24
      $region23: #{lgnet3_forward.1} parent=11 // pred_region
        _
      $region24: #{lgnet3_forward.1} parent=11 // pred_fallthru
        _
      // Predicated region
      $region25: #{lgnet3_forward.1} parent=11 // pred_check
        %p1005 = pneg %p199
      $region26: #{lgnet3_forward.1} parent=11 // pred_check_branch
        %1007 = sbr.rel (%p1005) target = $region28
      $region27: #{lgnet3_forward.1} parent=11 // pred_region
        _
      $region28: #{lgnet3_forward.1} parent=11 // pred_fallthru
        _
      // Predicated region
      $region29: #{lgnet3_forward.1} parent=11 // pred_check
        %p1008 = pneg %p220
      $region30: #{lgnet3_forward.1} parent=11 // pred_check_branch
        %1010 = sbr.rel (%p1008) target = $region32
      $region31: #{lgnet3_forward.1} parent=11 // pred_region
        _
      $region32: #{lgnet3_forward.1} parent=11 // pred_fallthru
        _
      // Predicated region
      $region33: #{lgnet3_forward.1} parent=11 // pred_check
        %p1011 = pneg %p241
      $region34: #{lgnet3_forward.1} parent=11 // pred_check_branch
        %1013 = sbr.rel (%p1011) target = $region36
      $region35: #{lgnet3_forward.1} parent=11 // pred_region
        _
      $region36: #{lgnet3_forward.1} parent=11 // pred_fallthru
        _
      // Predicated region
      $region37: #{lgnet3_forward.1} parent=11 // pred_check
        %p1014 = pneg %p262
      $region38: #{lgnet3_forward.1} parent=11 // pred_check_branch
        %1016 = sbr.rel (%p1014) target = $region40
      $region39: #{lgnet3_forward.1} parent=11 // pred_region
        _
      $region40: #{lgnet3_forward.1} parent=11 // pred_fallthru
        _
      // Predicated region
      $region41: #{lgnet3_forward.1} parent=11 // pred_check
        %p1017 = pneg %p283
      $region42: #{lgnet3_forward.1} parent=11 // pred_check_branch
        %1019 = sbr.rel (%p1017) target = $region44
      $region43: #{lgnet3_forward.1} parent=11 // pred_region
        _
      $region44: #{lgnet3_forward.1} parent=11 // pred_fallthru
        _
      // Predicated region
      $region45: #{lgnet3_forward.1} parent=11 // pred_check
        %p1020 = pneg %p304
      $region46: #{lgnet3_forward.1} parent=11 // pred_check_branch
        %1022 = sbr.rel (%p1020) target = $region48
      $region47: #{lgnet3_forward.1} parent=11 // pred_region
        _
      $region48: #{lgnet3_forward.1} parent=11 // pred_fallthru
        _
      // Predicated region
      $region49: #{lgnet3_forward.1} parent=11 // pred_check
        %p1023 = pneg %p325
      $region50: #{lgnet3_forward.1} parent=11 // pred_check_branch
        %1025 = sbr.rel (%p1023) target = $region52
      $region51: #{lgnet3_forward.1} parent=11 // pred_region
        _
      $region52: #{lgnet3_forward.1} parent=11 // pred_fallthru
        _
      // Predicated region
      $region53: #{lgnet3_forward.1} parent=11 // pred_check
        %p1026 = pneg %p346
      $region54: #{lgnet3_forward.1} parent=11 // pred_check_branch
        %1028 = sbr.rel (%p1026) target = $region56
      $region55: #{lgnet3_forward.1} parent=11 // pred_region
        _
      $region56: #{lgnet3_forward.1} parent=11 // pred_fallthru
        _
      // Predicated region
      $region57: #{lgnet3_forward.1} parent=11 // pred_check
        %p1029 = pneg %p367
      $region58: #{lgnet3_forward.1} parent=11 // pred_check_branch
        %1031 = sbr.rel (%p1029) target = $region60
      $region59: #{lgnet3_forward.1} parent=11 // pred_region
        _
      $region60: #{lgnet3_forward.1} parent=11 // pred_fallthru
        _
      // Predicated region
      $region61: #{lgnet3_forward.1} parent=11 // pred_check
        %p1032 = pneg %p388
      $region62: #{lgnet3_forward.1} parent=11 // pred_check_branch
        %1034 = sbr.rel (%p1032) target = $region64
      $region63: #{lgnet3_forward.1} parent=11 // pred_region
        _
      $region64: #{lgnet3_forward.1} parent=11 // pred_fallthru
        _
      // Predicated region
      $region65: #{lgnet3_forward.1} parent=11 // pred_check
        %p1035 = pneg %p409
      $region66: #{lgnet3_forward.1} parent=11 // pred_check_branch
        %1037 = sbr.rel (%p1035) target = $region68
      $region67: #{lgnet3_forward.1} parent=11 // pred_region
        _
      $region68: #{lgnet3_forward.1} parent=11 // pred_fallthru
        _
      // Predicated region
      $region69: #{lgnet3_forward.1} parent=11 // pred_check
        %p1038 = pneg %p430
      $region70: #{lgnet3_forward.1} parent=11 // pred_check_branch
        %1040 = sbr.rel (%p1038) target = $region72
      $region71: #{lgnet3_forward.1} parent=11 // pred_region
        _
      $region72: #{lgnet3_forward.1} parent=11 // pred_fallthru
        _
      // Predicated region
      $region73: #{lgnet3_forward.1} parent=11 // pred_check
        %p1041 = pneg %p451
      $region74: #{lgnet3_forward.1} parent=11 // pred_check_branch
        %1043 = sbr.rel (%p1041) target = $region76
      $region75: #{lgnet3_forward.1} parent=11 // pred_region
        _
      $region76: #{lgnet3_forward.1} parent=11 // pred_fallthru
        _
      // Predicated region
      $region77: #{lgnet3_forward.1} parent=11 // pred_check
        %p1044 = pneg %p472
      $region78: #{lgnet3_forward.1} parent=11 // pred_check_branch
        %1046 = sbr.rel (%p1044) target = $region80
      $region79: #{lgnet3_forward.1} parent=11 // pred_region
        _
      $region80: #{lgnet3_forward.1} parent=11 // pred_fallthru
        _
      // Predicated region
      $region81: #{lgnet3_forward.1} parent=11 // pred_check
        %p1047 = pneg %p493
      $region82: #{lgnet3_forward.1} parent=11 // pred_check_branch
        %1049 = sbr.rel (%p1047) target = $region84
      $region83: #{lgnet3_forward.1} parent=11 // pred_region
        _
      $region84: #{lgnet3_forward.1} parent=11 // pred_fallthru
        _
      // Predicated region
      $region85: #{lgnet3_forward.1} parent=11 // pred_check
        %p1050 = pneg %p514
      $region86: #{lgnet3_forward.1} parent=11 // pred_check_branch
        %1052 = sbr.rel (%p1050) target = $region88
      $region87: #{lgnet3_forward.1} parent=11 // pred_region
        _
      $region88: #{lgnet3_forward.1} parent=11 // pred_fallthru
        _
      // Predicated region
      $region89: #{lgnet3_forward.1} parent=11 // pred_check
        %p1053 = pneg %p535
      $region90: #{lgnet3_forward.1} parent=11 // pred_check_branch
        %1055 = sbr.rel (%p1053) target = $region92
      $region91: #{lgnet3_forward.1} parent=11 // pred_region
        _
      $region92: #{lgnet3_forward.1} parent=11 // pred_fallthru
        _
      // Predicated region
      $region93: #{lgnet3_forward.1} parent=11 // pred_check
        %p1056 = pneg %p556
      $region94: #{lgnet3_forward.1} parent=11 // pred_check_branch
        %1058 = sbr.rel (%p1056) target = $region96
      $region95: #{lgnet3_forward.1} parent=11 // pred_region
        _
      $region96: #{lgnet3_forward.1} parent=11 // pred_fallthru
        _
      // Predicated region
      $region97: #{lgnet3_forward.1} parent=11 // pred_check
        %p1059 = pneg %p577
      $region98: #{lgnet3_forward.1} parent=11 // pred_check_branch
        %1061 = sbr.rel (%p1059) target = $region100
      $region99: #{lgnet3_forward.1} parent=11 // pred_region
        _
      $region100: #{lgnet3_forward.1} parent=11 // pred_fallthru
        _
      // Predicated region
      $region101: #{lgnet3_forward.1} parent=11 // pred_check
        %p1062 = pneg %p598
      $region102: #{lgnet3_forward.1} parent=11 // pred_check_branch
        %1064 = sbr.rel (%p1062) target = $region104
      $region103: #{lgnet3_forward.1} parent=11 // pred_region
        _
      $region104: #{lgnet3_forward.1} parent=11 // pred_fallthru
        _
      // Predicated region
      $region105: #{lgnet3_forward.1} parent=11 // pred_check
        %p1065 = pneg %p619
      $region106: #{lgnet3_forward.1} parent=11 // pred_check_branch
        %1067 = sbr.rel (%p1065) target = $region108
      $region107: #{lgnet3_forward.1} parent=11 // pred_region
        _
      $region108: #{lgnet3_forward.1} parent=11 // pred_fallthru
        _
      // Predicated region
      $region109: #{lgnet3_forward.1} parent=11 // pred_check
        %p1068 = pneg %p640
      $region110: #{lgnet3_forward.1} parent=11 // pred_check_branch
        %1070 = sbr.rel (%p1068) target = $region112
      $region111: #{lgnet3_forward.1} parent=11 // pred_region
        _
      $region112: #{lgnet3_forward.1} parent=11 // pred_fallthru
        _
      // Predicated region
      $region113: #{lgnet3_forward.1} parent=11 // pred_check
        %p1071 = pneg %p661
      $region114: #{lgnet3_forward.1} parent=11 // pred_check_branch
        %1073 = sbr.rel (%p1071) target = $region116
      $region115: #{lgnet3_forward.1} parent=11 // pred_region
        _
      $region116: #{lgnet3_forward.1} parent=11 // pred_fallthru
        _
      // Predicated region
      $region117: #{lgnet3_forward.1} parent=11 // pred_check
        %p1074 = pneg %p682
      $region118: #{lgnet3_forward.1} parent=11 // pred_check_branch
        %1076 = sbr.rel (%p1074) target = $region120
      $region119: #{lgnet3_forward.1} parent=11 // pred_region
        _
      $region120: #{lgnet3_forward.1} parent=11 // pred_fallthru
        _
      // Predicated region
      $region121: #{lgnet3_forward.1} parent=11 // pred_check
        %p1077 = pneg %p703
      $region122: #{lgnet3_forward.1} parent=11 // pred_check_branch
        %1079 = sbr.rel (%p1077) target = $region124
      $region123: #{lgnet3_forward.1} parent=11 // pred_region
        _
      $region124: #{lgnet3_forward.1} parent=11 // pred_fallthru
        _
      // Predicated region
      $region125: #{lgnet3_forward.1} parent=11 // pred_check
        %p1080 = pneg %p724
      $region126: #{lgnet3_forward.1} parent=11 // pred_check_branch
        %1082 = sbr.rel (%p1080) target = $region128
      $region127: #{lgnet3_forward.1} parent=11 // pred_region
        _
      $region128: #{lgnet3_forward.1} parent=11 // pred_fallthru
        _
      // Predicated region
      $region129: #{lgnet3_forward.1} parent=11 // pred_check
        %p1083 = pneg %p745
      $region130: #{lgnet3_forward.1} parent=11 // pred_check_branch
        %1085 = sbr.rel (%p1083) target = $region132
      $region131: #{lgnet3_forward.1} parent=11 // pred_region
        _
      $region132: #{lgnet3_forward.1} parent=11 // pred_fallthru
        _
      // Predicated region
      $region133: #{lgnet3_forward.1} parent=11 // pred_check
        %p1086 = pneg %p766
      $region134: #{lgnet3_forward.1} parent=11 // pred_check_branch
        %1088 = sbr.rel (%p1086) target = $region136
      $region135: #{lgnet3_forward.1} parent=11 // pred_region
        _
      $region136: #{lgnet3_forward.1} parent=11 // pred_fallthru
        _
      // Predicated region
      $region137: #{lgnet3_forward.1} parent=11 // pred_check
        %p1089 = pneg %p787
      $region138: #{lgnet3_forward.1} parent=11 // pred_check_branch
        %1091 = sbr.rel (%p1089) target = $region140
      $region139: #{lgnet3_forward.1} parent=11 // pred_region
        _
      $region140: #{lgnet3_forward.1} parent=11 // pred_fallthru
        _
      // Predicated region
      $region141: #{lgnet3_forward.1} parent=11 // pred_check
        %p1092 = pneg %p808
      $region142: #{lgnet3_forward.1} parent=11 // pred_check_branch
        %1094 = sbr.rel (%p1092) target = $region144
      $region143: #{lgnet3_forward.1} parent=11 // pred_region
        _
      $region144: #{lgnet3_forward.1} parent=11 // pred_fallthru
        _
      // Predicated region
      $region145: #{lgnet3_forward.1} parent=11 // pred_check
        %p1095 = pneg %p829
      $region146: #{lgnet3_forward.1} parent=11 // pred_check_branch
        %1097 = sbr.rel (%p1095) target = $region148
      $region147: #{lgnet3_forward.1} parent=11 // pred_region
        _
      $region148: #{lgnet3_forward.1} parent=11 // pred_fallthru
        _
      // Predicated region
      $region149: #{lgnet3_forward.1} parent=11 // pred_check
        %p1098 = pneg %p850
      $region150: #{lgnet3_forward.1} parent=11 // pred_check_branch
        %1100 = sbr.rel (%p1098) target = $region152
      $region151: #{lgnet3_forward.1} parent=11 // pred_region
        _
      $region152: #{lgnet3_forward.1} parent=11 // pred_fallthru
        _
      // Predicated region
      $region153: #{lgnet3_forward.1} parent=11 // pred_check
        %p1101 = pneg %p871
      $region154: #{lgnet3_forward.1} parent=11 // pred_check_branch
        %1103 = sbr.rel (%p1101) target = $region156
      $region155: #{lgnet3_forward.1} parent=11 // pred_region
        _
      $region156: #{lgnet3_forward.1} parent=11 // pred_fallthru
        _
      // Predicated region
      $region157: #{lgnet3_forward.1} parent=11 // pred_check
        %p1104 = pneg %p892
      $region158: #{lgnet3_forward.1} parent=11 // pred_check_branch
        %1106 = sbr.rel (%p1104) target = $region160
      $region159: #{lgnet3_forward.1} parent=11 // pred_region
        _
      $region160: #{lgnet3_forward.1} parent=11 // pred_fallthru
        _
      // Predicated region
      $region161: #{lgnet3_forward.1} parent=11 // pred_check
        %p1107 = pneg %p913
      $region162: #{lgnet3_forward.1} parent=11 // pred_check_branch
        %1109 = sbr.rel (%p1107) target = $region164
      $region163: #{lgnet3_forward.1} parent=11 // pred_region
        _
      $region164: #{lgnet3_forward.1} parent=11 // pred_fallthru
        _
      // Predicated region
      $region165: #{lgnet3_forward.1} parent=11 // pred_check
        %p1110 = pneg %p934
      $region166: #{lgnet3_forward.1} parent=11 // pred_check_branch
        %1112 = sbr.rel (%p1110) target = $region168
      $region167: #{lgnet3_forward.1} parent=11 // pred_region
        _
      $region168: #{lgnet3_forward.1} parent=11 // pred_fallthru
        _
      // Predicated region
      $region169: #{lgnet3_forward.1} parent=11 // pred_check
        %p1113 = pneg %p955
      $region170: #{lgnet3_forward.1} parent=11 // pred_check_branch
        %1115 = sbr.rel (%p1113) target = $region172
      $region171: #{lgnet3_forward.1} parent=11 // pred_region
        _
      $region172: #{lgnet3_forward.1} parent=11 // pred_fallthru
        _
    $region12: #{lgnet3_forward.1} parent=5 // pred_fallthru
      _
    %p1116 = scmp.lt.s32.totalorder %s89, 2
    // Predicated region
    $region173: #{lgnet3_forward.1} parent=5 // pred_check
      %p1117 = pneg %p1116
    $region174: #{lgnet3_forward.1} parent=5 // pred_check_branch
      %1119 = sbr.rel (%p1117) target = $region176
    $region175: #{lgnet3_forward.1} parent=5 // pred_region
      // Predicated region
      $region177: #{lgnet3_forward.1} parent=175 // pred_check
        %p1120 = pneg %p109
      $region178: #{lgnet3_forward.1} parent=175 // pred_check_branch
        %1122 = sbr.rel (%p1120) target = $region180
      $region179: #{lgnet3_forward.1} parent=175 // pred_region
        %p1123 = scmp.lt.s32.totalorder %s89, 1
        %s1124 = scalar_select %p1123, %s89, 1
        %s1125 = smul.addr %s1124, 26
        %s1126 = smul.addr %s1125, 8
        %s1127 = scalar_lea.vmem %s1, %s1126
      $region180: #{lgnet3_forward.1} parent=175 // pred_fallthru
        _
    $region176: #{lgnet3_forward.1} parent=5 // pred_fallthru
      _
    %p1128 = scmp.le.s32.totalorder 1, %s89
    %p1129 = scmp.lt.s32.totalorder %s89, 3
    %p1130 = pnand %p1128, %p1129
    %p1131 = pneg %p1130
    // Predicated region
    $region181: #{lgnet3_forward.1} parent=5 // pred_check
      _
    $region182: #{lgnet3_forward.1} parent=5 // pred_check_branch
      %1133 = sbr.rel (%p1130) target = $region184
    $region183: #{lgnet3_forward.1} parent=5 // pred_region
      %s1134 = ssub.s32 %s89, 1
      %p1135 = scmp.lt.s32.totalorder %s94, 1
      %s1136 = scalar_select %p1135, %s94, 1
      %s1137 = smul.addr %s1136, 26
      %s1138 = smul.addr %s1137, 8
      %s1139 = scalar_lea.vmem %s1, %s1138
      %p1140 = pneg %p115
      %p1141 = pneg %p112
      %p1142 = pneg %p136
      %p1143 = pneg %p133
      %p1144 = pneg %p157
      %p1145 = pneg %p154
      %p1146 = pneg %p178
      %p1147 = pneg %p175
      %p1148 = pneg %p199
      %p1149 = pneg %p196
      %p1150 = pneg %p220
      %p1151 = pneg %p217
      %p1152 = pneg %p241
      %p1153 = pneg %p238
      %p1154 = pneg %p262
      %p1155 = pneg %p259
      %p1156 = pneg %p283
      %p1157 = pneg %p280
      %p1158 = pneg %p304
      %p1159 = pneg %p301
      %p1160 = pneg %p325
      %p1161 = pneg %p322
      %p1162 = pneg %p346
      %p1163 = pneg %p343
      %p1164 = pneg %p367
      %p1165 = pneg %p364
      %p1166 = pneg %p388
      %p1167 = pneg %p385
      %p1168 = pneg %p409
      %p1169 = pneg %p406
      %p1170 = pneg %p430
      %p1171 = pneg %p427
      %p1172 = pneg %p451
      %p1173 = pneg %p448
      %p1174 = pneg %p472
      %p1175 = pneg %p469
      %p1176 = pneg %p493
      %p1177 = pneg %p490
      %p1178 = pneg %p514
      %p1179 = pneg %p511
      %p1180 = pneg %p535
      %p1181 = pneg %p532
      %p1182 = pneg %p556
      %p1183 = pneg %p553
      %p1184 = pneg %p577
      %p1185 = pneg %p574
      %p1186 = pneg %p598
      %p1187 = pneg %p595
      %p1188 = pneg %p619
      %p1189 = pneg %p616
      %p1190 = pneg %p640
      %p1191 = pneg %p637
      %p1192 = pneg %p661
      %p1193 = pneg %p658
      %p1194 = pneg %p682
      %p1195 = pneg %p679
      %p1196 = pneg %p703
      %p1197 = pneg %p700
      %p1198 = pneg %p724
      %p1199 = pneg %p721
      %p1200 = pneg %p745
      %p1201 = pneg %p742
      %p1202 = pneg %p766
      %p1203 = pneg %p763
      %p1204 = pneg %p787
      %p1205 = pneg %p784
      %p1206 = pneg %p808
      %p1207 = pneg %p805
      %p1208 = pneg %p829
      %p1209 = pneg %p826
      %p1210 = pneg %p850
      %p1211 = pneg %p847
      %p1212 = pneg %p871
      %p1213 = pneg %p868
      %p1214 = pneg %p892
      %p1215 = pneg %p889
      %p1216 = pneg %p913
      %p1217 = pneg %p910
      %p1218 = pneg %p934
      %p1219 = pneg %p931
      %p1220 = pneg %p955
      %p1221 = pneg %p952
      %p1222 = pneg %p981
      %p1223 = pneg %p978
      %p1224 = scmp.lt.s32.totalorder %s94, 1
      %s1225 = scalar_select %p1224, %s94, 1
      %s1226 = smul.addr %s1225, 2
      %s1227 = scalar_lea.vmem %s83, %s1226
      %p1228 = scmp.lt.s32.totalorder %s94, 1
      %s1229 = scalar_select %p1228, %s94, 1
      %s1230 = smul.addr %s1229, 26
      %s1231 = smul.addr %s1230, 8
      %s1232 = scalar_lea.vmem %s1, %s1231
      %p1233 = scmp.lt.s32.totalorder %s94, 1
      %s1234 = scalar_select %p1233, %s94, 1
      %s1235 = smul.addr %s1234, 2
      %s1236 = scalar_lea.vmem %s83, %s1235
      %v1238 = vld [vmem:[%s1232] sm:$0xff]
      %v1239 = vld [vmem:[%s1232 + $0x8] sm:$0xff]
      %v1240 = vld [vmem:[%s1232 + $0x10] sm:$0xff]
      %v1241 = vld [vmem:[%s1232 + $0x18] sm:$0xff]
      %v1242 = vld [vmem:[%s1232 + $0x20] sm:$0xff]
      %v1243 = vld [vmem:[%s1232 + $0x28] sm:$0xff]
      %v1244 = vld [vmem:[%s1232 + $0x30] sm:$0xff]
      %v1245 = vld [vmem:[%s1232 + $0x38] sm:$0xff]
      %v1246 = vld [vmem:[%s1232 + $0x40] sm:$0xff]
      %v1247 = vld [vmem:[%s1232 + $0x48] sm:$0xff]
      %v1248 = vld [vmem:[%s1232 + $0x50] sm:$0xff]
      %v1249 = vld [vmem:[%s1232 + $0x58] sm:$0xff]
      %v1250 = vld [vmem:[%s1232 + $0x60] sm:$0xff]
      %v1251 = vld [vmem:[%s1232 + $0x68] sm:$0xff]
      %v1252 = vld [vmem:[%s1232 + $0x70] sm:$0xff]
      %v1253 = vld [vmem:[%s1232 + $0x78] sm:$0xff]
      %v1254 = vld [vmem:[%s1232 + $0x80] sm:$0xff]
      %v1255 = vld [vmem:[%s1232 + $0x88] sm:$0xff]
      %v1256 = vld [vmem:[%s1232 + $0x90] sm:$0xff]
      %v1257 = vld [vmem:[%s1232 + $0x98] sm:$0xff]
      %v1258 = vld [vmem:[%s1232 + $0xa0] sm:$0xff]
      %v1259 = vld [vmem:[%s1232 + $0xa8] sm:$0xff]
      %v1260 = vld [vmem:[%s1232 + $0xb0] sm:$0xff]
      %v1261 = vld [vmem:[%s1232 + $0xb8] sm:$0xff]
      %v1262 = vld [vmem:[%s1232 + $0xc0] sm:$0xff]
      %v1263 = vld [vmem:[%s1232 + $0xc8] sm:$0xff]
      %v1264 = vld [vmem:[%s7] sm:$0xf]
      %v1265 = vld [vmem:[%s7 + $0x4] sm:$0xf]
      %v1266 = vld [vmem:[%s7 + $0x8] sm:$0xf]
      %v1267 = vld [vmem:[%s7 + $0xc] sm:$0xf]
      %v1268 = vld [vmem:[%s7 + $0x10] sm:$0xf]
      %v1269 = vld [vmem:[%s7 + $0x14] sm:$0xf]
      %v1270 = vld [vmem:[%s7 + $0x18] sm:$0xf]
      %v1271 = vld [vmem:[%s7 + $0x1c] sm:$0xf]
      %v1272 = vld [vmem:[%s7 + $0x20] sm:$0xf]
      %v1273 = vld [vmem:[%s7 + $0x24] sm:$0xf]
      %v1274 = vld [vmem:[%s7 + $0x28] sm:$0xf]
      %v1275 = vld [vmem:[%s7 + $0x2c] sm:$0xf]
      %v1276 = vld [vmem:[%s7 + $0x30] sm:$0xf]
      %v1277 = vld [vmem:[%s7 + $0x34] sm:$0xf]
      %v1278 = vld [vmem:[%s7 + $0x38] sm:$0xf]
      %v1279 = vrot.slane %v1238, 7
      %v1280 = vrot.slane %v1239, 7
      %v1281 = vrot.slane %v1240, 7
      %v1282 = vrot.slane %v1241, 7
      %v1283 = vrot.slane %v1242, 7
      %v1284 = vrot.slane %v1243, 7
      %v1285 = vrot.slane %v1244, 7
      %v1286 = vrot.slane %v1245, 7
      %v1287 = vrot.slane %v1246, 7
      %v1288 = vrot.slane %v1247, 7
      %v1289 = vrot.slane %v1248, 7
      %v1290 = vrot.slane %v1249, 7
      %v1291 = vrot.slane %v1250, 7
      %v1292 = vrot.slane %v1251, 7
      %v1293 = vrot.slane %v1252, 7
      %v1294 = vrot.slane %v1253, 7
      %v1295 = vrot.slane %v1254, 7
      %v1296 = vrot.slane %v1255, 7
      %v1297 = vrot.slane %v1256, 7
      %v1298 = vrot.slane %v1257, 7
      %v1299 = vrot.slane %v1258, 7
      %v1300 = vrot.slane %v1259, 7
      %v1301 = vrot.slane %v1260, 7
      %v1302 = vrot.slane %v1261, 7
      %v1303 = vrot.slane %v1262, 7
      %v1304 = vrot.slane %v1263, 7
      %v1305 = vlaneseq
      %v1306 = vshrl.u32 %v1305, 7
      %vm1307 = vcmp.lt.s32.totalorder %v1306, 1
      %v1308 = vsel %vm1307, %v1303, %v1304
      %v1309 = vsel %vm1307, %v1302, %v1303
      %v1310 = vsel %vm1307, %v1301, %v1302
      %v1311 = vsel %vm1307, %v1300, %v1301
      %v1312 = vsel %vm1307, %v1299, %v1300
      %v1313 = vsel %vm1307, %v1298, %v1299
      %v1314 = vsel %vm1307, %v1297, %v1298
      %v1315 = vsel %vm1307, %v1296, %v1297
      %v1316 = vsel %vm1307, %v1295, %v1296
      %v1317 = vsel %vm1307, %v1294, %v1295
      %v1318 = vsel %vm1307, %v1293, %v1294
      %v1319 = vsel %vm1307, %v1292, %v1293
      %v1320 = vsel %vm1307, %v1291, %v1292
      %v1321 = vsel %vm1307, %v1290, %v1291
      %v1322 = vsel %vm1307, %v1289, %v1290
      %v1323 = vsel %vm1307, %v1288, %v1289
      %v1324 = vsel %vm1307, %v1287, %v1288
      %v1325 = vsel %vm1307, %v1286, %v1287
      %v1326 = vsel %vm1307, %v1285, %v1286
      %v1327 = vsel %vm1307, %v1284, %v1285
      %v1328 = vsel %vm1307, %v1283, %v1284
      %v1329 = vsel %vm1307, %v1282, %v1283
      %v1330 = vsel %vm1307, %v1281, %v1282
      %v1331 = vsel %vm1307, %v1280, %v1281
      %v1332 = vsel %vm1307, %v1279, %v1280
      %v1333 = vsel %vm1307, %v1304, %v1279
      %v1334 = vrot.slane %v1238, 1
      %v1335 = vrot.slane %v1239, 1
      %v1336 = vrot.slane %v1240, 1
      %v1337 = vrot.slane %v1241, 1
      %v1338 = vrot.slane %v1242, 1
      %v1339 = vrot.slane %v1243, 1
      %v1340 = vrot.slane %v1244, 1
      %v1341 = vrot.slane %v1245, 1
      %v1342 = vrot.slane %v1246, 1
      %v1343 = vrot.slane %v1247, 1
      %v1344 = vrot.slane %v1248, 1
      %v1345 = vrot.slane %v1249, 1
      %v1346 = vrot.slane %v1250, 1
      %v1347 = vrot.slane %v1251, 1
      %v1348 = vrot.slane %v1252, 1
      %v1349 = vrot.slane %v1253, 1
      %v1350 = vrot.slane %v1254, 1
      %v1351 = vrot.slane %v1255, 1
      %v1352 = vrot.slane %v1256, 1
      %v1353 = vrot.slane %v1257, 1
      %v1354 = vrot.slane %v1258, 1
      %v1355 = vrot.slane %v1259, 1
      %v1356 = vrot.slane %v1260, 1
      %v1357 = vrot.slane %v1261, 1
      %v1358 = vrot.slane %v1262, 1
      %v1359 = vrot.slane %v1263, 1
      %vm1360 = vcmp.lt.s32.totalorder %v1306, 7
      %v1361 = vsel %vm1360, %v1358, %v1359
      %v1362 = vsel %vm1360, %v1357, %v1358
      %v1363 = vsel %vm1360, %v1356, %v1357
      %v1364 = vsel %vm1360, %v1355, %v1356
      %v1365 = vsel %vm1360, %v1354, %v1355
      %v1366 = vsel %vm1360, %v1353, %v1354
      %v1367 = vsel %vm1360, %v1352, %v1353
      %v1368 = vsel %vm1360, %v1351, %v1352
      %v1369 = vsel %vm1360, %v1350, %v1351
      %v1370 = vsel %vm1360, %v1349, %v1350
      %v1371 = vsel %vm1360, %v1348, %v1349
      %v1372 = vsel %vm1360, %v1347, %v1348
      %v1373 = vsel %vm1360, %v1346, %v1347
      %v1374 = vsel %vm1360, %v1345, %v1346
      %v1375 = vsel %vm1360, %v1344, %v1345
      %v1376 = vsel %vm1360, %v1343, %v1344
      %v1377 = vsel %vm1360, %v1342, %v1343
      %v1378 = vsel %vm1360, %v1341, %v1342
      %v1379 = vsel %vm1360, %v1340, %v1341
      %v1380 = vsel %vm1360, %v1339, %v1340
      %v1381 = vsel %vm1360, %v1338, %v1339
      %v1382 = vsel %vm1360, %v1337, %v1338
      %v1383 = vsel %vm1360, %v1336, %v1337
      %v1384 = vsel %vm1360, %v1335, %v1336
      %v1385 = vsel %vm1360, %v1334, %v1335
      %v1386 = vsel %vm1360, %v1359, %v1334
      %1413 = vrot.lane.b32.xlu0 %v1238, 40
      %v1414 = vpop.permute.xlu0 %1413
      %1415 = vrot.lane.b32.xlu0 %v1239, 40
      %v1416 = vpop.permute.xlu0 %1415
      %1417 = vrot.lane.b32.xlu0 %v1240, 40
      %v1418 = vpop.permute.xlu0 %1417
      %1419 = vrot.lane.b32.xlu0 %v1241, 40
      %v1420 = vpop.permute.xlu0 %1419
      %1421 = vrot.lane.b32.xlu0 %v1242, 40
      %v1422 = vpop.permute.xlu0 %1421
      %1423 = vrot.lane.b32.xlu0 %v1243, 40
      %v1424 = vpop.permute.xlu0 %1423
      %1425 = vrot.lane.b32.xlu0 %v1244, 40
      %v1426 = vpop.permute.xlu0 %1425
      %1427 = vrot.lane.b32.xlu0 %v1245, 40
      %v1428 = vpop.permute.xlu0 %1427
      %1429 = vrot.lane.b32.xlu0 %v1246, 40
      %v1430 = vpop.permute.xlu0 %1429
      %1431 = vrot.lane.b32.xlu0 %v1247, 40
      %v1432 = vpop.permute.xlu0 %1431
      %1433 = vrot.lane.b32.xlu0 %v1248, 40
      %v1434 = vpop.permute.xlu0 %1433
      %1435 = vrot.lane.b32.xlu0 %v1249, 40
      %v1436 = vpop.permute.xlu0 %1435
      %1437 = vrot.lane.b32.xlu0 %v1250, 40
      %v1438 = vpop.permute.xlu0 %1437
      %1439 = vrot.lane.b32.xlu0 %v1251, 40
      %v1440 = vpop.permute.xlu0 %1439
      %1441 = vrot.lane.b32.xlu0 %v1252, 40
      %v1442 = vpop.permute.xlu0 %1441
      %1443 = vrot.lane.b32.xlu0 %v1253, 40
      %v1444 = vpop.permute.xlu0 %1443
      %1445 = vrot.lane.b32.xlu0 %v1254, 40
      %v1446 = vpop.permute.xlu0 %1445
      %1447 = vrot.lane.b32.xlu0 %v1255, 40
      %v1448 = vpop.permute.xlu0 %1447
      %1449 = vrot.lane.b32.xlu0 %v1256, 40
      %v1450 = vpop.permute.xlu0 %1449
      %1451 = vrot.lane.b32.xlu0 %v1257, 40
      %v1452 = vpop.permute.xlu0 %1451
      %1453 = vrot.lane.b32.xlu0 %v1258, 40
      %v1454 = vpop.permute.xlu0 %1453
      %1455 = vrot.lane.b32.xlu0 %v1259, 40
      %v1456 = vpop.permute.xlu0 %1455
      %1457 = vrot.lane.b32.xlu0 %v1260, 40
      %v1458 = vpop.permute.xlu0 %1457
      %1459 = vrot.lane.b32.xlu0 %v1261, 40
      %v1460 = vpop.permute.xlu0 %1459
      %1461 = vrot.lane.b32.xlu0 %v1262, 40
      %v1462 = vpop.permute.xlu0 %1461
      %1463 = vrot.lane.b32.xlu0 %v1263, 40
      %v1464 = vpop.permute.xlu0 %1463
      %1517 = vrot.lane.b32.xlu0 %v1385, 80
      %v1518 = vpop.permute.xlu0 %1517
      %1519 = vrot.lane.b32.xlu0 %v1384, 80
      %v1520 = vpop.permute.xlu0 %1519
      %1521 = vrot.lane.b32.xlu0 %v1383, 80
      %v1522 = vpop.permute.xlu0 %1521
      %1523 = vrot.lane.b32.xlu0 %v1382, 80
      %v1524 = vpop.permute.xlu0 %1523
      %1525 = vrot.lane.b32.xlu0 %v1381, 80
      %v1526 = vpop.permute.xlu0 %1525
      %1527 = vrot.lane.b32.xlu0 %v1380, 80
      %v1528 = vpop.permute.xlu0 %1527
      %1529 = vrot.lane.b32.xlu0 %v1379, 80
      %v1530 = vpop.permute.xlu0 %1529
      %1531 = vrot.lane.b32.xlu0 %v1378, 80
      %v1532 = vpop.permute.xlu0 %1531
      %1533 = vrot.lane.b32.xlu0 %v1377, 80
      %v1534 = vpop.permute.xlu0 %1533
      %1535 = vrot.lane.b32.xlu0 %v1376, 80
      %v1536 = vpop.permute.xlu0 %1535
      %1537 = vrot.lane.b32.xlu0 %v1375, 80
      %v1538 = vpop.permute.xlu0 %1537
      %1539 = vrot.lane.b32.xlu0 %v1374, 80
      %v1540 = vpop.permute.xlu0 %1539
      %1541 = vrot.lane.b32.xlu0 %v1373, 80
      %v1542 = vpop.permute.xlu0 %1541
      %1543 = vrot.lane.b32.xlu0 %v1372, 80
      %v1544 = vpop.permute.xlu0 %1543
      %1545 = vrot.lane.b32.xlu0 %v1371, 80
      %v1546 = vpop.permute.xlu0 %1545
      %1547 = vrot.lane.b32.xlu0 %v1370, 80
      %v1548 = vpop.permute.xlu0 %1547
      %1549 = vrot.lane.b32.xlu0 %v1369, 80
      %v1550 = vpop.permute.xlu0 %1549
      %1551 = vrot.lane.b32.xlu0 %v1368, 80
      %v1552 = vpop.permute.xlu0 %1551
      %1553 = vrot.lane.b32.xlu0 %v1367, 80
      %v1554 = vpop.permute.xlu0 %1553
      %1555 = vrot.lane.b32.xlu0 %v1366, 80
      %v1556 = vpop.permute.xlu0 %1555
      %1557 = vrot.lane.b32.xlu0 %v1365, 80
      %v1558 = vpop.permute.xlu0 %1557
      %1559 = vrot.lane.b32.xlu0 %v1364, 80
      %v1560 = vpop.permute.xlu0 %1559
      %1561 = vrot.lane.b32.xlu0 %v1363, 80
      %v1562 = vpop.permute.xlu0 %1561
      %1563 = vrot.lane.b32.xlu0 %v1362, 80
      %v1564 = vpop.permute.xlu0 %1563
      %1565 = vrot.lane.b32.xlu0 %v1361, 80
      %v1566 = vpop.permute.xlu0 %1565
      %1567 = vrot.lane.b32.xlu0 %v1386, 80
      %v1568 = vpop.permute.xlu0 %1567
      %vm1595 = vcmask 326656
      %v1596 = vsel %vm1595, %v1333, %v1414
      %v1597 = vsel %vm1595, %v1332, %v1416
      %v1598 = vsel %vm1595, %v1331, %v1418
      %v1599 = vsel %vm1595, %v1330, %v1420
      %v1600 = vsel %vm1595, %v1329, %v1422
      %v1601 = vsel %vm1595, %v1328, %v1424
      %v1602 = vsel %vm1595, %v1327, %v1426
      %v1603 = vsel %vm1595, %v1326, %v1428
      %v1604 = vsel %vm1595, %v1325, %v1430
      %v1605 = vsel %vm1595, %v1324, %v1432
      %v1606 = vsel %vm1595, %v1323, %v1434
      %v1607 = vsel %vm1595, %v1322, %v1436
      %v1608 = vsel %vm1595, %v1321, %v1438
      %v1609 = vsel %vm1595, %v1320, %v1440
      %v1610 = vsel %vm1595, %v1319, %v1442
      %v1611 = vsel %vm1595, %v1318, %v1444
      %v1612 = vsel %vm1595, %v1317, %v1446
      %v1613 = vsel %vm1595, %v1316, %v1448
      %v1614 = vsel %vm1595, %v1315, %v1450
      %v1615 = vsel %vm1595, %v1314, %v1452
      %v1616 = vsel %vm1595, %v1313, %v1454
      %v1617 = vsel %vm1595, %v1312, %v1456
      %v1618 = vsel %vm1595, %v1311, %v1458
      %v1619 = vsel %vm1595, %v1310, %v1460
      %v1620 = vsel %vm1595, %v1309, %v1462
      %v1621 = vsel %vm1595, %v1308, %v1464
      %vm1622 = vcmask 654336
      %v1623 = vsel %vm1622, %v1596, %v1518
      %v1624 = vsel %vm1622, %v1597, %v1520
      %v1625 = vsel %vm1622, %v1598, %v1522
      %v1626 = vsel %vm1622, %v1599, %v1524
      %v1627 = vsel %vm1622, %v1600, %v1526
      %v1628 = vsel %vm1622, %v1601, %v1528
      %v1629 = vsel %vm1622, %v1602, %v1530
      %v1630 = vsel %vm1622, %v1603, %v1532
      %v1631 = vsel %vm1622, %v1604, %v1534
      %v1632 = vsel %vm1622, %v1605, %v1536
      %v1633 = vsel %vm1622, %v1606, %v1538
      %v1634 = vsel %vm1622, %v1607, %v1540
      %v1635 = vsel %vm1622, %v1608, %v1542
      %v1636 = vsel %vm1622, %v1609, %v1544
      %v1637 = vsel %vm1622, %v1610, %v1546
      %v1638 = vsel %vm1622, %v1611, %v1548
      %v1639 = vsel %vm1622, %v1612, %v1550
      %v1640 = vsel %vm1622, %v1613, %v1552
      %v1641 = vsel %vm1622, %v1614, %v1554
      %v1642 = vsel %vm1622, %v1615, %v1556
      %v1643 = vsel %vm1622, %v1616, %v1558
      %v1644 = vsel %vm1622, %v1617, %v1560
      %v1645 = vsel %vm1622, %v1618, %v1562
      %v1646 = vsel %vm1622, %v1619, %v1564
      %v1647 = vsel %vm1622, %v1620, %v1566
      %v1648 = vsel %vm1622, %v1621, %v1568
      %v1649 = vpack.c.bf16 %v1624, %v1623
      %v1650 = vpack.c.bf16 %v1626, %v1625
      %v1651 = vpack.c.bf16 %v1628, %v1627
      %v1652 = vpack.c.bf16 %v1630, %v1629
      %v1653 = vpack.c.bf16 %v1632, %v1631
      %v1654 = vpack.c.bf16 %v1634, %v1633
      %v1655 = vpack.c.bf16 %v1636, %v1635
      %v1656 = vpack.c.bf16 %v1638, %v1637
      %v1657 = vpack.c.bf16 %v1640, %v1639
      %v1658 = vpack.c.bf16 %v1642, %v1641
      %v1659 = vpack.c.bf16 %v1644, %v1643
      %v1660 = vpack.c.bf16 %v1646, %v1645
      %v1661 = vpack.c.bf16 %v1648, %v1647
      %v1662 = vld [vmem:[%s9] sm:$0x1]
      %v1664 = vperm.slane %v1662, 0
      %v1681 = vunpack.c.l.b16 %v1264
      %v1682 = vunpack.c.l.b16 %v1265
      %v1683 = vunpack.c.l.b16 %v1266
      %v1684 = vunpack.c.l.b16 %v1267
      %v1685 = vunpack.c.l.b16 %v1268
      %v1686 = vunpack.c.l.b16 %v1269
      %v1687 = vunpack.c.l.b16 %v1270
      %v1688 = vunpack.c.l.b16 %v1271
      %v1689 = vunpack.c.l.b16 %v1272
      %v1690 = vunpack.c.l.b16 %v1273
      %v1691 = vunpack.c.l.b16 %v1274
      %v1692 = vunpack.c.l.b16 %v1275
      %v1693 = vunpack.c.l.b16 %v1276
      %v1694 = vunpack.c.l.b16 %v1277
      %v1695 = vunpack.c.l.b16 %v1278
      %v1696 = vpack.c.b16 %v1682, %v1681
      %v1697 = vpack.c.b16 %v1684, %v1683
      %v1698 = vpack.c.b16 %v1686, %v1685
      %v1699 = vpack.c.b16 %v1688, %v1687
      %v1700 = vpack.c.b16 %v1690, %v1689
      %v1701 = vpack.c.b16 %v1692, %v1691
      %v1702 = vpack.c.b16 %v1694, %v1693
      %v1703 = vpack.c.b16 %v1695, %v1695
      %vm1711 = vcmask 982016
      %v1713 = vsel %vm1711, %v1649, 0
      %v1716 = vsel %vm1711, %v1650, 0
      %v1719 = vsel %vm1711, %v1651, 0
      %v1722 = vsel %vm1711, %v1652, 0
      %v1725 = vsel %vm1711, %v1653, 0
      %v1728 = vsel %vm1711, %v1654, 0
      %v1731 = vsel %vm1711, %v1655, 0
      %v1734 = vsel %vm1711, %v1656, 0
      %v1737 = vsel %vm1711, %v1657, 0
      %v1740 = vsel %vm1711, %v1658, 0
      %v1743 = vsel %vm1711, %v1659, 0
      %v1746 = vsel %vm1711, %v1660, 0
      %v1749 = vsel %vm1711, %v1661, 0
      %vm1751 = vcmask 1043456
      %v1753 = vsel %vm1751, %v1703, 0
      %1755 = vmatpush.bf16.msra.mxu0 %v1753
      %1756 = vmatpush.bf16.msra.mxu0 %v1702
      %1757 = vmatpush.bf16.msra.mxu0 %v1701
      %1758 = vmatpush.bf16.msra.mxu0 %v1700
      %1759 = vmatpush.bf16.msra.mxu0 %v1699
      %1760 = vmatpush.bf16.msra.mxu0 %v1698
      %1761 = vmatpush.bf16.msra.mxu0 %v1697
      %1762 = vmatpush.bf16.msra.mxu0 %v1696
      %1763 = vmatmul.bf16.gmra.mxu0 %v1713
      %v1764 = vpop.f32.mrf.mxu0
      %v1765 = vadd.f32 %v1664, %v1764
      %v1766 = vpop.f32.mrf.mxu0
      %v1767 = vadd.f32 %v1664, %v1766
      %1768 = vmatmul.bf16.gmra.mxu0 %v1716
      %v1769 = vpop.f32.mrf.mxu0
      %v1770 = vadd.f32 %v1664, %v1769
      %v1771 = vpop.f32.mrf.mxu0
      %v1772 = vadd.f32 %v1664, %v1771
      %1773 = vmatmul.bf16.gmra.mxu0 %v1719
      %v1774 = vpop.f32.mrf.mxu0
      %v1775 = vadd.f32 %v1664, %v1774
      %v1776 = vpop.f32.mrf.mxu0
      %v1777 = vadd.f32 %v1664, %v1776
      %1778 = vmatmul.bf16.gmra.mxu0 %v1722
      %v1779 = vpop.f32.mrf.mxu0
      %v1780 = vadd.f32 %v1664, %v1779
      %v1781 = vpop.f32.mrf.mxu0
      %v1782 = vadd.f32 %v1664, %v1781
      %1783 = vmatmul.bf16.gmra.mxu0 %v1725
      %v1784 = vpop.f32.mrf.mxu0
      %v1785 = vadd.f32 %v1664, %v1784
      %v1786 = vpop.f32.mrf.mxu0
      %v1787 = vadd.f32 %v1664, %v1786
      %1788 = vmatmul.bf16.gmra.mxu0 %v1728
      %v1789 = vpop.f32.mrf.mxu0
      %v1790 = vadd.f32 %v1664, %v1789
      %v1791 = vpop.f32.mrf.mxu0
      %v1792 = vadd.f32 %v1664, %v1791
      %1793 = vmatmul.bf16.gmra.mxu0 %v1731
      %v1794 = vpop.f32.mrf.mxu0
      %v1795 = vadd.f32 %v1664, %v1794
      %v1796 = vpop.f32.mrf.mxu0
      %v1797 = vadd.f32 %v1664, %v1796
      %1798 = vmatmul.bf16.gmra.mxu0 %v1734
      %v1799 = vpop.f32.mrf.mxu0
      %v1800 = vadd.f32 %v1664, %v1799
      %v1801 = vpop.f32.mrf.mxu0
      %v1802 = vadd.f32 %v1664, %v1801
      %1803 = vmatmul.bf16.gmra.mxu0 %v1737
      %v1804 = vpop.f32.mrf.mxu0
      %v1805 = vadd.f32 %v1664, %v1804
      %v1806 = vpop.f32.mrf.mxu0
      %v1807 = vadd.f32 %v1664, %v1806
      %1808 = vmatmul.bf16.gmra.mxu0 %v1740
      %v1809 = vpop.f32.mrf.mxu0
      %v1810 = vadd.f32 %v1664, %v1809
      %v1811 = vpop.f32.mrf.mxu0
      %v1812 = vadd.f32 %v1664, %v1811
      %1813 = vmatmul.bf16.gmra.mxu0 %v1743
      %v1814 = vpop.f32.mrf.mxu0
      %v1815 = vadd.f32 %v1664, %v1814
      %v1816 = vpop.f32.mrf.mxu0
      %v1817 = vadd.f32 %v1664, %v1816
      %1818 = vmatmul.bf16.gmra.mxu0 %v1746
      %v1819 = vpop.f32.mrf.mxu0
      %v1820 = vadd.f32 %v1664, %v1819
      %v1821 = vpop.f32.mrf.mxu0
      %v1822 = vadd.f32 %v1664, %v1821
      %1823 = vmatmul.bf16.gmra.mxu0 %v1749
      %v1824 = vpop.f32.mrf.mxu0
      %v1825 = vadd.f32 %v1664, %v1824
      %v1826 = vpop.f32.mrf.mxu0
      %v1827 = vadd.f32 %v1664, %v1826
      %1828 = vdwg.mxu0
      %v1829 = vld [vmem:[%s5] sm:$0xff]
      %v1830 = vld [vmem:[%s5 + $0x8] sm:$0xff]
      %v1831 = vld [vmem:[%s5 + $0x10] sm:$0xff]
      %v1832 = vld [vmem:[%s5 + $0x18] sm:$0xff]
      %v1833 = vld [vmem:[%s5 + $0x20] sm:$0xff]
      %v1834 = vld [vmem:[%s5 + $0x28] sm:$0xff]
      %v1835 = vld [vmem:[%s5 + $0x30] sm:$0xff]
      %v1836 = vld [vmem:[%s5 + $0x38] sm:$0xff]
      %v1837 = vld [vmem:[%s5 + $0x40] sm:$0xff]
      %v1838 = vld [vmem:[%s5 + $0x48] sm:$0xff]
      %v1839 = vld [vmem:[%s5 + $0x50] sm:$0xff]
      %v1840 = vld [vmem:[%s5 + $0x58] sm:$0xff]
      %v1841 = vld [vmem:[%s5 + $0x60] sm:$0xff]
      %v1842 = vld [vmem:[%s5 + $0x68] sm:$0xff]
      %v1843 = vld [vmem:[%s5 + $0x70] sm:$0xff]
      %v1844 = vld [vmem:[%s5 + $0x78] sm:$0xff]
      %v1845 = vld [vmem:[%s5 + $0x80] sm:$0xff]
      %v1846 = vld [vmem:[%s5 + $0x88] sm:$0xff]
      %v1847 = vld [vmem:[%s5 + $0x90] sm:$0xff]
      %v1848 = vld [vmem:[%s5 + $0x98] sm:$0xff]
      %v1849 = vld [vmem:[%s5 + $0xa0] sm:$0xff]
      %v1850 = vld [vmem:[%s5 + $0xa8] sm:$0xff]
      %v1851 = vld [vmem:[%s5 + $0xb0] sm:$0xff]
      %v1852 = vld [vmem:[%s5 + $0xb8] sm:$0xff]
      %v1853 = vld [vmem:[%s5 + $0xc0] sm:$0xff]
      %v1854 = vld [vmem:[%s5 + $0xc8] sm:$0xff]
      %1856 = vset.pattern.permute.xlu0 0
      %1857 = vperm.xlu0 %1856, %v1829
      %v1858 = vpop.permute.xlu0 %1857
      %1861 = vset.pattern.permute.xlu0 0
      %1862 = vperm.xlu0 %1861, %v1830
      %v1863 = vpop.permute.xlu0 %1862
      %1866 = vset.pattern.permute.xlu0 0
      %1867 = vperm.xlu0 %1866, %v1831
      %v1868 = vpop.permute.xlu0 %1867
      %1871 = vset.pattern.permute.xlu0 0
      %1872 = vperm.xlu0 %1871, %v1832
      %v1873 = vpop.permute.xlu0 %1872
      %1876 = vset.pattern.permute.xlu0 0
      %1877 = vperm.xlu0 %1876, %v1833
      %v1878 = vpop.permute.xlu0 %1877
      %1881 = vset.pattern.permute.xlu0 0
      %1882 = vperm.xlu0 %1881, %v1834
      %v1883 = vpop.permute.xlu0 %1882
      %1886 = vset.pattern.permute.xlu0 0
      %1887 = vperm.xlu0 %1886, %v1835
      %v1888 = vpop.permute.xlu0 %1887
      %1891 = vset.pattern.permute.xlu0 0
      %1892 = vperm.xlu0 %1891, %v1836
      %v1893 = vpop.permute.xlu0 %1892
      %1896 = vset.pattern.permute.xlu0 0
      %1897 = vperm.xlu0 %1896, %v1837
      %v1898 = vpop.permute.xlu0 %1897
      %1901 = vset.pattern.permute.xlu0 0
      %1902 = vperm.xlu0 %1901, %v1838
      %v1903 = vpop.permute.xlu0 %1902
      %1906 = vset.pattern.permute.xlu0 0
      %1907 = vperm.xlu0 %1906, %v1839
      %v1908 = vpop.permute.xlu0 %1907
      %1911 = vset.pattern.permute.xlu0 0
      %1912 = vperm.xlu0 %1911, %v1840
      %v1913 = vpop.permute.xlu0 %1912
      %1916 = vset.pattern.permute.xlu0 0
      %1917 = vperm.xlu0 %1916, %v1841
      %v1918 = vpop.permute.xlu0 %1917
      %1921 = vset.pattern.permute.xlu0 0
      %1922 = vperm.xlu0 %1921, %v1842
      %v1923 = vpop.permute.xlu0 %1922
      %1926 = vset.pattern.permute.xlu0 0
      %1927 = vperm.xlu0 %1926, %v1843
      %v1928 = vpop.permute.xlu0 %1927
      %1931 = vset.pattern.permute.xlu0 0
      %1932 = vperm.xlu0 %1931, %v1844
      %v1933 = vpop.permute.xlu0 %1932
      %1936 = vset.pattern.permute.xlu0 0
      %1937 = vperm.xlu0 %1936, %v1845
      %v1938 = vpop.permute.xlu0 %1937
      %1941 = vset.pattern.permute.xlu0 0
      %1942 = vperm.xlu0 %1941, %v1846
      %v1943 = vpop.permute.xlu0 %1942
      %1946 = vset.pattern.permute.xlu0 0
      %1947 = vperm.xlu0 %1946, %v1847
      %v1948 = vpop.permute.xlu0 %1947
      %1951 = vset.pattern.permute.xlu0 0
      %1952 = vperm.xlu0 %1951, %v1848
      %v1953 = vpop.permute.xlu0 %1952
      %1956 = vset.pattern.permute.xlu0 0
      %1957 = vperm.xlu0 %1956, %v1849
      %v1958 = vpop.permute.xlu0 %1957
      %1961 = vset.pattern.permute.xlu0 0
      %1962 = vperm.xlu0 %1961, %v1850
      %v1963 = vpop.permute.xlu0 %1962
      %1966 = vset.pattern.permute.xlu0 0
      %1967 = vperm.xlu0 %1966, %v1851
      %v1968 = vpop.permute.xlu0 %1967
      %1971 = vset.pattern.permute.xlu0 0
      %1972 = vperm.xlu0 %1971, %v1852
      %v1973 = vpop.permute.xlu0 %1972
      %1976 = vset.pattern.permute.xlu0 0
      %1977 = vperm.xlu0 %1976, %v1853
      %v1978 = vpop.permute.xlu0 %1977
      %1981 = vset.pattern.permute.xlu0 0
      %1982 = vperm.xlu0 %1981, %v1854
      %v1983 = vpop.permute.xlu0 %1982
      %v1985 = vmul.f32 %v1765, %v1858
      %v1986 = vmul.f32 %v1767, %v1863
      %v1987 = vmul.f32 %v1770, %v1868
      %v1988 = vmul.f32 %v1772, %v1873
      %v1989 = vmul.f32 %v1775, %v1878
      %v1990 = vmul.f32 %v1777, %v1883
      %v1991 = vmul.f32 %v1780, %v1888
      %v1992 = vmul.f32 %v1782, %v1893
      %v1993 = vmul.f32 %v1785, %v1898
      %v1994 = vmul.f32 %v1787, %v1903
      %v1995 = vmul.f32 %v1790, %v1908
      %v1996 = vmul.f32 %v1792, %v1913
      %v1997 = vmul.f32 %v1795, %v1918
      %v1998 = vmul.f32 %v1797, %v1923
      %v1999 = vmul.f32 %v1800, %v1928
      %v2000 = vmul.f32 %v1802, %v1933
      %v2001 = vmul.f32 %v1805, %v1938
      %v2002 = vmul.f32 %v1807, %v1943
      %v2003 = vmul.f32 %v1810, %v1948
      %v2004 = vmul.f32 %v1812, %v1953
      %v2005 = vmul.f32 %v1815, %v1958
      %v2006 = vmul.f32 %v1817, %v1963
      %v2007 = vmul.f32 %v1820, %v1968
      %v2008 = vmul.f32 %v1822, %v1973
      %v2009 = vmul.f32 %v1825, %v1978
      %v2010 = vmul.f32 %v1827, %v1983
      %v2011 = vld [vmem:[%s11] sm:$0xff]
      %v2012 = vld [vmem:[%s11 + $0x8] sm:$0xff]
      %v2013 = vld [vmem:[%s11 + $0x10] sm:$0xff]
      %v2014 = vld [vmem:[%s11 + $0x18] sm:$0xff]
      %v2015 = vld [vmem:[%s11 + $0x20] sm:$0xff]
      %v2016 = vld [vmem:[%s11 + $0x28] sm:$0xff]
      %v2017 = vld [vmem:[%s11 + $0x30] sm:$0xff]
      %v2018 = vld [vmem:[%s11 + $0x38] sm:$0xff]
      %v2019 = vld [vmem:[%s11 + $0x40] sm:$0xff]
      %v2020 = vld [vmem:[%s11 + $0x48] sm:$0xff]
      %v2021 = vld [vmem:[%s11 + $0x50] sm:$0xff]
      %v2022 = vld [vmem:[%s11 + $0x58] sm:$0xff]
      %v2023 = vld [vmem:[%s11 + $0x60] sm:$0xff]
      %v2024 = vld [vmem:[%s11 + $0x68] sm:$0xff]
      %v2025 = vld [vmem:[%s13] sm:$0xf]
      %v2026 = vld [vmem:[%s13 + $0x4] sm:$0xf]
      %v2027 = vld [vmem:[%s13 + $0x8] sm:$0xf]
      %v2028 = vld [vmem:[%s13 + $0xc] sm:$0xf]
      %v2029 = vld [vmem:[%s13 + $0x10] sm:$0xf]
      %v2030 = vld [vmem:[%s13 + $0x14] sm:$0xf]
      %v2031 = vld [vmem:[%s13 + $0x18] sm:$0xf]
      %v2032 = vld [vmem:[%s13 + $0x1c] sm:$0xf]
      %v2033 = vld [vmem:[%s13 + $0x20] sm:$0xf]
      %v2034 = vld [vmem:[%s15] sm:$0xf]
      %v2035 = vld [vmem:[%s15 + $0x4] sm:$0xf]
      %v2036 = vld [vmem:[%s15 + $0x8] sm:$0xf]
      %v2037 = vld [vmem:[%s15 + $0xc] sm:$0xf]
      %v2038 = vld [vmem:[%s15 + $0x10] sm:$0xf]
      %v2039 = vld [vmem:[%s15 + $0x14] sm:$0xf]
      %v2040 = vld [vmem:[%s15 + $0x18] sm:$0xf]
      %v2041 = vld [vmem:[%s15 + $0x1c] sm:$0xf]
      %v2042 = vld [vmem:[%s15 + $0x20] sm:$0xf]
      %v2043 = vld [vmem:[%s15 + $0x24] sm:$0xf]
      %v2044 = vld [vmem:[%s15 + $0x28] sm:$0xf]
      %v2045 = vld [vmem:[%s15 + $0x2c] sm:$0xf]
      %v2046 = vld [vmem:[%s17] sm:$0xf]
      %v2047 = vld [vmem:[%s17 + $0x4] sm:$0xf]
      %v2048 = vld [vmem:[%s17 + $0x8] sm:$0xf]
      %v2049 = vld [vmem:[%s19] sm:$0xff]
      %v2050 = vld [vmem:[%s19 + $0x8] sm:$0xff]
      %v2051 = vld [vmem:[%s19 + $0x10] sm:$0xff]
      %v2052 = vld [vmem:[%s19 + $0x18] sm:$0xff]
      %v2053 = vld [vmem:[%s19 + $0x20] sm:$0xff]
      %v2054 = vld [vmem:[%s19 + $0x28] sm:$0xff]
      %v2055 = vld [vmem:[%s19 + $0x30] sm:$0xff]
      %v2056 = vld [vmem:[%s19 + $0x38] sm:$0xff]
      %v2057 = vld [vmem:[%s19 + $0x40] sm:$0xff]
      %v2058 = vld [vmem:[%s19 + $0x48] sm:$0xff]
      %v2059 = vld [vmem:[%s19 + $0x50] sm:$0xff]
      %v2060 = vld [vmem:[%s19 + $0x58] sm:$0xff]
      %v2061 = vld [vmem:[%s19 + $0x60] sm:$0xff]
      %v2062 = vld [vmem:[%s19 + $0x68] sm:$0xff]
      %v2063 = vld [vmem:[%s21] sm:$0xff]
      %v2064 = vld [vmem:[%s21 + $0x8] sm:$0xf]
      %v2065 = vld [vmem:[%s21 + $0xc] sm:$0xff]
      %v2066 = vld [vmem:[%s21 + $0x14] sm:$0xf]
      %v2067 = vld [vmem:[%s21 + $0x18] sm:$0xff]
      %v2068 = vld [vmem:[%s21 + $0x20] sm:$0xf]
      %v2069 = vld [vmem:[%s21 + $0x24] sm:$0xff]
      %v2070 = vld [vmem:[%s21 + $0x2c] sm:$0xf]
      %v2071 = vld [vmem:[%s23] sm:$0x7]
      %v2072 = vld [vmem:[%s25] sm:$0xf]
      %v2073 = vld [vmem:[%s25 + $0x4] sm:$0xf]
      %v2074 = vld [vmem:[%s25 + $0x8] sm:$0xf]
      %v2075 = vld [vmem:[%s25 + $0xc] sm:$0xf]
      %v2076 = vld [vmem:[%s25 + $0x10] sm:$0xf]
      %v2077 = vld [vmem:[%s25 + $0x14] sm:$0xf]
      %v2078 = vld [vmem:[%s25 + $0x18] sm:$0xf]
      %v2079 = vld [vmem:[%s25 + $0x1c] sm:$0xf]
      %v2080 = vld [vmem:[%s25 + $0x20] sm:$0xf]
      %v2081 = vld [vmem:[%s25 + $0x24] sm:$0xf]
      %v2082 = vld [vmem:[%s25 + $0x28] sm:$0xf]
      %v2083 = vld [vmem:[%s25 + $0x2c] sm:$0xf]
      %v2084 = vld [vmem:[%s25 + $0x30] sm:$0xf]
      %v2085 = vld [vmem:[%s25 + $0x34] sm:$0xf]
      %v2086 = vld [vmem:[%s25 + $0x38] sm:$0xf]
      %v2087 = vld [vmem:[%s25 + $0x3c] sm:$0xf]
      %v2088 = vld [vmem:[%s27] sm:$0x1]
      %v2089 = vpack.c.bf16 %v1986, %v1985
      %v2090 = vpack.c.bf16 %v1988, %v1987
      %v2091 = vpack.c.bf16 %v1990, %v1989
      %v2092 = vpack.c.bf16 %v1992, %v1991
      %v2093 = vpack.c.bf16 %v1994, %v1993
      %v2094 = vpack.c.bf16 %v1996, %v1995
      %v2095 = vpack.c.bf16 %v1998, %v1997
      %v2096 = vpack.c.bf16 %v2000, %v1999
      %v2097 = vpack.c.bf16 %v2002, %v2001
      %v2098 = vpack.c.bf16 %v2004, %v2003
      %v2099 = vpack.c.bf16 %v2006, %v2005
      %v2100 = vpack.c.bf16 %v2008, %v2007
      %v2101 = vpack.c.bf16 %v2010, %v2009
      %v2116 = vunpack.c.l.b16 %v2011
      %v2117 = vunpack.c.h.b16 %v2011
      %v2118 = vunpack.c.l.b16 %v2012
      %v2119 = vunpack.c.h.b16 %v2012
      %v2120 = vunpack.c.l.b16 %v2013
      %v2121 = vunpack.c.h.b16 %v2013
      %v2122 = vunpack.c.l.b16 %v2014
      %v2123 = vunpack.c.h.b16 %v2014
      %v2124 = vunpack.c.l.b16 %v2015
      %v2125 = vunpack.c.h.b16 %v2015
      %v2126 = vunpack.c.l.b16 %v2016
      %v2127 = vunpack.c.h.b16 %v2016
      %v2128 = vunpack.c.l.b16 %v2017
      %v2129 = vunpack.c.h.b16 %v2017
      %v2130 = vunpack.c.l.b16 %v2018
      %v2131 = vunpack.c.h.b16 %v2018
      %v2132 = vunpack.c.l.b16 %v2019
      %v2133 = vunpack.c.h.b16 %v2019
      %v2134 = vunpack.c.l.b16 %v2020
      %v2135 = vunpack.c.h.b16 %v2020
      %v2136 = vunpack.c.l.b16 %v2021
      %v2137 = vunpack.c.h.b16 %v2021
      %v2138 = vunpack.c.l.b16 %v2022
      %v2139 = vunpack.c.h.b16 %v2022
      %v2140 = vunpack.c.l.b16 %v2023
      %v2141 = vunpack.c.h.b16 %v2023
      %v2142 = vunpack.c.l.b16 %v2024
      %v2143 = vunpack.c.h.b16 %v2024
      %v2144 = vpack.c.b16 %v2118, %v2116
      %v2145 = vpack.c.b16 %v2119, %v2117
      %v2146 = vpack.c.b16 %v2122, %v2120
      %v2147 = vpack.c.b16 %v2123, %v2121
      %v2148 = vpack.c.b16 %v2126, %v2124
      %v2149 = vpack.c.b16 %v2127, %v2125
      %v2150 = vpack.c.b16 %v2130, %v2128
      %v2151 = vpack.c.b16 %v2131, %v2129
      %v2152 = vpack.c.b16 %v2134, %v2132
      %v2153 = vpack.c.b16 %v2135, %v2133
      %v2154 = vpack.c.b16 %v2138, %v2136
      %v2155 = vpack.c.b16 %v2139, %v2137
      %v2156 = vpack.c.b16 %v2142, %v2140
      %v2157 = vpack.c.b16 %v2143, %v2141
      %v2166 = vsel %vm1622, %v2145, 0
      %v2169 = vsel %vm1622, %v2147, 0
      %v2172 = vsel %vm1622, %v2149, 0
      %v2175 = vsel %vm1622, %v2151, 0
      %v2178 = vsel %vm1622, %v2153, 0
      %v2181 = vsel %vm1622, %v2155, 0
      %v2184 = vsel %vm1622, %v2157, 0
      %2186 = vmatpush.bf16.msra.mxu0 %v2096
      %2187 = vmatpush.bf16.msra.mxu0 %v2095
      %2188 = vmatpush.bf16.msra.mxu0 %v2094
      %2189 = vmatpush.bf16.msra.mxu0 %v2093
      %2190 = vmatpush.bf16.msra.mxu0 %v2092
      %2191 = vmatpush.bf16.msra.mxu0 %v2091
      %2192 = vmatpush.bf16.msra.mxu0 %v2090
      %2193 = vmatpush.bf16.msra.mxu0 %v2089
      %2194 = vmatmul.bf16.gmra.mxu0 %v2144
      %v2195 = vpop.f32.mrf.mxu0
      %v2196 = vadd.f32 0.0, %v2195
      %v2197 = vpop.f32.mrf.mxu0
      %v2198 = vadd.f32 0.0, %v2197
      %2199 = vmatmul.bf16.gmra.mxu0 %v2146
      %v2200 = vpop.f32.mrf.mxu0
      %v2201 = vadd.f32 0.0, %v2200
      %v2202 = vpop.f32.mrf.mxu0
      %v2203 = vadd.f32 0.0, %v2202
      %2204 = vmatmul.bf16.gmra.mxu0 %v2148
      %v2205 = vpop.f32.mrf.mxu0
      %v2206 = vadd.f32 0.0, %v2205
      %v2207 = vpop.f32.mrf.mxu0
      %v2208 = vadd.f32 0.0, %v2207
      %2209 = vmatmul.bf16.gmra.mxu0 %v2150
      %v2210 = vpop.f32.mrf.mxu0
      %v2211 = vadd.f32 0.0, %v2210
      %v2212 = vpop.f32.mrf.mxu0
      %v2213 = vadd.f32 0.0, %v2212
      %2214 = vmatmul.bf16.gmra.mxu0 %v2152
      %v2215 = vpop.f32.mrf.mxu0
      %v2216 = vadd.f32 0.0, %v2215
      %v2217 = vpop.f32.mrf.mxu0
      %v2218 = vadd.f32 0.0, %v2217
      %2219 = vmatmul.bf16.gmra.mxu0 %v2154
      %v2220 = vpop.f32.mrf.mxu0
      %v2221 = vadd.f32 0.0, %v2220
      %v2222 = vpop.f32.mrf.mxu0
      %v2223 = vadd.f32 0.0, %v2222
      %2224 = vmatmul.bf16.gmra.mxu0 %v2156
      %v2225 = vpop.f32.mrf.mxu0
      %v2226 = vadd.f32 0.0, %v2225
      %v2227 = vpop.f32.mrf.mxu0
      %v2228 = vadd.f32 0.0, %v2227
      %2229 = vdwg.mxu0
      %2230 = vmatpush.bf16.msra.mxu0 0
      %2231 = vmatpush.bf16.msra.mxu0 0
      %2232 = vmatpush.bf16.msra.mxu0 0
      %2233 = vmatpush.bf16.msra.mxu0 %v2101
      %2234 = vmatpush.bf16.msra.mxu0 %v2100
      %2235 = vmatpush.bf16.msra.mxu0 %v2099
      %2236 = vmatpush.bf16.msra.mxu0 %v2098
      %2237 = vmatpush.bf16.msra.mxu0 %v2097
      %2238 = vmatmul.bf16.gmra.mxu0 %v2166
      %v2239 = vpop.f32.mrf.mxu0
      %v2240 = vadd.f32 %v2196, %v2239
      %v2241 = vpop.f32.mrf.mxu0
      %v2242 = vadd.f32 %v2198, %v2241
      %2243 = vmatmul.bf16.gmra.mxu0 %v2169
      %v2244 = vpop.f32.mrf.mxu0
      %v2245 = vadd.f32 %v2201, %v2244
      %v2246 = vpop.f32.mrf.mxu0
      %v2247 = vadd.f32 %v2203, %v2246
      %2248 = vmatmul.bf16.gmra.mxu0 %v2172
      %v2249 = vpop.f32.mrf.mxu0
      %v2250 = vadd.f32 %v2206, %v2249
      %v2251 = vpop.f32.mrf.mxu0
      %v2252 = vadd.f32 %v2208, %v2251
      %2253 = vmatmul.bf16.gmra.mxu0 %v2175
      %v2254 = vpop.f32.mrf.mxu0
      %v2255 = vadd.f32 %v2211, %v2254
      %v2256 = vpop.f32.mrf.mxu0
      %v2257 = vadd.f32 %v2213, %v2256
      %2258 = vmatmul.bf16.gmra.mxu0 %v2178
      %v2259 = vpop.f32.mrf.mxu0
      %v2260 = vadd.f32 %v2216, %v2259
      %v2261 = vpop.f32.mrf.mxu0
      %v2262 = vadd.f32 %v2218, %v2261
      %2263 = vmatmul.bf16.gmra.mxu0 %v2181
      %v2264 = vpop.f32.mrf.mxu0
      %v2265 = vadd.f32 %v2221, %v2264
      %v2266 = vpop.f32.mrf.mxu0
      %v2267 = vadd.f32 %v2223, %v2266
      %2268 = vmatmul.bf16.gmra.mxu0 %v2184
      %v2269 = vpop.f32.mrf.mxu0
      %v2270 = vadd.f32 %v2226, %v2269
      %v2271 = vpop.f32.mrf.mxu0
      %v2272 = vadd.f32 %v2228, %v2271
      %2273 = vdwg.mxu0
      %v2274 = vpack.c.bf16 %v2242, %v2240
      %v2275 = vpack.c.bf16 %v2247, %v2245
      %v2276 = vpack.c.bf16 %v2252, %v2250
      %v2277 = vpack.c.bf16 %v2257, %v2255
      %v2278 = vpack.c.bf16 %v2262, %v2260
      %v2279 = vpack.c.bf16 %v2267, %v2265
      %v2280 = vpack.c.bf16 %v2272, %v2270
      %v2284 = vunpack.c.l.b16 %v2046
      %v2285 = vunpack.c.l.b16 %v2047
      %v2286 = vunpack.c.l.b16 %v2048
      %v2287 = vpack.c.b16 %v2285, %v2284
      %v2288 = vpack.c.b16 %v2286, %v2286
      %vm2290 = vcmask 195584
      %v2292 = vsel %vm2290, %v2274, 0
      %v2295 = vsel %vm2290, %v2275, 0
      %v2298 = vsel %vm2290, %v2276, 0
      %v2301 = vsel %vm2290, %v2277, 0
      %v2304 = vsel %vm2290, %v2278, 0
      %v2307 = vsel %vm2290, %v2279, 0
      %v2310 = vsel %vm2290, %v2280, 0
      %v2313 = vsel %vm1751, %v2288, 0
      %2315 = vmatpush.bf16.msra.mxu0 0
      %2316 = vmatpush.bf16.msra.mxu0 0
      %2317 = vmatpush.bf16.msra.mxu0 0
      %2318 = vmatpush.bf16.msra.mxu0 0
      %2319 = vmatpush.bf16.msra.mxu0 0
      %2320 = vmatpush.bf16.msra.mxu0 0
      %2321 = vmatpush.bf16.msra.mxu0 %v2313
      %2322 = vmatpush.bf16.msra.mxu0 %v2287
      %2323 = vmatmul.bf16.gmra.mxu0 %v2292
      %v2324 = vpop.f32.mrf.mxu0
      %v2325 = vadd.f32 0.0, %v2324
      %v2326 = vpop.f32.mrf.mxu0
      %v2327 = vadd.f32 0.0, %v2326
      %2328 = vmatmul.bf16.gmra.mxu0 %v2295
      %v2329 = vpop.f32.mrf.mxu0
      %v2330 = vadd.f32 0.0, %v2329
      %v2331 = vpop.f32.mrf.mxu0
      %v2332 = vadd.f32 0.0, %v2331
      %2333 = vmatmul.bf16.gmra.mxu0 %v2298
      %v2334 = vpop.f32.mrf.mxu0
      %v2335 = vadd.f32 0.0, %v2334
      %v2336 = vpop.f32.mrf.mxu0
      %v2337 = vadd.f32 0.0, %v2336
      %2338 = vmatmul.bf16.gmra.mxu0 %v2301
      %v2339 = vpop.f32.mrf.mxu0
      %v2340 = vadd.f32 0.0, %v2339
      %v2341 = vpop.f32.mrf.mxu0
      %v2342 = vadd.f32 0.0, %v2341
      %2343 = vmatmul.bf16.gmra.mxu0 %v2304
      %v2344 = vpop.f32.mrf.mxu0
      %v2345 = vadd.f32 0.0, %v2344
      %v2346 = vpop.f32.mrf.mxu0
      %v2347 = vadd.f32 0.0, %v2346
      %2348 = vmatmul.bf16.gmra.mxu0 %v2307
      %v2349 = vpop.f32.mrf.mxu0
      %v2350 = vadd.f32 0.0, %v2349
      %v2351 = vpop.f32.mrf.mxu0
      %v2352 = vadd.f32 0.0, %v2351
      %2353 = vmatmul.bf16.gmra.mxu0 %v2310
      %v2354 = vpop.f32.mrf.mxu0
      %v2355 = vadd.f32 0.0, %v2354
      %v2356 = vpop.f32.mrf.mxu0
      %v2357 = vadd.f32 0.0, %v2356
      %2358 = vdwg.mxu0
      %v2359 = vrot.slane %v1985, 7
      %v2360 = vrot.slane %v1986, 7
      %v2361 = vrot.slane %v1987, 7
      %v2362 = vrot.slane %v1988, 7
      %v2363 = vrot.slane %v1989, 7
      %v2364 = vrot.slane %v1990, 7
      %v2365 = vrot.slane %v1991, 7
      %v2366 = vrot.slane %v1992, 7
      %v2367 = vrot.slane %v1993, 7
      %v2368 = vrot.slane %v1994, 7
      %v2369 = vrot.slane %v1995, 7
      %v2370 = vrot.slane %v1996, 7
      %v2371 = vrot.slane %v1997, 7
      %v2372 = vrot.slane %v1998, 7
      %v2373 = vrot.slane %v1999, 7
      %v2374 = vrot.slane %v2000, 7
      %v2375 = vrot.slane %v2001, 7
      %v2376 = vrot.slane %v2002, 7
      %v2377 = vrot.slane %v2003, 7
      %v2378 = vrot.slane %v2004, 7
      %v2379 = vrot.slane %v2005, 7
      %v2380 = vrot.slane %v2006, 7
      %v2381 = vrot.slane %v2007, 7
      %v2382 = vrot.slane %v2008, 7
      %v2383 = vrot.slane %v2009, 7
      %v2384 = vrot.slane %v2010, 7
      %v2385 = vsel %vm1307, %v2383, %v2384
      %v2386 = vsel %vm1307, %v2382, %v2383
      %v2387 = vsel %vm1307, %v2381, %v2382
      %v2388 = vsel %vm1307, %v2380, %v2381
      %v2389 = vsel %vm1307, %v2379, %v2380
      %v2390 = vsel %vm1307, %v2378, %v2379
      %v2391 = vsel %vm1307, %v2377, %v2378
      %v2392 = vsel %vm1307, %v2376, %v2377
      %v2393 = vsel %vm1307, %v2375, %v2376
      %v2394 = vsel %vm1307, %v2374, %v2375
      %v2395 = vsel %vm1307, %v2373, %v2374
      %v2396 = vsel %vm1307, %v2372, %v2373
      %v2397 = vsel %vm1307, %v2371, %v2372
      %v2398 = vsel %vm1307, %v2370, %v2371
      %v2399 = vsel %vm1307, %v2369, %v2370
      %v2400 = vsel %vm1307, %v2368, %v2369
      %v2401 = vsel %vm1307, %v2367, %v2368
      %v2402 = vsel %vm1307, %v2366, %v2367
      %v2403 = vsel %vm1307, %v2365, %v2366
      %v2404 = vsel %vm1307, %v2364, %v2365
      %v2405 = vsel %vm1307, %v2363, %v2364
      %v2406 = vsel %vm1307, %v2362, %v2363
      %v2407 = vsel %vm1307, %v2361, %v2362
      %v2408 = vsel %vm1307, %v2360, %v2361
      %v2409 = vsel %vm1307, %v2359, %v2360
      %v2410 = vsel %vm1307, %v2384, %v2359
      %v2411 = vrot.slane %v1985, 1
      %v2412 = vrot.slane %v1986, 1
      %v2413 = vrot.slane %v1987, 1
      %v2414 = vrot.slane %v1988, 1
      %v2415 = vrot.slane %v1989, 1
      %v2416 = vrot.slane %v1990, 1
      %v2417 = vrot.slane %v1991, 1
      %v2418 = vrot.slane %v1992, 1
      %v2419 = vrot.slane %v1993, 1
      %v2420 = vrot.slane %v1994, 1
      %v2421 = vrot.slane %v1995, 1
      %v2422 = vrot.slane %v1996, 1
      %v2423 = vrot.slane %v1997, 1
      %v2424 = vrot.slane %v1998, 1
      %v2425 = vrot.slane %v1999, 1
      %v2426 = vrot.slane %v2000, 1
      %v2427 = vrot.slane %v2001, 1
      %v2428 = vrot.slane %v2002, 1
      %v2429 = vrot.slane %v2003, 1
      %v2430 = vrot.slane %v2004, 1
      %v2431 = vrot.slane %v2005, 1
      %v2432 = vrot.slane %v2006, 1
      %v2433 = vrot.slane %v2007, 1
      %v2434 = vrot.slane %v2008, 1
      %v2435 = vrot.slane %v2009, 1
      %v2436 = vrot.slane %v2010, 1
      %v2437 = vsel %vm1360, %v2435, %v2436
      %v2438 = vsel %vm1360, %v2434, %v2435
      %v2439 = vsel %vm1360, %v2433, %v2434
      %v2440 = vsel %vm1360, %v2432, %v2433
      %v2441 = vsel %vm1360, %v2431, %v2432
      %v2442 = vsel %vm1360, %v2430, %v2431
      %v2443 = vsel %vm1360, %v2429, %v2430
      %v2444 = vsel %vm1360, %v2428, %v2429
      %v2445 = vsel %vm1360, %v2427, %v2428
      %v2446 = vsel %vm1360, %v2426, %v2427
      %v2447 = vsel %vm1360, %v2425, %v2426
      %v2448 = vsel %vm1360, %v2424, %v2425
      %v2449 = vsel %vm1360, %v2423, %v2424
      %v2450 = vsel %vm1360, %v2422, %v2423
      %v2451 = vsel %vm1360, %v2421, %v2422
      %v2452 = vsel %vm1360, %v2420, %v2421
      %v2453 = vsel %vm1360, %v2419, %v2420
      %v2454 = vsel %vm1360, %v2418, %v2419
      %v2455 = vsel %vm1360, %v2417, %v2418
      %v2456 = vsel %vm1360, %v2416, %v2417
      %v2457 = vsel %vm1360, %v2415, %v2416
      %v2458 = vsel %vm1360, %v2414, %v2415
      %v2459 = vsel %vm1360, %v2413, %v2414
      %v2460 = vsel %vm1360, %v2412, %v2413
      %v2461 = vsel %vm1360, %v2411, %v2412
      %v2462 = vsel %vm1360, %v2436, %v2411
      %2489 = vrot.lane.b32.xlu0 %v1985, 24
      %v2490 = vpop.permute.xlu0 %2489
      %2491 = vrot.lane.b32.xlu0 %v1986, 24
      %v2492 = vpop.permute.xlu0 %2491
      %2493 = vrot.lane.b32.xlu0 %v1987, 24
      %v2494 = vpop.permute.xlu0 %2493
      %2495 = vrot.lane.b32.xlu0 %v1988, 24
      %v2496 = vpop.permute.xlu0 %2495
      %2497 = vrot.lane.b32.xlu0 %v1989, 24
      %v2498 = vpop.permute.xlu0 %2497
      %2499 = vrot.lane.b32.xlu0 %v1990, 24
      %v2500 = vpop.permute.xlu0 %2499
      %2501 = vrot.lane.b32.xlu0 %v1991, 24
      %v2502 = vpop.permute.xlu0 %2501
      %2503 = vrot.lane.b32.xlu0 %v1992, 24
      %v2504 = vpop.permute.xlu0 %2503
      %2505 = vrot.lane.b32.xlu0 %v1993, 24
      %v2506 = vpop.permute.xlu0 %2505
      %2507 = vrot.lane.b32.xlu0 %v1994, 24
      %v2508 = vpop.permute.xlu0 %2507
      %2509 = vrot.lane.b32.xlu0 %v1995, 24
      %v2510 = vpop.permute.xlu0 %2509
      %2511 = vrot.lane.b32.xlu0 %v1996, 24
      %v2512 = vpop.permute.xlu0 %2511
      %2513 = vrot.lane.b32.xlu0 %v1997, 24
      %v2514 = vpop.permute.xlu0 %2513
      %2515 = vrot.lane.b32.xlu0 %v1998, 24
      %v2516 = vpop.permute.xlu0 %2515
      %2517 = vrot.lane.b32.xlu0 %v1999, 24
      %v2518 = vpop.permute.xlu0 %2517
      %2519 = vrot.lane.b32.xlu0 %v2000, 24
      %v2520 = vpop.permute.xlu0 %2519
      %2521 = vrot.lane.b32.xlu0 %v2001, 24
      %v2522 = vpop.permute.xlu0 %2521
      %2523 = vrot.lane.b32.xlu0 %v2002, 24
      %v2524 = vpop.permute.xlu0 %2523
      %2525 = vrot.lane.b32.xlu0 %v2003, 24
      %v2526 = vpop.permute.xlu0 %2525
      %2527 = vrot.lane.b32.xlu0 %v2004, 24
      %v2528 = vpop.permute.xlu0 %2527
      %2529 = vrot.lane.b32.xlu0 %v2005, 24
      %v2530 = vpop.permute.xlu0 %2529
      %2531 = vrot.lane.b32.xlu0 %v2006, 24
      %v2532 = vpop.permute.xlu0 %2531
      %2533 = vrot.lane.b32.xlu0 %v2007, 24
      %v2534 = vpop.permute.xlu0 %2533
      %2535 = vrot.lane.b32.xlu0 %v2008, 24
      %v2536 = vpop.permute.xlu0 %2535
      %2537 = vrot.lane.b32.xlu0 %v2009, 24
      %v2538 = vpop.permute.xlu0 %2537
      %2539 = vrot.lane.b32.xlu0 %v2010, 24
      %v2540 = vpop.permute.xlu0 %2539
      %2593 = vrot.lane.b32.xlu0 %v2461, 48
      %v2594 = vpop.permute.xlu0 %2593
      %2595 = vrot.lane.b32.xlu0 %v2460, 48
      %v2596 = vpop.permute.xlu0 %2595
      %2597 = vrot.lane.b32.xlu0 %v2459, 48
      %v2598 = vpop.permute.xlu0 %2597
      %2599 = vrot.lane.b32.xlu0 %v2458, 48
      %v2600 = vpop.permute.xlu0 %2599
      %2601 = vrot.lane.b32.xlu0 %v2457, 48
      %v2602 = vpop.permute.xlu0 %2601
      %2603 = vrot.lane.b32.xlu0 %v2456, 48
      %v2604 = vpop.permute.xlu0 %2603
      %2605 = vrot.lane.b32.xlu0 %v2455, 48
      %v2606 = vpop.permute.xlu0 %2605
      %2607 = vrot.lane.b32.xlu0 %v2454, 48
      %v2608 = vpop.permute.xlu0 %2607
      %2609 = vrot.lane.b32.xlu0 %v2453, 48
      %v2610 = vpop.permute.xlu0 %2609
      %2611 = vrot.lane.b32.xlu0 %v2452, 48
      %v2612 = vpop.permute.xlu0 %2611
      %2613 = vrot.lane.b32.xlu0 %v2451, 48
      %v2614 = vpop.permute.xlu0 %2613
      %2615 = vrot.lane.b32.xlu0 %v2450, 48
      %v2616 = vpop.permute.xlu0 %2615
      %2617 = vrot.lane.b32.xlu0 %v2449, 48
      %v2618 = vpop.permute.xlu0 %2617
      %2619 = vrot.lane.b32.xlu0 %v2448, 48
      %v2620 = vpop.permute.xlu0 %2619
      %2621 = vrot.lane.b32.xlu0 %v2447, 48
      %v2622 = vpop.permute.xlu0 %2621
      %2623 = vrot.lane.b32.xlu0 %v2446, 48
      %v2624 = vpop.permute.xlu0 %2623
      %2625 = vrot.lane.b32.xlu0 %v2445, 48
      %v2626 = vpop.permute.xlu0 %2625
      %2627 = vrot.lane.b32.xlu0 %v2444, 48
      %v2628 = vpop.permute.xlu0 %2627
      %2629 = vrot.lane.b32.xlu0 %v2443, 48
      %v2630 = vpop.permute.xlu0 %2629
      %2631 = vrot.lane.b32.xlu0 %v2442, 48
      %v2632 = vpop.permute.xlu0 %2631
      %2633 = vrot.lane.b32.xlu0 %v2441, 48
      %v2634 = vpop.permute.xlu0 %2633
      %2635 = vrot.lane.b32.xlu0 %v2440, 48
      %v2636 = vpop.permute.xlu0 %2635
      %2637 = vrot.lane.b32.xlu0 %v2439, 48
      %v2638 = vpop.permute.xlu0 %2637
      %2639 = vrot.lane.b32.xlu0 %v2438, 48
      %v2640 = vpop.permute.xlu0 %2639
      %2641 = vrot.lane.b32.xlu0 %v2437, 48
      %v2642 = vpop.permute.xlu0 %2641
      %2643 = vrot.lane.b32.xlu0 %v2462, 48
      %v2644 = vpop.permute.xlu0 %2643
      %v2671 = vsel %vm2290, %v2410, %v2490
      %v2672 = vsel %vm2290, %v2409, %v2492
      %v2673 = vsel %vm2290, %v2408, %v2494
      %v2674 = vsel %vm2290, %v2407, %v2496
      %v2675 = vsel %vm2290, %v2406, %v2498
      %v2676 = vsel %vm2290, %v2405, %v2500
      %v2677 = vsel %vm2290, %v2404, %v2502
      %v2678 = vsel %vm2290, %v2403, %v2504
      %v2679 = vsel %vm2290, %v2402, %v2506
      %v2680 = vsel %vm2290, %v2401, %v2508
      %v2681 = vsel %vm2290, %v2400, %v2510
      %v2682 = vsel %vm2290, %v2399, %v2512
      %v2683 = vsel %vm2290, %v2398, %v2514
      %v2684 = vsel %vm2290, %v2397, %v2516
      %v2685 = vsel %vm2290, %v2396, %v2518
      %v2686 = vsel %vm2290, %v2395, %v2520
      %v2687 = vsel %vm2290, %v2394, %v2522
      %v2688 = vsel %vm2290, %v2393, %v2524
      %v2689 = vsel %vm2290, %v2392, %v2526
      %v2690 = vsel %vm2290, %v2391, %v2528
      %v2691 = vsel %vm2290, %v2390, %v2530
      %v2692 = vsel %vm2290, %v2389, %v2532
      %v2693 = vsel %vm2290, %v2388, %v2534
      %v2694 = vsel %vm2290, %v2387, %v2536
      %v2695 = vsel %vm2290, %v2386, %v2538
      %v2696 = vsel %vm2290, %v2385, %v2540
      %vm2697 = vcmask 392192
      %v2698 = vsel %vm2697, %v2671, %v2594
      %v2699 = vsel %vm2697, %v2672, %v2596
      %v2700 = vsel %vm2697, %v2673, %v2598
      %v2701 = vsel %vm2697, %v2674, %v2600
      %v2702 = vsel %vm2697, %v2675, %v2602
      %v2703 = vsel %vm2697, %v2676, %v2604
      %v2704 = vsel %vm2697, %v2677, %v2606
      %v2705 = vsel %vm2697, %v2678, %v2608
      %v2706 = vsel %vm2697, %v2679, %v2610
      %v2707 = vsel %vm2697, %v2680, %v2612
      %v2708 = vsel %vm2697, %v2681, %v2614
      %v2709 = vsel %vm2697, %v2682, %v2616
      %v2710 = vsel %vm2697, %v2683, %v2618
      %v2711 = vsel %vm2697, %v2684, %v2620
      %v2712 = vsel %vm2697, %v2685, %v2622
      %v2713 = vsel %vm2697, %v2686, %v2624
      %v2714 = vsel %vm2697, %v2687, %v2626
      %v2715 = vsel %vm2697, %v2688, %v2628
      %v2716 = vsel %vm2697, %v2689, %v2630
      %v2717 = vsel %vm2697, %v2690, %v2632
      %v2718 = vsel %vm2697, %v2691, %v2634
      %v2719 = vsel %vm2697, %v2692, %v2636
      %v2720 = vsel %vm2697, %v2693, %v2638
      %v2721 = vsel %vm2697, %v2694, %v2640
      %v2722 = vsel %vm2697, %v2695, %v2642
      %v2723 = vsel %vm2697, %v2696, %v2644
      %v2724 = vpack.c.bf16 %v2699, %v2698
      %v2725 = vpack.c.bf16 %v2701, %v2700
      %v2726 = vpack.c.bf16 %v2703, %v2702
      %v2727 = vpack.c.bf16 %v2705, %v2704
      %v2728 = vpack.c.bf16 %v2707, %v2706
      %v2729 = vpack.c.bf16 %v2709, %v2708
      %v2730 = vpack.c.bf16 %v2711, %v2710
      %v2731 = vpack.c.bf16 %v2713, %v2712
      %v2732 = vpack.c.bf16 %v2715, %v2714
      %v2733 = vpack.c.bf16 %v2717, %v2716
      %v2734 = vpack.c.bf16 %v2719, %v2718
      %v2735 = vpack.c.bf16 %v2721, %v2720
      %v2736 = vpack.c.bf16 %v2723, %v2722
      %v2746 = vunpack.c.l.b16 %v2025
      %v2747 = vunpack.c.l.b16 %v2026
      %v2748 = vunpack.c.l.b16 %v2027
      %v2749 = vunpack.c.l.b16 %v2028
      %v2750 = vunpack.c.l.b16 %v2029
      %v2751 = vunpack.c.l.b16 %v2030
      %v2752 = vunpack.c.l.b16 %v2031
      %v2753 = vunpack.c.l.b16 %v2032
      %v2754 = vunpack.c.l.b16 %v2033
      %v2755 = vpack.c.b16 %v2747, %v2746
      %v2756 = vpack.c.b16 %v2749, %v2748
      %v2757 = vpack.c.b16 %v2751, %v2750
      %v2758 = vpack.c.b16 %v2753, %v2752
      %v2759 = vpack.c.b16 %v2754, %v2754
      %vm2764 = vcmask 588800
      %v2766 = vsel %vm2764, %v2724, 0
      %v2769 = vsel %vm2764, %v2725, 0
      %v2772 = vsel %vm2764, %v2726, 0
      %v2775 = vsel %vm2764, %v2727, 0
      %v2778 = vsel %vm2764, %v2728, 0
      %v2781 = vsel %vm2764, %v2729, 0
      %v2784 = vsel %vm2764, %v2730, 0
      %v2787 = vsel %vm2764, %v2731, 0
      %v2790 = vsel %vm2764, %v2732, 0
      %v2793 = vsel %vm2764, %v2733, 0
      %v2796 = vsel %vm2764, %v2734, 0
      %v2799 = vsel %vm2764, %v2735, 0
      %v2802 = vsel %vm2764, %v2736, 0
      %v2805 = vsel %vm1751, %v2759, 0
      %2807 = vmatpush.bf16.msra.mxu0 0
      %2808 = vmatpush.bf16.msra.mxu0 0
      %2809 = vmatpush.bf16.msra.mxu0 0
      %2810 = vmatpush.bf16.msra.mxu0 %v2805
      %2811 = vmatpush.bf16.msra.mxu0 %v2758
      %2812 = vmatpush.bf16.msra.mxu0 %v2757
      %2813 = vmatpush.bf16.msra.mxu0 %v2756
      %2814 = vmatpush.bf16.msra.mxu0 %v2755
      %2815 = vmatmul.bf16.gmra.mxu0 %v2766
      %v2816 = vpop.f32.mrf.mxu0
      %v2817 = vadd.f32 0.0, %v2816
      %v2818 = vpop.f32.mrf.mxu0
      %v2819 = vadd.f32 0.0, %v2818
      %2820 = vmatmul.bf16.gmra.mxu0 %v2769
      %v2821 = vpop.f32.mrf.mxu0
      %v2822 = vadd.f32 0.0, %v2821
      %v2823 = vpop.f32.mrf.mxu0
      %v2824 = vadd.f32 0.0, %v2823
      %2825 = vmatmul.bf16.gmra.mxu0 %v2772
      %v2826 = vpop.f32.mrf.mxu0
      %v2827 = vadd.f32 0.0, %v2826
      %v2828 = vpop.f32.mrf.mxu0
      %v2829 = vadd.f32 0.0, %v2828
      %2830 = vmatmul.bf16.gmra.mxu0 %v2775
      %v2831 = vpop.f32.mrf.mxu0
      %v2832 = vadd.f32 0.0, %v2831
      %v2833 = vpop.f32.mrf.mxu0
      %v2834 = vadd.f32 0.0, %v2833
      %2835 = vmatmul.bf16.gmra.mxu0 %v2778
      %v2836 = vpop.f32.mrf.mxu0
      %v2837 = vadd.f32 0.0, %v2836
      %v2838 = vpop.f32.mrf.mxu0
      %v2839 = vadd.f32 0.0, %v2838
      %2840 = vmatmul.bf16.gmra.mxu0 %v2781
      %v2841 = vpop.f32.mrf.mxu0
      %v2842 = vadd.f32 0.0, %v2841
      %v2843 = vpop.f32.mrf.mxu0
      %v2844 = vadd.f32 0.0, %v2843
      %2845 = vmatmul.bf16.gmra.mxu0 %v2784
      %v2846 = vpop.f32.mrf.mxu0
      %v2847 = vadd.f32 0.0, %v2846
      %v2848 = vpop.f32.mrf.mxu0
      %v2849 = vadd.f32 0.0, %v2848
      %2850 = vmatmul.bf16.gmra.mxu0 %v2787
      %v2851 = vpop.f32.mrf.mxu0
      %v2852 = vadd.f32 0.0, %v2851
      %v2853 = vpop.f32.mrf.mxu0
      %v2854 = vadd.f32 0.0, %v2853
      %2855 = vmatmul.bf16.gmra.mxu0 %v2790
      %v2856 = vpop.f32.mrf.mxu0
      %v2857 = vadd.f32 0.0, %v2856
      %v2858 = vpop.f32.mrf.mxu0
      %v2859 = vadd.f32 0.0, %v2858
      %2860 = vmatmul.bf16.gmra.mxu0 %v2793
      %v2861 = vpop.f32.mrf.mxu0
      %v2862 = vadd.f32 0.0, %v2861
      %v2863 = vpop.f32.mrf.mxu0
      %v2864 = vadd.f32 0.0, %v2863
      %2865 = vmatmul.bf16.gmra.mxu0 %v2796
      %v2866 = vpop.f32.mrf.mxu0
      %v2867 = vadd.f32 0.0, %v2866
      %v2868 = vpop.f32.mrf.mxu0
      %v2869 = vadd.f32 0.0, %v2868
      %2870 = vmatmul.bf16.gmra.mxu0 %v2799
      %v2871 = vpop.f32.mrf.mxu0
      %v2872 = vadd.f32 0.0, %v2871
      %v2873 = vpop.f32.mrf.mxu0
      %v2874 = vadd.f32 0.0, %v2873
      %2875 = vmatmul.bf16.gmra.mxu0 %v2802
      %v2876 = vpop.f32.mrf.mxu0
      %v2877 = vadd.f32 0.0, %v2876
      %v2878 = vpop.f32.mrf.mxu0
      %v2879 = vadd.f32 0.0, %v2878
      %2880 = vdwg.mxu0
      %v2881 = vpack.c.bf16 %v2819, %v2817
      %v2882 = vpack.c.bf16 %v2824, %v2822
      %v2883 = vpack.c.bf16 %v2829, %v2827
      %v2884 = vpack.c.bf16 %v2834, %v2832
      %v2885 = vpack.c.bf16 %v2839, %v2837
      %v2886 = vpack.c.bf16 %v2844, %v2842
      %v2887 = vpack.c.bf16 %v2849, %v2847
      %v2888 = vpack.c.bf16 %v2854, %v2852
      %v2889 = vpack.c.bf16 %v2859, %v2857
      %v2890 = vpack.c.bf16 %v2864, %v2862
      %v2891 = vpack.c.bf16 %v2869, %v2867
      %v2892 = vpack.c.bf16 %v2874, %v2872
      %v2893 = vpack.c.bf16 %v2879, %v2877
      %2894 = vmatpush.bf16.msra.mxu0 %v2888
      %2895 = vmatpush.bf16.msra.mxu0 %v2887
      %2896 = vmatpush.bf16.msra.mxu0 %v2886
      %2897 = vmatpush.bf16.msra.mxu0 %v2885
      %2898 = vmatpush.bf16.msra.mxu0 %v2884
      %2899 = vmatpush.bf16.msra.mxu0 %v2883
      %2900 = vmatpush.bf16.msra.mxu0 %v2882
      %2901 = vmatpush.bf16.msra.mxu0 %v2881
      %2902 = vmatmul.bf16.gmra.mxu0 %v2144
      %v2903 = vpop.f32.mrf.mxu0
      %v2904 = vadd.f32 0.0, %v2903
      %v2905 = vpop.f32.mrf.mxu0
      %v2906 = vadd.f32 0.0, %v2905
      %2907 = vmatmul.bf16.gmra.mxu0 %v2146
      %v2908 = vpop.f32.mrf.mxu0
      %v2909 = vadd.f32 0.0, %v2908
      %v2910 = vpop.f32.mrf.mxu0
      %v2911 = vadd.f32 0.0, %v2910
      %2912 = vmatmul.bf16.gmra.mxu0 %v2148
      %v2913 = vpop.f32.mrf.mxu0
      %v2914 = vadd.f32 0.0, %v2913
      %v2915 = vpop.f32.mrf.mxu0
      %v2916 = vadd.f32 0.0, %v2915
      %2917 = vmatmul.bf16.gmra.mxu0 %v2150
      %v2918 = vpop.f32.mrf.mxu0
      %v2919 = vadd.f32 0.0, %v2918
      %v2920 = vpop.f32.mrf.mxu0
      %v2921 = vadd.f32 0.0, %v2920
      %2922 = vmatmul.bf16.gmra.mxu0 %v2152
      %v2923 = vpop.f32.mrf.mxu0
      %v2924 = vadd.f32 0.0, %v2923
      %v2925 = vpop.f32.mrf.mxu0
      %v2926 = vadd.f32 0.0, %v2925
      %2927 = vmatmul.bf16.gmra.mxu0 %v2154
      %v2928 = vpop.f32.mrf.mxu0
      %v2929 = vadd.f32 0.0, %v2928
      %v2930 = vpop.f32.mrf.mxu0
      %v2931 = vadd.f32 0.0, %v2930
      %2932 = vmatmul.bf16.gmra.mxu0 %v2156
      %v2933 = vpop.f32.mrf.mxu0
      %v2934 = vadd.f32 0.0, %v2933
      %v2935 = vpop.f32.mrf.mxu0
      %v2936 = vadd.f32 0.0, %v2935
      %2937 = vdwg.mxu0
      %2938 = vmatpush.bf16.msra.mxu0 0
      %2939 = vmatpush.bf16.msra.mxu0 0
      %2940 = vmatpush.bf16.msra.mxu0 0
      %2941 = vmatpush.bf16.msra.mxu0 %v2893
      %2942 = vmatpush.bf16.msra.mxu0 %v2892
      %2943 = vmatpush.bf16.msra.mxu0 %v2891
      %2944 = vmatpush.bf16.msra.mxu0 %v2890
      %2945 = vmatpush.bf16.msra.mxu0 %v2889
      %2946 = vmatmul.bf16.gmra.mxu0 %v2166
      %v2947 = vpop.f32.mrf.mxu0
      %v2948 = vadd.f32 %v2904, %v2947
      %v2949 = vpop.f32.mrf.mxu0
      %v2950 = vadd.f32 %v2906, %v2949
      %2951 = vmatmul.bf16.gmra.mxu0 %v2169
      %v2952 = vpop.f32.mrf.mxu0
      %v2953 = vadd.f32 %v2909, %v2952
      %v2954 = vpop.f32.mrf.mxu0
      %v2955 = vadd.f32 %v2911, %v2954
      %2956 = vmatmul.bf16.gmra.mxu0 %v2172
      %v2957 = vpop.f32.mrf.mxu0
      %v2958 = vadd.f32 %v2914, %v2957
      %v2959 = vpop.f32.mrf.mxu0
      %v2960 = vadd.f32 %v2916, %v2959
      %2961 = vmatmul.bf16.gmra.mxu0 %v2175
      %v2962 = vpop.f32.mrf.mxu0
      %v2963 = vadd.f32 %v2919, %v2962
      %v2964 = vpop.f32.mrf.mxu0
      %v2965 = vadd.f32 %v2921, %v2964
      %2966 = vmatmul.bf16.gmra.mxu0 %v2178
      %v2967 = vpop.f32.mrf.mxu0
      %v2968 = vadd.f32 %v2924, %v2967
      %v2969 = vpop.f32.mrf.mxu0
      %v2970 = vadd.f32 %v2926, %v2969
      %2971 = vmatmul.bf16.gmra.mxu0 %v2181
      %v2972 = vpop.f32.mrf.mxu0
      %v2973 = vadd.f32 %v2929, %v2972
      %v2974 = vpop.f32.mrf.mxu0
      %v2975 = vadd.f32 %v2931, %v2974
      %2976 = vmatmul.bf16.gmra.mxu0 %v2184
      %v2977 = vpop.f32.mrf.mxu0
      %v2978 = vadd.f32 %v2934, %v2977
      %v2979 = vpop.f32.mrf.mxu0
      %v2980 = vadd.f32 %v2936, %v2979
      %2981 = vdwg.mxu0
      %v2982 = vmax.f32 %v2948, 0.0
      %v2983 = vmax.f32 %v2950, 0.0
      %v2984 = vmax.f32 %v2953, 0.0
      %v2985 = vmax.f32 %v2955, 0.0
      %v2986 = vmax.f32 %v2958, 0.0
      %v2987 = vmax.f32 %v2960, 0.0
      %v2988 = vmax.f32 %v2963, 0.0
      %v2989 = vmax.f32 %v2965, 0.0
      %v2990 = vmax.f32 %v2968, 0.0
      %v2991 = vmax.f32 %v2970, 0.0
      %v2992 = vmax.f32 %v2973, 0.0
      %v2993 = vmax.f32 %v2975, 0.0
      %v2994 = vmax.f32 %v2978, 0.0
      %v2995 = vmax.f32 %v2980, 0.0
      %v2996 = vrot.slane %v2982, 7
      %v2997 = vrot.slane %v2983, 7
      %v2998 = vrot.slane %v2984, 7
      %v2999 = vrot.slane %v2985, 7
      %v3000 = vrot.slane %v2986, 7
      %v3001 = vrot.slane %v2987, 7
      %v3002 = vrot.slane %v2988, 7
      %v3003 = vrot.slane %v2989, 7
      %v3004 = vrot.slane %v2990, 7
      %v3005 = vrot.slane %v2991, 7
      %v3006 = vrot.slane %v2992, 7
      %v3007 = vrot.slane %v2993, 7
      %v3008 = vrot.slane %v2994, 7
      %v3009 = vrot.slane %v2995, 7
      %v3010 = vsel %vm1307, %v3008, %v3009
      %v3011 = vsel %vm1307, %v3007, %v3008
      %v3012 = vsel %vm1307, %v3006, %v3007
      %v3013 = vsel %vm1307, %v3005, %v3006
      %v3014 = vsel %vm1307, %v3004, %v3005
      %v3015 = vsel %vm1307, %v3003, %v3004
      %v3016 = vsel %vm1307, %v3002, %v3003
      %v3017 = vsel %vm1307, %v3001, %v3002
      %v3018 = vsel %vm1307, %v3000, %v3001
      %v3019 = vsel %vm1307, %v2999, %v3000
      %v3020 = vsel %vm1307, %v2998, %v2999
      %v3021 = vsel %vm1307, %v2997, %v2998
      %v3022 = vsel %vm1307, %v2996, %v2997
      %v3023 = vsel %vm1307, %v3009, %v2996
      %v3024 = vrot.slane %v2982, 1
      %v3025 = vrot.slane %v2983, 1
      %v3026 = vrot.slane %v2984, 1
      %v3027 = vrot.slane %v2985, 1
      %v3028 = vrot.slane %v2986, 1
      %v3029 = vrot.slane %v2987, 1
      %v3030 = vrot.slane %v2988, 1
      %v3031 = vrot.slane %v2989, 1
      %v3032 = vrot.slane %v2990, 1
      %v3033 = vrot.slane %v2991, 1
      %v3034 = vrot.slane %v2992, 1
      %v3035 = vrot.slane %v2993, 1
      %v3036 = vrot.slane %v2994, 1
      %v3037 = vrot.slane %v2995, 1
      %v3038 = vsel %vm1360, %v3036, %v3037
      %v3039 = vsel %vm1360, %v3035, %v3036
      %v3040 = vsel %vm1360, %v3034, %v3035
      %v3041 = vsel %vm1360, %v3033, %v3034
      %v3042 = vsel %vm1360, %v3032, %v3033
      %v3043 = vsel %vm1360, %v3031, %v3032
      %v3044 = vsel %vm1360, %v3030, %v3031
      %v3045 = vsel %vm1360, %v3029, %v3030
      %v3046 = vsel %vm1360, %v3028, %v3029
      %v3047 = vsel %vm1360, %v3027, %v3028
      %v3048 = vsel %vm1360, %v3026, %v3027
      %v3049 = vsel %vm1360, %v3025, %v3026
      %v3050 = vsel %vm1360, %v3024, %v3025
      %v3051 = vsel %vm1360, %v3037, %v3024
      %3066 = vrot.lane.b32.xlu0 %v2982, 32
      %v3067 = vpop.permute.xlu0 %3066
      %3068 = vrot.lane.b32.xlu0 %v2983, 32
      %v3069 = vpop.permute.xlu0 %3068
      %3070 = vrot.lane.b32.xlu0 %v2984, 32
      %v3071 = vpop.permute.xlu0 %3070
      %3072 = vrot.lane.b32.xlu0 %v2985, 32
      %v3073 = vpop.permute.xlu0 %3072
      %3074 = vrot.lane.b32.xlu0 %v2986, 32
      %v3075 = vpop.permute.xlu0 %3074
      %3076 = vrot.lane.b32.xlu0 %v2987, 32
      %v3077 = vpop.permute.xlu0 %3076
      %3078 = vrot.lane.b32.xlu0 %v2988, 32
      %v3079 = vpop.permute.xlu0 %3078
      %3080 = vrot.lane.b32.xlu0 %v2989, 32
      %v3081 = vpop.permute.xlu0 %3080
      %3082 = vrot.lane.b32.xlu0 %v2990, 32
      %v3083 = vpop.permute.xlu0 %3082
      %3084 = vrot.lane.b32.xlu0 %v2991, 32
      %v3085 = vpop.permute.xlu0 %3084
      %3086 = vrot.lane.b32.xlu0 %v2992, 32
      %v3087 = vpop.permute.xlu0 %3086
      %3088 = vrot.lane.b32.xlu0 %v2993, 32
      %v3089 = vpop.permute.xlu0 %3088
      %3090 = vrot.lane.b32.xlu0 %v2994, 32
      %v3091 = vpop.permute.xlu0 %3090
      %3092 = vrot.lane.b32.xlu0 %v2995, 32
      %v3093 = vpop.permute.xlu0 %3092
      %3122 = vrot.lane.b32.xlu0 %v3050, 64
      %v3123 = vpop.permute.xlu0 %3122
      %3124 = vrot.lane.b32.xlu0 %v3049, 64
      %v3125 = vpop.permute.xlu0 %3124
      %3126 = vrot.lane.b32.xlu0 %v3048, 64
      %v3127 = vpop.permute.xlu0 %3126
      %3128 = vrot.lane.b32.xlu0 %v3047, 64
      %v3129 = vpop.permute.xlu0 %3128
      %3130 = vrot.lane.b32.xlu0 %v3046, 64
      %v3131 = vpop.permute.xlu0 %3130
      %3132 = vrot.lane.b32.xlu0 %v3045, 64
      %v3133 = vpop.permute.xlu0 %3132
      %3134 = vrot.lane.b32.xlu0 %v3044, 64
      %v3135 = vpop.permute.xlu0 %3134
      %3136 = vrot.lane.b32.xlu0 %v3043, 64
      %v3137 = vpop.permute.xlu0 %3136
      %3138 = vrot.lane.b32.xlu0 %v3042, 64
      %v3139 = vpop.permute.xlu0 %3138
      %3140 = vrot.lane.b32.xlu0 %v3041, 64
      %v3141 = vpop.permute.xlu0 %3140
      %3142 = vrot.lane.b32.xlu0 %v3040, 64
      %v3143 = vpop.permute.xlu0 %3142
      %3144 = vrot.lane.b32.xlu0 %v3039, 64
      %v3145 = vpop.permute.xlu0 %3144
      %3146 = vrot.lane.b32.xlu0 %v3038, 64
      %v3147 = vpop.permute.xlu0 %3146
      %3148 = vrot.lane.b32.xlu0 %v3051, 64
      %v3149 = vpop.permute.xlu0 %3148
      %vm3164 = vcmask 261120
      %v3165 = vsel %vm3164, %v3023, %v3067
      %v3166 = vsel %vm3164, %v3022, %v3069
      %v3167 = vsel %vm3164, %v3021, %v3071
      %v3168 = vsel %vm3164, %v3020, %v3073
      %v3169 = vsel %vm3164, %v3019, %v3075
      %v3170 = vsel %vm3164, %v3018, %v3077
      %v3171 = vsel %vm3164, %v3017, %v3079
      %v3172 = vsel %vm3164, %v3016, %v3081
      %v3173 = vsel %vm3164, %v3015, %v3083
      %v3174 = vsel %vm3164, %v3014, %v3085
      %v3175 = vsel %vm3164, %v3013, %v3087
      %v3176 = vsel %vm3164, %v3012, %v3089
      %v3177 = vsel %vm3164, %v3011, %v3091
      %v3178 = vsel %vm3164, %v3010, %v3093
      %vm3179 = vcmask 523264
      %v3180 = vsel %vm3179, %v3165, %v3123
      %v3181 = vsel %vm3179, %v3166, %v3125
      %v3182 = vsel %vm3179, %v3167, %v3127
      %v3183 = vsel %vm3179, %v3168, %v3129
      %v3184 = vsel %vm3179, %v3169, %v3131
      %v3185 = vsel %vm3179, %v3170, %v3133
      %v3186 = vsel %vm3179, %v3171, %v3135
      %v3187 = vsel %vm3179, %v3172, %v3137
      %v3188 = vsel %vm3179, %v3173, %v3139
      %v3189 = vsel %vm3179, %v3174, %v3141
      %v3190 = vsel %vm3179, %v3175, %v3143
      %v3191 = vsel %vm3179, %v3176, %v3145
      %v3192 = vsel %vm3179, %v3177, %v3147
      %v3193 = vsel %vm3179, %v3178, %v3149
      %v3194 = vpack.c.bf16 %v3181, %v3180
      %v3195 = vpack.c.bf16 %v3183, %v3182
      %v3196 = vpack.c.bf16 %v3185, %v3184
      %v3197 = vpack.c.bf16 %v3187, %v3186
      %v3198 = vpack.c.bf16 %v3189, %v3188
      %v3199 = vpack.c.bf16 %v3191, %v3190
      %v3200 = vpack.c.bf16 %v3193, %v3192
      %v3213 = vunpack.c.l.b16 %v2034
      %v3214 = vunpack.c.l.b16 %v2035
      %v3215 = vunpack.c.l.b16 %v2036
      %v3216 = vunpack.c.l.b16 %v2037
      %v3217 = vunpack.c.l.b16 %v2038
      %v3218 = vunpack.c.l.b16 %v2039
      %v3219 = vunpack.c.l.b16 %v2040
      %v3220 = vunpack.c.l.b16 %v2041
      %v3221 = vunpack.c.l.b16 %v2042
      %v3222 = vunpack.c.l.b16 %v2043
      %v3223 = vunpack.c.l.b16 %v2044
      %v3224 = vunpack.c.l.b16 %v2045
      %v3225 = vpack.c.b16 %v3214, %v3213
      %v3226 = vpack.c.b16 %v3216, %v3215
      %v3227 = vpack.c.b16 %v3218, %v3217
      %v3228 = vpack.c.b16 %v3220, %v3219
      %v3229 = vpack.c.b16 %v3222, %v3221
      %v3230 = vpack.c.b16 %v3224, %v3223
      %vm3237 = vcmask 785408
      %v3239 = vsel %vm3237, %v3194, 0
      %v3242 = vsel %vm3237, %v3195, 0
      %v3245 = vsel %vm3237, %v3196, 0
      %v3248 = vsel %vm3237, %v3197, 0
      %v3251 = vsel %vm3237, %v3198, 0
      %v3254 = vsel %vm3237, %v3199, 0
      %v3257 = vsel %vm3237, %v3200, 0
      %3259 = vmatpush.bf16.msra.mxu0 0
      %3260 = vmatpush.bf16.msra.mxu0 0
      %3261 = vmatpush.bf16.msra.mxu0 %v3230
      %3262 = vmatpush.bf16.msra.mxu0 %v3229
      %3263 = vmatpush.bf16.msra.mxu0 %v3228
      %3264 = vmatpush.bf16.msra.mxu0 %v3227
      %3265 = vmatpush.bf16.msra.mxu0 %v3226
      %3266 = vmatpush.bf16.msra.mxu0 %v3225
      %3267 = vmatmul.bf16.gmra.mxu0 %v3239
      %v3268 = vpop.f32.mrf.mxu0
      %v3269 = vadd.f32 %v2325, %v3268
      %v3270 = vpop.f32.mrf.mxu0
      %v3271 = vadd.f32 %v2327, %v3270
      %3272 = vmatmul.bf16.gmra.mxu0 %v3242
      %v3273 = vpop.f32.mrf.mxu0
      %v3274 = vadd.f32 %v2330, %v3273
      %v3275 = vpop.f32.mrf.mxu0
      %v3276 = vadd.f32 %v2332, %v3275
      %3277 = vmatmul.bf16.gmra.mxu0 %v3245
      %v3278 = vpop.f32.mrf.mxu0
      %v3279 = vadd.f32 %v2335, %v3278
      %v3280 = vpop.f32.mrf.mxu0
      %v3281 = vadd.f32 %v2337, %v3280
      %3282 = vmatmul.bf16.gmra.mxu0 %v3248
      %v3283 = vpop.f32.mrf.mxu0
      %v3284 = vadd.f32 %v2340, %v3283
      %v3285 = vpop.f32.mrf.mxu0
      %v3286 = vadd.f32 %v2342, %v3285
      %3287 = vmatmul.bf16.gmra.mxu0 %v3251
      %v3288 = vpop.f32.mrf.mxu0
      %v3289 = vadd.f32 %v2345, %v3288
      %v3290 = vpop.f32.mrf.mxu0
      %v3291 = vadd.f32 %v2347, %v3290
      %3292 = vmatmul.bf16.gmra.mxu0 %v3254
      %v3293 = vpop.f32.mrf.mxu0
      %v3294 = vadd.f32 %v2350, %v3293
      %v3295 = vpop.f32.mrf.mxu0
      %v3296 = vadd.f32 %v2352, %v3295
      %3297 = vmatmul.bf16.gmra.mxu0 %v3257
      %v3298 = vpop.f32.mrf.mxu0
      %v3299 = vadd.f32 %v2355, %v3298
      %v3300 = vpop.f32.mrf.mxu0
      %v3301 = vadd.f32 %v2357, %v3300
      %3302 = vdwg.mxu0
      %v3303 = vmax.f32 %v3269, 0.0
      %v3304 = vmax.f32 %v3271, 0.0
      %v3305 = vmax.f32 %v3274, 0.0
      %v3306 = vmax.f32 %v3276, 0.0
      %v3307 = vmax.f32 %v3279, 0.0
      %v3308 = vmax.f32 %v3281, 0.0
      %v3309 = vmax.f32 %v3284, 0.0
      %v3310 = vmax.f32 %v3286, 0.0
      %v3311 = vmax.f32 %v3289, 0.0
      %v3312 = vmax.f32 %v3291, 0.0
      %v3313 = vmax.f32 %v3294, 0.0
      %v3314 = vmax.f32 %v3296, 0.0
      %v3315 = vmax.f32 %v3299, 0.0
      %v3316 = vmax.f32 %v3301, 0.0
      %v3317 = vadd.f32 %v3303, %v2049
      %v3318 = vadd.f32 %v3304, %v2050
      %v3319 = vadd.f32 %v3305, %v2051
      %v3320 = vadd.f32 %v3306, %v2052
      %v3321 = vadd.f32 %v3307, %v2053
      %v3322 = vadd.f32 %v3308, %v2054
      %v3323 = vadd.f32 %v3309, %v2055
      %v3324 = vadd.f32 %v3310, %v2056
      %v3325 = vadd.f32 %v3311, %v2057
      %v3326 = vadd.f32 %v3312, %v2058
      %v3327 = vadd.f32 %v3313, %v2059
      %v3328 = vadd.f32 %v3314, %v2060
      %v3329 = vadd.f32 %v3315, %v2061
      %v3330 = vadd.f32 %v3316, %v2062
      %v3331 = vpack.c.bf16 %v3318, %v3317
      %v3332 = vpack.c.bf16 %v3320, %v3319
      %v3333 = vpack.c.bf16 %v3322, %v3321
      %v3334 = vpack.c.bf16 %v3324, %v3323
      %v3335 = vpack.c.bf16 %v3326, %v3325
      %v3336 = vpack.c.bf16 %v3328, %v3327
      %v3337 = vpack.c.bf16 %v3330, %v3329
      %v3339 = vperm.slane %v2071, 0
      %v3340 = vperm.slane %v2071, 1
      %v3341 = vperm.slane %v2071, 2
      %v3353 = vunpack.c.l.b16 %v2063
      %v3354 = vunpack.c.h.b16 %v2063
      %v3355 = vunpack.c.l.b16 %v2064
      %v3356 = vunpack.c.l.b16 %v2065
      %v3357 = vunpack.c.h.b16 %v2065
      %v3358 = vunpack.c.l.b16 %v2066
      %v3359 = vunpack.c.l.b16 %v2067
      %v3360 = vunpack.c.h.b16 %v2067
      %v3361 = vunpack.c.l.b16 %v2068
      %v3362 = vunpack.c.l.b16 %v2069
      %v3363 = vunpack.c.h.b16 %v2069
      %v3364 = vunpack.c.l.b16 %v2070
      %v3365 = vpack.c.b16 %v3356, %v3353
      %v3366 = vpack.c.b16 %v3357, %v3354
      %v3367 = vpack.c.b16 %v3358, %v3355
      %v3368 = vpack.c.b16 %v3362, %v3359
      %v3369 = vpack.c.b16 %v3363, %v3360
      %v3370 = vpack.c.b16 %v3364, %v3361
      %v3378 = vsel %vm3164, %v3331, 0
      %v3381 = vsel %vm3164, %v3332, 0
      %v3384 = vsel %vm3164, %v3333, 0
      %v3387 = vsel %vm3164, %v3334, 0
      %v3390 = vsel %vm3164, %v3335, 0
      %v3393 = vsel %vm3164, %v3336, 0
      %v3396 = vsel %vm3164, %v3337, 0
      %3398 = vmatpush.bf16.msra.mxu0 0
      %3399 = vmatpush.bf16.msra.mxu0 0
      %3400 = vmatpush.bf16.msra.mxu0 0
      %3401 = vmatpush.bf16.msra.mxu0 0
      %3402 = vmatpush.bf16.msra.mxu0 0
      %3403 = vmatpush.bf16.msra.mxu0 0
      %3404 = vmatpush.bf16.msra.mxu0 %v3368
      %3405 = vmatpush.bf16.msra.mxu0 %v3365
      %3406 = vmatmul.bf16.gmra.mxu0 %v3378
      %v3407 = vpop.f32.mrf.mxu0
      %v3408 = vadd.f32 %v3339, %v3407
      %v3409 = vpop.f32.mrf.mxu0
      %v3410 = vadd.f32 %v3339, %v3409
      %3411 = vmatmul.bf16.gmra.mxu0 %v3381
      %v3412 = vpop.f32.mrf.mxu0
      %v3413 = vadd.f32 %v3339, %v3412
      %v3414 = vpop.f32.mrf.mxu0
      %v3415 = vadd.f32 %v3339, %v3414
      %3416 = vmatmul.bf16.gmra.mxu0 %v3384
      %v3417 = vpop.f32.mrf.mxu0
      %v3418 = vadd.f32 %v3339, %v3417
      %v3419 = vpop.f32.mrf.mxu0
      %v3420 = vadd.f32 %v3339, %v3419
      %3421 = vmatmul.bf16.gmra.mxu0 %v3387
      %v3422 = vpop.f32.mrf.mxu0
      %v3423 = vadd.f32 %v3339, %v3422
      %v3424 = vpop.f32.mrf.mxu0
      %v3425 = vadd.f32 %v3339, %v3424
      %3426 = vmatmul.bf16.gmra.mxu0 %v3390
      %v3427 = vpop.f32.mrf.mxu0
      %v3428 = vadd.f32 %v3339, %v3427
      %v3429 = vpop.f32.mrf.mxu0
      %v3430 = vadd.f32 %v3339, %v3429
      %3431 = vmatmul.bf16.gmra.mxu0 %v3393
      %v3432 = vpop.f32.mrf.mxu0
      %v3433 = vadd.f32 %v3339, %v3432
      %v3434 = vpop.f32.mrf.mxu0
      %v3435 = vadd.f32 %v3339, %v3434
      %3436 = vmatmul.bf16.gmra.mxu0 %v3396
      %v3437 = vpop.f32.mrf.mxu0
      %v3438 = vadd.f32 %v3339, %v3437
      %v3439 = vpop.f32.mrf.mxu0
      %v3440 = vadd.f32 %v3339, %v3439
      %3441 = vdwg.mxu0
      %3442 = vmatpush.bf16.msra.mxu0 0
      %3443 = vmatpush.bf16.msra.mxu0 0
      %3444 = vmatpush.bf16.msra.mxu0 0
      %3445 = vmatpush.bf16.msra.mxu0 0
      %3446 = vmatpush.bf16.msra.mxu0 0
      %3447 = vmatpush.bf16.msra.mxu0 0
      %3448 = vmatpush.bf16.msra.mxu0 %v3369
      %3449 = vmatpush.bf16.msra.mxu0 %v3366
      %3450 = vmatmul.bf16.gmra.mxu0 %v3378
      %v3451 = vpop.f32.mrf.mxu0
      %v3452 = vadd.f32 %v3340, %v3451
      %v3453 = vpop.f32.mrf.mxu0
      %v3454 = vadd.f32 %v3340, %v3453
      %3455 = vmatmul.bf16.gmra.mxu0 %v3381
      %v3456 = vpop.f32.mrf.mxu0
      %v3457 = vadd.f32 %v3340, %v3456
      %v3458 = vpop.f32.mrf.mxu0
      %v3459 = vadd.f32 %v3340, %v3458
      %3460 = vmatmul.bf16.gmra.mxu0 %v3384
      %v3461 = vpop.f32.mrf.mxu0
      %v3462 = vadd.f32 %v3340, %v3461
      %v3463 = vpop.f32.mrf.mxu0
      %v3464 = vadd.f32 %v3340, %v3463
      %3465 = vmatmul.bf16.gmra.mxu0 %v3387
      %v3466 = vpop.f32.mrf.mxu0
      %v3467 = vadd.f32 %v3340, %v3466
      %v3468 = vpop.f32.mrf.mxu0
      %v3469 = vadd.f32 %v3340, %v3468
      %3470 = vmatmul.bf16.gmra.mxu0 %v3390
      %v3471 = vpop.f32.mrf.mxu0
      %v3472 = vadd.f32 %v3340, %v3471
      %v3473 = vpop.f32.mrf.mxu0
      %v3474 = vadd.f32 %v3340, %v3473
      %3475 = vmatmul.bf16.gmra.mxu0 %v3393
      %v3476 = vpop.f32.mrf.mxu0
      %v3477 = vadd.f32 %v3340, %v3476
      %v3478 = vpop.f32.mrf.mxu0
      %v3479 = vadd.f32 %v3340, %v3478
      %3480 = vmatmul.bf16.gmra.mxu0 %v3396
      %v3481 = vpop.f32.mrf.mxu0
      %v3482 = vadd.f32 %v3340, %v3481
      %v3483 = vpop.f32.mrf.mxu0
      %v3484 = vadd.f32 %v3340, %v3483
      %3485 = vdwg.mxu0
      %3486 = vmatpush.bf16.msra.mxu0 0
      %3487 = vmatpush.bf16.msra.mxu0 0
      %3488 = vmatpush.bf16.msra.mxu0 0
      %3489 = vmatpush.bf16.msra.mxu0 0
      %3490 = vmatpush.bf16.msra.mxu0 0
      %3491 = vmatpush.bf16.msra.mxu0 0
      %3492 = vmatpush.bf16.msra.mxu0 %v3370
      %3493 = vmatpush.bf16.msra.mxu0 %v3367
      %3494 = vmatmul.bf16.gmra.mxu0 %v3378
      %v3495 = vpop.f32.mrf.mxu0
      %v3496 = vadd.f32 %v3341, %v3495
      %v3497 = vpop.f32.mrf.mxu0
      %v3498 = vadd.f32 %v3341, %v3497
      %3499 = vmatmul.bf16.gmra.mxu0 %v3381
      %v3500 = vpop.f32.mrf.mxu0
      %v3501 = vadd.f32 %v3341, %v3500
      %v3502 = vpop.f32.mrf.mxu0
      %v3503 = vadd.f32 %v3341, %v3502
      %3504 = vmatmul.bf16.gmra.mxu0 %v3384
      %v3505 = vpop.f32.mrf.mxu0
      %v3506 = vadd.f32 %v3341, %v3505
      %v3507 = vpop.f32.mrf.mxu0
      %v3508 = vadd.f32 %v3341, %v3507
      %3509 = vmatmul.bf16.gmra.mxu0 %v3387
      %v3510 = vpop.f32.mrf.mxu0
      %v3511 = vadd.f32 %v3341, %v3510
      %v3512 = vpop.f32.mrf.mxu0
      %v3513 = vadd.f32 %v3341, %v3512
      %3514 = vmatmul.bf16.gmra.mxu0 %v3390
      %v3515 = vpop.f32.mrf.mxu0
      %v3516 = vadd.f32 %v3341, %v3515
      %v3517 = vpop.f32.mrf.mxu0
      %v3518 = vadd.f32 %v3341, %v3517
      %3519 = vmatmul.bf16.gmra.mxu0 %v3393
      %v3520 = vpop.f32.mrf.mxu0
      %v3521 = vadd.f32 %v3341, %v3520
      %v3522 = vpop.f32.mrf.mxu0
      %v3523 = vadd.f32 %v3341, %v3522
      %3524 = vmatmul.bf16.gmra.mxu0 %v3396
      %v3525 = vpop.f32.mrf.mxu0
      %v3526 = vadd.f32 %v3341, %v3525
      %v3527 = vpop.f32.mrf.mxu0
      %v3528 = vadd.f32 %v3341, %v3527
      %3529 = vdwg.mxu0
      %v3530 = vpack.c.bf16 %v3408, %v3408
      %v3531 = vpack.c.bf16 %v3410, %v3410
      %v3532 = vpack.c.bf16 %v3413, %v3413
      %v3533 = vpack.c.bf16 %v3415, %v3415
      %v3534 = vpack.c.bf16 %v3418, %v3418
      %v3535 = vpack.c.bf16 %v3420, %v3420
      %v3536 = vpack.c.bf16 %v3423, %v3423
      %v3537 = vpack.c.bf16 %v3425, %v3425
      %v3538 = vpack.c.bf16 %v3428, %v3428
      %v3539 = vpack.c.bf16 %v3430, %v3430
      %v3540 = vpack.c.bf16 %v3433, %v3433
      %v3541 = vpack.c.bf16 %v3435, %v3435
      %v3542 = vpack.c.bf16 %v3438, %v3438
      %v3543 = vpack.c.bf16 %v3440, %v3440
      %v3544 = vpack.c.bf16 %v3452, %v3452
      %v3545 = vpack.c.bf16 %v3454, %v3454
      %v3546 = vpack.c.bf16 %v3457, %v3457
      %v3547 = vpack.c.bf16 %v3459, %v3459
      %v3548 = vpack.c.bf16 %v3462, %v3462
      %v3549 = vpack.c.bf16 %v3464, %v3464
      %v3550 = vpack.c.bf16 %v3467, %v3467
      %v3551 = vpack.c.bf16 %v3469, %v3469
      %v3552 = vpack.c.bf16 %v3472, %v3472
      %v3553 = vpack.c.bf16 %v3474, %v3474
      %v3554 = vpack.c.bf16 %v3477, %v3477
      %v3555 = vpack.c.bf16 %v3479, %v3479
      %v3556 = vpack.c.bf16 %v3482, %v3482
      %v3557 = vpack.c.bf16 %v3484, %v3484
      %v3565 = vunpack.c.l.b16 %v3530
      %v3566 = vunpack.c.l.b16 %v3531
      %v3567 = vunpack.c.l.b16 %v3532
      %v3568 = vunpack.c.l.b16 %v3533
      %v3569 = vunpack.c.l.b16 %v3534
      %v3570 = vunpack.c.l.b16 %v3535
      %v3571 = vunpack.c.l.b16 %v3536
      %v3572 = vpack.c.b16 %v3566, %v3565
      %v3573 = vpack.c.b16 %v3568, %v3567
      %v3574 = vpack.c.b16 %v3570, %v3569
      %v3575 = vpack.c.b16 %v3571, %v3571
      %v3587 = vunpack.c.l.b16 %v3544
      %v3588 = vunpack.c.l.b16 %v3545
      %v3589 = vunpack.c.l.b16 %v3546
      %v3590 = vunpack.c.l.b16 %v3547
      %v3591 = vunpack.c.l.b16 %v3548
      %v3592 = vunpack.c.l.b16 %v3549
      %v3593 = vunpack.c.l.b16 %v3550
      %v3594 = vpack.c.b16 %v3588, %v3587
      %v3595 = vpack.c.b16 %v3590, %v3589
      %v3596 = vpack.c.b16 %v3592, %v3591
      %v3597 = vpack.c.b16 %v3593, %v3593
      %3602 = vmatpush.bf16.xpose.msra.mxu0 0
      %3603 = vmatpush.bf16.xpose.msra.mxu0 0
      %3604 = vmatpush.bf16.xpose.msra.mxu0 0
      %3605 = vmatpush.bf16.xpose.msra.mxu0 0
      %3606 = vmatpush.bf16.xpose.msra.mxu0 %v3597
      %3607 = vmatpush.bf16.xpose.msra.mxu0 %v3596
      %3608 = vmatpush.bf16.xpose.msra.mxu0 %v3595
      %3609 = vmatpush.bf16.xpose.msra.mxu0 %v3594
      %3610 = vmatmul.bf16.gmra.mxu0 %v3572
      %v3611 = vpop.f32.mrf.mxu0
      %v3612 = vadd.f32 0.0, %v3611
      %v3613 = vpop.f32.mrf.mxu0
      %v3614 = vadd.f32 0.0, %v3613
      %3615 = vmatmul.bf16.gmra.mxu0 %v3573
      %v3616 = vpop.f32.mrf.mxu0
      %v3617 = vadd.f32 0.0, %v3616
      %v3618 = vpop.f32.mrf.mxu0
      %v3619 = vadd.f32 0.0, %v3618
      %3620 = vmatmul.bf16.gmra.mxu0 %v3574
      %v3621 = vpop.f32.mrf.mxu0
      %v3622 = vadd.f32 0.0, %v3621
      %v3623 = vpop.f32.mrf.mxu0
      %v3624 = vadd.f32 0.0, %v3623
      %3625 = vmatmul.bf16.gmra.mxu0 %v3575
      %v3626 = vpop.f32.mrf.mxu0
      %v3627 = vadd.f32 0.0, %v3626
      %v3628 = vpop.f32.mrf.mxu0
      %3629 = vdwg.mxu0
      %v3637 = vunpack.c.l.b16 %v3537
      %v3638 = vunpack.c.l.b16 %v3538
      %v3639 = vunpack.c.l.b16 %v3539
      %v3640 = vunpack.c.l.b16 %v3540
      %v3641 = vunpack.c.l.b16 %v3541
      %v3642 = vunpack.c.l.b16 %v3542
      %v3643 = vunpack.c.l.b16 %v3543
      %v3644 = vpack.c.b16 %v3638, %v3637
      %v3645 = vpack.c.b16 %v3640, %v3639
      %v3646 = vpack.c.b16 %v3642, %v3641
      %v3647 = vpack.c.b16 %v3643, %v3643
      %v3659 = vunpack.c.l.b16 %v3551
      %v3660 = vunpack.c.l.b16 %v3552
      %v3661 = vunpack.c.l.b16 %v3553
      %v3662 = vunpack.c.l.b16 %v3554
      %v3663 = vunpack.c.l.b16 %v3555
      %v3664 = vunpack.c.l.b16 %v3556
      %v3665 = vunpack.c.l.b16 %v3557
      %v3666 = vpack.c.b16 %v3660, %v3659
      %v3667 = vpack.c.b16 %v3662, %v3661
      %v3668 = vpack.c.b16 %v3664, %v3663
      %v3669 = vpack.c.b16 %v3665, %v3665
      %3674 = vmatpush.bf16.xpose.msra.mxu0 0
      %3675 = vmatpush.bf16.xpose.msra.mxu0 0
      %3676 = vmatpush.bf16.xpose.msra.mxu0 0
      %3677 = vmatpush.bf16.xpose.msra.mxu0 0
      %3678 = vmatpush.bf16.xpose.msra.mxu0 %v3669
      %3679 = vmatpush.bf16.xpose.msra.mxu0 %v3668
      %3680 = vmatpush.bf16.xpose.msra.mxu0 %v3667
      %3681 = vmatpush.bf16.xpose.msra.mxu0 %v3666
      %3682 = vmatmul.bf16.gmra.mxu0 %v3644
      %v3683 = vpop.f32.mrf.mxu0
      %v3684 = vadd.f32 0.0, %v3683
      %v3685 = vpop.f32.mrf.mxu0
      %v3686 = vadd.f32 0.0, %v3685
      %3687 = vmatmul.bf16.gmra.mxu0 %v3645
      %v3688 = vpop.f32.mrf.mxu0
      %v3689 = vadd.f32 0.0, %v3688
      %v3690 = vpop.f32.mrf.mxu0
      %v3691 = vadd.f32 0.0, %v3690
      %3692 = vmatmul.bf16.gmra.mxu0 %v3646
      %v3693 = vpop.f32.mrf.mxu0
      %v3694 = vadd.f32 0.0, %v3693
      %v3695 = vpop.f32.mrf.mxu0
      %v3696 = vadd.f32 0.0, %v3695
      %3697 = vmatmul.bf16.gmra.mxu0 %v3647
      %v3698 = vpop.f32.mrf.mxu0
      %v3699 = vadd.f32 0.0, %v3698
      %v3700 = vpop.f32.mrf.mxu0
      %3701 = vdwg.mxu0
      %v3702 = vmul.f32 %v3612, 0.17677669
      %v3703 = vmul.f32 %v3614, 0.17677669
      %v3704 = vmul.f32 %v3617, 0.17677669
      %v3705 = vmul.f32 %v3619, 0.17677669
      %v3706 = vmul.f32 %v3622, 0.17677669
      %v3707 = vmul.f32 %v3624, 0.17677669
      %v3708 = vmul.f32 %v3627, 0.17677669
      %v3709 = vmul.f32 %v3684, 0.17677669
      %v3710 = vmul.f32 %v3686, 0.17677669
      %v3711 = vmul.f32 %v3689, 0.17677669
      %v3712 = vmul.f32 %v3691, 0.17677669
      %v3713 = vmul.f32 %v3694, 0.17677669
      %v3714 = vmul.f32 %v3696, 0.17677669
      %v3715 = vmul.f32 %v3699, 0.17677669
      %v3716 = vlaneseq
      %v3717 = vand.u32 %v3716, 127
      %vm3718 = vcmp.lt.s32.totalorder %v3717, 51
      %v3719 = vsel %vm3718, %v3702, -1e+30
      %v3720 = vsel %vm3718, %v3703, -1e+30
      %v3721 = vsel %vm3718, %v3704, -1e+30
      %v3722 = vsel %vm3718, %v3705, -1e+30
      %v3723 = vsel %vm3718, %v3706, -1e+30
      %v3724 = vsel %vm3718, %v3707, -1e+30
      %v3725 = vsel %vm3718, %v3708, -1e+30
      %v3726 = vsel %vm3718, %v3709, -1e+30
      %v3727 = vsel %vm3718, %v3710, -1e+30
      %v3728 = vsel %vm3718, %v3711, -1e+30
      %v3729 = vsel %vm3718, %v3712, -1e+30
      %v3730 = vsel %vm3718, %v3713, -1e+30
      %v3731 = vsel %vm3718, %v3714, -1e+30
      %v3732 = vsel %vm3718, %v3715, -1e+30
      %vm3733 = vcmask 457728
      %v3734 = vsel %vm3733, %v3719, -inf
      %3735 = vmax.xlane.f32.xlu0 %v3734
      %v3736 = vpop.xlane.xlu0 %3735
      %v3737 = vsel %vm3733, %v3720, -inf
      %3738 = vmax.xlane.f32.xlu0 %v3737
      %v3739 = vpop.xlane.xlu0 %3738
      %v3740 = vsel %vm3733, %v3721, -inf
      %3741 = vmax.xlane.f32.xlu0 %v3740
      %v3742 = vpop.xlane.xlu0 %3741
      %v3743 = vsel %vm3733, %v3722, -inf
      %3744 = vmax.xlane.f32.xlu0 %v3743
      %v3745 = vpop.xlane.xlu0 %3744
      %v3746 = vsel %vm3733, %v3723, -inf
      %3747 = vmax.xlane.f32.xlu0 %v3746
      %v3748 = vpop.xlane.xlu0 %3747
      %v3749 = vsel %vm3733, %v3724, -inf
      %3750 = vmax.xlane.f32.xlu0 %v3749
      %v3751 = vpop.xlane.xlu0 %3750
      %v3752 = vsel %vm3733, %v3725, -inf
      %3753 = vmax.xlane.f32.xlu0 %v3752
      %v3754 = vpop.xlane.xlu0 %3753
      %v3755 = vsel %vm3733, %v3726, -inf
      %3756 = vmax.xlane.f32.xlu0 %v3755
      %v3757 = vpop.xlane.xlu0 %3756
      %v3758 = vsel %vm3733, %v3727, -inf
      %3759 = vmax.xlane.f32.xlu0 %v3758
      %v3760 = vpop.xlane.xlu0 %3759
      %v3761 = vsel %vm3733, %v3728, -inf
      %3762 = vmax.xlane.f32.xlu0 %v3761
      %v3763 = vpop.xlane.xlu0 %3762
      %v3764 = vsel %vm3733, %v3729, -inf
      %3765 = vmax.xlane.f32.xlu0 %v3764
      %v3766 = vpop.xlane.xlu0 %3765
      %v3767 = vsel %vm3733, %v3730, -inf
      %3768 = vmax.xlane.f32.xlu0 %v3767
      %v3769 = vpop.xlane.xlu0 %3768
      %v3770 = vsel %vm3733, %v3731, -inf
      %3771 = vmax.xlane.f32.xlu0 %v3770
      %v3772 = vpop.xlane.xlu0 %3771
      %v3773 = vsel %vm3733, %v3732, -inf
      %3774 = vmax.xlane.f32.xlu0 %v3773
      %v3775 = vpop.xlane.xlu0 %3774
      %v3776 = vsub.f32 %v3719, %v3736
      %v3777 = vsub.f32 %v3720, %v3739
      %v3778 = vsub.f32 %v3721, %v3742
      %v3779 = vsub.f32 %v3722, %v3745
      %v3780 = vsub.f32 %v3723, %v3748
      %v3781 = vsub.f32 %v3724, %v3751
      %v3782 = vsub.f32 %v3725, %v3754
      %v3783 = vsub.f32 %v3726, %v3757
      %v3784 = vsub.f32 %v3727, %v3760
      %v3785 = vsub.f32 %v3728, %v3763
      %v3786 = vsub.f32 %v3729, %v3766
      %v3787 = vsub.f32 %v3730, %v3769
      %v3788 = vsub.f32 %v3731, %v3772
      %v3789 = vsub.f32 %v3732, %v3775
      %v3790 = vmul.f32 %v3776, 1.442695
      %v3791 = vpow.pop %v3790
      %v3792 = vmul.f32 %v3777, 1.442695
      %v3793 = vpow.pop %v3792
      %v3794 = vmul.f32 %v3778, 1.442695
      %v3795 = vpow.pop %v3794
      %v3796 = vmul.f32 %v3779, 1.442695
      %v3797 = vpow.pop %v3796
      %v3798 = vmul.f32 %v3780, 1.442695
      %v3799 = vpow.pop %v3798
      %v3800 = vmul.f32 %v3781, 1.442695
      %v3801 = vpow.pop %v3800
      %v3802 = vmul.f32 %v3782, 1.442695
      %v3803 = vpow.pop %v3802
      %v3804 = vmul.f32 %v3783, 1.442695
      %v3805 = vpow.pop %v3804
      %v3806 = vmul.f32 %v3784, 1.442695
      %v3807 = vpow.pop %v3806
      %v3808 = vmul.f32 %v3785, 1.442695
      %v3809 = vpow.pop %v3808
      %v3810 = vmul.f32 %v3786, 1.442695
      %v3811 = vpow.pop %v3810
      %v3812 = vmul.f32 %v3787, 1.442695
      %v3813 = vpow.pop %v3812
      %v3814 = vmul.f32 %v3788, 1.442695
      %v3815 = vpow.pop %v3814
      %v3816 = vmul.f32 %v3789, 1.442695
      %v3817 = vpow.pop %v3816
      %v3818 = vsel %vm3733, %v3791, 0.0
      %3819 = vadd.xlane.f32.xlu0 %v3818
      %v3820 = vpop.xlane.xlu0 %3819
      %v3821 = vsel %vm3733, %v3793, 0.0
      %3822 = vadd.xlane.f32.xlu0 %v3821
      %v3823 = vpop.xlane.xlu0 %3822
      %v3824 = vsel %vm3733, %v3795, 0.0
      %3825 = vadd.xlane.f32.xlu0 %v3824
      %v3826 = vpop.xlane.xlu0 %3825
      %v3827 = vsel %vm3733, %v3797, 0.0
      %3828 = vadd.xlane.f32.xlu0 %v3827
      %v3829 = vpop.xlane.xlu0 %3828
      %v3830 = vsel %vm3733, %v3799, 0.0
      %3831 = vadd.xlane.f32.xlu0 %v3830
      %v3832 = vpop.xlane.xlu0 %3831
      %v3833 = vsel %vm3733, %v3801, 0.0
      %3834 = vadd.xlane.f32.xlu0 %v3833
      %v3835 = vpop.xlane.xlu0 %3834
      %v3836 = vsel %vm3733, %v3803, 0.0
      %3837 = vadd.xlane.f32.xlu0 %v3836
      %v3838 = vpop.xlane.xlu0 %3837
      %v3839 = vsel %vm3733, %v3805, 0.0
      %3840 = vadd.xlane.f32.xlu0 %v3839
      %v3841 = vpop.xlane.xlu0 %3840
      %v3842 = vsel %vm3733, %v3807, 0.0
      %3843 = vadd.xlane.f32.xlu0 %v3842
      %v3844 = vpop.xlane.xlu0 %3843
      %v3845 = vsel %vm3733, %v3809, 0.0
      %3846 = vadd.xlane.f32.xlu0 %v3845
      %v3847 = vpop.xlane.xlu0 %3846
      %v3848 = vsel %vm3733, %v3811, 0.0
      %3849 = vadd.xlane.f32.xlu0 %v3848
      %v3850 = vpop.xlane.xlu0 %3849
      %v3851 = vsel %vm3733, %v3813, 0.0
      %3852 = vadd.xlane.f32.xlu0 %v3851
      %v3853 = vpop.xlane.xlu0 %3852
      %v3854 = vsel %vm3733, %v3815, 0.0
      %3855 = vadd.xlane.f32.xlu0 %v3854
      %v3856 = vpop.xlane.xlu0 %3855
      %v3857 = vsel %vm3733, %v3817, 0.0
      %3858 = vadd.xlane.f32.xlu0 %v3857
      %v3859 = vpop.xlane.xlu0 %3858
      %v3860 = vrcp.pop %v3820
      %v3861 = vrcp.pop %v3823
      %v3862 = vrcp.pop %v3826
      %v3863 = vrcp.pop %v3829
      %v3864 = vrcp.pop %v3832
      %v3865 = vrcp.pop %v3835
      %v3866 = vrcp.pop %v3838
      %v3867 = vrcp.pop %v3841
      %v3868 = vrcp.pop %v3844
      %v3869 = vrcp.pop %v3847
      %v3870 = vrcp.pop %v3850
      %v3871 = vrcp.pop %v3853
      %v3872 = vrcp.pop %v3856
      %v3873 = vrcp.pop %v3859
      %v3874 = vmul.f32 %v3791, %v3860
      %v3875 = vmul.f32 %v3793, %v3861
      %v3876 = vmul.f32 %v3795, %v3862
      %v3877 = vmul.f32 %v3797, %v3863
      %v3878 = vmul.f32 %v3799, %v3864
      %v3879 = vmul.f32 %v3801, %v3865
      %v3880 = vmul.f32 %v3803, %v3866
      %v3881 = vmul.f32 %v3805, %v3867
      %v3882 = vmul.f32 %v3807, %v3868
      %v3883 = vmul.f32 %v3809, %v3869
      %v3884 = vmul.f32 %v3811, %v3870
      %v3885 = vmul.f32 %v3813, %v3871
      %v3886 = vmul.f32 %v3815, %v3872
      %v3887 = vmul.f32 %v3817, %v3873
      %v3888 = vpack.c.bf16 %v3874, %v3874
      %v3889 = vpack.c.bf16 %v3875, %v3875
      %v3890 = vpack.c.bf16 %v3876, %v3876
      %v3891 = vpack.c.bf16 %v3877, %v3877
      %v3892 = vpack.c.bf16 %v3878, %v3878
      %v3893 = vpack.c.bf16 %v3879, %v3879
      %v3894 = vpack.c.bf16 %v3880, %v3880
      %v3895 = vpack.c.bf16 %v3881, %v3881
      %v3896 = vpack.c.bf16 %v3882, %v3882
      %v3897 = vpack.c.bf16 %v3883, %v3883
      %v3898 = vpack.c.bf16 %v3884, %v3884
      %v3899 = vpack.c.bf16 %v3885, %v3885
      %v3900 = vpack.c.bf16 %v3886, %v3886
      %v3901 = vpack.c.bf16 %v3887, %v3887
      %v3902 = vpack.c.bf16 %v3496, %v3496
      %v3903 = vpack.c.bf16 %v3498, %v3498
      %v3904 = vpack.c.bf16 %v3501, %v3501
      %v3905 = vpack.c.bf16 %v3503, %v3503
      %v3906 = vpack.c.bf16 %v3506, %v3506
      %v3907 = vpack.c.bf16 %v3508, %v3508
      %v3908 = vpack.c.bf16 %v3511, %v3511
      %v3909 = vpack.c.bf16 %v3513, %v3513
      %v3910 = vpack.c.bf16 %v3516, %v3516
      %v3911 = vpack.c.bf16 %v3518, %v3518
      %v3912 = vpack.c.bf16 %v3521, %v3521
      %v3913 = vpack.c.bf16 %v3523, %v3523
      %v3914 = vpack.c.bf16 %v3526, %v3526
      %v3915 = vpack.c.bf16 %v3528, %v3528
      %v3923 = vunpack.c.l.b16 %v3888
      %v3924 = vunpack.c.l.b16 %v3889
      %v3925 = vunpack.c.l.b16 %v3890
      %v3926 = vunpack.c.l.b16 %v3891
      %v3927 = vunpack.c.l.b16 %v3892
      %v3928 = vunpack.c.l.b16 %v3893
      %v3929 = vunpack.c.l.b16 %v3894
      %v3930 = vpack.c.b16 %v3924, %v3923
      %v3931 = vpack.c.b16 %v3926, %v3925
      %v3932 = vpack.c.b16 %v3928, %v3927
      %v3933 = vpack.c.b16 %v3929, %v3929
      %v3941 = vunpack.c.l.b16 %v3902
      %v3942 = vunpack.c.l.b16 %v3903
      %v3943 = vunpack.c.l.b16 %v3904
      %v3944 = vunpack.c.l.b16 %v3905
      %v3945 = vunpack.c.l.b16 %v3906
      %v3946 = vunpack.c.l.b16 %v3907
      %v3947 = vunpack.c.l.b16 %v3908
      %v3948 = vpack.c.b16 %v3942, %v3941
      %v3949 = vpack.c.b16 %v3944, %v3943
      %v3950 = vpack.c.b16 %v3946, %v3945
      %v3951 = vpack.c.b16 %v3947, %v3947
      %v3956 = vsel %vm3733, %v3930, 0
      %v3959 = vsel %vm3733, %v3931, 0
      %v3962 = vsel %vm3733, %v3932, 0
      %v3965 = vsel %vm3733, %v3933, 0
      %v3968 = vsel %vm1751, %v3951, 0
      %3970 = vmatpush.bf16.msra.mxu0 0
      %3971 = vmatpush.bf16.msra.mxu0 0
      %3972 = vmatpush.bf16.msra.mxu0 0
      %3973 = vmatpush.bf16.msra.mxu0 0
      %3974 = vmatpush.bf16.msra.mxu0 %v3968
      %3975 = vmatpush.bf16.msra.mxu0 %v3950
      %3976 = vmatpush.bf16.msra.mxu0 %v3949
      %3977 = vmatpush.bf16.msra.mxu0 %v3948
      %3978 = vmatmul.bf16.gmra.mxu0 %v3956
      %v3979 = vpop.f32.mrf.mxu0
      %v3980 = vadd.f32 0.0, %v3979
      %v3981 = vpop.f32.mrf.mxu0
      %v3982 = vadd.f32 0.0, %v3981
      %3983 = vmatmul.bf16.gmra.mxu0 %v3959
      %v3984 = vpop.f32.mrf.mxu0
      %v3985 = vadd.f32 0.0, %v3984
      %v3986 = vpop.f32.mrf.mxu0
      %v3987 = vadd.f32 0.0, %v3986
      %3988 = vmatmul.bf16.gmra.mxu0 %v3962
      %v3989 = vpop.f32.mrf.mxu0
      %v3990 = vadd.f32 0.0, %v3989
      %v3991 = vpop.f32.mrf.mxu0
      %v3992 = vadd.f32 0.0, %v3991
      %3993 = vmatmul.bf16.gmra.mxu0 %v3965
      %v3994 = vpop.f32.mrf.mxu0
      %v3995 = vadd.f32 0.0, %v3994
      %v3996 = vpop.f32.mrf.mxu0
      %3997 = vdwg.mxu0
      %v4005 = vunpack.c.l.b16 %v3895
      %v4006 = vunpack.c.l.b16 %v3896
      %v4007 = vunpack.c.l.b16 %v3897
      %v4008 = vunpack.c.l.b16 %v3898
      %v4009 = vunpack.c.l.b16 %v3899
      %v4010 = vunpack.c.l.b16 %v3900
      %v4011 = vunpack.c.l.b16 %v3901
      %v4012 = vpack.c.b16 %v4006, %v4005
      %v4013 = vpack.c.b16 %v4008, %v4007
      %v4014 = vpack.c.b16 %v4010, %v4009
      %v4015 = vpack.c.b16 %v4011, %v4011
      %v4023 = vunpack.c.l.b16 %v3909
      %v4024 = vunpack.c.l.b16 %v3910
      %v4025 = vunpack.c.l.b16 %v3911
      %v4026 = vunpack.c.l.b16 %v3912
      %v4027 = vunpack.c.l.b16 %v3913
      %v4028 = vunpack.c.l.b16 %v3914
      %v4029 = vunpack.c.l.b16 %v3915
      %v4030 = vpack.c.b16 %v4024, %v4023
      %v4031 = vpack.c.b16 %v4026, %v4025
      %v4032 = vpack.c.b16 %v4028, %v4027
      %v4033 = vpack.c.b16 %v4029, %v4029
      %v4038 = vsel %vm3733, %v4012, 0
      %v4041 = vsel %vm3733, %v4013, 0
      %v4044 = vsel %vm3733, %v4014, 0
      %v4047 = vsel %vm3733, %v4015, 0
      %v4050 = vsel %vm1751, %v4033, 0
      %4052 = vmatpush.bf16.msra.mxu0 0
      %4053 = vmatpush.bf16.msra.mxu0 0
      %4054 = vmatpush.bf16.msra.mxu0 0
      %4055 = vmatpush.bf16.msra.mxu0 0
      %4056 = vmatpush.bf16.msra.mxu0 %v4050
      %4057 = vmatpush.bf16.msra.mxu0 %v4032
      %4058 = vmatpush.bf16.msra.mxu0 %v4031
      %4059 = vmatpush.bf16.msra.mxu0 %v4030
      %4060 = vmatmul.bf16.gmra.mxu0 %v4038
      %v4061 = vpop.f32.mrf.mxu0
      %v4062 = vadd.f32 0.0, %v4061
      %v4063 = vpop.f32.mrf.mxu0
      %v4064 = vadd.f32 0.0, %v4063
      %4065 = vmatmul.bf16.gmra.mxu0 %v4041
      %v4066 = vpop.f32.mrf.mxu0
      %v4067 = vadd.f32 0.0, %v4066
      %v4068 = vpop.f32.mrf.mxu0
      %v4069 = vadd.f32 0.0, %v4068
      %4070 = vmatmul.bf16.gmra.mxu0 %v4044
      %v4071 = vpop.f32.mrf.mxu0
      %v4072 = vadd.f32 0.0, %v4071
      %v4073 = vpop.f32.mrf.mxu0
      %v4074 = vadd.f32 0.0, %v4073
      %4075 = vmatmul.bf16.gmra.mxu0 %v4047
      %v4076 = vpop.f32.mrf.mxu0
      %v4077 = vadd.f32 0.0, %v4076
      %v4078 = vpop.f32.mrf.mxu0
      %4079 = vdwg.mxu0
      %v4080 = vpack.c.bf16 %v3982, %v3980
      %v4081 = vpack.c.bf16 %v3987, %v3985
      %v4082 = vpack.c.bf16 %v3992, %v3990
      %v4083 = vpack.c.bf16 %v4062, %v3995
      %v4084 = vpack.c.bf16 %v4067, %v4064
      %v4085 = vpack.c.bf16 %v4072, %v4069
      %v4086 = vpack.c.bf16 %v4077, %v4074
      %v4088 = vperm.slane %v2088, 0
      %v4106 = vunpack.c.l.b16 %v2072
      %v4107 = vunpack.c.l.b16 %v2073
      %v4108 = vunpack.c.l.b16 %v2074
      %v4109 = vunpack.c.l.b16 %v2075
      %v4110 = vunpack.c.l.b16 %v2076
      %v4111 = vunpack.c.l.b16 %v2077
      %v4112 = vunpack.c.l.b16 %v2078
      %v4113 = vunpack.c.l.b16 %v2079
      %v4114 = vunpack.c.l.b16 %v2080
      %v4115 = vunpack.c.l.b16 %v2081
      %v4116 = vunpack.c.l.b16 %v2082
      %v4117 = vunpack.c.l.b16 %v2083
      %v4118 = vunpack.c.l.b16 %v2084
      %v4119 = vunpack.c.l.b16 %v2085
      %v4120 = vunpack.c.l.b16 %v2086
      %v4121 = vunpack.c.l.b16 %v2087
      %v4122 = vpack.c.b16 %v4107, %v4106
      %v4123 = vpack.c.b16 %v4109, %v4108
      %v4124 = vpack.c.b16 %v4111, %v4110
      %v4125 = vpack.c.b16 %v4113, %v4112
      %v4126 = vpack.c.b16 %v4115, %v4114
      %v4127 = vpack.c.b16 %v4117, %v4116
      %v4128 = vpack.c.b16 %v4119, %v4118
      %v4129 = vpack.c.b16 %v4121, %v4120
      %4138 = vmatpush.bf16.msra.mxu0 %v4129
      %4139 = vmatpush.bf16.msra.mxu0 %v4128
      %4140 = vmatpush.bf16.msra.mxu0 %v4127
      %4141 = vmatpush.bf16.msra.mxu0 %v4126
      %4142 = vmatpush.bf16.msra.mxu0 %v4125
      %4143 = vmatpush.bf16.msra.mxu0 %v4124
      %4144 = vmatpush.bf16.msra.mxu0 %v4123
      %4145 = vmatpush.bf16.msra.mxu0 %v4122
      %4146 = vmatmul.bf16.gmra.mxu0 %v4080
      %v4147 = vpop.f32.mrf.mxu0
      %v4148 = vadd.f32 %v4088, %v4147
      %v4149 = vpop.f32.mrf.mxu0
      %v4150 = vadd.f32 %v4088, %v4149
      %4151 = vmatmul.bf16.gmra.mxu0 %v4081
      %v4152 = vpop.f32.mrf.mxu0
      %v4153 = vadd.f32 %v4088, %v4152
      %v4154 = vpop.f32.mrf.mxu0
      %v4155 = vadd.f32 %v4088, %v4154
      %4156 = vmatmul.bf16.gmra.mxu0 %v4082
      %v4157 = vpop.f32.mrf.mxu0
      %v4158 = vadd.f32 %v4088, %v4157
      %v4159 = vpop.f32.mrf.mxu0
      %v4160 = vadd.f32 %v4088, %v4159
      %4161 = vmatmul.bf16.gmra.mxu0 %v4083
      %v4162 = vpop.f32.mrf.mxu0
      %v4163 = vadd.f32 %v4088, %v4162
      %v4164 = vpop.f32.mrf.mxu0
      %v4165 = vadd.f32 %v4088, %v4164
      %4166 = vmatmul.bf16.gmra.mxu0 %v4084
      %v4167 = vpop.f32.mrf.mxu0
      %v4168 = vadd.f32 %v4088, %v4167
      %v4169 = vpop.f32.mrf.mxu0
      %v4170 = vadd.f32 %v4088, %v4169
      %4171 = vmatmul.bf16.gmra.mxu0 %v4085
      %v4172 = vpop.f32.mrf.mxu0
      %v4173 = vadd.f32 %v4088, %v4172
      %v4174 = vpop.f32.mrf.mxu0
      %v4175 = vadd.f32 %v4088, %v4174
      %4176 = vmatmul.bf16.gmra.mxu0 %v4086
      %v4177 = vpop.f32.mrf.mxu0
      %v4178 = vadd.f32 %v4088, %v4177
      %v4179 = vpop.f32.mrf.mxu0
      %v4180 = vadd.f32 %v4088, %v4179
      %4181 = vdwg.mxu0
      %v4182 = vld [vmem:[%s29] sm:$0xff]
      %v4183 = vld [vmem:[%s29 + $0x8] sm:$0xff]
      %v4184 = vld [vmem:[%s29 + $0x10] sm:$0xff]
      %v4185 = vld [vmem:[%s29 + $0x18] sm:$0xff]
      %v4186 = vld [vmem:[%s29 + $0x20] sm:$0xff]
      %v4187 = vld [vmem:[%s29 + $0x28] sm:$0xff]
      %v4188 = vld [vmem:[%s29 + $0x30] sm:$0xff]
      %v4189 = vld [vmem:[%s29 + $0x38] sm:$0xff]
      %v4190 = vld [vmem:[%s29 + $0x40] sm:$0xff]
      %v4191 = vld [vmem:[%s29 + $0x48] sm:$0xff]
      %v4192 = vld [vmem:[%s29 + $0x50] sm:$0xff]
      %v4193 = vld [vmem:[%s29 + $0x58] sm:$0xff]
      %v4194 = vld [vmem:[%s29 + $0x60] sm:$0xff]
      %v4195 = vld [vmem:[%s29 + $0x68] sm:$0xff]
      %4197 = vset.pattern.permute.xlu0 0
      %4198 = vperm.xlu0 %4197, %v4182
      %v4199 = vpop.permute.xlu0 %4198
      %4202 = vset.pattern.permute.xlu0 0
      %4203 = vperm.xlu0 %4202, %v4183
      %v4204 = vpop.permute.xlu0 %4203
      %4207 = vset.pattern.permute.xlu0 0
      %4208 = vperm.xlu0 %4207, %v4184
      %v4209 = vpop.permute.xlu0 %4208
      %4212 = vset.pattern.permute.xlu0 0
      %4213 = vperm.xlu0 %4212, %v4185
      %v4214 = vpop.permute.xlu0 %4213
      %4217 = vset.pattern.permute.xlu0 0
      %4218 = vperm.xlu0 %4217, %v4186
      %v4219 = vpop.permute.xlu0 %4218
      %4222 = vset.pattern.permute.xlu0 0
      %4223 = vperm.xlu0 %4222, %v4187
      %v4224 = vpop.permute.xlu0 %4223
      %4227 = vset.pattern.permute.xlu0 0
      %4228 = vperm.xlu0 %4227, %v4188
      %v4229 = vpop.permute.xlu0 %4228
      %4232 = vset.pattern.permute.xlu0 0
      %4233 = vperm.xlu0 %4232, %v4189
      %v4234 = vpop.permute.xlu0 %4233
      %4237 = vset.pattern.permute.xlu0 0
      %4238 = vperm.xlu0 %4237, %v4190
      %v4239 = vpop.permute.xlu0 %4238
      %4242 = vset.pattern.permute.xlu0 0
      %4243 = vperm.xlu0 %4242, %v4191
      %v4244 = vpop.permute.xlu0 %4243
      %4247 = vset.pattern.permute.xlu0 0
      %4248 = vperm.xlu0 %4247, %v4192
      %v4249 = vpop.permute.xlu0 %4248
      %4252 = vset.pattern.permute.xlu0 0
      %4253 = vperm.xlu0 %4252, %v4193
      %v4254 = vpop.permute.xlu0 %4253
      %4257 = vset.pattern.permute.xlu0 0
      %4258 = vperm.xlu0 %4257, %v4194
      %v4259 = vpop.permute.xlu0 %4258
      %4262 = vset.pattern.permute.xlu0 0
      %4263 = vperm.xlu0 %4262, %v4195
      %v4264 = vpop.permute.xlu0 %4263
      %v4266 = vmul.f32 %v4148, %v4199
      %v4267 = vmul.f32 %v4150, %v4204
      %v4268 = vmul.f32 %v4153, %v4209
      %v4269 = vmul.f32 %v4155, %v4214
      %v4270 = vmul.f32 %v4158, %v4219
      %v4271 = vmul.f32 %v4160, %v4224
      %v4272 = vmul.f32 %v4163, %v4229
      %v4273 = vmul.f32 %v4165, %v4234
      %v4274 = vmul.f32 %v4168, %v4239
      %v4275 = vmul.f32 %v4170, %v4244
      %v4276 = vmul.f32 %v4173, %v4249
      %v4277 = vmul.f32 %v4175, %v4254
      %v4278 = vmul.f32 %v4178, %v4259
      %v4279 = vmul.f32 %v4180, %v4264
      %v4280 = vld [vmem:[%s31] sm:$0xf]
      %v4281 = vld [vmem:[%s31 + $0x4] sm:$0xf]
      %v4282 = vld [vmem:[%s31 + $0x8] sm:$0xf]
      %v4283 = vld [vmem:[%s31 + $0xc] sm:$0xf]
      %v4284 = vld [vmem:[%s31 + $0x10] sm:$0xf]
      %v4285 = vld [vmem:[%s31 + $0x14] sm:$0xf]
      %v4286 = vld [vmem:[%s31 + $0x18] sm:$0xf]
      %v4287 = vld [vmem:[%s31 + $0x1c] sm:$0xf]
      %v4288 = vld [vmem:[%s33] sm:$0xf]
      %v4289 = vld [vmem:[%s33 + $0x4] sm:$0xf]
      %v4290 = vld [vmem:[%s33 + $0x8] sm:$0xf]
      %v4291 = vld [vmem:[%s33 + $0xc] sm:$0xf]
      %v4292 = vld [vmem:[%s33 + $0x10] sm:$0xf]
      %v4293 = vld [vmem:[%s33 + $0x14] sm:$0xf]
      %v4294 = vld [vmem:[%s33 + $0x18] sm:$0xf]
      %v4295 = vld [vmem:[%s33 + $0x1c] sm:$0xf]
      %v4296 = vld [vmem:[%s33 + $0x20] sm:$0xf]
      %v4297 = vld [vmem:[%s33 + $0x24] sm:$0xf]
      %v4298 = vld [vmem:[%s33 + $0x28] sm:$0xf]
      %v4299 = vld [vmem:[%s33 + $0x2c] sm:$0xf]
      %v4300 = vld [vmem:[%s35] sm:$0xf]
      %v4301 = vld [vmem:[%s35 + $0x4] sm:$0xf]
      %v4302 = vld [vmem:[%s35 + $0x8] sm:$0xf]
      %v4303 = vld [vmem:[%s35 + $0xc] sm:$0xf]
      %v4304 = vld [vmem:[%s35 + $0x10] sm:$0xf]
      %v4305 = vld [vmem:[%s35 + $0x14] sm:$0xf]
      %v4306 = vld [vmem:[%s35 + $0x18] sm:$0xf]
      %v4307 = vld [vmem:[%s35 + $0x1c] sm:$0xf]
      %v4308 = vld [vmem:[%s35 + $0x20] sm:$0xf]
      %v4309 = vld [vmem:[%s35 + $0x24] sm:$0xf]
      %v4310 = vld [vmem:[%s35 + $0x28] sm:$0xf]
      %v4311 = vld [vmem:[%s35 + $0x2c] sm:$0xf]
      %v4312 = vld [vmem:[%s35 + $0x30] sm:$0xf]
      %v4313 = vld [vmem:[%s35 + $0x34] sm:$0xf]
      %v4314 = vld [vmem:[%s35 + $0x38] sm:$0xf]
      %v4315 = vld [vmem:[%s35 + $0x3c] sm:$0xf]
      %v4316 = vld [vmem:[%s35 + $0x40] sm:$0xf]
      %v4317 = vld [vmem:[%s35 + $0x44] sm:$0xf]
      %v4318 = vld [vmem:[%s37] sm:$0xf]
      %v4319 = vld [vmem:[%s37 + $0x4] sm:$0xf]
      %v4320 = vld [vmem:[%s37 + $0x8] sm:$0xf]
      %v4321 = vld [vmem:[%s37 + $0xc] sm:$0xf]
      %v4322 = vld [vmem:[%s39] sm:$0xff]
      %v4323 = vld [vmem:[%s39 + $0x8] sm:$0xff]
      %v4324 = vld [vmem:[%s39 + $0x10] sm:$0xff]
      %v4325 = vld [vmem:[%s39 + $0x18] sm:$0xff]
      %v4326 = vld [vmem:[%s39 + $0x20] sm:$0xff]
      %v4327 = vld [vmem:[%s39 + $0x28] sm:$0xff]
      %v4328 = vld [vmem:[%s39 + $0x30] sm:$0xff]
      %v4329 = vld [vmem:[%s39 + $0x38] sm:$0xff]
      %v4330 = vld [vmem:[%s41] sm:$0xff]
      %v4331 = vld [vmem:[%s41 + $0x8] sm:$0xf]
      %v4332 = vld [vmem:[%s41 + $0xc] sm:$0xff]
      %v4333 = vld [vmem:[%s41 + $0x14] sm:$0xf]
      %v4334 = vld [vmem:[%s41 + $0x18] sm:$0xff]
      %v4335 = vld [vmem:[%s41 + $0x20] sm:$0xf]
      %v4336 = vld [vmem:[%s41 + $0x24] sm:$0xff]
      %v4337 = vld [vmem:[%s41 + $0x2c] sm:$0xf]
      %v4338 = vld [vmem:[%s41 + $0x30] sm:$0xff]
      %v4339 = vld [vmem:[%s41 + $0x38] sm:$0xf]
      %v4340 = vld [vmem:[%s41 + $0x3c] sm:$0xff]
      %v4341 = vld [vmem:[%s41 + $0x44] sm:$0xf]
      %v4342 = vld [vmem:[%s43] sm:$0x7]
      %v4343 = vld [vmem:[%s45] sm:$0xf]
      %v4344 = vld [vmem:[%s45 + $0x4] sm:$0xf]
      %v4345 = vld [vmem:[%s45 + $0x8] sm:$0xf]
      %v4346 = vld [vmem:[%s45 + $0xc] sm:$0xf]
      %v4347 = vld [vmem:[%s45 + $0x10] sm:$0xf]
      %v4348 = vld [vmem:[%s45 + $0x14] sm:$0xf]
      %v4349 = vld [vmem:[%s45 + $0x18] sm:$0xf]
      %v4350 = vld [vmem:[%s45 + $0x1c] sm:$0xf]
      %v4351 = vld [vmem:[%s45 + $0x20] sm:$0xf]
      %v4352 = vld [vmem:[%s45 + $0x24] sm:$0xf]
      %v4353 = vld [vmem:[%s45 + $0x28] sm:$0xf]
      %v4354 = vld [vmem:[%s45 + $0x2c] sm:$0xf]
      %v4355 = vld [vmem:[%s45 + $0x30] sm:$0xf]
      %v4356 = vld [vmem:[%s45 + $0x34] sm:$0xf]
      %v4357 = vld [vmem:[%s45 + $0x38] sm:$0xf]
      %v4358 = vld [vmem:[%s45 + $0x3c] sm:$0xf]
      %v4359 = vld [vmem:[%s47] sm:$0x1]
      %v4360 = vpack.c.bf16 %v4267, %v4266
      %v4361 = vpack.c.bf16 %v4269, %v4268
      %v4362 = vpack.c.bf16 %v4271, %v4270
      %v4363 = vpack.c.bf16 %v4273, %v4272
      %v4364 = vpack.c.bf16 %v4275, %v4274
      %v4365 = vpack.c.bf16 %v4277, %v4276
      %v4366 = vpack.c.bf16 %v4279, %v4278
      %v4375 = vunpack.c.l.b16 %v4280
      %v4376 = vunpack.c.l.b16 %v4281
      %v4377 = vunpack.c.l.b16 %v4282
      %v4378 = vunpack.c.l.b16 %v4283
      %v4379 = vunpack.c.l.b16 %v4284
      %v4380 = vunpack.c.l.b16 %v4285
      %v4381 = vunpack.c.l.b16 %v4286
      %v4382 = vunpack.c.l.b16 %v4287
      %v4383 = vpack.c.b16 %v4376, %v4375
      %v4384 = vpack.c.b16 %v4378, %v4377
      %v4385 = vpack.c.b16 %v4380, %v4379
      %v4386 = vpack.c.b16 %v4382, %v4381
      %vm4387 = vcmask 916480
      %v4389 = vsel %vm4387, %v4383, 0
      %v4392 = vsel %vm4387, %v4384, 0
      %v4395 = vsel %vm4387, %v4385, 0
      %v4398 = vsel %vm4387, %v4386, 0
      %4400 = vmatpush.bf16.msra.mxu0 0
      %4401 = vmatpush.bf16.msra.mxu0 %v4366
      %4402 = vmatpush.bf16.msra.mxu0 %v4365
      %4403 = vmatpush.bf16.msra.mxu0 %v4364
      %4404 = vmatpush.bf16.msra.mxu0 %v4363
      %4405 = vmatpush.bf16.msra.mxu0 %v4362
      %4406 = vmatpush.bf16.msra.mxu0 %v4361
      %4407 = vmatpush.bf16.msra.mxu0 %v4360
      %4408 = vmatmul.bf16.gmra.mxu0 %v4389
      %v4409 = vpop.f32.mrf.mxu0
      %v4410 = vadd.f32 0.0, %v4409
      %v4411 = vpop.f32.mrf.mxu0
      %v4412 = vadd.f32 0.0, %v4411
      %4413 = vmatmul.bf16.gmra.mxu0 %v4392
      %v4414 = vpop.f32.mrf.mxu0
      %v4415 = vadd.f32 0.0, %v4414
      %v4416 = vpop.f32.mrf.mxu0
      %v4417 = vadd.f32 0.0, %v4416
      %4418 = vmatmul.bf16.gmra.mxu0 %v4395
      %v4419 = vpop.f32.mrf.mxu0
      %v4420 = vadd.f32 0.0, %v4419
      %v4421 = vpop.f32.mrf.mxu0
      %v4422 = vadd.f32 0.0, %v4421
      %4423 = vmatmul.bf16.gmra.mxu0 %v4398
      %v4424 = vpop.f32.mrf.mxu0
      %v4425 = vadd.f32 0.0, %v4424
      %v4426 = vpop.f32.mrf.mxu0
      %v4427 = vadd.f32 0.0, %v4426
      %4428 = vdwg.mxu0
      %v4429 = vpack.c.bf16 %v4412, %v4410
      %v4430 = vpack.c.bf16 %v4417, %v4415
      %v4431 = vpack.c.bf16 %v4422, %v4420
      %v4432 = vpack.c.bf16 %v4427, %v4425
      %v4437 = vunpack.c.l.b16 %v4318
      %v4438 = vunpack.c.l.b16 %v4319
      %v4439 = vunpack.c.l.b16 %v4320
      %v4440 = vunpack.c.l.b16 %v4321
      %v4441 = vpack.c.b16 %v4438, %v4437
      %v4442 = vpack.c.b16 %v4440, %v4439
      %v4446 = vsel %vm3164, %v4429, 0
      %v4449 = vsel %vm3164, %v4430, 0
      %v4452 = vsel %vm3164, %v4431, 0
      %v4455 = vsel %vm3164, %v4432, 0
      %4457 = vmatpush.bf16.msra.mxu0 0
      %4458 = vmatpush.bf16.msra.mxu0 0
      %4459 = vmatpush.bf16.msra.mxu0 0
      %4460 = vmatpush.bf16.msra.mxu0 0
      %4461 = vmatpush.bf16.msra.mxu0 0
      %4462 = vmatpush.bf16.msra.mxu0 0
      %4463 = vmatpush.bf16.msra.mxu0 %v4442
      %4464 = vmatpush.bf16.msra.mxu0 %v4441
      %4465 = vmatmul.bf16.gmra.mxu0 %v4446
      %v4466 = vpop.f32.mrf.mxu0
      %v4467 = vadd.f32 0.0, %v4466
      %v4468 = vpop.f32.mrf.mxu0
      %v4469 = vadd.f32 0.0, %v4468
      %4470 = vmatmul.bf16.gmra.mxu0 %v4449
      %v4471 = vpop.f32.mrf.mxu0
      %v4472 = vadd.f32 0.0, %v4471
      %v4473 = vpop.f32.mrf.mxu0
      %v4474 = vadd.f32 0.0, %v4473
      %4475 = vmatmul.bf16.gmra.mxu0 %v4452
      %v4476 = vpop.f32.mrf.mxu0
      %v4477 = vadd.f32 0.0, %v4476
      %v4478 = vpop.f32.mrf.mxu0
      %v4479 = vadd.f32 0.0, %v4478
      %4480 = vmatmul.bf16.gmra.mxu0 %v4455
      %v4481 = vpop.f32.mrf.mxu0
      %v4482 = vadd.f32 0.0, %v4481
      %v4483 = vpop.f32.mrf.mxu0
      %v4484 = vadd.f32 0.0, %v4483
      %4485 = vdwg.mxu0
      %v4486 = vrot.slane %v4266, 7
      %v4487 = vrot.slane %v4267, 7
      %v4488 = vrot.slane %v4268, 7
      %v4489 = vrot.slane %v4269, 7
      %v4490 = vrot.slane %v4270, 7
      %v4491 = vrot.slane %v4271, 7
      %v4492 = vrot.slane %v4272, 7
      %v4493 = vrot.slane %v4273, 7
      %v4494 = vrot.slane %v4274, 7
      %v4495 = vrot.slane %v4275, 7
      %v4496 = vrot.slane %v4276, 7
      %v4497 = vrot.slane %v4277, 7
      %v4498 = vrot.slane %v4278, 7
      %v4499 = vrot.slane %v4279, 7
      %v4500 = vsel %vm1307, %v4498, %v4499
      %v4501 = vsel %vm1307, %v4497, %v4498
      %v4502 = vsel %vm1307, %v4496, %v4497
      %v4503 = vsel %vm1307, %v4495, %v4496
      %v4504 = vsel %vm1307, %v4494, %v4495
      %v4505 = vsel %vm1307, %v4493, %v4494
      %v4506 = vsel %vm1307, %v4492, %v4493
      %v4507 = vsel %vm1307, %v4491, %v4492
      %v4508 = vsel %vm1307, %v4490, %v4491
      %v4509 = vsel %vm1307, %v4489, %v4490
      %v4510 = vsel %vm1307, %v4488, %v4489
      %v4511 = vsel %vm1307, %v4487, %v4488
      %v4512 = vsel %vm1307, %v4486, %v4487
      %v4513 = vsel %vm1307, %v4499, %v4486
      %v4514 = vrot.slane %v4266, 1
      %v4515 = vrot.slane %v4267, 1
      %v4516 = vrot.slane %v4268, 1
      %v4517 = vrot.slane %v4269, 1
      %v4518 = vrot.slane %v4270, 1
      %v4519 = vrot.slane %v4271, 1
      %v4520 = vrot.slane %v4272, 1
      %v4521 = vrot.slane %v4273, 1
      %v4522 = vrot.slane %v4274, 1
      %v4523 = vrot.slane %v4275, 1
      %v4524 = vrot.slane %v4276, 1
      %v4525 = vrot.slane %v4277, 1
      %v4526 = vrot.slane %v4278, 1
      %v4527 = vrot.slane %v4279, 1
      %v4528 = vsel %vm1360, %v4526, %v4527
      %v4529 = vsel %vm1360, %v4525, %v4526
      %v4530 = vsel %vm1360, %v4524, %v4525
      %v4531 = vsel %vm1360, %v4523, %v4524
      %v4532 = vsel %vm1360, %v4522, %v4523
      %v4533 = vsel %vm1360, %v4521, %v4522
      %v4534 = vsel %vm1360, %v4520, %v4521
      %v4535 = vsel %vm1360, %v4519, %v4520
      %v4536 = vsel %vm1360, %v4518, %v4519
      %v4537 = vsel %vm1360, %v4517, %v4518
      %v4538 = vsel %vm1360, %v4516, %v4517
      %v4539 = vsel %vm1360, %v4515, %v4516
      %v4540 = vsel %vm1360, %v4514, %v4515
      %v4541 = vsel %vm1360, %v4527, %v4514
      %4556 = vrot.lane.b32.xlu0 %v4266, 32
      %v4557 = vpop.permute.xlu0 %4556
      %4558 = vrot.lane.b32.xlu0 %v4267, 32
      %v4559 = vpop.permute.xlu0 %4558
      %4560 = vrot.lane.b32.xlu0 %v4268, 32
      %v4561 = vpop.permute.xlu0 %4560
      %4562 = vrot.lane.b32.xlu0 %v4269, 32
      %v4563 = vpop.permute.xlu0 %4562
      %4564 = vrot.lane.b32.xlu0 %v4270, 32
      %v4565 = vpop.permute.xlu0 %4564
      %4566 = vrot.lane.b32.xlu0 %v4271, 32
      %v4567 = vpop.permute.xlu0 %4566
      %4568 = vrot.lane.b32.xlu0 %v4272, 32
      %v4569 = vpop.permute.xlu0 %4568
      %4570 = vrot.lane.b32.xlu0 %v4273, 32
      %v4571 = vpop.permute.xlu0 %4570
      %4572 = vrot.lane.b32.xlu0 %v4274, 32
      %v4573 = vpop.permute.xlu0 %4572
      %4574 = vrot.lane.b32.xlu0 %v4275, 32
      %v4575 = vpop.permute.xlu0 %4574
      %4576 = vrot.lane.b32.xlu0 %v4276, 32
      %v4577 = vpop.permute.xlu0 %4576
      %4578 = vrot.lane.b32.xlu0 %v4277, 32
      %v4579 = vpop.permute.xlu0 %4578
      %4580 = vrot.lane.b32.xlu0 %v4278, 32
      %v4581 = vpop.permute.xlu0 %4580
      %4582 = vrot.lane.b32.xlu0 %v4279, 32
      %v4583 = vpop.permute.xlu0 %4582
      %4612 = vrot.lane.b32.xlu0 %v4540, 64
      %v4613 = vpop.permute.xlu0 %4612
      %4614 = vrot.lane.b32.xlu0 %v4539, 64
      %v4615 = vpop.permute.xlu0 %4614
      %4616 = vrot.lane.b32.xlu0 %v4538, 64
      %v4617 = vpop.permute.xlu0 %4616
      %4618 = vrot.lane.b32.xlu0 %v4537, 64
      %v4619 = vpop.permute.xlu0 %4618
      %4620 = vrot.lane.b32.xlu0 %v4536, 64
      %v4621 = vpop.permute.xlu0 %4620
      %4622 = vrot.lane.b32.xlu0 %v4535, 64
      %v4623 = vpop.permute.xlu0 %4622
      %4624 = vrot.lane.b32.xlu0 %v4534, 64
      %v4625 = vpop.permute.xlu0 %4624
      %4626 = vrot.lane.b32.xlu0 %v4533, 64
      %v4627 = vpop.permute.xlu0 %4626
      %4628 = vrot.lane.b32.xlu0 %v4532, 64
      %v4629 = vpop.permute.xlu0 %4628
      %4630 = vrot.lane.b32.xlu0 %v4531, 64
      %v4631 = vpop.permute.xlu0 %4630
      %4632 = vrot.lane.b32.xlu0 %v4530, 64
      %v4633 = vpop.permute.xlu0 %4632
      %4634 = vrot.lane.b32.xlu0 %v4529, 64
      %v4635 = vpop.permute.xlu0 %4634
      %4636 = vrot.lane.b32.xlu0 %v4528, 64
      %v4637 = vpop.permute.xlu0 %4636
      %4638 = vrot.lane.b32.xlu0 %v4541, 64
      %v4639 = vpop.permute.xlu0 %4638
      %v4654 = vsel %vm3164, %v4513, %v4557
      %v4655 = vsel %vm3164, %v4512, %v4559
      %v4656 = vsel %vm3164, %v4511, %v4561
      %v4657 = vsel %vm3164, %v4510, %v4563
      %v4658 = vsel %vm3164, %v4509, %v4565
      %v4659 = vsel %vm3164, %v4508, %v4567
      %v4660 = vsel %vm3164, %v4507, %v4569
      %v4661 = vsel %vm3164, %v4506, %v4571
      %v4662 = vsel %vm3164, %v4505, %v4573
      %v4663 = vsel %vm3164, %v4504, %v4575
      %v4664 = vsel %vm3164, %v4503, %v4577
      %v4665 = vsel %vm3164, %v4502, %v4579
      %v4666 = vsel %vm3164, %v4501, %v4581
      %v4667 = vsel %vm3164, %v4500, %v4583
      %v4668 = vsel %vm3179, %v4654, %v4613
      %v4669 = vsel %vm3179, %v4655, %v4615
      %v4670 = vsel %vm3179, %v4656, %v4617
      %v4671 = vsel %vm3179, %v4657, %v4619
      %v4672 = vsel %vm3179, %v4658, %v4621
      %v4673 = vsel %vm3179, %v4659, %v4623
      %v4674 = vsel %vm3179, %v4660, %v4625
      %v4675 = vsel %vm3179, %v4661, %v4627
      %v4676 = vsel %vm3179, %v4662, %v4629
      %v4677 = vsel %vm3179, %v4663, %v4631
      %v4678 = vsel %vm3179, %v4664, %v4633
      %v4679 = vsel %vm3179, %v4665, %v4635
      %v4680 = vsel %vm3179, %v4666, %v4637
      %v4681 = vsel %vm3179, %v4667, %v4639
      %v4682 = vpack.c.bf16 %v4669, %v4668
      %v4683 = vpack.c.bf16 %v4671, %v4670
      %v4684 = vpack.c.bf16 %v4673, %v4672
      %v4685 = vpack.c.bf16 %v4675, %v4674
      %v4686 = vpack.c.bf16 %v4677, %v4676
      %v4687 = vpack.c.bf16 %v4679, %v4678
      %v4688 = vpack.c.bf16 %v4681, %v4680
      %v4701 = vunpack.c.l.b16 %v4288
      %v4702 = vunpack.c.l.b16 %v4289
      %v4703 = vunpack.c.l.b16 %v4290
      %v4704 = vunpack.c.l.b16 %v4291
      %v4705 = vunpack.c.l.b16 %v4292
      %v4706 = vunpack.c.l.b16 %v4293
      %v4707 = vunpack.c.l.b16 %v4294
      %v4708 = vunpack.c.l.b16 %v4295
      %v4709 = vunpack.c.l.b16 %v4296
      %v4710 = vunpack.c.l.b16 %v4297
      %v4711 = vunpack.c.l.b16 %v4298
      %v4712 = vunpack.c.l.b16 %v4299
      %v4713 = vpack.c.b16 %v4702, %v4701
      %v4714 = vpack.c.b16 %v4704, %v4703
      %v4715 = vpack.c.b16 %v4706, %v4705
      %v4716 = vpack.c.b16 %v4708, %v4707
      %v4717 = vpack.c.b16 %v4710, %v4709
      %v4718 = vpack.c.b16 %v4712, %v4711
      %v4726 = vsel %vm3237, %v4682, 0
      %v4729 = vsel %vm3237, %v4683, 0
      %v4732 = vsel %vm3237, %v4684, 0
      %v4735 = vsel %vm3237, %v4685, 0
      %v4738 = vsel %vm3237, %v4686, 0
      %v4741 = vsel %vm3237, %v4687, 0
      %v4744 = vsel %vm3237, %v4688, 0
      %4746 = vmatpush.bf16.msra.mxu0 0
      %4747 = vmatpush.bf16.msra.mxu0 0
      %4748 = vmatpush.bf16.msra.mxu0 %v4718
      %4749 = vmatpush.bf16.msra.mxu0 %v4717
      %4750 = vmatpush.bf16.msra.mxu0 %v4716
      %4751 = vmatpush.bf16.msra.mxu0 %v4715
      %4752 = vmatpush.bf16.msra.mxu0 %v4714
      %4753 = vmatpush.bf16.msra.mxu0 %v4713
      %4754 = vmatmul.bf16.gmra.mxu0 %v4726
      %v4755 = vpop.f32.mrf.mxu0
      %v4756 = vadd.f32 0.0, %v4755
      %v4757 = vpop.f32.mrf.mxu0
      %v4758 = vadd.f32 0.0, %v4757
      %4759 = vmatmul.bf16.gmra.mxu0 %v4729
      %v4760 = vpop.f32.mrf.mxu0
      %v4761 = vadd.f32 0.0, %v4760
      %v4762 = vpop.f32.mrf.mxu0
      %v4763 = vadd.f32 0.0, %v4762
      %4764 = vmatmul.bf16.gmra.mxu0 %v4732
      %v4765 = vpop.f32.mrf.mxu0
      %v4766 = vadd.f32 0.0, %v4765
      %v4767 = vpop.f32.mrf.mxu0
      %v4768 = vadd.f32 0.0, %v4767
      %4769 = vmatmul.bf16.gmra.mxu0 %v4735
      %v4770 = vpop.f32.mrf.mxu0
      %v4771 = vadd.f32 0.0, %v4770
      %v4772 = vpop.f32.mrf.mxu0
      %v4773 = vadd.f32 0.0, %v4772
      %4774 = vmatmul.bf16.gmra.mxu0 %v4738
      %v4775 = vpop.f32.mrf.mxu0
      %v4776 = vadd.f32 0.0, %v4775
      %v4777 = vpop.f32.mrf.mxu0
      %v4778 = vadd.f32 0.0, %v4777
      %4779 = vmatmul.bf16.gmra.mxu0 %v4741
      %v4780 = vpop.f32.mrf.mxu0
      %v4781 = vadd.f32 0.0, %v4780
      %v4782 = vpop.f32.mrf.mxu0
      %v4783 = vadd.f32 0.0, %v4782
      %4784 = vmatmul.bf16.gmra.mxu0 %v4744
      %v4785 = vpop.f32.mrf.mxu0
      %v4786 = vadd.f32 0.0, %v4785
      %v4787 = vpop.f32.mrf.mxu0
      %v4788 = vadd.f32 0.0, %v4787
      %4789 = vdwg.mxu0
      %v4790 = vpack.c.bf16 %v4758, %v4756
      %v4791 = vpack.c.bf16 %v4763, %v4761
      %v4792 = vpack.c.bf16 %v4768, %v4766
      %v4793 = vpack.c.bf16 %v4773, %v4771
      %v4794 = vpack.c.bf16 %v4778, %v4776
      %v4795 = vpack.c.bf16 %v4783, %v4781
      %v4796 = vpack.c.bf16 %v4788, %v4786
      %4797 = vmatpush.bf16.msra.mxu0 0
      %4798 = vmatpush.bf16.msra.mxu0 %v4796
      %4799 = vmatpush.bf16.msra.mxu0 %v4795
      %4800 = vmatpush.bf16.msra.mxu0 %v4794
      %4801 = vmatpush.bf16.msra.mxu0 %v4793
      %4802 = vmatpush.bf16.msra.mxu0 %v4792
      %4803 = vmatpush.bf16.msra.mxu0 %v4791
      %4804 = vmatpush.bf16.msra.mxu0 %v4790
      %4805 = vmatmul.bf16.gmra.mxu0 %v4389
      %v4806 = vpop.f32.mrf.mxu0
      %v4807 = vadd.f32 0.0, %v4806
      %v4808 = vpop.f32.mrf.mxu0
      %v4809 = vadd.f32 0.0, %v4808
      %4810 = vmatmul.bf16.gmra.mxu0 %v4392
      %v4811 = vpop.f32.mrf.mxu0
      %v4812 = vadd.f32 0.0, %v4811
      %v4813 = vpop.f32.mrf.mxu0
      %v4814 = vadd.f32 0.0, %v4813
      %4815 = vmatmul.bf16.gmra.mxu0 %v4395
      %v4816 = vpop.f32.mrf.mxu0
      %v4817 = vadd.f32 0.0, %v4816
      %v4818 = vpop.f32.mrf.mxu0
      %v4819 = vadd.f32 0.0, %v4818
      %4820 = vmatmul.bf16.gmra.mxu0 %v4398
      %v4821 = vpop.f32.mrf.mxu0
      %v4822 = vadd.f32 0.0, %v4821
      %v4823 = vpop.f32.mrf.mxu0
      %v4824 = vadd.f32 0.0, %v4823
      %4825 = vdwg.mxu0
      %v4826 = vmax.f32 %v4807, 0.0
      %v4827 = vmax.f32 %v4809, 0.0
      %v4828 = vmax.f32 %v4812, 0.0
      %v4829 = vmax.f32 %v4814, 0.0
      %v4830 = vmax.f32 %v4817, 0.0
      %v4831 = vmax.f32 %v4819, 0.0
      %v4832 = vmax.f32 %v4822, 0.0
      %v4833 = vmax.f32 %v4824, 0.0
      %v4834 = vrot.slane %v4826, 7
      %v4835 = vrot.slane %v4827, 7
      %v4836 = vrot.slane %v4828, 7
      %v4837 = vrot.slane %v4829, 7
      %v4838 = vrot.slane %v4830, 7
      %v4839 = vrot.slane %v4831, 7
      %v4840 = vrot.slane %v4832, 7
      %v4841 = vrot.slane %v4833, 7
      %v4842 = vsel %vm1307, %v4840, %v4841
      %v4843 = vsel %vm1307, %v4839, %v4840
      %v4844 = vsel %vm1307, %v4838, %v4839
      %v4845 = vsel %vm1307, %v4837, %v4838
      %v4846 = vsel %vm1307, %v4836, %v4837
      %v4847 = vsel %vm1307, %v4835, %v4836
      %v4848 = vsel %vm1307, %v4834, %v4835
      %v4849 = vsel %vm1307, %v4841, %v4834
      %v4850 = vrot.slane %v4826, 1
      %v4851 = vrot.slane %v4827, 1
      %v4852 = vrot.slane %v4828, 1
      %v4853 = vrot.slane %v4829, 1
      %v4854 = vrot.slane %v4830, 1
      %v4855 = vrot.slane %v4831, 1
      %v4856 = vrot.slane %v4832, 1
      %v4857 = vrot.slane %v4833, 1
      %v4858 = vsel %vm1360, %v4856, %v4857
      %v4859 = vsel %vm1360, %v4855, %v4856
      %v4860 = vsel %vm1360, %v4854, %v4855
      %v4861 = vsel %vm1360, %v4853, %v4854
      %v4862 = vsel %vm1360, %v4852, %v4853
      %v4863 = vsel %vm1360, %v4851, %v4852
      %v4864 = vsel %vm1360, %v4850, %v4851
      %v4865 = vsel %vm1360, %v4857, %v4850
      %4874 = vrot.lane.b32.xlu0 %v4826, 48
      %v4875 = vpop.permute.xlu0 %4874
      %4876 = vrot.lane.b32.xlu0 %v4827, 48
      %v4877 = vpop.permute.xlu0 %4876
      %4878 = vrot.lane.b32.xlu0 %v4828, 48
      %v4879 = vpop.permute.xlu0 %4878
      %4880 = vrot.lane.b32.xlu0 %v4829, 48
      %v4881 = vpop.permute.xlu0 %4880
      %4882 = vrot.lane.b32.xlu0 %v4830, 48
      %v4883 = vpop.permute.xlu0 %4882
      %4884 = vrot.lane.b32.xlu0 %v4831, 48
      %v4885 = vpop.permute.xlu0 %4884
      %4886 = vrot.lane.b32.xlu0 %v4832, 48
      %v4887 = vpop.permute.xlu0 %4886
      %4888 = vrot.lane.b32.xlu0 %v4833, 48
      %v4889 = vpop.permute.xlu0 %4888
      %4906 = vrot.lane.b32.xlu0 %v4864, 96
      %v4907 = vpop.permute.xlu0 %4906
      %4908 = vrot.lane.b32.xlu0 %v4863, 96
      %v4909 = vpop.permute.xlu0 %4908
      %4910 = vrot.lane.b32.xlu0 %v4862, 96
      %v4911 = vpop.permute.xlu0 %4910
      %4912 = vrot.lane.b32.xlu0 %v4861, 96
      %v4913 = vpop.permute.xlu0 %4912
      %4914 = vrot.lane.b32.xlu0 %v4860, 96
      %v4915 = vpop.permute.xlu0 %4914
      %4916 = vrot.lane.b32.xlu0 %v4859, 96
      %v4917 = vpop.permute.xlu0 %4916
      %4918 = vrot.lane.b32.xlu0 %v4858, 96
      %v4919 = vpop.permute.xlu0 %4918
      %4920 = vrot.lane.b32.xlu0 %v4865, 96
      %v4921 = vpop.permute.xlu0 %4920
      %v4930 = vsel %vm2697, %v4849, %v4875
      %v4931 = vsel %vm2697, %v4848, %v4877
      %v4932 = vsel %vm2697, %v4847, %v4879
      %v4933 = vsel %vm2697, %v4846, %v4881
      %v4934 = vsel %vm2697, %v4845, %v4883
      %v4935 = vsel %vm2697, %v4844, %v4885
      %v4936 = vsel %vm2697, %v4843, %v4887
      %v4937 = vsel %vm2697, %v4842, %v4889
      %v4938 = vsel %vm3237, %v4930, %v4907
      %v4939 = vsel %vm3237, %v4931, %v4909
      %v4940 = vsel %vm3237, %v4932, %v4911
      %v4941 = vsel %vm3237, %v4933, %v4913
      %v4942 = vsel %vm3237, %v4934, %v4915
      %v4943 = vsel %vm3237, %v4935, %v4917
      %v4944 = vsel %vm3237, %v4936, %v4919
      %v4945 = vsel %vm3237, %v4937, %v4921
      %v4946 = vpack.c.bf16 %v4939, %v4938
      %v4947 = vpack.c.bf16 %v4909, %v4907
      %v4948 = vpack.c.bf16 %v4941, %v4940
      %v4949 = vpack.c.bf16 %v4913, %v4911
      %v4950 = vpack.c.bf16 %v4943, %v4942
      %v4951 = vpack.c.bf16 %v4917, %v4915
      %v4952 = vpack.c.bf16 %v4945, %v4944
      %v4953 = vpack.c.bf16 %v4921, %v4919
      %v4972 = vunpack.c.l.b16 %v4300
      %v4973 = vunpack.c.l.b16 %v4301
      %v4974 = vunpack.c.l.b16 %v4302
      %v4975 = vunpack.c.l.b16 %v4303
      %v4976 = vunpack.c.l.b16 %v4304
      %v4977 = vunpack.c.l.b16 %v4305
      %v4978 = vunpack.c.l.b16 %v4306
      %v4979 = vunpack.c.l.b16 %v4307
      %v4980 = vunpack.c.l.b16 %v4308
      %v4981 = vunpack.c.l.b16 %v4309
      %v4982 = vunpack.c.l.b16 %v4310
      %v4983 = vunpack.c.l.b16 %v4311
      %v4984 = vunpack.c.l.b16 %v4312
      %v4985 = vunpack.c.l.b16 %v4313
      %v4986 = vunpack.c.l.b16 %v4314
      %v4987 = vunpack.c.l.b16 %v4315
      %v4988 = vunpack.c.l.b16 %v4316
      %v4989 = vunpack.c.l.b16 %v4317
      %v4990 = vpack.c.b16 %v4973, %v4972
      %v4991 = vpack.c.b16 %v4975, %v4974
      %v4992 = vpack.c.b16 %v4977, %v4976
      %v4993 = vpack.c.b16 %v4979, %v4978
      %v4994 = vpack.c.b16 %v4981, %v4980
      %v4995 = vpack.c.b16 %v4983, %v4982
      %v4996 = vpack.c.b16 %v4985, %v4984
      %v4997 = vpack.c.b16 %v4987, %v4986
      %v4998 = vpack.c.b16 %v4989, %v4988
      %vm5008 = vcmask 130048
      %v5010 = vsel %vm5008, %v4947, 0
      %v5013 = vsel %vm5008, %v4949, 0
      %v5016 = vsel %vm5008, %v4951, 0
      %v5019 = vsel %vm5008, %v4953, 0
      %5021 = vmatpush.bf16.msra.mxu0 %v4997
      %5022 = vmatpush.bf16.msra.mxu0 %v4996
      %5023 = vmatpush.bf16.msra.mxu0 %v4995
      %5024 = vmatpush.bf16.msra.mxu0 %v4994
      %5025 = vmatpush.bf16.msra.mxu0 %v4993
      %5026 = vmatpush.bf16.msra.mxu0 %v4992
      %5027 = vmatpush.bf16.msra.mxu0 %v4991
      %5028 = vmatpush.bf16.msra.mxu0 %v4990
      %5029 = vmatmul.bf16.gmra.mxu0 %v4946
      %v5030 = vpop.f32.mrf.mxu0
      %v5031 = vadd.f32 %v4467, %v5030
      %v5032 = vpop.f32.mrf.mxu0
      %v5033 = vadd.f32 %v4469, %v5032
      %5034 = vmatmul.bf16.gmra.mxu0 %v4948
      %v5035 = vpop.f32.mrf.mxu0
      %v5036 = vadd.f32 %v4472, %v5035
      %v5037 = vpop.f32.mrf.mxu0
      %v5038 = vadd.f32 %v4474, %v5037
      %5039 = vmatmul.bf16.gmra.mxu0 %v4950
      %v5040 = vpop.f32.mrf.mxu0
      %v5041 = vadd.f32 %v4477, %v5040
      %v5042 = vpop.f32.mrf.mxu0
      %v5043 = vadd.f32 %v4479, %v5042
      %5044 = vmatmul.bf16.gmra.mxu0 %v4952
      %v5045 = vpop.f32.mrf.mxu0
      %v5046 = vadd.f32 %v4482, %v5045
      %v5047 = vpop.f32.mrf.mxu0
      %v5048 = vadd.f32 %v4484, %v5047
      %5049 = vdwg.mxu0
      %5050 = vmatpush.bf16.msra.mxu0 0
      %5051 = vmatpush.bf16.msra.mxu0 0
      %5052 = vmatpush.bf16.msra.mxu0 0
      %5053 = vmatpush.bf16.msra.mxu0 0
      %5054 = vmatpush.bf16.msra.mxu0 0
      %5055 = vmatpush.bf16.msra.mxu0 0
      %5056 = vmatpush.bf16.msra.mxu0 0
      %5057 = vmatpush.bf16.msra.mxu0 %v4998
      %5058 = vmatmul.bf16.gmra.mxu0 %v5010
      %v5059 = vpop.f32.mrf.mxu0
      %v5060 = vadd.f32 %v5031, %v5059
      %v5061 = vpop.f32.mrf.mxu0
      %v5062 = vadd.f32 %v5033, %v5061
      %5063 = vmatmul.bf16.gmra.mxu0 %v5013
      %v5064 = vpop.f32.mrf.mxu0
      %v5065 = vadd.f32 %v5036, %v5064
      %v5066 = vpop.f32.mrf.mxu0
      %v5067 = vadd.f32 %v5038, %v5066
      %5068 = vmatmul.bf16.gmra.mxu0 %v5016
      %v5069 = vpop.f32.mrf.mxu0
      %v5070 = vadd.f32 %v5041, %v5069
      %v5071 = vpop.f32.mrf.mxu0
      %v5072 = vadd.f32 %v5043, %v5071
      %5073 = vmatmul.bf16.gmra.mxu0 %v5019
      %v5074 = vpop.f32.mrf.mxu0
      %v5075 = vadd.f32 %v5046, %v5074
      %v5076 = vpop.f32.mrf.mxu0
      %v5077 = vadd.f32 %v5048, %v5076
      %5078 = vdwg.mxu0
      %v5079 = vmax.f32 %v5060, 0.0
      %v5080 = vmax.f32 %v5062, 0.0
      %v5081 = vmax.f32 %v5065, 0.0
      %v5082 = vmax.f32 %v5067, 0.0
      %v5083 = vmax.f32 %v5070, 0.0
      %v5084 = vmax.f32 %v5072, 0.0
      %v5085 = vmax.f32 %v5075, 0.0
      %v5086 = vmax.f32 %v5077, 0.0
      %v5087 = vadd.f32 %v5079, %v4322
      %v5088 = vadd.f32 %v5080, %v4323
      %v5089 = vadd.f32 %v5081, %v4324
      %v5090 = vadd.f32 %v5082, %v4325
      %v5091 = vadd.f32 %v5083, %v4326
      %v5092 = vadd.f32 %v5084, %v4327
      %v5093 = vadd.f32 %v5085, %v4328
      %v5094 = vadd.f32 %v5086, %v4329
      %v5095 = vpack.c.bf16 %v5088, %v5087
      %v5096 = vpack.c.bf16 %v5090, %v5089
      %v5097 = vpack.c.bf16 %v5092, %v5091
      %v5098 = vpack.c.bf16 %v5094, %v5093
      %v5100 = vperm.slane %v4342, 0
      %v5101 = vperm.slane %v4342, 1
      %v5102 = vperm.slane %v4342, 2
      %v5118 = vunpack.c.l.b16 %v4330
      %v5119 = vunpack.c.h.b16 %v4330
      %v5120 = vunpack.c.l.b16 %v4331
      %v5121 = vunpack.c.l.b16 %v4332
      %v5122 = vunpack.c.h.b16 %v4332
      %v5123 = vunpack.c.l.b16 %v4333
      %v5124 = vunpack.c.l.b16 %v4334
      %v5125 = vunpack.c.h.b16 %v4334
      %v5126 = vunpack.c.l.b16 %v4335
      %v5127 = vunpack.c.l.b16 %v4336
      %v5128 = vunpack.c.h.b16 %v4336
      %v5129 = vunpack.c.l.b16 %v4337
      %v5130 = vunpack.c.l.b16 %v4338
      %v5131 = vunpack.c.h.b16 %v4338
      %v5132 = vunpack.c.l.b16 %v4339
      %v5133 = vunpack.c.l.b16 %v4340
      %v5134 = vunpack.c.h.b16 %v4340
      %v5135 = vunpack.c.l.b16 %v4341
      %v5136 = vpack.c.b16 %v5121, %v5118
      %v5137 = vpack.c.b16 %v5122, %v5119
      %v5138 = vpack.c.b16 %v5123, %v5120
      %v5139 = vpack.c.b16 %v5127, %v5124
      %v5140 = vpack.c.b16 %v5128, %v5125
      %v5141 = vpack.c.b16 %v5129, %v5126
      %v5142 = vpack.c.b16 %v5133, %v5130
      %v5143 = vpack.c.b16 %v5134, %v5131
      %v5144 = vpack.c.b16 %v5135, %v5132
      %v5155 = vsel %vm2697, %v5095, 0
      %v5158 = vsel %vm2697, %v5096, 0
      %v5161 = vsel %vm2697, %v5097, 0
      %v5164 = vsel %vm2697, %v5098, 0
      %5166 = vmatpush.bf16.msra.mxu0 0
      %5167 = vmatpush.bf16.msra.mxu0 0
      %5168 = vmatpush.bf16.msra.mxu0 0
      %5169 = vmatpush.bf16.msra.mxu0 0
      %5170 = vmatpush.bf16.msra.mxu0 0
      %5171 = vmatpush.bf16.msra.mxu0 %v5142
      %5172 = vmatpush.bf16.msra.mxu0 %v5139
      %5173 = vmatpush.bf16.msra.mxu0 %v5136
      %5174 = vmatmul.bf16.gmra.mxu0 %v5155
      %v5175 = vpop.f32.mrf.mxu0
      %v5176 = vadd.f32 %v5100, %v5175
      %v5177 = vpop.f32.mrf.mxu0
      %v5178 = vadd.f32 %v5100, %v5177
      %5179 = vmatmul.bf16.gmra.mxu0 %v5158
      %v5180 = vpop.f32.mrf.mxu0
      %v5181 = vadd.f32 %v5100, %v5180
      %v5182 = vpop.f32.mrf.mxu0
      %v5183 = vadd.f32 %v5100, %v5182
      %5184 = vmatmul.bf16.gmra.mxu0 %v5161
      %v5185 = vpop.f32.mrf.mxu0
      %v5186 = vadd.f32 %v5100, %v5185
      %v5187 = vpop.f32.mrf.mxu0
      %v5188 = vadd.f32 %v5100, %v5187
      %5189 = vmatmul.bf16.gmra.mxu0 %v5164
      %v5190 = vpop.f32.mrf.mxu0
      %v5191 = vadd.f32 %v5100, %v5190
      %v5192 = vpop.f32.mrf.mxu0
      %v5193 = vadd.f32 %v5100, %v5192
      %5194 = vdwg.mxu0
      %5195 = vmatpush.bf16.msra.mxu0 0
      %5196 = vmatpush.bf16.msra.mxu0 0
      %5197 = vmatpush.bf16.msra.mxu0 0
      %5198 = vmatpush.bf16.msra.mxu0 0
      %5199 = vmatpush.bf16.msra.mxu0 0
      %5200 = vmatpush.bf16.msra.mxu0 %v5143
      %5201 = vmatpush.bf16.msra.mxu0 %v5140
      %5202 = vmatpush.bf16.msra.mxu0 %v5137
      %5203 = vmatmul.bf16.gmra.mxu0 %v5155
      %v5204 = vpop.f32.mrf.mxu0
      %v5205 = vadd.f32 %v5101, %v5204
      %v5206 = vpop.f32.mrf.mxu0
      %v5207 = vadd.f32 %v5101, %v5206
      %5208 = vmatmul.bf16.gmra.mxu0 %v5158
      %v5209 = vpop.f32.mrf.mxu0
      %v5210 = vadd.f32 %v5101, %v5209
      %v5211 = vpop.f32.mrf.mxu0
      %v5212 = vadd.f32 %v5101, %v5211
      %5213 = vmatmul.bf16.gmra.mxu0 %v5161
      %v5214 = vpop.f32.mrf.mxu0
      %v5215 = vadd.f32 %v5101, %v5214
      %v5216 = vpop.f32.mrf.mxu0
      %v5217 = vadd.f32 %v5101, %v5216
      %5218 = vmatmul.bf16.gmra.mxu0 %v5164
      %v5219 = vpop.f32.mrf.mxu0
      %v5220 = vadd.f32 %v5101, %v5219
      %v5221 = vpop.f32.mrf.mxu0
      %v5222 = vadd.f32 %v5101, %v5221
      %5223 = vdwg.mxu0
      %5224 = vmatpush.bf16.msra.mxu0 0
      %5225 = vmatpush.bf16.msra.mxu0 0
      %5226 = vmatpush.bf16.msra.mxu0 0
      %5227 = vmatpush.bf16.msra.mxu0 0
      %5228 = vmatpush.bf16.msra.mxu0 0
      %5229 = vmatpush.bf16.msra.mxu0 %v5144
      %5230 = vmatpush.bf16.msra.mxu0 %v5141
      %5231 = vmatpush.bf16.msra.mxu0 %v5138
      %5232 = vmatmul.bf16.gmra.mxu0 %v5155
      %v5233 = vpop.f32.mrf.mxu0
      %v5234 = vadd.f32 %v5102, %v5233
      %v5235 = vpop.f32.mrf.mxu0
      %v5236 = vadd.f32 %v5102, %v5235
      %5237 = vmatmul.bf16.gmra.mxu0 %v5158
      %v5238 = vpop.f32.mrf.mxu0
      %v5239 = vadd.f32 %v5102, %v5238
      %v5240 = vpop.f32.mrf.mxu0
      %v5241 = vadd.f32 %v5102, %v5240
      %5242 = vmatmul.bf16.gmra.mxu0 %v5161
      %v5243 = vpop.f32.mrf.mxu0
      %v5244 = vadd.f32 %v5102, %v5243
      %v5245 = vpop.f32.mrf.mxu0
      %v5246 = vadd.f32 %v5102, %v5245
      %5247 = vmatmul.bf16.gmra.mxu0 %v5164
      %v5248 = vpop.f32.mrf.mxu0
      %v5249 = vadd.f32 %v5102, %v5248
      %v5250 = vpop.f32.mrf.mxu0
      %v5251 = vadd.f32 %v5102, %v5250
      %5252 = vdwg.mxu0
      %v5253 = vpack.c.bf16 %v5176, %v5176
      %v5254 = vpack.c.bf16 %v5178, %v5178
      %v5255 = vpack.c.bf16 %v5181, %v5181
      %v5256 = vpack.c.bf16 %v5183, %v5183
      %v5257 = vpack.c.bf16 %v5186, %v5186
      %v5258 = vpack.c.bf16 %v5188, %v5188
      %v5259 = vpack.c.bf16 %v5191, %v5191
      %v5260 = vpack.c.bf16 %v5193, %v5193
      %v5261 = vpack.c.bf16 %v5205, %v5205
      %v5262 = vpack.c.bf16 %v5207, %v5207
      %v5263 = vpack.c.bf16 %v5210, %v5210
      %v5264 = vpack.c.bf16 %v5212, %v5212
      %v5265 = vpack.c.bf16 %v5215, %v5215
      %v5266 = vpack.c.bf16 %v5217, %v5217
      %v5267 = vpack.c.bf16 %v5220, %v5220
      %v5268 = vpack.c.bf16 %v5222, %v5222
      %v5273 = vunpack.c.l.b16 %v5253
      %v5274 = vunpack.c.l.b16 %v5254
      %v5275 = vunpack.c.l.b16 %v5255
      %v5276 = vunpack.c.l.b16 %v5256
      %v5277 = vpack.c.b16 %v5274, %v5273
      %v5278 = vpack.c.b16 %v5276, %v5275
      %v5285 = vunpack.c.l.b16 %v5261
      %v5286 = vunpack.c.l.b16 %v5262
      %v5287 = vunpack.c.l.b16 %v5263
      %v5288 = vunpack.c.l.b16 %v5264
      %v5289 = vpack.c.b16 %v5286, %v5285
      %v5290 = vpack.c.b16 %v5288, %v5287
      %5293 = vmatpush.bf16.xpose.msra.mxu0 0
      %5294 = vmatpush.bf16.xpose.msra.mxu0 0
      %5295 = vmatpush.bf16.xpose.msra.mxu0 0
      %5296 = vmatpush.bf16.xpose.msra.mxu0 0
      %5297 = vmatpush.bf16.xpose.msra.mxu0 0
      %5298 = vmatpush.bf16.xpose.msra.mxu0 0
      %5299 = vmatpush.bf16.xpose.msra.mxu0 %v5290
      %5300 = vmatpush.bf16.xpose.msra.mxu0 %v5289
      %5301 = vmatmul.bf16.gmra.mxu0 %v5277
      %v5302 = vpop.f32.mrf.mxu0
      %v5303 = vadd.f32 0.0, %v5302
      %v5304 = vpop.f32.mrf.mxu0
      %v5305 = vadd.f32 0.0, %v5304
      %5306 = vmatmul.bf16.gmra.mxu0 %v5278
      %v5307 = vpop.f32.mrf.mxu0
      %v5308 = vadd.f32 0.0, %v5307
      %v5309 = vpop.f32.mrf.mxu0
      %v5310 = vadd.f32 0.0, %v5309
      %5311 = vdwg.mxu0
      %v5316 = vunpack.c.l.b16 %v5257
      %v5317 = vunpack.c.l.b16 %v5258
      %v5318 = vunpack.c.l.b16 %v5259
      %v5319 = vunpack.c.l.b16 %v5260
      %v5320 = vpack.c.b16 %v5317, %v5316
      %v5321 = vpack.c.b16 %v5319, %v5318
      %v5328 = vunpack.c.l.b16 %v5265
      %v5329 = vunpack.c.l.b16 %v5266
      %v5330 = vunpack.c.l.b16 %v5267
      %v5331 = vunpack.c.l.b16 %v5268
      %v5332 = vpack.c.b16 %v5329, %v5328
      %v5333 = vpack.c.b16 %v5331, %v5330
      %5336 = vmatpush.bf16.xpose.msra.mxu0 0
      %5337 = vmatpush.bf16.xpose.msra.mxu0 0
      %5338 = vmatpush.bf16.xpose.msra.mxu0 0
      %5339 = vmatpush.bf16.xpose.msra.mxu0 0
      %5340 = vmatpush.bf16.xpose.msra.mxu0 0
      %5341 = vmatpush.bf16.xpose.msra.mxu0 0
      %5342 = vmatpush.bf16.xpose.msra.mxu0 %v5333
      %5343 = vmatpush.bf16.xpose.msra.mxu0 %v5332
      %5344 = vmatmul.bf16.gmra.mxu0 %v5320
      %v5345 = vpop.f32.mrf.mxu0
      %v5346 = vadd.f32 0.0, %v5345
      %v5347 = vpop.f32.mrf.mxu0
      %v5348 = vadd.f32 0.0, %v5347
      %5349 = vmatmul.bf16.gmra.mxu0 %v5321
      %v5350 = vpop.f32.mrf.mxu0
      %v5351 = vadd.f32 0.0, %v5350
      %v5352 = vpop.f32.mrf.mxu0
      %v5353 = vadd.f32 0.0, %v5352
      %5354 = vdwg.mxu0
      %v5355 = vmul.f32 %v5303, 0.14433756
      %v5356 = vmul.f32 %v5305, 0.14433756
      %v5357 = vmul.f32 %v5308, 0.14433756
      %v5358 = vmul.f32 %v5310, 0.14433756
      %v5359 = vmul.f32 %v5346, 0.14433756
      %v5360 = vmul.f32 %v5348, 0.14433756
      %v5361 = vmul.f32 %v5351, 0.14433756
      %v5362 = vmul.f32 %v5353, 0.14433756
      %vm5363 = vcmp.lt.s32.totalorder %v3717, 26
      %v5364 = vsel %vm5363, %v5355, -1e+30
      %v5365 = vsel %vm5363, %v5356, -1e+30
      %v5366 = vsel %vm5363, %v5357, -1e+30
      %v5367 = vsel %vm5363, %v5358, -1e+30
      %v5368 = vsel %vm5363, %v5359, -1e+30
      %v5369 = vsel %vm5363, %v5360, -1e+30
      %v5370 = vsel %vm5363, %v5361, -1e+30
      %v5371 = vsel %vm5363, %v5362, -1e+30
      %v5372 = vsel %vm3164, %v5364, -inf
      %5373 = vmax.xlane.f32.xlu0 %v5372
      %v5374 = vpop.xlane.xlu0 %5373
      %v5375 = vsel %vm3164, %v5365, -inf
      %5376 = vmax.xlane.f32.xlu0 %v5375
      %v5377 = vpop.xlane.xlu0 %5376
      %v5378 = vsel %vm3164, %v5366, -inf
      %5379 = vmax.xlane.f32.xlu0 %v5378
      %v5380 = vpop.xlane.xlu0 %5379
      %v5381 = vsel %vm3164, %v5367, -inf
      %5382 = vmax.xlane.f32.xlu0 %v5381
      %v5383 = vpop.xlane.xlu0 %5382
      %v5384 = vsel %vm3164, %v5368, -inf
      %5385 = vmax.xlane.f32.xlu0 %v5384
      %v5386 = vpop.xlane.xlu0 %5385
      %v5387 = vsel %vm3164, %v5369, -inf
      %5388 = vmax.xlane.f32.xlu0 %v5387
      %v5389 = vpop.xlane.xlu0 %5388
      %v5390 = vsel %vm3164, %v5370, -inf
      %5391 = vmax.xlane.f32.xlu0 %v5390
      %v5392 = vpop.xlane.xlu0 %5391
      %v5393 = vsel %vm3164, %v5371, -inf
      %5394 = vmax.xlane.f32.xlu0 %v5393
      %v5395 = vpop.xlane.xlu0 %5394
      %v5396 = vsub.f32 %v5364, %v5374
      %v5397 = vsub.f32 %v5365, %v5377
      %v5398 = vsub.f32 %v5366, %v5380
      %v5399 = vsub.f32 %v5367, %v5383
      %v5400 = vsub.f32 %v5368, %v5386
      %v5401 = vsub.f32 %v5369, %v5389
      %v5402 = vsub.f32 %v5370, %v5392
      %v5403 = vsub.f32 %v5371, %v5395
      %v5404 = vmul.f32 %v5396, 1.442695
      %v5405 = vpow.pop %v5404
      %v5406 = vmul.f32 %v5397, 1.442695
      %v5407 = vpow.pop %v5406
      %v5408 = vmul.f32 %v5398, 1.442695
      %v5409 = vpow.pop %v5408
      %v5410 = vmul.f32 %v5399, 1.442695
      %v5411 = vpow.pop %v5410
      %v5412 = vmul.f32 %v5400, 1.442695
      %v5413 = vpow.pop %v5412
      %v5414 = vmul.f32 %v5401, 1.442695
      %v5415 = vpow.pop %v5414
      %v5416 = vmul.f32 %v5402, 1.442695
      %v5417 = vpow.pop %v5416
      %v5418 = vmul.f32 %v5403, 1.442695
      %v5419 = vpow.pop %v5418
      %v5420 = vsel %vm3164, %v5405, 0.0
      %5421 = vadd.xlane.f32.xlu0 %v5420
      %v5422 = vpop.xlane.xlu0 %5421
      %v5423 = vsel %vm3164, %v5407, 0.0
      %5424 = vadd.xlane.f32.xlu0 %v5423
      %v5425 = vpop.xlane.xlu0 %5424
      %v5426 = vsel %vm3164, %v5409, 0.0
      %5427 = vadd.xlane.f32.xlu0 %v5426
      %v5428 = vpop.xlane.xlu0 %5427
      %v5429 = vsel %vm3164, %v5411, 0.0
      %5430 = vadd.xlane.f32.xlu0 %v5429
      %v5431 = vpop.xlane.xlu0 %5430
      %v5432 = vsel %vm3164, %v5413, 0.0
      %5433 = vadd.xlane.f32.xlu0 %v5432
      %v5434 = vpop.xlane.xlu0 %5433
      %v5435 = vsel %vm3164, %v5415, 0.0
      %5436 = vadd.xlane.f32.xlu0 %v5435
      %v5437 = vpop.xlane.xlu0 %5436
      %v5438 = vsel %vm3164, %v5417, 0.0
      %5439 = vadd.xlane.f32.xlu0 %v5438
      %v5440 = vpop.xlane.xlu0 %5439
      %v5441 = vsel %vm3164, %v5419, 0.0
      %5442 = vadd.xlane.f32.xlu0 %v5441
      %v5443 = vpop.xlane.xlu0 %5442
      %v5444 = vrcp.pop %v5422
      %v5445 = vrcp.pop %v5425
      %v5446 = vrcp.pop %v5428
      %v5447 = vrcp.pop %v5431
      %v5448 = vrcp.pop %v5434
      %v5449 = vrcp.pop %v5437
      %v5450 = vrcp.pop %v5440
      %v5451 = vrcp.pop %v5443
      %v5452 = vmul.f32 %v5405, %v5444
      %v5453 = vmul.f32 %v5407, %v5445
      %v5454 = vmul.f32 %v5409, %v5446
      %v5455 = vmul.f32 %v5411, %v5447
      %v5456 = vmul.f32 %v5413, %v5448
      %v5457 = vmul.f32 %v5415, %v5449
      %v5458 = vmul.f32 %v5417, %v5450
      %v5459 = vmul.f32 %v5419, %v5451
      %v5460 = vpack.c.bf16 %v5452, %v5452
      %v5461 = vpack.c.bf16 %v5453, %v5453
      %v5462 = vpack.c.bf16 %v5454, %v5454
      %v5463 = vpack.c.bf16 %v5455, %v5455
      %v5464 = vpack.c.bf16 %v5456, %v5456
      %v5465 = vpack.c.bf16 %v5457, %v5457
      %v5466 = vpack.c.bf16 %v5458, %v5458
      %v5467 = vpack.c.bf16 %v5459, %v5459
      %v5468 = vpack.c.bf16 %v5234, %v5234
      %v5469 = vpack.c.bf16 %v5236, %v5236
      %v5470 = vpack.c.bf16 %v5239, %v5239
      %v5471 = vpack.c.bf16 %v5241, %v5241
      %v5472 = vpack.c.bf16 %v5244, %v5244
      %v5473 = vpack.c.bf16 %v5246, %v5246
      %v5474 = vpack.c.bf16 %v5249, %v5249
      %v5475 = vpack.c.bf16 %v5251, %v5251
      %v5480 = vunpack.c.l.b16 %v5460
      %v5481 = vunpack.c.l.b16 %v5461
      %v5482 = vunpack.c.l.b16 %v5462
      %v5483 = vunpack.c.l.b16 %v5463
      %v5484 = vpack.c.b16 %v5481, %v5480
      %v5485 = vpack.c.b16 %v5483, %v5482
      %v5490 = vunpack.c.l.b16 %v5468
      %v5491 = vunpack.c.l.b16 %v5469
      %v5492 = vunpack.c.l.b16 %v5470
      %v5493 = vunpack.c.l.b16 %v5471
      %v5494 = vpack.c.b16 %v5491, %v5490
      %v5495 = vpack.c.b16 %v5493, %v5492
      %v5499 = vsel %vm3164, %v5484, 0
      %v5502 = vsel %vm3164, %v5485, 0
      %5504 = vmatpush.bf16.msra.mxu0 0
      %5505 = vmatpush.bf16.msra.mxu0 0
      %5506 = vmatpush.bf16.msra.mxu0 0
      %5507 = vmatpush.bf16.msra.mxu0 0
      %5508 = vmatpush.bf16.msra.mxu0 0
      %5509 = vmatpush.bf16.msra.mxu0 0
      %5510 = vmatpush.bf16.msra.mxu0 %v5495
      %5511 = vmatpush.bf16.msra.mxu0 %v5494
      %5512 = vmatmul.bf16.gmra.mxu0 %v5499
      %v5513 = vpop.f32.mrf.mxu0
      %v5514 = vadd.f32 0.0, %v5513
      %v5515 = vpop.f32.mrf.mxu0
      %v5516 = vadd.f32 0.0, %v5515
      %5517 = vmatmul.bf16.gmra.mxu0 %v5502
      %v5518 = vpop.f32.mrf.mxu0
      %v5519 = vadd.f32 0.0, %v5518
      %v5520 = vpop.f32.mrf.mxu0
      %v5521 = vadd.f32 0.0, %v5520
      %5522 = vdwg.mxu0
      %v5527 = vunpack.c.l.b16 %v5464
      %v5528 = vunpack.c.l.b16 %v5465
      %v5529 = vunpack.c.l.b16 %v5466
      %v5530 = vunpack.c.l.b16 %v5467
      %v5531 = vpack.c.b16 %v5528, %v5527
      %v5532 = vpack.c.b16 %v5530, %v5529
      %v5537 = vunpack.c.l.b16 %v5472
      %v5538 = vunpack.c.l.b16 %v5473
      %v5539 = vunpack.c.l.b16 %v5474
      %v5540 = vunpack.c.l.b16 %v5475
      %v5541 = vpack.c.b16 %v5538, %v5537
      %v5542 = vpack.c.b16 %v5540, %v5539
      %v5546 = vsel %vm3164, %v5531, 0
      %v5549 = vsel %vm3164, %v5532, 0
      %5551 = vmatpush.bf16.msra.mxu0 0
      %5552 = vmatpush.bf16.msra.mxu0 0
      %5553 = vmatpush.bf16.msra.mxu0 0
      %5554 = vmatpush.bf16.msra.mxu0 0
      %5555 = vmatpush.bf16.msra.mxu0 0
      %5556 = vmatpush.bf16.msra.mxu0 0
      %5557 = vmatpush.bf16.msra.mxu0 %v5542
      %5558 = vmatpush.bf16.msra.mxu0 %v5541
      %5559 = vmatmul.bf16.gmra.mxu0 %v5546
      %v5560 = vpop.f32.mrf.mxu0
      %v5561 = vadd.f32 0.0, %v5560
      %v5562 = vpop.f32.mrf.mxu0
      %v5563 = vadd.f32 0.0, %v5562
      %5564 = vmatmul.bf16.gmra.mxu0 %v5549
      %v5565 = vpop.f32.mrf.mxu0
      %v5566 = vadd.f32 0.0, %v5565
      %v5567 = vpop.f32.mrf.mxu0
      %v5568 = vadd.f32 0.0, %v5567
      %5569 = vdwg.mxu0
      %v5570 = vpack.c.bf16 %v5516, %v5514
      %v5571 = vpack.c.bf16 %v5521, %v5519
      %v5572 = vpack.c.bf16 %v5563, %v5561
      %v5573 = vpack.c.bf16 %v5568, %v5566
      %v5575 = vperm.slane %v4359, 0
      %v5593 = vunpack.c.l.b16 %v4343
      %v5594 = vunpack.c.l.b16 %v4344
      %v5595 = vunpack.c.l.b16 %v4345
      %v5596 = vunpack.c.l.b16 %v4346
      %v5597 = vunpack.c.l.b16 %v4347
      %v5598 = vunpack.c.l.b16 %v4348
      %v5599 = vunpack.c.l.b16 %v4349
      %v5600 = vunpack.c.l.b16 %v4350
      %v5601 = vunpack.c.l.b16 %v4351
      %v5602 = vunpack.c.l.b16 %v4352
      %v5603 = vunpack.c.l.b16 %v4353
      %v5604 = vunpack.c.l.b16 %v4354
      %v5605 = vunpack.c.l.b16 %v4355
      %v5606 = vunpack.c.l.b16 %v4356
      %v5607 = vunpack.c.l.b16 %v4357
      %v5608 = vunpack.c.l.b16 %v4358
      %v5609 = vpack.c.b16 %v5594, %v5593
      %v5610 = vpack.c.b16 %v5596, %v5595
      %v5611 = vpack.c.b16 %v5598, %v5597
      %v5612 = vpack.c.b16 %v5600, %v5599
      %v5613 = vpack.c.b16 %v5602, %v5601
      %v5614 = vpack.c.b16 %v5604, %v5603
      %v5615 = vpack.c.b16 %v5606, %v5605
      %v5616 = vpack.c.b16 %v5608, %v5607
      %5625 = vmatpush.bf16.msra.mxu0 %v5616
      %5626 = vmatpush.bf16.msra.mxu0 %v5615
      %5627 = vmatpush.bf16.msra.mxu0 %v5614
      %5628 = vmatpush.bf16.msra.mxu0 %v5613
      %5629 = vmatpush.bf16.msra.mxu0 %v5612
      %5630 = vmatpush.bf16.msra.mxu0 %v5611
      %5631 = vmatpush.bf16.msra.mxu0 %v5610
      %5632 = vmatpush.bf16.msra.mxu0 %v5609
      %5633 = vmatmul.bf16.gmra.mxu0 %v5570
      %v5634 = vpop.f32.mrf.mxu0
      %v5635 = vadd.f32 %v5575, %v5634
      %v5636 = vpop.f32.mrf.mxu0
      %v5637 = vadd.f32 %v5575, %v5636
      %5638 = vmatmul.bf16.gmra.mxu0 %v5571
      %v5639 = vpop.f32.mrf.mxu0
      %v5640 = vadd.f32 %v5575, %v5639
      %v5641 = vpop.f32.mrf.mxu0
      %v5642 = vadd.f32 %v5575, %v5641
      %5643 = vmatmul.bf16.gmra.mxu0 %v5572
      %v5644 = vpop.f32.mrf.mxu0
      %v5645 = vadd.f32 %v5575, %v5644
      %v5646 = vpop.f32.mrf.mxu0
      %v5647 = vadd.f32 %v5575, %v5646
      %5648 = vmatmul.bf16.gmra.mxu0 %v5573
      %v5649 = vpop.f32.mrf.mxu0
      %v5650 = vadd.f32 %v5575, %v5649
      %v5651 = vpop.f32.mrf.mxu0
      %v5652 = vadd.f32 %v5575, %v5651
      %5653 = vdwg.mxu0
      %v5654 = vld [vmem:[%s49] sm:$0xff]
      %v5655 = vld [vmem:[%s49 + $0x8] sm:$0xff]
      %v5656 = vld [vmem:[%s49 + $0x10] sm:$0xff]
      %v5657 = vld [vmem:[%s49 + $0x18] sm:$0xff]
      %v5658 = vld [vmem:[%s49 + $0x20] sm:$0xff]
      %v5659 = vld [vmem:[%s49 + $0x28] sm:$0xff]
      %v5660 = vld [vmem:[%s49 + $0x30] sm:$0xff]
      %v5661 = vld [vmem:[%s49 + $0x38] sm:$0xff]
      %5663 = vset.pattern.permute.xlu0 0
      %5664 = vperm.xlu0 %5663, %v5654
      %v5665 = vpop.permute.xlu0 %5664
      %5668 = vset.pattern.permute.xlu0 0
      %5669 = vperm.xlu0 %5668, %v5655
      %v5670 = vpop.permute.xlu0 %5669
      %5673 = vset.pattern.permute.xlu0 0
      %5674 = vperm.xlu0 %5673, %v5656
      %v5675 = vpop.permute.xlu0 %5674
      %5678 = vset.pattern.permute.xlu0 0
      %5679 = vperm.xlu0 %5678, %v5657
      %v5680 = vpop.permute.xlu0 %5679
      %5683 = vset.pattern.permute.xlu0 0
      %5684 = vperm.xlu0 %5683, %v5658
      %v5685 = vpop.permute.xlu0 %5684
      %5688 = vset.pattern.permute.xlu0 0
      %5689 = vperm.xlu0 %5688, %v5659
      %v5690 = vpop.permute.xlu0 %5689
      %5693 = vset.pattern.permute.xlu0 0
      %5694 = vperm.xlu0 %5693, %v5660
      %v5695 = vpop.permute.xlu0 %5694
      %5698 = vset.pattern.permute.xlu0 0
      %5699 = vperm.xlu0 %5698, %v5661
      %v5700 = vpop.permute.xlu0 %5699
      %v5702 = vmul.f32 %v5635, %v5665
      %v5703 = vmul.f32 %v5637, %v5670
      %v5704 = vmul.f32 %v5640, %v5675
      %v5705 = vmul.f32 %v5642, %v5680
      %v5706 = vmul.f32 %v5645, %v5685
      %v5707 = vmul.f32 %v5647, %v5690
      %v5708 = vmul.f32 %v5650, %v5695
      %v5709 = vmul.f32 %v5652, %v5700
      %v5710 = vld [vmem:[%s51] sm:$0xf]
      %v5711 = vld [vmem:[%s51 + $0x4] sm:$0xf]
      %v5712 = vld [vmem:[%s51 + $0x8] sm:$0xf]
      %v5713 = vld [vmem:[%s51 + $0xc] sm:$0xf]
      %v5714 = vld [vmem:[%s53] sm:$0xf]
      %v5715 = vld [vmem:[%s53 + $0x4] sm:$0xf]
      %v5716 = vld [vmem:[%s53 + $0x8] sm:$0xf]
      %v5717 = vld [vmem:[%s53 + $0xc] sm:$0xf]
      %v5718 = vld [vmem:[%s53 + $0x10] sm:$0xf]
      %v5719 = vld [vmem:[%s53 + $0x14] sm:$0xf]
      %v5720 = vld [vmem:[%s53 + $0x18] sm:$0xf]
      %v5721 = vld [vmem:[%s53 + $0x1c] sm:$0xf]
      %v5722 = vld [vmem:[%s53 + $0x20] sm:$0xf]
      %v5723 = vld [vmem:[%s53 + $0x24] sm:$0xf]
      %v5724 = vld [vmem:[%s53 + $0x28] sm:$0xf]
      %v5725 = vld [vmem:[%s53 + $0x2c] sm:$0xf]
      %v5726 = vld [vmem:[%s53 + $0x30] sm:$0xf]
      %v5727 = vld [vmem:[%s53 + $0x34] sm:$0xf]
      %v5728 = vld [vmem:[%s53 + $0x38] sm:$0xf]
      %v5729 = vld [vmem:[%s53 + $0x3c] sm:$0xf]
      %v5730 = vld [vmem:[%s53 + $0x40] sm:$0xf]
      %v5731 = vld [vmem:[%s53 + $0x44] sm:$0xf]
      %v5732 = vld [vmem:[%s55] sm:$0xf]
      %v5733 = vld [vmem:[%s55 + $0x4] sm:$0xf]
      %v5734 = vld [vmem:[%s55 + $0x8] sm:$0xf]
      %v5735 = vld [vmem:[%s55 + $0xc] sm:$0xf]
      %v5736 = vld [vmem:[%s55 + $0x10] sm:$0xf]
      %v5737 = vld [vmem:[%s55 + $0x14] sm:$0xf]
      %v5738 = vld [vmem:[%s55 + $0x18] sm:$0xf]
      %v5739 = vld [vmem:[%s55 + $0x1c] sm:$0xf]
      %v5740 = vld [vmem:[%s55 + $0x20] sm:$0xf]
      %v5741 = vld [vmem:[%s55 + $0x24] sm:$0xf]
      %v5742 = vld [vmem:[%s55 + $0x28] sm:$0xf]
      %v5743 = vld [vmem:[%s55 + $0x2c] sm:$0xf]
      %v5744 = vld [vmem:[%s55 + $0x30] sm:$0xf]
      %v5745 = vld [vmem:[%s55 + $0x34] sm:$0xf]
      %v5746 = vld [vmem:[%s55 + $0x38] sm:$0xf]
      %v5747 = vld [vmem:[%s55 + $0x3c] sm:$0xf]
      %v5748 = vld [vmem:[%s55 + $0x40] sm:$0xf]
      %v5749 = vld [vmem:[%s55 + $0x44] sm:$0xf]
      %v5750 = vld [vmem:[%s55 + $0x48] sm:$0xf]
      %v5751 = vld [vmem:[%s55 + $0x4c] sm:$0x3]
      %v5752 = vld [vmem:[%s57] sm:$0xf]
      %v5753 = vld [vmem:[%s57 + $0x4] sm:$0xf]
      %v5754 = vld [vmem:[%s57 + $0x8] sm:$0xf]
      %v5755 = vld [vmem:[%s57 + $0xc] sm:$0xf]
      %v5756 = vld [vmem:[%s57 + $0x10] sm:$0xf]
      %v5757 = vld [vmem:[%s57 + $0x14] sm:$0xf]
      %v5758 = vld [vmem:[%s59] sm:$0xff]
      %v5759 = vld [vmem:[%s59 + $0x8] sm:$0xff]
      %v5760 = vld [vmem:[%s59 + $0x10] sm:$0xff]
      %v5761 = vld [vmem:[%s59 + $0x18] sm:$0xff]
      %v5762 = vld [vmem:[%s61] sm:$0xff]
      %v5763 = vld [vmem:[%s61 + $0x8] sm:$0xf]
      %v5764 = vld [vmem:[%s61 + $0xc] sm:$0xff]
      %v5765 = vld [vmem:[%s61 + $0x14] sm:$0xf]
      %v5766 = vld [vmem:[%s61 + $0x18] sm:$0xff]
      %v5767 = vld [vmem:[%s61 + $0x20] sm:$0xf]
      %v5768 = vld [vmem:[%s61 + $0x24] sm:$0xff]
      %v5769 = vld [vmem:[%s61 + $0x2c] sm:$0xf]
      %v5770 = vld [vmem:[%s61 + $0x30] sm:$0xff]
      %v5771 = vld [vmem:[%s61 + $0x38] sm:$0xf]
      %v5772 = vld [vmem:[%s61 + $0x3c] sm:$0xff]
      %v5773 = vld [vmem:[%s61 + $0x44] sm:$0xf]
      %v5774 = vld [vmem:[%s61 + $0x48] sm:$0x33]
      %v5775 = vld [vmem:[%s61 + $0x50] sm:$0x3]
      %v5776 = vld [vmem:[%s63] sm:$0x7]
      %v5777 = vld [vmem:[%s65] sm:$0xf]
      %v5778 = vld [vmem:[%s65 + $0x4] sm:$0xf]
      %v5779 = vld [vmem:[%s65 + $0x8] sm:$0xf]
      %v5780 = vld [vmem:[%s65 + $0xc] sm:$0xf]
      %v5781 = vld [vmem:[%s65 + $0x10] sm:$0xf]
      %v5782 = vld [vmem:[%s65 + $0x14] sm:$0xf]
      %v5783 = vld [vmem:[%s65 + $0x18] sm:$0xf]
      %v5784 = vld [vmem:[%s65 + $0x1c] sm:$0xf]
      %v5785 = vld [vmem:[%s65 + $0x20] sm:$0xf]
      %v5786 = vld [vmem:[%s65 + $0x24] sm:$0xf]
      %v5787 = vld [vmem:[%s65 + $0x28] sm:$0xf]
      %v5788 = vld [vmem:[%s65 + $0x2c] sm:$0xf]
      %v5789 = vld [vmem:[%s65 + $0x30] sm:$0xf]
      %v5790 = vld [vmem:[%s65 + $0x34] sm:$0xf]
      %v5791 = vld [vmem:[%s65 + $0x38] sm:$0xf]
      %v5792 = vld [vmem:[%s65 + $0x3c] sm:$0xf]
      %v5793 = vld [vmem:[%s67] sm:$0x1]
      %v5794 = vpack.c.bf16 %v5703, %v5702
      %v5795 = vpack.c.bf16 %v5705, %v5704
      %v5796 = vpack.c.bf16 %v5707, %v5706
      %v5797 = vpack.c.bf16 %v5709, %v5708
      %v5802 = vunpack.c.l.b16 %v5710
      %v5803 = vunpack.c.l.b16 %v5711
      %v5804 = vunpack.c.l.b16 %v5712
      %v5805 = vunpack.c.l.b16 %v5713
      %v5806 = vpack.c.b16 %v5803, %v5802
      %v5807 = vpack.c.b16 %v5805, %v5804
      %v5809 = vsel %vm3179, %v5806, 0
      %v5812 = vsel %vm3179, %v5807, 0
      %5814 = vmatpush.bf16.msra.mxu0 0
      %5815 = vmatpush.bf16.msra.mxu0 0
      %5816 = vmatpush.bf16.msra.mxu0 0
      %5817 = vmatpush.bf16.msra.mxu0 0
      %5818 = vmatpush.bf16.msra.mxu0 %v5797
      %5819 = vmatpush.bf16.msra.mxu0 %v5796
      %5820 = vmatpush.bf16.msra.mxu0 %v5795
      %5821 = vmatpush.bf16.msra.mxu0 %v5794
      %5822 = vmatmul.bf16.gmra.mxu0 %v5809
      %v5823 = vpop.f32.mrf.mxu0
      %v5824 = vadd.f32 0.0, %v5823
      %v5825 = vpop.f32.mrf.mxu0
      %v5826 = vadd.f32 0.0, %v5825
      %5827 = vmatmul.bf16.gmra.mxu0 %v5812
      %v5828 = vpop.f32.mrf.mxu0
      %v5829 = vadd.f32 0.0, %v5828
      %v5830 = vpop.f32.mrf.mxu0
      %v5831 = vadd.f32 0.0, %v5830
      %5832 = vdwg.mxu0
      %v5833 = vpack.c.bf16 %v5826, %v5824
      %v5834 = vpack.c.bf16 %v5831, %v5829
      %v5841 = vunpack.c.l.b16 %v5752
      %v5842 = vunpack.c.l.b16 %v5753
      %v5843 = vunpack.c.l.b16 %v5754
      %v5844 = vunpack.c.l.b16 %v5755
      %v5845 = vunpack.c.l.b16 %v5756
      %v5846 = vunpack.c.l.b16 %v5757
      %v5847 = vpack.c.b16 %v5842, %v5841
      %v5848 = vpack.c.b16 %v5844, %v5843
      %v5849 = vpack.c.b16 %v5846, %v5845
      %v5854 = vsel %vm2697, %v5833, 0
      %v5857 = vsel %vm2697, %v5834, 0
      %5859 = vmatpush.bf16.msra.mxu0 0
      %5860 = vmatpush.bf16.msra.mxu0 0
      %5861 = vmatpush.bf16.msra.mxu0 0
      %5862 = vmatpush.bf16.msra.mxu0 0
      %5863 = vmatpush.bf16.msra.mxu0 0
      %5864 = vmatpush.bf16.msra.mxu0 %v5849
      %5865 = vmatpush.bf16.msra.mxu0 %v5848
      %5866 = vmatpush.bf16.msra.mxu0 %v5847
      %5867 = vmatmul.bf16.gmra.mxu0 %v5854
      %v5868 = vpop.f32.mrf.mxu0
      %v5869 = vadd.f32 0.0, %v5868
      %v5870 = vpop.f32.mrf.mxu0
      %v5871 = vadd.f32 0.0, %v5870
      %5872 = vmatmul.bf16.gmra.mxu0 %v5857
      %v5873 = vpop.f32.mrf.mxu0
      %v5874 = vadd.f32 0.0, %v5873
      %v5875 = vpop.f32.mrf.mxu0
      %v5876 = vadd.f32 0.0, %v5875
      %5877 = vdwg.mxu0
      %v5878 = vrot.slane %v5702, 7
      %v5879 = vrot.slane %v5703, 7
      %v5880 = vrot.slane %v5704, 7
      %v5881 = vrot.slane %v5705, 7
      %v5882 = vrot.slane %v5706, 7
      %v5883 = vrot.slane %v5707, 7
      %v5884 = vrot.slane %v5708, 7
      %v5885 = vrot.slane %v5709, 7
      %v5886 = vsel %vm1307, %v5884, %v5885
      %v5887 = vsel %vm1307, %v5883, %v5884
      %v5888 = vsel %vm1307, %v5882, %v5883
      %v5889 = vsel %vm1307, %v5881, %v5882
      %v5890 = vsel %vm1307, %v5880, %v5881
      %v5891 = vsel %vm1307, %v5879, %v5880
      %v5892 = vsel %vm1307, %v5878, %v5879
      %v5893 = vsel %vm1307, %v5885, %v5878
      %v5894 = vrot.slane %v5702, 1
      %v5895 = vrot.slane %v5703, 1
      %v5896 = vrot.slane %v5704, 1
      %v5897 = vrot.slane %v5705, 1
      %v5898 = vrot.slane %v5706, 1
      %v5899 = vrot.slane %v5707, 1
      %v5900 = vrot.slane %v5708, 1
      %v5901 = vrot.slane %v5709, 1
      %v5902 = vsel %vm1360, %v5900, %v5901
      %v5903 = vsel %vm1360, %v5899, %v5900
      %v5904 = vsel %vm1360, %v5898, %v5899
      %v5905 = vsel %vm1360, %v5897, %v5898
      %v5906 = vsel %vm1360, %v5896, %v5897
      %v5907 = vsel %vm1360, %v5895, %v5896
      %v5908 = vsel %vm1360, %v5894, %v5895
      %v5909 = vsel %vm1360, %v5901, %v5894
      %5918 = vrot.lane.b32.xlu0 %v5702, 48
      %v5919 = vpop.permute.xlu0 %5918
      %5920 = vrot.lane.b32.xlu0 %v5703, 48
      %v5921 = vpop.permute.xlu0 %5920
      %5922 = vrot.lane.b32.xlu0 %v5704, 48
      %v5923 = vpop.permute.xlu0 %5922
      %5924 = vrot.lane.b32.xlu0 %v5705, 48
      %v5925 = vpop.permute.xlu0 %5924
      %5926 = vrot.lane.b32.xlu0 %v5706, 48
      %v5927 = vpop.permute.xlu0 %5926
      %5928 = vrot.lane.b32.xlu0 %v5707, 48
      %v5929 = vpop.permute.xlu0 %5928
      %5930 = vrot.lane.b32.xlu0 %v5708, 48
      %v5931 = vpop.permute.xlu0 %5930
      %5932 = vrot.lane.b32.xlu0 %v5709, 48
      %v5933 = vpop.permute.xlu0 %5932
      %5950 = vrot.lane.b32.xlu0 %v5908, 96
      %v5951 = vpop.permute.xlu0 %5950
      %5952 = vrot.lane.b32.xlu0 %v5907, 96
      %v5953 = vpop.permute.xlu0 %5952
      %5954 = vrot.lane.b32.xlu0 %v5906, 96
      %v5955 = vpop.permute.xlu0 %5954
      %5956 = vrot.lane.b32.xlu0 %v5905, 96
      %v5957 = vpop.permute.xlu0 %5956
      %5958 = vrot.lane.b32.xlu0 %v5904, 96
      %v5959 = vpop.permute.xlu0 %5958
      %5960 = vrot.lane.b32.xlu0 %v5903, 96
      %v5961 = vpop.permute.xlu0 %5960
      %5962 = vrot.lane.b32.xlu0 %v5902, 96
      %v5963 = vpop.permute.xlu0 %5962
      %5964 = vrot.lane.b32.xlu0 %v5909, 96
      %v5965 = vpop.permute.xlu0 %5964
      %v5974 = vsel %vm2697, %v5893, %v5919
      %v5975 = vsel %vm2697, %v5892, %v5921
      %v5976 = vsel %vm2697, %v5891, %v5923
      %v5977 = vsel %vm2697, %v5890, %v5925
      %v5978 = vsel %vm2697, %v5889, %v5927
      %v5979 = vsel %vm2697, %v5888, %v5929
      %v5980 = vsel %vm2697, %v5887, %v5931
      %v5981 = vsel %vm2697, %v5886, %v5933
      %v5982 = vsel %vm3237, %v5974, %v5951
      %v5983 = vsel %vm3237, %v5975, %v5953
      %v5984 = vsel %vm3237, %v5976, %v5955
      %v5985 = vsel %vm3237, %v5977, %v5957
      %v5986 = vsel %vm3237, %v5978, %v5959
      %v5987 = vsel %vm3237, %v5979, %v5961
      %v5988 = vsel %vm3237, %v5980, %v5963
      %v5989 = vsel %vm3237, %v5981, %v5965
      %v5990 = vpack.c.bf16 %v5983, %v5982
      %v5991 = vpack.c.bf16 %v5953, %v5951
      %v5992 = vpack.c.bf16 %v5985, %v5984
      %v5993 = vpack.c.bf16 %v5957, %v5955
      %v5994 = vpack.c.bf16 %v5987, %v5986
      %v5995 = vpack.c.bf16 %v5961, %v5959
      %v5996 = vpack.c.bf16 %v5989, %v5988
      %v5997 = vpack.c.bf16 %v5965, %v5963
      %v6016 = vunpack.c.l.b16 %v5714
      %v6017 = vunpack.c.l.b16 %v5715
      %v6018 = vunpack.c.l.b16 %v5716
      %v6019 = vunpack.c.l.b16 %v5717
      %v6020 = vunpack.c.l.b16 %v5718
      %v6021 = vunpack.c.l.b16 %v5719
      %v6022 = vunpack.c.l.b16 %v5720
      %v6023 = vunpack.c.l.b16 %v5721
      %v6024 = vunpack.c.l.b16 %v5722
      %v6025 = vunpack.c.l.b16 %v5723
      %v6026 = vunpack.c.l.b16 %v5724
      %v6027 = vunpack.c.l.b16 %v5725
      %v6028 = vunpack.c.l.b16 %v5726
      %v6029 = vunpack.c.l.b16 %v5727
      %v6030 = vunpack.c.l.b16 %v5728
      %v6031 = vunpack.c.l.b16 %v5729
      %v6032 = vunpack.c.l.b16 %v5730
      %v6033 = vunpack.c.l.b16 %v5731
      %v6034 = vpack.c.b16 %v6017, %v6016
      %v6035 = vpack.c.b16 %v6019, %v6018
      %v6036 = vpack.c.b16 %v6021, %v6020
      %v6037 = vpack.c.b16 %v6023, %v6022
      %v6038 = vpack.c.b16 %v6025, %v6024
      %v6039 = vpack.c.b16 %v6027, %v6026
      %v6040 = vpack.c.b16 %v6029, %v6028
      %v6041 = vpack.c.b16 %v6031, %v6030
      %v6042 = vpack.c.b16 %v6033, %v6032
      %v6053 = vsel %vm5008, %v5991, 0
      %v6056 = vsel %vm5008, %v5993, 0
      %v6059 = vsel %vm5008, %v5995, 0
      %v6062 = vsel %vm5008, %v5997, 0
      %6064 = vmatpush.bf16.msra.mxu0 %v6041
      %6065 = vmatpush.bf16.msra.mxu0 %v6040
      %6066 = vmatpush.bf16.msra.mxu0 %v6039
      %6067 = vmatpush.bf16.msra.mxu0 %v6038
      %6068 = vmatpush.bf16.msra.mxu0 %v6037
      %6069 = vmatpush.bf16.msra.mxu0 %v6036
      %6070 = vmatpush.bf16.msra.mxu0 %v6035
      %6071 = vmatpush.bf16.msra.mxu0 %v6034
      %6072 = vmatmul.bf16.gmra.mxu0 %v5990
      %v6073 = vpop.f32.mrf.mxu0
      %v6074 = vadd.f32 0.0, %v6073
      %v6075 = vpop.f32.mrf.mxu0
      %v6076 = vadd.f32 0.0, %v6075
      %6077 = vmatmul.bf16.gmra.mxu0 %v5992
      %v6078 = vpop.f32.mrf.mxu0
      %v6079 = vadd.f32 0.0, %v6078
      %v6080 = vpop.f32.mrf.mxu0
      %v6081 = vadd.f32 0.0, %v6080
      %6082 = vmatmul.bf16.gmra.mxu0 %v5994
      %v6083 = vpop.f32.mrf.mxu0
      %v6084 = vadd.f32 0.0, %v6083
      %v6085 = vpop.f32.mrf.mxu0
      %v6086 = vadd.f32 0.0, %v6085
      %6087 = vmatmul.bf16.gmra.mxu0 %v5996
      %v6088 = vpop.f32.mrf.mxu0
      %v6089 = vadd.f32 0.0, %v6088
      %v6090 = vpop.f32.mrf.mxu0
      %v6091 = vadd.f32 0.0, %v6090
      %6092 = vdwg.mxu0
      %6093 = vmatpush.bf16.msra.mxu0 0
      %6094 = vmatpush.bf16.msra.mxu0 0
      %6095 = vmatpush.bf16.msra.mxu0 0
      %6096 = vmatpush.bf16.msra.mxu0 0
      %6097 = vmatpush.bf16.msra.mxu0 0
      %6098 = vmatpush.bf16.msra.mxu0 0
      %6099 = vmatpush.bf16.msra.mxu0 0
      %6100 = vmatpush.bf16.msra.mxu0 %v6042
      %6101 = vmatmul.bf16.gmra.mxu0 %v6053
      %v6102 = vpop.f32.mrf.mxu0
      %v6103 = vadd.f32 %v6074, %v6102
      %v6104 = vpop.f32.mrf.mxu0
      %v6105 = vadd.f32 %v6076, %v6104
      %6106 = vmatmul.bf16.gmra.mxu0 %v6056
      %v6107 = vpop.f32.mrf.mxu0
      %v6108 = vadd.f32 %v6079, %v6107
      %v6109 = vpop.f32.mrf.mxu0
      %v6110 = vadd.f32 %v6081, %v6109
      %6111 = vmatmul.bf16.gmra.mxu0 %v6059
      %v6112 = vpop.f32.mrf.mxu0
      %v6113 = vadd.f32 %v6084, %v6112
      %v6114 = vpop.f32.mrf.mxu0
      %v6115 = vadd.f32 %v6086, %v6114
      %6116 = vmatmul.bf16.gmra.mxu0 %v6062
      %v6117 = vpop.f32.mrf.mxu0
      %v6118 = vadd.f32 %v6089, %v6117
      %v6119 = vpop.f32.mrf.mxu0
      %v6120 = vadd.f32 %v6091, %v6119
      %6121 = vdwg.mxu0
      %v6122 = vpack.c.bf16 %v6105, %v6103
      %v6123 = vpack.c.bf16 %v6110, %v6108
      %v6124 = vpack.c.bf16 %v6115, %v6113
      %v6125 = vpack.c.bf16 %v6120, %v6118
      %6126 = vmatpush.bf16.msra.mxu0 0
      %6127 = vmatpush.bf16.msra.mxu0 0
      %6128 = vmatpush.bf16.msra.mxu0 0
      %6129 = vmatpush.bf16.msra.mxu0 0
      %6130 = vmatpush.bf16.msra.mxu0 %v6125
      %6131 = vmatpush.bf16.msra.mxu0 %v6124
      %6132 = vmatpush.bf16.msra.mxu0 %v6123
      %6133 = vmatpush.bf16.msra.mxu0 %v6122
      %6134 = vmatmul.bf16.gmra.mxu0 %v5809
      %v6135 = vpop.f32.mrf.mxu0
      %v6136 = vadd.f32 0.0, %v6135
      %v6137 = vpop.f32.mrf.mxu0
      %v6138 = vadd.f32 0.0, %v6137
      %6139 = vmatmul.bf16.gmra.mxu0 %v5812
      %v6140 = vpop.f32.mrf.mxu0
      %v6141 = vadd.f32 0.0, %v6140
      %v6142 = vpop.f32.mrf.mxu0
      %v6143 = vadd.f32 0.0, %v6142
      %6144 = vdwg.mxu0
      %v6145 = vmax.f32 %v6136, 0.0
      %v6146 = vmax.f32 %v6138, 0.0
      %v6147 = vmax.f32 %v6141, 0.0
      %v6148 = vmax.f32 %v6143, 0.0
      %v6149 = vrot.slane %v6145, 7
      %v6150 = vrot.slane %v6146, 7
      %v6151 = vrot.slane %v6147, 7
      %v6152 = vrot.slane %v6148, 7
      %v6153 = vsel %vm1307, %v6151, %v6152
      %v6154 = vsel %vm1307, %v6150, %v6151
      %v6155 = vsel %vm1307, %v6149, %v6150
      %v6156 = vsel %vm1307, %v6152, %v6149
      %v6157 = vrot.slane %v6145, 1
      %v6158 = vrot.slane %v6146, 1
      %v6159 = vrot.slane %v6147, 1
      %v6160 = vrot.slane %v6148, 1
      %v6161 = vsel %vm1360, %v6159, %v6160
      %v6162 = vsel %vm1360, %v6158, %v6159
      %v6163 = vsel %vm1360, %v6157, %v6158
      %v6164 = vsel %vm1360, %v6160, %v6157
      %6169 = vrot.lane.b32.xlu0 %v6145, 52
      %v6170 = vpop.permute.xlu0 %6169
      %6171 = vrot.lane.b32.xlu0 %v6146, 52
      %v6172 = vpop.permute.xlu0 %6171
      %6173 = vrot.lane.b32.xlu0 %v6147, 52
      %v6174 = vpop.permute.xlu0 %6173
      %6175 = vrot.lane.b32.xlu0 %v6148, 52
      %v6176 = vpop.permute.xlu0 %6175
      %6185 = vrot.lane.b32.xlu0 %v6163, 104
      %v6186 = vpop.permute.xlu0 %6185
      %6187 = vrot.lane.b32.xlu0 %v6162, 104
      %v6188 = vpop.permute.xlu0 %6187
      %6189 = vrot.lane.b32.xlu0 %v6161, 104
      %v6190 = vpop.permute.xlu0 %6189
      %6191 = vrot.lane.b32.xlu0 %v6164, 104
      %v6192 = vpop.permute.xlu0 %6191
      %vm6197 = vcmask 424960
      %v6198 = vsel %vm6197, %v6156, %v6170
      %v6199 = vsel %vm6197, %v6155, %v6172
      %v6200 = vsel %vm6197, %v6154, %v6174
      %v6201 = vsel %vm6197, %v6153, %v6176
      %vm6202 = vcmask 850944
      %v6203 = vsel %vm6202, %v6198, %v6186
      %v6204 = vsel %vm6202, %v6199, %v6188
      %v6205 = vsel %vm6202, %v6200, %v6190
      %v6206 = vsel %vm6202, %v6201, %v6192
      %v6207 = vpack.c.bf16 %v6204, %v6203
      %v6208 = vpack.c.bf16 %v6188, %v6186
      %v6209 = vpack.c.bf16 %v6206, %v6205
      %v6210 = vpack.c.bf16 %v6192, %v6190
      %v6231 = vunpack.c.l.b16 %v5732
      %v6232 = vunpack.c.l.b16 %v5733
      %v6233 = vunpack.c.l.b16 %v5734
      %v6234 = vunpack.c.l.b16 %v5735
      %v6235 = vunpack.c.l.b16 %v5736
      %v6236 = vunpack.c.l.b16 %v5737
      %v6237 = vunpack.c.l.b16 %v5738
      %v6238 = vunpack.c.l.b16 %v5739
      %v6239 = vunpack.c.l.b16 %v5740
      %v6240 = vunpack.c.l.b16 %v5741
      %v6241 = vunpack.c.l.b16 %v5742
      %v6242 = vunpack.c.l.b16 %v5743
      %v6243 = vunpack.c.l.b16 %v5744
      %v6244 = vunpack.c.l.b16 %v5745
      %v6245 = vunpack.c.l.b16 %v5746
      %v6246 = vunpack.c.l.b16 %v5747
      %v6247 = vunpack.c.l.b16 %v5748
      %v6248 = vunpack.c.l.b16 %v5749
      %v6249 = vunpack.c.l.b16 %v5750
      %v6250 = vunpack.c.l.b16 %v5751
      %v6251 = vpack.c.b16 %v6232, %v6231
      %v6252 = vpack.c.b16 %v6234, %v6233
      %v6253 = vpack.c.b16 %v6236, %v6235
      %v6254 = vpack.c.b16 %v6238, %v6237
      %v6255 = vpack.c.b16 %v6240, %v6239
      %v6256 = vpack.c.b16 %v6242, %v6241
      %v6257 = vpack.c.b16 %v6244, %v6243
      %v6258 = vpack.c.b16 %v6246, %v6245
      %v6259 = vpack.c.b16 %v6248, %v6247
      %v6260 = vpack.c.b16 %v6250, %v6249
      %vm6270 = vcmask 228352
      %v6272 = vsel %vm6270, %v6208, 0
      %v6275 = vsel %vm6270, %v6210, 0
      %vm6277 = vcmask 1045504
      %v6279 = vsel %vm6277, %v6260, 0
      %6281 = vmatpush.bf16.msra.mxu0 %v6258
      %6282 = vmatpush.bf16.msra.mxu0 %v6257
      %6283 = vmatpush.bf16.msra.mxu0 %v6256
      %6284 = vmatpush.bf16.msra.mxu0 %v6255
      %6285 = vmatpush.bf16.msra.mxu0 %v6254
      %6286 = vmatpush.bf16.msra.mxu0 %v6253
      %6287 = vmatpush.bf16.msra.mxu0 %v6252
      %6288 = vmatpush.bf16.msra.mxu0 %v6251
      %6289 = vmatmul.bf16.gmra.mxu0 %v6207
      %v6290 = vpop.f32.mrf.mxu0
      %v6291 = vadd.f32 %v5869, %v6290
      %v6292 = vpop.f32.mrf.mxu0
      %v6293 = vadd.f32 %v5871, %v6292
      %6294 = vmatmul.bf16.gmra.mxu0 %v6209
      %v6295 = vpop.f32.mrf.mxu0
      %v6296 = vadd.f32 %v5874, %v6295
      %v6297 = vpop.f32.mrf.mxu0
      %v6298 = vadd.f32 %v5876, %v6297
      %6299 = vdwg.mxu0
      %6300 = vmatpush.bf16.msra.mxu0 0
      %6301 = vmatpush.bf16.msra.mxu0 0
      %6302 = vmatpush.bf16.msra.mxu0 0
      %6303 = vmatpush.bf16.msra.mxu0 0
      %6304 = vmatpush.bf16.msra.mxu0 0
      %6305 = vmatpush.bf16.msra.mxu0 0
      %6306 = vmatpush.bf16.msra.mxu0 %v6279
      %6307 = vmatpush.bf16.msra.mxu0 %v6259
      %6308 = vmatmul.bf16.gmra.mxu0 %v6272
      %v6309 = vpop.f32.mrf.mxu0
      %v6310 = vadd.f32 %v6291, %v6309
      %v6311 = vpop.f32.mrf.mxu0
      %v6312 = vadd.f32 %v6293, %v6311
      %6313 = vmatmul.bf16.gmra.mxu0 %v6275
      %v6314 = vpop.f32.mrf.mxu0
      %v6315 = vadd.f32 %v6296, %v6314
      %v6316 = vpop.f32.mrf.mxu0
      %v6317 = vadd.f32 %v6298, %v6316
      %6318 = vdwg.mxu0
      %v6319 = vmax.f32 %v6310, 0.0
      %v6320 = vmax.f32 %v6312, 0.0
      %v6321 = vmax.f32 %v6315, 0.0
      %v6322 = vmax.f32 %v6317, 0.0
      %v6323 = vadd.f32 %v6319, %v5758
      %v6324 = vadd.f32 %v6320, %v5759
      %v6325 = vadd.f32 %v6321, %v5760
      %v6326 = vadd.f32 %v6322, %v5761
      %v6327 = vpack.c.bf16 %v6324, %v6323
      %v6328 = vpack.c.bf16 %v6326, %v6325
      %v6330 = vperm.slane %v5776, 0
      %v6331 = vperm.slane %v5776, 1
      %v6332 = vperm.slane %v5776, 2
      %v6350 = vunpack.c.l.b16 %v5762
      %v6351 = vunpack.c.h.b16 %v5762
      %v6352 = vunpack.c.l.b16 %v5763
      %v6353 = vunpack.c.l.b16 %v5764
      %v6354 = vunpack.c.h.b16 %v5764
      %v6355 = vunpack.c.l.b16 %v5765
      %v6356 = vunpack.c.l.b16 %v5766
      %v6357 = vunpack.c.h.b16 %v5766
      %v6358 = vunpack.c.l.b16 %v5767
      %v6359 = vunpack.c.l.b16 %v5768
      %v6360 = vunpack.c.h.b16 %v5768
      %v6361 = vunpack.c.l.b16 %v5769
      %v6362 = vunpack.c.l.b16 %v5770
      %v6363 = vunpack.c.h.b16 %v5770
      %v6364 = vunpack.c.l.b16 %v5771
      %v6365 = vunpack.c.l.b16 %v5772
      %v6366 = vunpack.c.h.b16 %v5772
      %v6367 = vunpack.c.l.b16 %v5773
      %v6368 = vunpack.c.l.b16 %v5774
      %v6369 = vunpack.c.h.b16 %v5774
      %v6370 = vunpack.c.l.b16 %v5775
      %v6371 = vpack.c.b16 %v6353, %v6350
      %v6372 = vpack.c.b16 %v6354, %v6351
      %v6373 = vpack.c.b16 %v6355, %v6352
      %v6374 = vpack.c.b16 %v6359, %v6356
      %v6375 = vpack.c.b16 %v6360, %v6357
      %v6376 = vpack.c.b16 %v6361, %v6358
      %v6377 = vpack.c.b16 %v6365, %v6362
      %v6378 = vpack.c.b16 %v6366, %v6363
      %v6379 = vpack.c.b16 %v6367, %v6364
      %v6380 = vpack.c.b16 %v6368, %v6368
      %v6381 = vpack.c.b16 %v6369, %v6369
      %v6382 = vpack.c.b16 %v6370, %v6370
      %v6393 = vsel %vm6197, %v6327, 0
      %v6396 = vsel %vm6197, %v6328, 0
      %vm6398 = vcmask 1041408
      %v6400 = vsel %vm6398, %v6380, 0
      %v6403 = vsel %vm6398, %v6381, 0
      %v6406 = vsel %vm6398, %v6382, 0
      %6408 = vmatpush.bf16.msra.mxu0 0
      %6409 = vmatpush.bf16.msra.mxu0 0
      %6410 = vmatpush.bf16.msra.mxu0 0
      %6411 = vmatpush.bf16.msra.mxu0 0
      %6412 = vmatpush.bf16.msra.mxu0 %v6400
      %6413 = vmatpush.bf16.msra.mxu0 %v6377
      %6414 = vmatpush.bf16.msra.mxu0 %v6374
      %6415 = vmatpush.bf16.msra.mxu0 %v6371
      %6416 = vmatmul.bf16.gmra.mxu0 %v6393
      %v6417 = vpop.f32.mrf.mxu0
      %v6418 = vadd.f32 %v6330, %v6417
      %v6419 = vpop.f32.mrf.mxu0
      %v6420 = vadd.f32 %v6330, %v6419
      %6421 = vmatmul.bf16.gmra.mxu0 %v6396
      %v6422 = vpop.f32.mrf.mxu0
      %v6423 = vadd.f32 %v6330, %v6422
      %v6424 = vpop.f32.mrf.mxu0
      %v6425 = vadd.f32 %v6330, %v6424
      %6426 = vdwg.mxu0
      %6427 = vmatpush.bf16.msra.mxu0 0
      %6428 = vmatpush.bf16.msra.mxu0 0
      %6429 = vmatpush.bf16.msra.mxu0 0
      %6430 = vmatpush.bf16.msra.mxu0 0
      %6431 = vmatpush.bf16.msra.mxu0 %v6403
      %6432 = vmatpush.bf16.msra.mxu0 %v6378
      %6433 = vmatpush.bf16.msra.mxu0 %v6375
      %6434 = vmatpush.bf16.msra.mxu0 %v6372
      %6435 = vmatmul.bf16.gmra.mxu0 %v6393
      %v6436 = vpop.f32.mrf.mxu0
      %v6437 = vadd.f32 %v6331, %v6436
      %v6438 = vpop.f32.mrf.mxu0
      %v6439 = vadd.f32 %v6331, %v6438
      %6440 = vmatmul.bf16.gmra.mxu0 %v6396
      %v6441 = vpop.f32.mrf.mxu0
      %v6442 = vadd.f32 %v6331, %v6441
      %v6443 = vpop.f32.mrf.mxu0
      %v6444 = vadd.f32 %v6331, %v6443
      %6445 = vdwg.mxu0
      %6446 = vmatpush.bf16.msra.mxu0 0
      %6447 = vmatpush.bf16.msra.mxu0 0
      %6448 = vmatpush.bf16.msra.mxu0 0
      %6449 = vmatpush.bf16.msra.mxu0 0
      %6450 = vmatpush.bf16.msra.mxu0 %v6406
      %6451 = vmatpush.bf16.msra.mxu0 %v6379
      %6452 = vmatpush.bf16.msra.mxu0 %v6376
      %6453 = vmatpush.bf16.msra.mxu0 %v6373
      %6454 = vmatmul.bf16.gmra.mxu0 %v6393
      %v6455 = vpop.f32.mrf.mxu0
      %v6456 = vadd.f32 %v6332, %v6455
      %v6457 = vpop.f32.mrf.mxu0
      %v6458 = vadd.f32 %v6332, %v6457
      %6459 = vmatmul.bf16.gmra.mxu0 %v6396
      %v6460 = vpop.f32.mrf.mxu0
      %v6461 = vadd.f32 %v6332, %v6460
      %v6462 = vpop.f32.mrf.mxu0
      %v6463 = vadd.f32 %v6332, %v6462
      %6464 = vdwg.mxu0
      %v6465 = vpack.c.bf16 %v6418, %v6418
      %v6466 = vpack.c.bf16 %v6420, %v6420
      %v6467 = vpack.c.bf16 %v6423, %v6423
      %v6468 = vpack.c.bf16 %v6425, %v6425
      %v6469 = vpack.c.bf16 %v6437, %v6437
      %v6470 = vpack.c.bf16 %v6439, %v6439
      %v6471 = vpack.c.bf16 %v6442, %v6442
      %v6472 = vpack.c.bf16 %v6444, %v6444
      %v6475 = vunpack.c.l.b16 %v6465
      %v6476 = vunpack.c.l.b16 %v6466
      %v6477 = vpack.c.b16 %v6476, %v6475
      %v6481 = vunpack.c.l.b16 %v6469
      %v6482 = vunpack.c.l.b16 %v6470
      %v6483 = vpack.c.b16 %v6482, %v6481
      %6485 = vmatpush.bf16.xpose.msra.mxu0 0
      %6486 = vmatpush.bf16.xpose.msra.mxu0 0
      %6487 = vmatpush.bf16.xpose.msra.mxu0 0
      %6488 = vmatpush.bf16.xpose.msra.mxu0 0
      %6489 = vmatpush.bf16.xpose.msra.mxu0 0
      %6490 = vmatpush.bf16.xpose.msra.mxu0 0
      %6491 = vmatpush.bf16.xpose.msra.mxu0 0
      %6492 = vmatpush.bf16.xpose.msra.mxu0 %v6483
      %6493 = vmatmul.bf16.gmra.mxu0 %v6477
      %v6494 = vpop.f32.mrf.mxu0
      %v6495 = vadd.f32 0.0, %v6494
      %v6496 = vpop.f32.mrf.mxu0
      %v6497 = vadd.f32 0.0, %v6496
      %6498 = vdwg.mxu0
      %v6501 = vunpack.c.l.b16 %v6467
      %v6502 = vunpack.c.l.b16 %v6468
      %v6503 = vpack.c.b16 %v6502, %v6501
      %v6507 = vunpack.c.l.b16 %v6471
      %v6508 = vunpack.c.l.b16 %v6472
      %v6509 = vpack.c.b16 %v6508, %v6507
      %6511 = vmatpush.bf16.xpose.msra.mxu0 0
      %6512 = vmatpush.bf16.xpose.msra.mxu0 0
      %6513 = vmatpush.bf16.xpose.msra.mxu0 0
      %6514 = vmatpush.bf16.xpose.msra.mxu0 0
      %6515 = vmatpush.bf16.xpose.msra.mxu0 0
      %6516 = vmatpush.bf16.xpose.msra.mxu0 0
      %6517 = vmatpush.bf16.xpose.msra.mxu0 0
      %6518 = vmatpush.bf16.xpose.msra.mxu0 %v6509
      %6519 = vmatmul.bf16.gmra.mxu0 %v6503
      %v6520 = vpop.f32.mrf.mxu0
      %v6521 = vadd.f32 0.0, %v6520
      %v6522 = vpop.f32.mrf.mxu0
      %v6523 = vadd.f32 0.0, %v6522
      %6524 = vdwg.mxu0
      %v6525 = vmul.f32 %v6495, 0.13867505
      %v6526 = vmul.f32 %v6497, 0.13867505
      %v6527 = vmul.f32 %v6521, 0.13867505
      %v6528 = vmul.f32 %v6523, 0.13867505
      %vm6529 = vcmp.lt.s32.totalorder %v3717, 13
      %v6530 = vsel %vm6529, %v6525, -1e+30
      %v6531 = vsel %vm6529, %v6526, -1e+30
      %v6532 = vsel %vm6529, %v6527, -1e+30
      %v6533 = vsel %vm6529, %v6528, -1e+30
      %v6534 = vsel %vm5008, %v6530, -inf
      %6535 = vmax.xlane.f32.xlu0 %v6534
      %v6536 = vpop.xlane.xlu0 %6535
      %v6537 = vsel %vm5008, %v6531, -inf
      %6538 = vmax.xlane.f32.xlu0 %v6537
      %v6539 = vpop.xlane.xlu0 %6538
      %v6540 = vsel %vm5008, %v6532, -inf
      %6541 = vmax.xlane.f32.xlu0 %v6540
      %v6542 = vpop.xlane.xlu0 %6541
      %v6543 = vsel %vm5008, %v6533, -inf
      %6544 = vmax.xlane.f32.xlu0 %v6543
      %v6545 = vpop.xlane.xlu0 %6544
      %v6546 = vsub.f32 %v6530, %v6536
      %v6547 = vsub.f32 %v6531, %v6539
      %v6548 = vsub.f32 %v6532, %v6542
      %v6549 = vsub.f32 %v6533, %v6545
      %v6550 = vmul.f32 %v6546, 1.442695
      %v6551 = vpow.pop %v6550
      %v6552 = vmul.f32 %v6547, 1.442695
      %v6553 = vpow.pop %v6552
      %v6554 = vmul.f32 %v6548, 1.442695
      %v6555 = vpow.pop %v6554
      %v6556 = vmul.f32 %v6549, 1.442695
      %v6557 = vpow.pop %v6556
      %v6558 = vsel %vm5008, %v6551, 0.0
      %6559 = vadd.xlane.f32.xlu0 %v6558
      %v6560 = vpop.xlane.xlu0 %6559
      %v6561 = vsel %vm5008, %v6553, 0.0
      %6562 = vadd.xlane.f32.xlu0 %v6561
      %v6563 = vpop.xlane.xlu0 %6562
      %v6564 = vsel %vm5008, %v6555, 0.0
      %6565 = vadd.xlane.f32.xlu0 %v6564
      %v6566 = vpop.xlane.xlu0 %6565
      %v6567 = vsel %vm5008, %v6557, 0.0
      %6568 = vadd.xlane.f32.xlu0 %v6567
      %v6569 = vpop.xlane.xlu0 %6568
      %v6570 = vrcp.pop %v6560
      %v6571 = vrcp.pop %v6563
      %v6572 = vrcp.pop %v6566
      %v6573 = vrcp.pop %v6569
      %v6574 = vmul.f32 %v6551, %v6570
      %v6575 = vmul.f32 %v6553, %v6571
      %v6576 = vmul.f32 %v6555, %v6572
      %v6577 = vmul.f32 %v6557, %v6573
      %v6578 = vpack.c.bf16 %v6574, %v6574
      %v6579 = vpack.c.bf16 %v6575, %v6575
      %v6580 = vpack.c.bf16 %v6576, %v6576
      %v6581 = vpack.c.bf16 %v6577, %v6577
      %v6582 = vpack.c.bf16 %v6456, %v6456
      %v6583 = vpack.c.bf16 %v6458, %v6458
      %v6584 = vpack.c.bf16 %v6461, %v6461
      %v6585 = vpack.c.bf16 %v6463, %v6463
      %v6588 = vunpack.c.l.b16 %v6578
      %v6589 = vunpack.c.l.b16 %v6579
      %v6590 = vpack.c.b16 %v6589, %v6588
      %v6593 = vunpack.c.l.b16 %v6582
      %v6594 = vunpack.c.l.b16 %v6583
      %v6595 = vpack.c.b16 %v6594, %v6593
      %v6598 = vsel %vm5008, %v6590, 0
      %6600 = vmatpush.bf16.msra.mxu0 0
      %6601 = vmatpush.bf16.msra.mxu0 0
      %6602 = vmatpush.bf16.msra.mxu0 0
      %6603 = vmatpush.bf16.msra.mxu0 0
      %6604 = vmatpush.bf16.msra.mxu0 0
      %6605 = vmatpush.bf16.msra.mxu0 0
      %6606 = vmatpush.bf16.msra.mxu0 0
      %6607 = vmatpush.bf16.msra.mxu0 %v6595
      %6608 = vmatmul.bf16.gmra.mxu0 %v6598
      %v6609 = vpop.f32.mrf.mxu0
      %v6610 = vadd.f32 0.0, %v6609
      %v6611 = vpop.f32.mrf.mxu0
      %v6612 = vadd.f32 0.0, %v6611
      %6613 = vdwg.mxu0
      %v6616 = vunpack.c.l.b16 %v6580
      %v6617 = vunpack.c.l.b16 %v6581
      %v6618 = vpack.c.b16 %v6617, %v6616
      %v6621 = vunpack.c.l.b16 %v6584
      %v6622 = vunpack.c.l.b16 %v6585
      %v6623 = vpack.c.b16 %v6622, %v6621
      %v6626 = vsel %vm5008, %v6618, 0
      %6628 = vmatpush.bf16.msra.mxu0 0
      %6629 = vmatpush.bf16.msra.mxu0 0
      %6630 = vmatpush.bf16.msra.mxu0 0
      %6631 = vmatpush.bf16.msra.mxu0 0
      %6632 = vmatpush.bf16.msra.mxu0 0
      %6633 = vmatpush.bf16.msra.mxu0 0
      %6634 = vmatpush.bf16.msra.mxu0 0
      %6635 = vmatpush.bf16.msra.mxu0 %v6623
      %6636 = vmatmul.bf16.gmra.mxu0 %v6626
      %v6637 = vpop.f32.mrf.mxu0
      %v6638 = vadd.f32 0.0, %v6637
      %v6639 = vpop.f32.mrf.mxu0
      %v6640 = vadd.f32 0.0, %v6639
      %6641 = vdwg.mxu0
      %v6642 = vpack.c.bf16 %v6612, %v6610
      %v6643 = vpack.c.bf16 %v6640, %v6638
      %v6645 = vperm.slane %v5793, 0
      %v6663 = vunpack.c.l.b16 %v5777
      %v6664 = vunpack.c.l.b16 %v5778
      %v6665 = vunpack.c.l.b16 %v5779
      %v6666 = vunpack.c.l.b16 %v5780
      %v6667 = vunpack.c.l.b16 %v5781
      %v6668 = vunpack.c.l.b16 %v5782
      %v6669 = vunpack.c.l.b16 %v5783
      %v6670 = vunpack.c.l.b16 %v5784
      %v6671 = vunpack.c.l.b16 %v5785
      %v6672 = vunpack.c.l.b16 %v5786
      %v6673 = vunpack.c.l.b16 %v5787
      %v6674 = vunpack.c.l.b16 %v5788
      %v6675 = vunpack.c.l.b16 %v5789
      %v6676 = vunpack.c.l.b16 %v5790
      %v6677 = vunpack.c.l.b16 %v5791
      %v6678 = vunpack.c.l.b16 %v5792
      %v6679 = vpack.c.b16 %v6664, %v6663
      %v6680 = vpack.c.b16 %v6666, %v6665
      %v6681 = vpack.c.b16 %v6668, %v6667
      %v6682 = vpack.c.b16 %v6670, %v6669
      %v6683 = vpack.c.b16 %v6672, %v6671
      %v6684 = vpack.c.b16 %v6674, %v6673
      %v6685 = vpack.c.b16 %v6676, %v6675
      %v6686 = vpack.c.b16 %v6678, %v6677
      %6695 = vmatpush.bf16.msra.mxu0 %v6686
      %6696 = vmatpush.bf16.msra.mxu0 %v6685
      %6697 = vmatpush.bf16.msra.mxu0 %v6684
      %6698 = vmatpush.bf16.msra.mxu0 %v6683
      %6699 = vmatpush.bf16.msra.mxu0 %v6682
      %6700 = vmatpush.bf16.msra.mxu0 %v6681
      %6701 = vmatpush.bf16.msra.mxu0 %v6680
      %6702 = vmatpush.bf16.msra.mxu0 %v6679
      %6703 = vmatmul.bf16.gmra.mxu0 %v6642
      %v6704 = vpop.f32.mrf.mxu0
      %v6705 = vadd.f32 %v6645, %v6704
      %v6706 = vpop.f32.mrf.mxu0
      %v6707 = vadd.f32 %v6645, %v6706
      %6708 = vmatmul.bf16.gmra.mxu0 %v6643
      %v6709 = vpop.f32.mrf.mxu0
      %v6710 = vadd.f32 %v6645, %v6709
      %v6711 = vpop.f32.mrf.mxu0
      %v6712 = vadd.f32 %v6645, %v6711
      %6713 = vdwg.mxu0
      %v6714 = vld [vmem:[%s69] sm:$0x1]
      %v6715 = vpack.c.bf16 %v6707, %v6705
      %v6716 = vpack.c.bf16 %v6712, %v6710
      %v6718 = vsel %vm3164, %v6714, 0
      %6720 = vmatpush.bf16.msra.mxu0 0
      %6721 = vmatpush.bf16.msra.mxu0 0
      %6722 = vmatpush.bf16.msra.mxu0 0
      %6723 = vmatpush.bf16.msra.mxu0 0
      %6724 = vmatpush.bf16.msra.mxu0 0
      %6725 = vmatpush.bf16.msra.mxu0 0
      %6726 = vmatpush.bf16.msra.mxu0 %v6716
      %6727 = vmatpush.bf16.msra.mxu0 %v6715
      %6728 = vmatmul.bf16.gmra.mxu0 %v6718
      %v6729 = vpop.f32.mrf.mxu0
      %v6730 = vadd.f32 0.0, %v6729
      %v6731 = vpop.f32.mrf.mxu0
      %6732 = vdwg.mxu0
      %v6733 = vmul.f32 %v6730, 0.07692308
      %v6734 = vld [vmem:[%s71] sm:$0xf]
      %v6735 = vld [vmem:[%s71 + $0x4] sm:$0xf]
      %v6736 = vld [vmem:[%s71 + $0x8] sm:$0xf]
      %v6737 = vld [vmem:[%s71 + $0xc] sm:$0xf]
      %v6738 = vld [vmem:[%s71 + $0x10] sm:$0xf]
      %v6739 = vld [vmem:[%s71 + $0x14] sm:$0xf]
      %v6740 = vld [vmem:[%s71 + $0x18] sm:$0x3]
      %v6741 = vpack.c.bf16 %v6733, %v6733
      %v6742 = vld [vmem:[%s73] sm:$0x1]
      %v6744 = vperm.slane %v6742, 0
      %v6753 = vunpack.c.l.b16 %v6734
      %v6754 = vunpack.c.l.b16 %v6735
      %v6755 = vunpack.c.l.b16 %v6736
      %v6756 = vunpack.c.l.b16 %v6737
      %v6757 = vunpack.c.l.b16 %v6738
      %v6758 = vunpack.c.l.b16 %v6739
      %v6759 = vunpack.c.l.b16 %v6740
      %v6760 = vpack.c.b16 %v6754, %v6753
      %v6761 = vpack.c.b16 %v6756, %v6755
      %v6762 = vpack.c.b16 %v6758, %v6757
      %v6763 = vpack.c.b16 %v6759, %v6759
      %v6768 = vsel %vm6197, %v6741, 0
      %v6771 = vsel %vm6398, %v6763, 0
      %6773 = vmatpush.bf16.msra.mxu0 0
      %6774 = vmatpush.bf16.msra.mxu0 0
      %6775 = vmatpush.bf16.msra.mxu0 0
      %6776 = vmatpush.bf16.msra.mxu0 0
      %6777 = vmatpush.bf16.msra.mxu0 %v6771
      %6778 = vmatpush.bf16.msra.mxu0 %v6762
      %6779 = vmatpush.bf16.msra.mxu0 %v6761
      %6780 = vmatpush.bf16.msra.mxu0 %v6760
      %6781 = vmatmul.bf16.gmra.mxu0 %v6768
      %v6782 = vpop.f32.mrf.mxu0
      %v6783 = vadd.f32 %v6744, %v6782
      %v6784 = vpop.f32.mrf.mxu0
      %6785 = vdwg.mxu0
      %v6786 = vld [vmem:[%s75] sm:$0xf]
      %v6787 = vld [vmem:[%s75 + $0x4] sm:$0xf]
      %v6788 = vld [vmem:[%s75 + $0x8] sm:$0xf]
      %v6789 = vld [vmem:[%s75 + $0xc] sm:$0xf]
      %v6790 = vld [vmem:[%s75 + $0x10] sm:$0xf]
      %v6791 = vld [vmem:[%s75 + $0x14] sm:$0xf]
      %v6792 = vld [vmem:[%s75 + $0x18] sm:$0xf]
      %v6793 = vld [vmem:[%s75 + $0x1c] sm:$0xf]
      %v6794 = vpack.c.bf16 %v6783, %v6783
      %v6795 = vld [vmem:[%s77] sm:$0x1]
      %v6797 = vperm.slane %v6795, 0
      %v6807 = vunpack.c.l.b16 %v6786
      %v6808 = vunpack.c.l.b16 %v6787
      %v6809 = vunpack.c.l.b16 %v6788
      %v6810 = vunpack.c.l.b16 %v6789
      %v6811 = vunpack.c.l.b16 %v6790
      %v6812 = vunpack.c.l.b16 %v6791
      %v6813 = vunpack.c.l.b16 %v6792
      %v6814 = vunpack.c.l.b16 %v6793
      %v6815 = vpack.c.b16 %v6808, %v6807
      %v6816 = vpack.c.b16 %v6810, %v6809
      %v6817 = vpack.c.b16 %v6812, %v6811
      %v6818 = vpack.c.b16 %v6814, %v6813
      %v6824 = vsel %vm3179, %v6794, 0
      %6826 = vmatpush.bf16.msra.mxu0 0
      %6827 = vmatpush.bf16.msra.mxu0 0
      %6828 = vmatpush.bf16.msra.mxu0 0
      %6829 = vmatpush.bf16.msra.mxu0 0
      %6830 = vmatpush.bf16.msra.mxu0 %v6818
      %6831 = vmatpush.bf16.msra.mxu0 %v6817
      %6832 = vmatpush.bf16.msra.mxu0 %v6816
      %6833 = vmatpush.bf16.msra.mxu0 %v6815
      %6834 = vmatmul.bf16.gmra.mxu0 %v6824
      %v6835 = vpop.f32.mrf.mxu0
      %v6836 = vadd.f32 %v6797, %v6835
      %v6837 = vpop.f32.mrf.mxu0
      %6838 = vdwg.mxu0
      %v6839 = vld [vmem:[%s3] sm:$0x3]
      %v6840 = vld [vmem:[%s79] sm:$0xf]
      %v6841 = vld [vmem:[%s79 + $0x4] sm:$0xf]
      %v6842 = vld [vmem:[%s79 + $0x8] sm:$0xf]
      %v6843 = vld [vmem:[%s79 + $0xc] sm:$0xf]
      %v6844 = vld [vmem:[%s79 + $0x10] sm:$0xf]
      %v6845 = vld [vmem:[%s79 + $0x14] sm:$0xf]
      %v6846 = vld [vmem:[%s79 + $0x18] sm:$0xf]
      %v6847 = vld [vmem:[%s79 + $0x1c] sm:$0xf]
      %v6848 = vld [vmem:[%s79 + $0x20] sm:$0xf]
      %v6849 = vld [vmem:[%s79 + $0x24] sm:$0xf]
      %v6850 = vld [vmem:[%s79 + $0x28] sm:$0xf]
      %v6851 = vld [vmem:[%s79 + $0x2c] sm:$0xf]
      %v6852 = vpack.c.bf16 %v6839, %v6839
      %v6853 = vld [vmem:[%s81] sm:$0x1]
      %v6855 = vperm.slane %v6853, 0
      %v6869 = vunpack.c.l.b16 %v6840
      %v6870 = vunpack.c.l.b16 %v6841
      %v6871 = vunpack.c.l.b16 %v6842
      %v6872 = vunpack.c.l.b16 %v6843
      %v6873 = vunpack.c.l.b16 %v6844
      %v6874 = vunpack.c.l.b16 %v6845
      %v6875 = vunpack.c.l.b16 %v6846
      %v6876 = vunpack.c.l.b16 %v6847
      %v6877 = vunpack.c.l.b16 %v6848
      %v6878 = vunpack.c.l.b16 %v6849
      %v6879 = vunpack.c.l.b16 %v6850
      %v6880 = vunpack.c.l.b16 %v6851
      %v6881 = vpack.c.b16 %v6870, %v6869
      %v6882 = vpack.c.b16 %v6872, %v6871
      %v6883 = vpack.c.b16 %v6874, %v6873
      %v6884 = vpack.c.b16 %v6876, %v6875
      %v6885 = vpack.c.b16 %v6878, %v6877
      %v6886 = vpack.c.b16 %v6880, %v6879
      %v6894 = vsel %vm3237, %v6852, 0
      %6896 = vmatpush.bf16.msra.mxu0 0
      %6897 = vmatpush.bf16.msra.mxu0 0
      %6898 = vmatpush.bf16.msra.mxu0 %v6886
      %6899 = vmatpush.bf16.msra.mxu0 %v6885
      %6900 = vmatpush.bf16.msra.mxu0 %v6884
      %6901 = vmatpush.bf16.msra.mxu0 %v6883
      %6902 = vmatpush.bf16.msra.mxu0 %v6882
      %6903 = vmatpush.bf16.msra.mxu0 %v6881
      %6904 = vmatmul.bf16.gmra.mxu0 %v6894
      %v6905 = vpop.f32.mrf.mxu0
      %v6906 = vadd.f32 %v6855, %v6905
      %v6907 = vpop.f32.mrf.mxu0
      %6908 = vdwg.mxu0
      %vm6909 = vcmask 97280
      %v6910 = vsel %vm6909, %v6836, 0.0
      %p6911 = scmp.eq.s32.totalorder %s94, 0
      %s6912 = scalar_select %p6911, 1, 0
      %s6913 = scvt.s32.f32 %s6912
      %v6914 = vstv %s6913
      %v6915 = vmul.f32 %v6914, %v6910
      %s6916 = ssub.f32 1.0, %s6913
      %v6917 = vstv %s6916
      %v6918 = vmul.f32 %v6917, %v6906
      %v6919 = vadd.f32 %v6915, %v6918
      %6921 = vrot.lane.b32.xlu0 %v6919, 64
      %v6922 = vpop.permute.xlu0 %6921
      %v6924 = vsel %vm3179, %v6783, %v6922
      %6925 = vst [vmem:[%s1236] sm:$0x3] %v6924
      %p6926 = scmp.lt.s32.totalorder %s94, 1
      %s6927 = scalar_select %p6926, %s94, 1
      %s6928 = smul.addr %s6927, 2
      %s6929 = scalar_lea.vmem %s83, %s6928
      // Predicated region
      $region185: #{lgnet3_forward.1} parent=183 // pred_check
        %p6930 = pneg %p978
      $region186: #{lgnet3_forward.1} parent=183 // pred_check_branch
        %6932 = sbr.rel (%p6930) target = $region188
      $region187: #{lgnet3_forward.1} parent=183 // pred_region
        _
      $region188: #{lgnet3_forward.1} parent=183 // pred_fallthru
        _
    $region184: #{lgnet3_forward.1} parent=5 // pred_fallthru
      _
    %p6933 = scmp.le.s32.totalorder 2, %s89
    // Predicated region
    $region189: #{lgnet3_forward.1} parent=5 // pred_check
      %p6934 = pneg %p6933
    $region190: #{lgnet3_forward.1} parent=5 // pred_check_branch
      %6936 = sbr.rel (%p6934) target = $region192
    $region191: #{lgnet3_forward.1} parent=5 // pred_region
      %s6937 = ssub.s32 %s89, 2
      // Predicated region
      $region193: #{lgnet3_forward.1} parent=191 // pred_check
        %p6938 = pneg %p984
      $region194: #{lgnet3_forward.1} parent=191 // pred_check_branch
        %6940 = sbr.rel (%p6938) target = $region196
      $region195: #{lgnet3_forward.1} parent=191 // pred_region
        %p6941 = scmp.lt.s32.totalorder %s95, 1
        %s6942 = scalar_select %p6941, %s95, 1
        %s6943 = smul.addr %s6942, 2
        %s6944 = scalar_lea.vmem %s83, %s6943
      $region196: #{lgnet3_forward.1} parent=191 // pred_fallthru
        _
    $region192: #{lgnet3_forward.1} parent=5 // pred_fallthru
      _
  $region6: #{lgnet3_forward.1} parent=0 // loop_footer
    %s93 = sadd.s32 1, %s89
  $region7: #{lgnet3_forward.1} parent=0 // loop_footer_branch
    %88 = sbr.rel target = $region3
  $region8: #{lgnet3_forward.1} parent=0 // loop_exit
    _

</llo_original>
